<compile_context>
chip_gen: v5e
topology: v5e:2x2
jax: 0.10.0
libtpu: 0.0.40
codegen_flags: <defaults>
</compile_context>

<pallas_src>
import functools

import jax
import jax.numpy as jnp
from jax.experimental import pallas as pl
from jax.experimental.pallas import tpu as pltpu


def _round_up(x, m):
    return (x + m - 1) // m * m


# ----------------------------------------------------------------------------
# Pallas kernels
# ----------------------------------------------------------------------------
def _matmul_bias_act_kernel(x_ref, w_ref, b_ref, o_ref, *, relu):
    # bf16 x bf16 -> f32 on the MXU, bias + ReLU fused, single full-K block.
    out = jnp.dot(x_ref[...], w_ref[...], preferred_element_type=jnp.float32)
    out = out + b_ref[...]
    if relu:
        out = jnp.maximum(out, 0.0)
    o_ref[...] = out.astype(o_ref.dtype)


def pallas_matmul(x, w, b, relu=False, out_dtype=jnp.bfloat16):
    """(M,K) @ (K,Np) + b with optional ReLU on the MXU.

    `w` must be bf16 with Np a multiple of 128 (pre-padded at param build);
    `b` is f32 of shape (Np,). Only M is (cheaply) padded here when needed.
    """
    M, K = x.shape
    Kw, Np = w.shape
    assert K == Kw and Np % 128 == 0 and b.shape == (Np,)

    x = x.astype(jnp.bfloat16)
    b2 = b.reshape(1, Np)

    if M <= 512:
        Mp = _round_up(M, 16)          # keep bf16 sublane packing happy
        tm = Mp
    else:
        tm = 512
        Mp = _round_up(M, tm)
    xp = x if Mp == M else jnp.pad(x, ((0, Mp - M), (0, 0)))
    tn = 256 if Np % 256 == 0 else 128

    kernel = functools.partial(_matmul_bias_act_kernel, relu=relu)
    out = pl.pallas_call(
        kernel,
        out_shape=jax.ShapeDtypeStruct((Mp, Np), out_dtype),
        grid_spec=pltpu.PrefetchScalarGridSpec(
            num_scalar_prefetch=0,
            grid=(Mp // tm, Np // tn),
            in_specs=[
                pl.BlockSpec((tm, K), lambda i, j: (i, 0)),
                pl.BlockSpec((K, tn), lambda i, j: (0, j)),
                pl.BlockSpec((1, tn), lambda i, j: (0, j)),
            ],
            out_specs=pl.BlockSpec((tm, tn), lambda i, j: (i, j)),
        ),
        compiler_params=pltpu.CompilerParams(
            dimension_semantics=("parallel", "parallel"),
            vmem_limit_bytes=32 * 1024 * 1024,
        ),
    )(xp, w, b2)
    if Mp != M:
        out = out[:M]
    return out


def _gap_kernel(x_ref, o_ref):
    o_ref[...] = jnp.mean(x_ref[...].astype(jnp.float32), axis=1, keepdims=True)


def pallas_global_avg_pool(x):
    """NHWC -> (N,1,1,C) global average pool (ASPP image-pool branch)."""
    n, h, w, c = x.shape
    xr = x.reshape(n, h * w, c)
    out = pl.pallas_call(
        _gap_kernel,
        out_shape=jax.ShapeDtypeStruct((n, 1, c), jnp.float32),
        grid=(n,),
        in_specs=[pl.BlockSpec((1, h * w, c), lambda i: (i, 0, 0))],
        out_specs=pl.BlockSpec((1, 1, c), lambda i: (i, 0, 0)),
    )(xr)
    return out.reshape(n, 1, 1, c)


# ----------------------------------------------------------------------------
# Convolution = im2col (bf16, dead taps dropped) + Pallas matmul (hot path)
# ----------------------------------------------------------------------------
def conv2d(x, w_taps, b, *, kh, kw, cout, stride=1, dilation=1, padding=0,
           relu=True):
    """x: NHWC bf16, w_taps: (kh*kw, cin, Np) bf16 pre-padded, b: (Np,) f32."""
    n, h, w, cin = x.shape
    oh = (h + 2 * padding - dilation * (kh - 1) - 1) // stride + 1
    ow = (w + 2 * padding - dilation * (kw - 1) - 1) // stride + 1

    def alive(k_sz, in_sz, out_sz):
        # Static: does tap index i ever sample inside the (unpadded) input?
        return [
            any(0 <= i * dilation + o * stride - padding < in_sz
                for o in range(out_sz))
            for i in range(k_sz)
        ]

    row_ok = alive(kh, h, oh)
    col_ok = alive(kw, w, ow)
    taps = [(i, j) for i in range(kh) for j in range(kw)
            if row_ok[i] and col_ok[j]]

    xp = x
    if padding > 0:
        xp = jnp.pad(x, ((0, 0), (padding, padding), (padding, padding), (0, 0)))
    cols = []
    for (i, j) in taps:
        cols.append(
            xp[:,
               i * dilation: i * dilation + stride * (oh - 1) + 1: stride,
               j * dilation: j * dilation + stride * (ow - 1) + 1: stride,
               :])
    cols = jnp.concatenate(cols, axis=-1) if len(cols) > 1 else cols[0]

    if len(taps) == kh * kw:
        w_mat = w_taps.reshape(kh * kw * cin, -1)
    else:
        idx = jnp.asarray([i * kw + j for (i, j) in taps], dtype=jnp.int32)
        w_mat = jnp.take(w_taps, idx, axis=0).reshape(len(taps) * cin, -1)

    out = pallas_matmul(cols.reshape(n * oh * ow, len(taps) * cin),
                        w_mat, b, relu=relu)
    return out[:, :cout].reshape(n, oh, ow, cout)


def conv_apply(x, p, d):
    return conv2d(x, p["w"], p["b"], kh=d["kh"], kw=d["kw"], cout=d["cout"],
                  stride=d["stride"], dilation=d["dilation"],
                  padding=d["padding"], relu=d["relu"])


# ----------------------------------------------------------------------------
# Bilinear upsampling (align_corners=True, matches nn.UpsamplingBilinear2d)
# as interpolation-matrix contractions (MXU dots, no gathers).
# ----------------------------------------------------------------------------
def _interp_matrix(in_s, out_s):
    pos = jnp.arange(out_s, dtype=jnp.float32) * (
        (in_s - 1) / (out_s - 1) if out_s > 1 else 0.0)
    i0 = jnp.clip(jnp.floor(pos).astype(jnp.int32), 0, in_s - 1)
    i1 = jnp.clip(i0 + 1, 0, in_s - 1)
    f = pos - i0.astype(jnp.float32)
    m = jnp.zeros((out_s, in_s), jnp.float32)
    m = m.at[jnp.arange(out_s), i0].add(1.0 - f)
    m = m.at[jnp.arange(out_s), i1].add(f)
    return m


def upsample_bilinear(x, scale):
    n, h, w, c = x.shape
    ay = _interp_matrix(h, h * scale)          # (OH, H)
    ax = _interp_matrix(w, w * scale)          # (OW, W)
    y = jnp.einsum('ph,nhwc->npwc', ay, x.astype(jnp.float32))
    y = jnp.einsum('qw,npwc->npqc', ax, y)
    return y                                   # f32, (N, OH, OW, C)


# ----------------------------------------------------------------------------
# Parameters (deterministic synthetic init, pre-padded / pre-cast to bf16)
# ----------------------------------------------------------------------------
def _conv_defs(in_channels=3, classes=12):
    # Reduced channel plan (stand-in for efficientnet-b7 widths).
    c_stem, c_low, c_mid, c_high = 16, 24, 32, 64
    aspp_c, low_red, dec_c = 64, 48, 64

    def d(kh, kw, cin, cout, stride=1, dilation=1, padding=0, relu=True):
        return dict(kh=kh, kw=kw, cin=cin, cout=cout, stride=stride,
                    dilation=dilation, padding=padding, relu=relu)

    return {
        "stem": d(3, 3, in_channels, c_stem, stride=2, padding=1),
        "enc1": d(3, 3, c_stem, c_low, stride=2, padding=1),
        "enc2": d(3, 3, c_low, c_mid, stride=2, padding=1),
        "enc3": d(3, 3, c_mid, c_high, stride=2, padding=1),
        "aspp0": d(1, 1, c_high, aspp_c),
        "aspp1": d(3, 3, c_high, aspp_c, dilation=12, padding=12),
        "aspp2": d(3, 3, c_high, aspp_c, dilation=24, padding=24),
        "aspp3": d(3, 3, c_high, aspp_c, dilation=36, padding=36),
        "aspp_pool": d(1, 1, c_high, aspp_c),
        "aspp_proj": d(1, 1, 5 * aspp_c, aspp_c),
        "aspp_sep": d(3, 3, aspp_c, aspp_c, padding=1),
        "low_proj": d(1, 1, c_low, low_red),
        "dec": d(3, 3, aspp_c + low_red, dec_c, padding=1),
        "head": d(3, 3, dec_c, classes, padding=1, relu=False),
    }


def make_params(key, in_channels=3, classes=12):
    defs = _conv_defs(in_channels, classes)
    keys = jax.random.split(key, len(defs))
    raw = {}
    for k, (name, d) in zip(keys, defs.items()):
        std = (2.0 / (d["kh"] * d["kw"] * d["cin"])) ** 0.5
        raw[name] = jax.random.normal(
            k, (d["kh"], d["kw"], d["cin"], d["cout"]), jnp.float32) * std

    params = {}
    for name, d in defs.items():
        np_ = _round_up(d["cout"], 128)
        w_taps = raw[name].reshape(d["kh"] * d["kw"], d["cin"], d["cout"])
        w_taps = jnp.pad(w_taps, ((0, 0), (0, 0), (0, np_ - d["cout"])))
        params[name] = {
            "w": w_taps.astype(jnp.bfloat16),          # (kh*kw, cin, Np) bf16
            "b": jnp.zeros((np_,), jnp.float32),       # (Np,) f32
        }

    # Pre-fused ASPP centre-tap weight: used when the high-level map is small
    # enough that every dilated tap except the centre lands in zero padding,
    # so the 1x1 + three dilated 3x3 branches collapse to one N=256 matmul.
    centre = [raw["aspp0"][0, 0], raw["aspp1"][1, 1],
              raw["aspp2"][1, 1], raw["aspp3"][1, 1]]
    fused_w = jnp.concatenate(centre, axis=-1)          # (c_high, 4*aspp_c)
    params["aspp_fused"] = {
        "w": fused_w.astype(jnp.bfloat16),
        "b": jnp.zeros((fused_w.shape[-1],), jnp.float32),
    }
    return params


# ----------------------------------------------------------------------------
# Forward pass (DeepLabV3Plus)
# ----------------------------------------------------------------------------
def deeplabv3plus_forward(params, x_nchw, *, in_channels=3, classes=12):
    defs = _conv_defs(in_channels, classes)
    p = params
    x = jnp.transpose(x_nchw, (0, 2, 3, 1)).astype(jnp.bfloat16)  # NCHW->NHWC

    # Encoder (reduced stand-in; stride-4 low-level & stride-16 high-level).
    f = conv_apply(x, p["stem"], defs["stem"])        # /2
    low = conv_apply(f, p["enc1"], defs["enc1"])      # /4
    f = conv_apply(low, p["enc2"], defs["enc2"])      # /8
    high = conv_apply(f, p["enc3"], defs["enc3"])     # /16

    n, hh, hw, c_high = high.shape
    aspp_c = defs["aspp0"]["cout"]

    # ASPP
    min_dil = min(defs[k]["dilation"] for k in ("aspp1", "aspp2", "aspp3"))
    if hh <= min_dil and hw <= min_dil:
        # All dilated taps except the centre fall in zero padding: the four
        # non-pool branches are mathematically a single fused 1x1 conv (N=256).
        m = n * hh * hw
        a0123 = pallas_matmul(high.reshape(m, c_high),
                              p["aspp_fused"]["w"], p["aspp_fused"]["b"],
                              relu=True)
        a0123 = a0123[:, :4 * aspp_c].reshape(n, hh, hw, 4 * aspp_c)
    else:
        branches = [conv_apply(high, p[k], defs[k])
                    for k in ("aspp0", "aspp1", "aspp2", "aspp3")]
        a0123 = jnp.concatenate(branches, axis=-1)

    pooled = pallas_global_avg_pool(high)                          # (N,1,1,C)
    a4 = conv_apply(pooled.astype(jnp.bfloat16),
                    p["aspp_pool"], defs["aspp_pool"])
    a4 = jnp.broadcast_to(a4, (n, hh, hw, aspp_c))
    a = jnp.concatenate([a0123, a4], axis=-1)
    a = conv_apply(a, p["aspp_proj"], defs["aspp_proj"])
    a = conv_apply(a, p["aspp_sep"], defs["aspp_sep"])

    # Decoder
    a_up = upsample_bilinear(a, 4).astype(jnp.bfloat16)            # /16 -> /4
    lowp = conv_apply(low, p["low_proj"], defs["low_proj"])
    d = jnp.concatenate([a_up, lowp], axis=-1)
    d = conv_apply(d, p["dec"], defs["dec"])

    # Segmentation head
    logits = conv_apply(d, p["head"], defs["head"])
    logits = upsample_bilinear(logits, 4)                          # /4 -> /1
    return jnp.transpose(logits, (0, 3, 1, 2)).astype(jnp.float32)  # NCHW


if __name__ == "__main__":
    key = jax.random.PRNGKey(0)
    pkey, xkey = jax.random.split(key)
    in_channels, classes = 3, 12
    params = make_params(pkey, in_channels=in_channels, classes=classes)

    # Small deterministic input (NCHW, like the PyTorch module).
    x = jax.random.normal(xkey, (2, in_channels, 64, 64), jnp.float32)

    fwd = jax.jit(deeplabv3plus_forward)
    out = fwd(params, x)
    out = jax.block_until_ready(out)

    assert out.shape == (2, classes, 64, 64), out.shape
    assert jnp.all(jnp.isfinite(out))
    print("KERNEL_OK")
</pallas_src>

<mosaic_0001>
module attributes {stable_mosaic.version = 11 : i64} {
  func.func @_matmul_bias_act_kernel(%arg0: i32, %arg1: i32, %arg2: memref<512x27xbf16, #tpu.memory_space<vmem>>, %arg3: memref<27x128xbf16, #tpu.memory_space<vmem>>, %arg4: memref<1x128xf32, #tpu.memory_space<vmem>>, %arg5: memref<512x128xbf16, #tpu.memory_space<vmem>>) attributes {dimension_semantics = [#tpu.dimension_semantics<parallel>, #tpu.dimension_semantics<parallel>], iteration_bounds = array<i64: 4, 1>, scalar_prefetch = 0 : i64, scratch_operands = 0 : i64, tpu.core_type = #tpu.core_type<tc>, window_params = [{transform_indices = @transform_0, window_bounds = array<i64: 512, 27>}, {transform_indices = @transform_1, window_bounds = array<i64: 27, 128>}, {transform_indices = @transform_2, window_bounds = array<i64: 1, 128>}, {transform_indices = @transform_3, window_bounds = array<i64: 512, 128>}]} {
    %c0 = arith.constant 0 : index
    %c0_0 = arith.constant 0 : index
    %0 = vector.load %arg2[%c0, %c0_0] : memref<512x27xbf16, #tpu.memory_space<vmem>>, vector<512x27xbf16>
    %c0_1 = arith.constant 0 : index
    %c0_2 = arith.constant 0 : index
    %1 = vector.load %arg3[%c0_1, %c0_2] : memref<27x128xbf16, #tpu.memory_space<vmem>>, vector<27x128xbf16>
    %cst = arith.constant dense<0.000000e+00> : vector<512x128xf32>
    %2 = tpu.matmul %0, %1, %cst {dimension_numbers = #tpu.dot_dimension_numbers<[1], [0], [0], [1], [0, 0, 1, 1], [], []>} : vector<512x27xbf16>, vector<27x128xbf16>, vector<512x128xf32> -> vector<512x128xf32>
    %c0_3 = arith.constant 0 : index
    %c0_4 = arith.constant 0 : index
    %3 = vector.load %arg4[%c0_3, %c0_4] : memref<1x128xf32, #tpu.memory_space<vmem>>, vector<1x128xf32>
    %4 = vector.broadcast %3 : vector<1x128xf32> to vector<512x128xf32>
    %5 = arith.addf %2, %4 : vector<512x128xf32>
    %cst_5 = arith.constant 0.000000e+00 : f32
    %6 = vector.broadcast %cst_5 : f32 to vector<512x128xf32>
    %7 = arith.maximumf %5, %6 : vector<512x128xf32>
    %8 = arith.truncf %7 : vector<512x128xf32> to vector<512x128xbf16>
    %c0_6 = arith.constant 0 : index
    %c0_7 = arith.constant 0 : index
    %9 = vector.load %arg5[%c0_6, %c0_7] : memref<512x128xbf16, #tpu.memory_space<vmem>>, vector<512x128xbf16>
    tpu.vector_store %arg5[%c0_6, %c0_7], %8 {strides = array<i32>} : memref<512x128xbf16, #tpu.memory_space<vmem>>, vector<512x128xbf16>,
    return
  }
  func.func @transform_0(%arg0: i32, %arg1: i32) -> (i32, i32) {
    %c0_i32 = arith.constant 0 : i32
    %c0_i32_0 = arith.constant 0 : i32
    return %arg0, %c0_i32 : i32, i32
  }
  func.func @transform_1(%arg0: i32, %arg1: i32) -> (i32, i32) {
    %c0_i32 = arith.constant 0 : i32
    %c0_i32_0 = arith.constant 0 : i32
    return %c0_i32, %arg1 : i32, i32
  }
  func.func @transform_2(%arg0: i32, %arg1: i32) -> (i32, i32) {
    %c0_i32 = arith.constant 0 : i32
    %c0_i32_0 = arith.constant 0 : i32
    return %c0_i32, %arg1 : i32, i32
  }
  func.func @transform_3(%arg0: i32, %arg1: i32) -> (i32, i32) {
    %c0_i32 = arith.constant 0 : i32
    return %arg0, %arg1 : i32, i32
  }
}

module attributes {stable_mosaic.version = 11 : i64} {
  func.func @_matmul_bias_act_kernel(%arg0: i32, %arg1: i32, %arg2: memref<512x144xbf16, #tpu.memory_space<vmem>>, %arg3: memref<144x128xbf16, #tpu.memory_space<vmem>>, %arg4: memref<1x128xf32, #tpu.memory_space<vmem>>, %arg5: memref<512x128xbf16, #tpu.memory_space<vmem>>) attributes {dimension_semantics = [#tpu.dimension_semantics<parallel>, #tpu.dimension_semantics<parallel>], iteration_bounds = array<i64: 1, 1>, scalar_prefetch = 0 : i64, scratch_operands = 0 : i64, tpu.core_type = #tpu.core_type<tc>, window_params = [{transform_indices = @transform_0, window_bounds = array<i64: 512, 144>}, {transform_indices = @transform_1, window_bounds = array<i64: 144, 128>}, {transform_indices = @transform_2, window_bounds = array<i64: 1, 128>}, {transform_indices = @transform_3, window_bounds = array<i64: 512, 128>}]} {
    %c0 = arith.constant 0 : index
    %c0_0 = arith.constant 0 : index
    %0 = vector.load %arg2[%c0, %c0_0] : memref<512x144xbf16, #tpu.memory_space<vmem>>, vector<512x144xbf16>
    %c0_1 = arith.constant 0 : index
    %c0_2 = arith.constant 0 : index
    %1 = vector.load %arg3[%c0_1, %c0_2] : memref<144x128xbf16, #tpu.memory_space<vmem>>, vector<144x128xbf16>
    %cst = arith.constant dense<0.000000e+00> : vector<512x128xf32>
    %2 = tpu.matmul %0, %1, %cst {dimension_numbers = #tpu.dot_dimension_numbers<[1], [0], [0], [1], [0, 0, 1, 1], [], []>} : vector<512x144xbf16>, vector<144x128xbf16>, vector<512x128xf32> -> vector<512x128xf32>
    %c0_3 = arith.constant 0 : index
    %c0_4 = arith.constant 0 : index
    %3 = vector.load %arg4[%c0_3, %c0_4] : memref<1x128xf32, #tpu.memory_space<vmem>>, vector<1x128xf32>
    %4 = vector.broadcast %3 : vector<1x128xf32> to vector<512x128xf32>
    %5 = arith.addf %2, %4 : vector<512x128xf32>
    %cst_5 = arith.constant 0.000000e+00 : f32
    %6 = vector.broadcast %cst_5 : f32 to vector<512x128xf32>
    %7 = arith.maximumf %5, %6 : vector<512x128xf32>
    %8 = arith.truncf %7 : vector<512x128xf32> to vector<512x128xbf16>
    %c0_6 = arith.constant 0 : index
    %c0_7 = arith.constant 0 : index
    %9 = vector.load %arg5[%c0_6, %c0_7] : memref<512x128xbf16, #tpu.memory_space<vmem>>, vector<512x128xbf16>
    tpu.vector_store %arg5[%c0_6, %c0_7], %8 {strides = array<i32>} : memref<512x128xbf16, #tpu.memory_space<vmem>>, vector<512x128xbf16>,
    return
  }
  func.func @transform_0(%arg0: i32, %arg1: i32) -> (i32, i32) {
    %c0_i32 = arith.constant 0 : i32
    %c0_i32_0 = arith.constant 0 : i32
    return %arg0, %c0_i32 : i32, i32
  }
  func.func @transform_1(%arg0: i32, %arg1: i32) -> (i32, i32) {
    %c0_i32 = arith.constant 0 : i32
    %c0_i32_0 = arith.constant 0 : i32
    return %c0_i32, %arg1 : i32, i32
  }
  func.func @transform_2(%arg0: i32, %arg1: i32) -> (i32, i32) {
    %c0_i32 = arith.constant 0 : i32
    %c0_i32_0 = arith.constant 0 : i32
    return %c0_i32, %arg1 : i32, i32
  }
  func.func @transform_3(%arg0: i32, %arg1: i32) -> (i32, i32) {
    %c0_i32 = arith.constant 0 : i32
    return %arg0, %arg1 : i32, i32
  }
}

module attributes {stable_mosaic.version = 11 : i64} {
  func.func @_matmul_bias_act_kernel(%arg0: i32, %arg1: i32, %arg2: memref<128x216xbf16, #tpu.memory_space<vmem>>, %arg3: memref<216x128xbf16, #tpu.memory_space<vmem>>, %arg4: memref<1x128xf32, #tpu.memory_space<vmem>>, %arg5: memref<128x128xbf16, #tpu.memory_space<vmem>>) attributes {dimension_semantics = [#tpu.dimension_semantics<parallel>, #tpu.dimension_semantics<parallel>], iteration_bounds = array<i64: 1, 1>, scalar_prefetch = 0 : i64, scratch_operands = 0 : i64, tpu.core_type = #tpu.core_type<tc>, window_params = [{transform_indices = @transform_0, window_bounds = array<i64: 128, 216>}, {transform_indices = @transform_1, window_bounds = array<i64: 216, 128>}, {transform_indices = @transform_2, window_bounds = array<i64: 1, 128>}, {transform_indices = @transform_3, window_bounds = array<i64: 128, 128>}]} {
    %c0 = arith.constant 0 : index
    %c0_0 = arith.constant 0 : index
    %0 = vector.load %arg2[%c0, %c0_0] : memref<128x216xbf16, #tpu.memory_space<vmem>>, vector<128x216xbf16>
    %c0_1 = arith.constant 0 : index
    %c0_2 = arith.constant 0 : index
    %1 = vector.load %arg3[%c0_1, %c0_2] : memref<216x128xbf16, #tpu.memory_space<vmem>>, vector<216x128xbf16>
    %cst = arith.constant dense<0.000000e+00> : vector<128x128xf32>
    %2 = tpu.matmul %0, %1, %cst {dimension_numbers = #tpu.dot_dimension_numbers<[1], [0], [0], [1], [0, 0, 1, 1], [], []>} : vector<128x216xbf16>, vector<216x128xbf16>, vector<128x128xf32> -> vector<128x128xf32>
    %c0_3 = arith.constant 0 : index
    %c0_4 = arith.constant 0 : index
    %3 = vector.load %arg4[%c0_3, %c0_4] : memref<1x128xf32, #tpu.memory_space<vmem>>, vector<1x128xf32>
    %4 = vector.broadcast %3 : vector<1x128xf32> to vector<128x128xf32>
    %5 = arith.addf %2, %4 : vector<128x128xf32>
    %cst_5 = arith.constant 0.000000e+00 : f32
    %6 = vector.broadcast %cst_5 : f32 to vector<128x128xf32>
    %7 = arith.maximumf %5, %6 : vector<128x128xf32>
    %8 = arith.truncf %7 : vector<128x128xf32> to vector<128x128xbf16>
    %c0_6 = arith.constant 0 : index
    %c0_7 = arith.constant 0 : index
    %9 = vector.load %arg5[%c0_6, %c0_7] : memref<128x128xbf16, #tpu.memory_space<vmem>>, vector<128x128xbf16>
    tpu.vector_store %arg5[%c0_6, %c0_7], %8 {strides = array<i32>} : memref<128x128xbf16, #tpu.memory_space<vmem>>, vector<128x128xbf16>,
    return
  }
  func.func @transform_0(%arg0: i32, %arg1: i32) -> (i32, i32) {
    %c0_i32 = arith.constant 0 : i32
    %c0_i32_0 = arith.constant 0 : i32
    return %arg0, %c0_i32 : i32, i32
  }
  func.func @transform_1(%arg0: i32, %arg1: i32) -> (i32, i32) {
    %c0_i32 = arith.constant 0 : i32
    %c0_i32_0 = arith.constant 0 : i32
    return %c0_i32, %arg1 : i32, i32
  }
  func.func @transform_2(%arg0: i32, %arg1: i32) -> (i32, i32) {
    %c0_i32 = arith.constant 0 : i32
    %c0_i32_0 = arith.constant 0 : i32
    return %c0_i32, %arg1 : i32, i32
  }
  func.func @transform_3(%arg0: i32, %arg1: i32) -> (i32, i32) {
    %c0_i32 = arith.constant 0 : i32
    return %arg0, %arg1 : i32, i32
  }
}

module attributes {stable_mosaic.version = 11 : i64} {
  func.func @_matmul_bias_act_kernel(%arg0: i32, %arg1: i32, %arg2: memref<32x288xbf16, #tpu.memory_space<vmem>>, %arg3: memref<288x128xbf16, #tpu.memory_space<vmem>>, %arg4: memref<1x128xf32, #tpu.memory_space<vmem>>, %arg5: memref<32x128xbf16, #tpu.memory_space<vmem>>) attributes {dimension_semantics = [#tpu.dimension_semantics<parallel>, #tpu.dimension_semantics<parallel>], iteration_bounds = array<i64: 1, 1>, scalar_prefetch = 0 : i64, scratch_operands = 0 : i64, tpu.core_type = #tpu.core_type<tc>, window_params = [{transform_indices = @transform_0, window_bounds = array<i64: 32, 288>}, {transform_indices = @transform_1, window_bounds = array<i64: 288, 128>}, {transform_indices = @transform_2, window_bounds = array<i64: 1, 128>}, {transform_indices = @transform_3, window_bounds = array<i64: 32, 128>}]} {
    %c0 = arith.constant 0 : index
    %c0_0 = arith.constant 0 : index
    %0 = vector.load %arg2[%c0, %c0_0] : memref<32x288xbf16, #tpu.memory_space<vmem>>, vector<32x288xbf16>
    %c0_1 = arith.constant 0 : index
    %c0_2 = arith.constant 0 : index
    %1 = vector.load %arg3[%c0_1, %c0_2] : memref<288x128xbf16, #tpu.memory_space<vmem>>, vector<288x128xbf16>
    %cst = arith.constant dense<0.000000e+00> : vector<32x128xf32>
    %2 = tpu.matmul %0, %1, %cst {dimension_numbers = #tpu.dot_dimension_numbers<[1], [0], [0], [1], [0, 0, 1, 1], [], []>} : vector<32x288xbf16>, vector<288x128xbf16>, vector<32x128xf32> -> vector<32x128xf32>
    %c0_3 = arith.constant 0 : index
    %c0_4 = arith.constant 0 : index
    %3 = vector.load %arg4[%c0_3, %c0_4] : memref<1x128xf32, #tpu.memory_space<vmem>>, vector<1x128xf32>
    %4 = vector.broadcast %3 : vector<1x128xf32> to vector<32x128xf32>
    %5 = arith.addf %2, %4 : vector<32x128xf32>
    %cst_5 = arith.constant 0.000000e+00 : f32
    %6 = vector.broadcast %cst_5 : f32 to vector<32x128xf32>
    %7 = arith.maximumf %5, %6 : vector<32x128xf32>
    %8 = arith.truncf %7 : vector<32x128xf32> to vector<32x128xbf16>
    %c0_6 = arith.constant 0 : index
    %c0_7 = arith.constant 0 : index
    %9 = vector.load %arg5[%c0_6, %c0_7] : memref<32x128xbf16, #tpu.memory_space<vmem>>, vector<32x128xbf16>
    tpu.vector_store %arg5[%c0_6, %c0_7], %8 {strides = array<i32>} : memref<32x128xbf16, #tpu.memory_space<vmem>>, vector<32x128xbf16>,
    return
  }
  func.func @transform_0(%arg0: i32, %arg1: i32) -> (i32, i32) {
    %c0_i32 = arith.constant 0 : i32
    %c0_i32_0 = arith.constant 0 : i32
    return %arg0, %c0_i32 : i32, i32
  }
  func.func @transform_1(%arg0: i32, %arg1: i32) -> (i32, i32) {
    %c0_i32 = arith.constant 0 : i32
    %c0_i32_0 = arith.constant 0 : i32
    return %c0_i32, %arg1 : i32, i32
  }
  func.func @transform_2(%arg0: i32, %arg1: i32) -> (i32, i32) {
    %c0_i32 = arith.constant 0 : i32
    %c0_i32_0 = arith.constant 0 : i32
    return %c0_i32, %arg1 : i32, i32
  }
  func.func @transform_3(%arg0: i32, %arg1: i32) -> (i32, i32) {
    %c0_i32 = arith.constant 0 : i32
    return %arg0, %arg1 : i32, i32
  }
}

module attributes {stable_mosaic.version = 11 : i64} {
  func.func @_gap_kernel(%arg0: i32, %arg1: memref<1x16x64xbf16, #tpu.memory_space<vmem>>, %arg2: memref<1x1x64xf32, #tpu.memory_space<vmem>>) attributes {dimension_semantics = [#tpu.dimension_semantics<arbitrary>], iteration_bounds = array<i64: 2>, scalar_prefetch = 0 : i64, scratch_operands = 0 : i64, tpu.core_type = #tpu.core_type<tc>, window_params = [{transform_indices = @transform_0, window_bounds = array<i64: 1, 16, 64>}, {transform_indices = @transform_1, window_bounds = array<i64: 1, 1, 64>}]} {
    %c0 = arith.constant 0 : index
    %c0_0 = arith.constant 0 : index
    %c0_1 = arith.constant 0 : index
    %0 = vector.load %arg1[%c0, %c0_0, %c0_1] : memref<1x16x64xbf16, #tpu.memory_space<vmem>>, vector<1x16x64xbf16>
    %1 = arith.extf %0 : vector<1x16x64xbf16> to vector<1x16x64xf32>
    %cst = arith.constant dense<0.000000e+00> : vector<1x64xf32>
    %2 = vector.multi_reduction <add>, %1, %cst [1] : vector<1x16x64xf32> to vector<1x64xf32>
    %3 = vector.shape_cast %2 : vector<1x64xf32> to vector<1x1x64xf32>
    %cst_2 = arith.constant 1.600000e+01 : f32
    %4 = vector.broadcast %cst_2 : f32 to vector<1x1x64xf32>
    %5 = arith.divf %3, %4 : vector<1x1x64xf32>
    %c0_3 = arith.constant 0 : index
    %c0_4 = arith.constant 0 : index
    %c0_5 = arith.constant 0 : index
    %6 = vector.load %arg2[%c0_3, %c0_4, %c0_5] : memref<1x1x64xf32, #tpu.memory_space<vmem>>, vector<1x1x64xf32>
    tpu.vector_store %arg2[%c0_3, %c0_4, %c0_5], %5 {strides = array<i32>} : memref<1x1x64xf32, #tpu.memory_space<vmem>>, vector<1x1x64xf32>,
    return
  }
  func.func @transform_0(%arg0: i32) -> (i32, i32, i32) {
    %c0_i32 = arith.constant 0 : i32
    %c0_i32_0 = arith.constant 0 : i32
    %c0_i32_1 = arith.constant 0 : i32
    return %arg0, %c0_i32, %c0_i32_0 : i32, i32, i32
  }
  func.func @transform_1(%arg0: i32) -> (i32, i32, i32) {
    %c0_i32 = arith.constant 0 : i32
    %c0_i32_0 = arith.constant 0 : i32
    %c0_i32_1 = arith.constant 0 : i32
    return %arg0, %c0_i32, %c0_i32_0 : i32, i32, i32
  }
}

module attributes {stable_mosaic.version = 11 : i64} {
  func.func @_matmul_bias_act_kernel(%arg0: i32, %arg1: i32, %arg2: memref<16x64xbf16, #tpu.memory_space<vmem>>, %arg3: memref<64x128xbf16, #tpu.memory_space<vmem>>, %arg4: memref<1x128xf32, #tpu.memory_space<vmem>>, %arg5: memref<16x128xbf16, #tpu.memory_space<vmem>>) attributes {dimension_semantics = [#tpu.dimension_semantics<parallel>, #tpu.dimension_semantics<parallel>], iteration_bounds = array<i64: 1, 1>, scalar_prefetch = 0 : i64, scratch_operands = 0 : i64, tpu.core_type = #tpu.core_type<tc>, window_params = [{transform_indices = @transform_0, window_bounds = array<i64: 16, 64>}, {transform_indices = @transform_1, window_bounds = array<i64: 64, 128>}, {transform_indices = @transform_2, window_bounds = array<i64: 1, 128>}, {transform_indices = @transform_3, window_bounds = array<i64: 16, 128>}]} {
    %c0 = arith.constant 0 : index
    %c0_0 = arith.constant 0 : index
    %0 = vector.load %arg2[%c0, %c0_0] : memref<16x64xbf16, #tpu.memory_space<vmem>>, vector<16x64xbf16>
    %c0_1 = arith.constant 0 : index
    %c0_2 = arith.constant 0 : index
    %1 = vector.load %arg3[%c0_1, %c0_2] : memref<64x128xbf16, #tpu.memory_space<vmem>>, vector<64x128xbf16>
    %cst = arith.constant dense<0.000000e+00> : vector<16x128xf32>
    %2 = tpu.matmul %0, %1, %cst {dimension_numbers = #tpu.dot_dimension_numbers<[1], [0], [0], [1], [0, 0, 1, 1], [], []>} : vector<16x64xbf16>, vector<64x128xbf16>, vector<16x128xf32> -> vector<16x128xf32>
    %c0_3 = arith.constant 0 : index
    %c0_4 = arith.constant 0 : index
    %3 = vector.load %arg4[%c0_3, %c0_4] : memref<1x128xf32, #tpu.memory_space<vmem>>, vector<1x128xf32>
    %4 = vector.broadcast %3 : vector<1x128xf32> to vector<16x128xf32>
    %5 = arith.addf %2, %4 : vector<16x128xf32>
    %cst_5 = arith.constant 0.000000e+00 : f32
    %6 = vector.broadcast %cst_5 : f32 to vector<16x128xf32>
    %7 = arith.maximumf %5, %6 : vector<16x128xf32>
    %8 = arith.truncf %7 : vector<16x128xf32> to vector<16x128xbf16>
    %c0_6 = arith.constant 0 : index
    %c0_7 = arith.constant 0 : index
    %9 = vector.load %arg5[%c0_6, %c0_7] : memref<16x128xbf16, #tpu.memory_space<vmem>>, vector<16x128xbf16>
    tpu.vector_store %arg5[%c0_6, %c0_7], %8 {strides = array<i32>} : memref<16x128xbf16, #tpu.memory_space<vmem>>, vector<16x128xbf16>,
    return
  }
  func.func @transform_0(%arg0: i32, %arg1: i32) -> (i32, i32) {
    %c0_i32 = arith.constant 0 : i32
    %c0_i32_0 = arith.constant 0 : i32
    return %arg0, %c0_i32 : i32, i32
  }
  func.func @transform_1(%arg0: i32, %arg1: i32) -> (i32, i32) {
    %c0_i32 = arith.constant 0 : i32
    %c0_i32_0 = arith.constant 0 : i32
    return %c0_i32, %arg1 : i32, i32
  }
  func.func @transform_2(%arg0: i32, %arg1: i32) -> (i32, i32) {
    %c0_i32 = arith.constant 0 : i32
    %c0_i32_0 = arith.constant 0 : i32
    return %c0_i32, %arg1 : i32, i32
  }
  func.func @transform_3(%arg0: i32, %arg1: i32) -> (i32, i32) {
    %c0_i32 = arith.constant 0 : i32
    return %arg0, %arg1 : i32, i32
  }
}

module attributes {stable_mosaic.version = 11 : i64} {
  func.func @_matmul_bias_act_kernel(%arg0: i32, %arg1: i32, %arg2: memref<32x320xbf16, #tpu.memory_space<vmem>>, %arg3: memref<320x128xbf16, #tpu.memory_space<vmem>>, %arg4: memref<1x128xf32, #tpu.memory_space<vmem>>, %arg5: memref<32x128xbf16, #tpu.memory_space<vmem>>) attributes {dimension_semantics = [#tpu.dimension_semantics<parallel>, #tpu.dimension_semantics<parallel>], iteration_bounds = array<i64: 1, 1>, scalar_prefetch = 0 : i64, scratch_operands = 0 : i64, tpu.core_type = #tpu.core_type<tc>, window_params = [{transform_indices = @transform_0, window_bounds = array<i64: 32, 320>}, {transform_indices = @transform_1, window_bounds = array<i64: 320, 128>}, {transform_indices = @transform_2, window_bounds = array<i64: 1, 128>}, {transform_indices = @transform_3, window_bounds = array<i64: 32, 128>}]} {
    %c0 = arith.constant 0 : index
    %c0_0 = arith.constant 0 : index
    %0 = vector.load %arg2[%c0, %c0_0] : memref<32x320xbf16, #tpu.memory_space<vmem>>, vector<32x320xbf16>
    %c0_1 = arith.constant 0 : index
    %c0_2 = arith.constant 0 : index
    %1 = vector.load %arg3[%c0_1, %c0_2] : memref<320x128xbf16, #tpu.memory_space<vmem>>, vector<320x128xbf16>
    %cst = arith.constant dense<0.000000e+00> : vector<32x128xf32>
    %2 = tpu.matmul %0, %1, %cst {dimension_numbers = #tpu.dot_dimension_numbers<[1], [0], [0], [1], [0, 0, 1, 1], [], []>} : vector<32x320xbf16>, vector<320x128xbf16>, vector<32x128xf32> -> vector<32x128xf32>
    %c0_3 = arith.constant 0 : index
    %c0_4 = arith.constant 0 : index
    %3 = vector.load %arg4[%c0_3, %c0_4] : memref<1x128xf32, #tpu.memory_space<vmem>>, vector<1x128xf32>
    %4 = vector.broadcast %3 : vector<1x128xf32> to vector<32x128xf32>
    %5 = arith.addf %2, %4 : vector<32x128xf32>
    %cst_5 = arith.constant 0.000000e+00 : f32
    %6 = vector.broadcast %cst_5 : f32 to vector<32x128xf32>
    %7 = arith.maximumf %5, %6 : vector<32x128xf32>
    %8 = arith.truncf %7 : vector<32x128xf32> to vector<32x128xbf16>
    %c0_6 = arith.constant 0 : index
    %c0_7 = arith.constant 0 : index
    %9 = vector.load %arg5[%c0_6, %c0_7] : memref<32x128xbf16, #tpu.memory_space<vmem>>, vector<32x128xbf16>
    tpu.vector_store %arg5[%c0_6, %c0_7], %8 {strides = array<i32>} : memref<32x128xbf16, #tpu.memory_space<vmem>>, vector<32x128xbf16>,
    return
  }
  func.func @transform_0(%arg0: i32, %arg1: i32) -> (i32, i32) {
    %c0_i32 = arith.constant 0 : i32
    %c0_i32_0 = arith.constant 0 : i32
    return %arg0, %c0_i32 : i32, i32
  }
  func.func @transform_1(%arg0: i32, %arg1: i32) -> (i32, i32) {
    %c0_i32 = arith.constant 0 : i32
    %c0_i32_0 = arith.constant 0 : i32
    return %c0_i32, %arg1 : i32, i32
  }
  func.func @transform_2(%arg0: i32, %arg1: i32) -> (i32, i32) {
    %c0_i32 = arith.constant 0 : i32
    %c0_i32_0 = arith.constant 0 : i32
    return %c0_i32, %arg1 : i32, i32
  }
  func.func @transform_3(%arg0: i32, %arg1: i32) -> (i32, i32) {
    %c0_i32 = arith.constant 0 : i32
    return %arg0, %arg1 : i32, i32
  }
}

module attributes {stable_mosaic.version = 11 : i64} {
  func.func @_matmul_bias_act_kernel(%arg0: i32, %arg1: i32, %arg2: memref<32x64xbf16, #tpu.memory_space<vmem>>, %arg3: memref<64x256xbf16, #tpu.memory_space<vmem>>, %arg4: memref<1x256xf32, #tpu.memory_space<vmem>>, %arg5: memref<32x256xbf16, #tpu.memory_space<vmem>>) attributes {dimension_semantics = [#tpu.dimension_semantics<parallel>, #tpu.dimension_semantics<parallel>], iteration_bounds = array<i64: 1, 1>, scalar_prefetch = 0 : i64, scratch_operands = 0 : i64, tpu.core_type = #tpu.core_type<tc>, window_params = [{transform_indices = @transform_0, window_bounds = array<i64: 32, 64>}, {transform_indices = @transform_1, window_bounds = array<i64: 64, 256>}, {transform_indices = @transform_2, window_bounds = array<i64: 1, 256>}, {transform_indices = @transform_3, window_bounds = array<i64: 32, 256>}]} {
    %c0 = arith.constant 0 : index
    %c0_0 = arith.constant 0 : index
    %0 = vector.load %arg2[%c0, %c0_0] : memref<32x64xbf16, #tpu.memory_space<vmem>>, vector<32x64xbf16>
    %c0_1 = arith.constant 0 : index
    %c0_2 = arith.constant 0 : index
    %1 = vector.load %arg3[%c0_1, %c0_2] : memref<64x256xbf16, #tpu.memory_space<vmem>>, vector<64x256xbf16>
    %cst = arith.constant dense<0.000000e+00> : vector<32x256xf32>
    %2 = tpu.matmul %0, %1, %cst {dimension_numbers = #tpu.dot_dimension_numbers<[1], [0], [0], [1], [0, 0, 1, 1], [], []>} : vector<32x64xbf16>, vector<64x256xbf16>, vector<32x256xf32> -> vector<32x256xf32>
    %c0_3 = arith.constant 0 : index
    %c0_4 = arith.constant 0 : index
    %3 = vector.load %arg4[%c0_3, %c0_4] : memref<1x256xf32, #tpu.memory_space<vmem>>, vector<1x256xf32>
    %4 = vector.broadcast %3 : vector<1x256xf32> to vector<32x256xf32>
    %5 = arith.addf %2, %4 : vector<32x256xf32>
    %cst_5 = arith.constant 0.000000e+00 : f32
    %6 = vector.broadcast %cst_5 : f32 to vector<32x256xf32>
    %7 = arith.maximumf %5, %6 : vector<32x256xf32>
    %8 = arith.truncf %7 : vector<32x256xf32> to vector<32x256xbf16>
    %c0_6 = arith.constant 0 : index
    %c0_7 = arith.constant 0 : index
    %9 = vector.load %arg5[%c0_6, %c0_7] : memref<32x256xbf16, #tpu.memory_space<vmem>>, vector<32x256xbf16>
    tpu.vector_store %arg5[%c0_6, %c0_7], %8 {strides = array<i32>} : memref<32x256xbf16, #tpu.memory_space<vmem>>, vector<32x256xbf16>,
    return
  }
  func.func @transform_0(%arg0: i32, %arg1: i32) -> (i32, i32) {
    %c0_i32 = arith.constant 0 : i32
    %c0_i32_0 = arith.constant 0 : i32
    return %arg0, %c0_i32 : i32, i32
  }
  func.func @transform_1(%arg0: i32, %arg1: i32) -> (i32, i32) {
    %c0_i32 = arith.constant 0 : i32
    %c0_i32_0 = arith.constant 0 : i32
    return %c0_i32, %arg1 : i32, i32
  }
  func.func @transform_2(%arg0: i32, %arg1: i32) -> (i32, i32) {
    %c0_i32 = arith.constant 0 : i32
    %c0_i32_0 = arith.constant 0 : i32
    return %c0_i32, %arg1 : i32, i32
  }
  func.func @transform_3(%arg0: i32, %arg1: i32) -> (i32, i32) {
    %c0_i32 = arith.constant 0 : i32
    return %arg0, %arg1 : i32, i32
  }
}

module attributes {stable_mosaic.version = 11 : i64} {
  func.func @_matmul_bias_act_kernel(%arg0: i32, %arg1: i32, %arg2: memref<32x576xbf16, #tpu.memory_space<vmem>>, %arg3: memref<576x128xbf16, #tpu.memory_space<vmem>>, %arg4: memref<1x128xf32, #tpu.memory_space<vmem>>, %arg5: memref<32x128xbf16, #tpu.memory_space<vmem>>) attributes {dimension_semantics = [#tpu.dimension_semantics<parallel>, #tpu.dimension_semantics<parallel>], iteration_bounds = array<i64: 1, 1>, scalar_prefetch = 0 : i64, scratch_operands = 0 : i64, tpu.core_type = #tpu.core_type<tc>, window_params = [{transform_indices = @transform_0, window_bounds = array<i64: 32, 576>}, {transform_indices = @transform_1, window_bounds = array<i64: 576, 128>}, {transform_indices = @transform_2, window_bounds = array<i64: 1, 128>}, {transform_indices = @transform_3, window_bounds = array<i64: 32, 128>}]} {
    %c0 = arith.constant 0 : index
    %c0_0 = arith.constant 0 : index
    %0 = vector.load %arg2[%c0, %c0_0] : memref<32x576xbf16, #tpu.memory_space<vmem>>, vector<32x576xbf16>
    %c0_1 = arith.constant 0 : index
    %c0_2 = arith.constant 0 : index
    %1 = vector.load %arg3[%c0_1, %c0_2] : memref<576x128xbf16, #tpu.memory_space<vmem>>, vector<576x128xbf16>
    %cst = arith.constant dense<0.000000e+00> : vector<32x128xf32>
    %2 = tpu.matmul %0, %1, %cst {dimension_numbers = #tpu.dot_dimension_numbers<[1], [0], [0], [1], [0, 0, 1, 1], [], []>} : vector<32x576xbf16>, vector<576x128xbf16>, vector<32x128xf32> -> vector<32x128xf32>
    %c0_3 = arith.constant 0 : index
    %c0_4 = arith.constant 0 : index
    %3 = vector.load %arg4[%c0_3, %c0_4] : memref<1x128xf32, #tpu.memory_space<vmem>>, vector<1x128xf32>
    %4 = vector.broadcast %3 : vector<1x128xf32> to vector<32x128xf32>
    %5 = arith.addf %2, %4 : vector<32x128xf32>
    %cst_5 = arith.constant 0.000000e+00 : f32
    %6 = vector.broadcast %cst_5 : f32 to vector<32x128xf32>
    %7 = arith.maximumf %5, %6 : vector<32x128xf32>
    %8 = arith.truncf %7 : vector<32x128xf32> to vector<32x128xbf16>
    %c0_6 = arith.constant 0 : index
    %c0_7 = arith.constant 0 : index
    %9 = vector.load %arg5[%c0_6, %c0_7] : memref<32x128xbf16, #tpu.memory_space<vmem>>, vector<32x128xbf16>
    tpu.vector_store %arg5[%c0_6, %c0_7], %8 {strides = array<i32>} : memref<32x128xbf16, #tpu.memory_space<vmem>>, vector<32x128xbf16>,
    return
  }
  func.func @transform_0(%arg0: i32, %arg1: i32) -> (i32, i32) {
    %c0_i32 = arith.constant 0 : i32
    %c0_i32_0 = arith.constant 0 : i32
    return %arg0, %c0_i32 : i32, i32
  }
  func.func @transform_1(%arg0: i32, %arg1: i32) -> (i32, i32) {
    %c0_i32 = arith.constant 0 : i32
    %c0_i32_0 = arith.constant 0 : i32
    return %c0_i32, %arg1 : i32, i32
  }
  func.func @transform_2(%arg0: i32, %arg1: i32) -> (i32, i32) {
    %c0_i32 = arith.constant 0 : i32
    %c0_i32_0 = arith.constant 0 : i32
    return %c0_i32, %arg1 : i32, i32
  }
  func.func @transform_3(%arg0: i32, %arg1: i32) -> (i32, i32) {
    %c0_i32 = arith.constant 0 : i32
    return %arg0, %arg1 : i32, i32
  }
}

module attributes {stable_mosaic.version = 11 : i64} {
  func.func @_matmul_bias_act_kernel(%arg0: i32, %arg1: i32, %arg2: memref<512x24xbf16, #tpu.memory_space<vmem>>, %arg3: memref<24x128xbf16, #tpu.memory_space<vmem>>, %arg4: memref<1x128xf32, #tpu.memory_space<vmem>>, %arg5: memref<512x128xbf16, #tpu.memory_space<vmem>>) attributes {dimension_semantics = [#tpu.dimension_semantics<parallel>, #tpu.dimension_semantics<parallel>], iteration_bounds = array<i64: 1, 1>, scalar_prefetch = 0 : i64, scratch_operands = 0 : i64, tpu.core_type = #tpu.core_type<tc>, window_params = [{transform_indices = @transform_0, window_bounds = array<i64: 512, 24>}, {transform_indices = @transform_1, window_bounds = array<i64: 24, 128>}, {transform_indices = @transform_2, window_bounds = array<i64: 1, 128>}, {transform_indices = @transform_3, window_bounds = array<i64: 512, 128>}]} {
    %c0 = arith.constant 0 : index
    %c0_0 = arith.constant 0 : index
    %0 = vector.load %arg2[%c0, %c0_0] : memref<512x24xbf16, #tpu.memory_space<vmem>>, vector<512x24xbf16>
    %c0_1 = arith.constant 0 : index
    %c0_2 = arith.constant 0 : index
    %1 = vector.load %arg3[%c0_1, %c0_2] : memref<24x128xbf16, #tpu.memory_space<vmem>>, vector<24x128xbf16>
    %cst = arith.constant dense<0.000000e+00> : vector<512x128xf32>
    %2 = tpu.matmul %0, %1, %cst {dimension_numbers = #tpu.dot_dimension_numbers<[1], [0], [0], [1], [0, 0, 1, 1], [], []>} : vector<512x24xbf16>, vector<24x128xbf16>, vector<512x128xf32> -> vector<512x128xf32>
    %c0_3 = arith.constant 0 : index
    %c0_4 = arith.constant 0 : index
    %3 = vector.load %arg4[%c0_3, %c0_4] : memref<1x128xf32, #tpu.memory_space<vmem>>, vector<1x128xf32>
    %4 = vector.broadcast %3 : vector<1x128xf32> to vector<512x128xf32>
    %5 = arith.addf %2, %4 : vector<512x128xf32>
    %cst_5 = arith.constant 0.000000e+00 : f32
    %6 = vector.broadcast %cst_5 : f32 to vector<512x128xf32>
    %7 = arith.maximumf %5, %6 : vector<512x128xf32>
    %8 = arith.truncf %7 : vector<512x128xf32> to vector<512x128xbf16>
    %c0_6 = arith.constant 0 : index
    %c0_7 = arith.constant 0 : index
    %9 = vector.load %arg5[%c0_6, %c0_7] : memref<512x128xbf16, #tpu.memory_space<vmem>>, vector<512x128xbf16>
    tpu.vector_store %arg5[%c0_6, %c0_7], %8 {strides = array<i32>} : memref<512x128xbf16, #tpu.memory_space<vmem>>, vector<512x128xbf16>,
    return
  }
  func.func @transform_0(%arg0: i32, %arg1: i32) -> (i32, i32) {
    %c0_i32 = arith.constant 0 : i32
    %c0_i32_0 = arith.constant 0 : i32
    return %arg0, %c0_i32 : i32, i32
  }
  func.func @transform_1(%arg0: i32, %arg1: i32) -> (i32, i32) {
    %c0_i32 = arith.constant 0 : i32
    %c0_i32_0 = arith.constant 0 : i32
    return %c0_i32, %arg1 : i32, i32
  }
  func.func @transform_2(%arg0: i32, %arg1: i32) -> (i32, i32) {
    %c0_i32 = arith.constant 0 : i32
    %c0_i32_0 = arith.constant 0 : i32
    return %c0_i32, %arg1 : i32, i32
  }
  func.func @transform_3(%arg0: i32, %arg1: i32) -> (i32, i32) {
    %c0_i32 = arith.constant 0 : i32
    return %arg0, %arg1 : i32, i32
  }
}

module attributes {stable_mosaic.version = 11 : i64} {
  func.func @_matmul_bias_act_kernel(%arg0: i32, %arg1: i32, %arg2: memref<512x1008xbf16, #tpu.memory_space<vmem>>, %arg3: memref<1008x128xbf16, #tpu.memory_space<vmem>>, %arg4: memref<1x128xf32, #tpu.memory_space<vmem>>, %arg5: memref<512x128xbf16, #tpu.memory_space<vmem>>) attributes {dimension_semantics = [#tpu.dimension_semantics<parallel>, #tpu.dimension_semantics<parallel>], iteration_bounds = array<i64: 1, 1>, scalar_prefetch = 0 : i64, scratch_operands = 0 : i64, tpu.core_type = #tpu.core_type<tc>, window_params = [{transform_indices = @transform_0, window_bounds = array<i64: 512, 1008>}, {transform_indices = @transform_1, window_bounds = array<i64: 1008, 128>}, {transform_indices = @transform_2, window_bounds = array<i64: 1, 128>}, {transform_indices = @transform_3, window_bounds = array<i64: 512, 128>}]} {
    %c0 = arith.constant 0 : index
    %c0_0 = arith.constant 0 : index
    %0 = vector.load %arg2[%c0, %c0_0] : memref<512x1008xbf16, #tpu.memory_space<vmem>>, vector<512x1008xbf16>
    %c0_1 = arith.constant 0 : index
    %c0_2 = arith.constant 0 : index
    %1 = vector.load %arg3[%c0_1, %c0_2] : memref<1008x128xbf16, #tpu.memory_space<vmem>>, vector<1008x128xbf16>
    %cst = arith.constant dense<0.000000e+00> : vector<512x128xf32>
    %2 = tpu.matmul %0, %1, %cst {dimension_numbers = #tpu.dot_dimension_numbers<[1], [0], [0], [1], [0, 0, 1, 1], [], []>} : vector<512x1008xbf16>, vector<1008x128xbf16>, vector<512x128xf32> -> vector<512x128xf32>
    %c0_3 = arith.constant 0 : index
    %c0_4 = arith.constant 0 : index
    %3 = vector.load %arg4[%c0_3, %c0_4] : memref<1x128xf32, #tpu.memory_space<vmem>>, vector<1x128xf32>
    %4 = vector.broadcast %3 : vector<1x128xf32> to vector<512x128xf32>
    %5 = arith.addf %2, %4 : vector<512x128xf32>
    %cst_5 = arith.constant 0.000000e+00 : f32
    %6 = vector.broadcast %cst_5 : f32 to vector<512x128xf32>
    %7 = arith.maximumf %5, %6 : vector<512x128xf32>
    %8 = arith.truncf %7 : vector<512x128xf32> to vector<512x128xbf16>
    %c0_6 = arith.constant 0 : index
    %c0_7 = arith.constant 0 : index
    %9 = vector.load %arg5[%c0_6, %c0_7] : memref<512x128xbf16, #tpu.memory_space<vmem>>, vector<512x128xbf16>
    tpu.vector_store %arg5[%c0_6, %c0_7], %8 {strides = array<i32>} : memref<512x128xbf16, #tpu.memory_space<vmem>>, vector<512x128xbf16>,
    return
  }
  func.func @transform_0(%arg0: i32, %arg1: i32) -> (i32, i32) {
    %c0_i32 = arith.constant 0 : i32
    %c0_i32_0 = arith.constant 0 : i32
    return %arg0, %c0_i32 : i32, i32
  }
  func.func @transform_1(%arg0: i32, %arg1: i32) -> (i32, i32) {
    %c0_i32 = arith.constant 0 : i32
    %c0_i32_0 = arith.constant 0 : i32
    return %c0_i32, %arg1 : i32, i32
  }
  func.func @transform_2(%arg0: i32, %arg1: i32) -> (i32, i32) {
    %c0_i32 = arith.constant 0 : i32
    %c0_i32_0 = arith.constant 0 : i32
    return %c0_i32, %arg1 : i32, i32
  }
  func.func @transform_3(%arg0: i32, %arg1: i32) -> (i32, i32) {
    %c0_i32 = arith.constant 0 : i32
    return %arg0, %arg1 : i32, i32
  }
}

module attributes {stable_mosaic.version = 11 : i64} {
  func.func @_matmul_bias_act_kernel(%arg0: i32, %arg1: i32, %arg2: memref<512x576xbf16, #tpu.memory_space<vmem>>, %arg3: memref<576x128xbf16, #tpu.memory_space<vmem>>, %arg4: memref<1x128xf32, #tpu.memory_space<vmem>>, %arg5: memref<512x128xbf16, #tpu.memory_space<vmem>>) attributes {dimension_semantics = [#tpu.dimension_semantics<parallel>, #tpu.dimension_semantics<parallel>], iteration_bounds = array<i64: 1, 1>, scalar_prefetch = 0 : i64, scratch_operands = 0 : i64, tpu.core_type = #tpu.core_type<tc>, window_params = [{transform_indices = @transform_0, window_bounds = array<i64: 512, 576>}, {transform_indices = @transform_1, window_bounds = array<i64: 576, 128>}, {transform_indices = @transform_2, window_bounds = array<i64: 1, 128>}, {transform_indices = @transform_3, window_bounds = array<i64: 512, 128>}]} {
    %c0 = arith.constant 0 : index
    %c0_0 = arith.constant 0 : index
    %0 = vector.load %arg2[%c0, %c0_0] : memref<512x576xbf16, #tpu.memory_space<vmem>>, vector<512x576xbf16>
    %c0_1 = arith.constant 0 : index
    %c0_2 = arith.constant 0 : index
    %1 = vector.load %arg3[%c0_1, %c0_2] : memref<576x128xbf16, #tpu.memory_space<vmem>>, vector<576x128xbf16>
    %cst = arith.constant dense<0.000000e+00> : vector<512x128xf32>
    %2 = tpu.matmul %0, %1, %cst {dimension_numbers = #tpu.dot_dimension_numbers<[1], [0], [0], [1], [0, 0, 1, 1], [], []>} : vector<512x576xbf16>, vector<576x128xbf16>, vector<512x128xf32> -> vector<512x128xf32>
    %c0_3 = arith.constant 0 : index
    %c0_4 = arith.constant 0 : index
    %3 = vector.load %arg4[%c0_3, %c0_4] : memref<1x128xf32, #tpu.memory_space<vmem>>, vector<1x128xf32>
    %4 = vector.broadcast %3 : vector<1x128xf32> to vector<512x128xf32>
    %5 = arith.addf %2, %4 : vector<512x128xf32>
    %6 = arith.truncf %5 : vector<512x128xf32> to vector<512x128xbf16>
    %c0_5 = arith.constant 0 : index
    %c0_6 = arith.constant 0 : index
    %7 = vector.load %arg5[%c0_5, %c0_6] : memref<512x128xbf16, #tpu.memory_space<vmem>>, vector<512x128xbf16>
    tpu.vector_store %arg5[%c0_5, %c0_6], %6 {strides = array<i32>} : memref<512x128xbf16, #tpu.memory_space<vmem>>, vector<512x128xbf16>,
    return
  }
  func.func @transform_0(%arg0: i32, %arg1: i32) -> (i32, i32) {
    %c0_i32 = arith.constant 0 : i32
    %c0_i32_0 = arith.constant 0 : i32
    return %arg0, %c0_i32 : i32, i32
  }
  func.func @transform_1(%arg0: i32, %arg1: i32) -> (i32, i32) {
    %c0_i32 = arith.constant 0 : i32
    %c0_i32_0 = arith.constant 0 : i32
    return %c0_i32, %arg1 : i32, i32
  }
  func.func @transform_2(%arg0: i32, %arg1: i32) -> (i32, i32) {
    %c0_i32 = arith.constant 0 : i32
    %c0_i32_0 = arith.constant 0 : i32
    return %c0_i32, %arg1 : i32, i32
  }
  func.func @transform_3(%arg0: i32, %arg1: i32) -> (i32, i32) {
    %c0_i32 = arith.constant 0 : i32
    return %arg0, %arg1 : i32, i32
  }
}

</mosaic_0001>

<llo_original>
// kernel: deeplabv3plus_forward.12
$region0: #{deeplabv3plus_forward.12}
  #allocation0 [shape = 'u32[]', space=smem, size = 0x4, offset = 0x4, fixed_abs, tag = 'smem constant byte address 0x4 - core index']
  #allocation1 [shape = 'u32[72,128]{1,0:T(1,128)}', space=vmem, size = 0x9000, scoped, tag = 'internal scratch']
  %s0 = inlined_call_operand.vmem [shape: bf16[2048,27], index: 0, kind: input, shape index: {}]
  %s1 = inlined_call_operand.vmem [shape: bf16[27,128], index: 1, kind: input, shape index: {}]
  %s2 = inlined_call_operand.vmem [shape: f32[1,128], index: 2, kind: input, shape index: {}]
  %s3 = inlined_call_operand.vmem [shape: bf16[2048,128], index: 3, kind: output, shape index: {}]
  %s4 = sld [smem:[#allocation0]]
  $region45: #{deeplabv3plus_forward.12} parent=0
    _
  %s6 = ssub.s32 1, %s4
  %s7 = scalar_select 0, %s6, %s4
  loop: start=0, step=1, limit=6
  $region2: #{deeplabv3plus_forward.12} parent=0 // loop_pre_header
    _
  $region3: #{deeplabv3plus_forward.12} parent=0 // loop_header
    %s9 = sphi 0, %s13
    %p10 = scmp.ge.s32.totalorder %s9, 6
    %s16 = sphi 0, %s28
    %s17 = sphi 0, %s24
    %s18 = sphi 0, %s16
    %s19 = sphi 0, %s17
    %s20 = sphi 0, %s18
    %s21 = sphi 0, %s19
    %s31 = sphi 0, %s33
    %s34 = sphi 0, %s31
    %s35 = sphi 0, %s34
    %s51 = sphi 0, %s35
    %s57 = sphi 0, %s59
    %s60 = sphi 0, %s57
    %s61 = sphi 0, %s60
    %s77 = sphi 0, %s61
    %s83 = sphi 0, %s85
    %s86 = sphi 0, %s83
    %s87 = sphi 0, %s86
    %s103 = sphi 0, %s87
    %s111 = sphi 0, %s113
    %s114 = sphi 0, %s111
    %s115 = sphi 0, %s114
    %s131 = sphi 0, %s115
  $region4: #{deeplabv3plus_forward.12} parent=0 // loop_header_branch
    %12 = sbr.rel (%p10) target = $region8
  $region5: #{deeplabv3plus_forward.12} parent=0 // loop_body
    %s14 = ssub.s32 %s9, 1
    %s15 = ssub.s32 %s9, 2
    %s22 = sadd.s32 1, %s17
    %p23 = scmp.ge.s32.totalorder %s22, 1
    %s24 = scalar_select %p23, 0, %s22
    %s25 = sadd.s32 1, %s16
    %s26 = scalar_select %p23, %s25, %s16
    %p27 = scmp.ge.s32.totalorder %s26, 4
    %s28 = scalar_select %p27, 0, %s26
    %s29 = ssub.s32 %s16, %s28
    %p30 = scmp.eq.s32.totalorder %s29, 0
    %s32 = sadd.s32 %s31, 1
    %s33 = scalar_select %p30, %s31, %s32
    %p36 = pneg %p30
    %p37 = scmp.eq.s32.totalorder %s9, 3
    %p38 = por %p36, %p37
    %p39 = scmp.ne.s32.totalorder %s31, %s34
    %p40 = scmp.eq.s32.totalorder %s9, 0
    %p41 = por %p39, %p40
    %p42 = scmp.ne.s32.totalorder %s31, %s34
    %p43 = scmp.eq.s32.totalorder %s14, 3
    %p44 = por %p42, %p43
    %p45 = scmp.ne.s32.totalorder %s34, %s35
    %p46 = scmp.eq.s32.totalorder %s14, 0
    %p47 = por %p45, %p46
    %p48 = scmp.ne.s32.totalorder %s34, %s35
    %p49 = scmp.eq.s32.totalorder %s15, 3
    %p50 = por %p48, %p49
    %p52 = scmp.ne.s32.totalorder %s35, %s51
    %p53 = scmp.eq.s32.totalorder %s15, 0
    %p54 = por %p52, %p53
    %s55 = ssub.s32 %s17, %s24
    %p56 = scmp.eq.s32.totalorder %s55, 0
    %s58 = sadd.s32 %s57, 1
    %s59 = scalar_select %p56, %s57, %s58
    %p62 = pneg %p56
    %p63 = scmp.eq.s32.totalorder %s9, 3
    %p64 = por %p62, %p63
    %p65 = scmp.ne.s32.totalorder %s57, %s60
    %p66 = scmp.eq.s32.totalorder %s9, 0
    %p67 = por %p65, %p66
    %p68 = scmp.ne.s32.totalorder %s57, %s60
    %p69 = scmp.eq.s32.totalorder %s14, 3
    %p70 = por %p68, %p69
    %p71 = scmp.ne.s32.totalorder %s60, %s61
    %p72 = scmp.eq.s32.totalorder %s14, 0
    %p73 = por %p71, %p72
    %p74 = scmp.ne.s32.totalorder %s60, %s61
    %p75 = scmp.eq.s32.totalorder %s15, 3
    %p76 = por %p74, %p75
    %p78 = scmp.ne.s32.totalorder %s61, %s77
    %p79 = scmp.eq.s32.totalorder %s15, 0
    %p80 = por %p78, %p79
    %s81 = ssub.s32 %s17, %s24
    %p82 = scmp.eq.s32.totalorder %s81, 0
    %s84 = sadd.s32 %s83, 1
    %s85 = scalar_select %p82, %s83, %s84
    %p88 = pneg %p82
    %p89 = scmp.eq.s32.totalorder %s9, 3
    %p90 = por %p88, %p89
    %p91 = scmp.ne.s32.totalorder %s83, %s86
    %p92 = scmp.eq.s32.totalorder %s9, 0
    %p93 = por %p91, %p92
    %p94 = scmp.ne.s32.totalorder %s83, %s86
    %p95 = scmp.eq.s32.totalorder %s14, 3
    %p96 = por %p94, %p95
    %p97 = scmp.ne.s32.totalorder %s86, %s87
    %p98 = scmp.eq.s32.totalorder %s14, 0
    %p99 = por %p97, %p98
    %p100 = scmp.ne.s32.totalorder %s86, %s87
    %p101 = scmp.eq.s32.totalorder %s15, 3
    %p102 = por %p100, %p101
    %p104 = scmp.ne.s32.totalorder %s87, %s103
    %p105 = scmp.eq.s32.totalorder %s15, 0
    %p106 = por %p104, %p105
    %s107 = ssub.s32 %s16, %s28
    %s108 = ssub.s32 %s17, %s24
    %s109 = sor.u32 %s107, %s108
    %p110 = scmp.eq.s32.totalorder %s109, 0
    %s112 = sadd.s32 %s111, 1
    %s113 = scalar_select %p110, %s111, %s112
    %p116 = pneg %p110
    %p117 = scmp.eq.s32.totalorder %s9, 3
    %p118 = por %p116, %p117
    %p119 = scmp.ne.s32.totalorder %s111, %s114
    %p120 = scmp.eq.s32.totalorder %s9, 0
    %p121 = por %p119, %p120
    %p122 = scmp.ne.s32.totalorder %s111, %s114
    %p123 = scmp.eq.s32.totalorder %s14, 3
    %p124 = por %p122, %p123
    %p125 = scmp.ne.s32.totalorder %s114, %s115
    %p126 = scmp.eq.s32.totalorder %s14, 0
    %p127 = por %p125, %p126
    %p128 = scmp.ne.s32.totalorder %s114, %s115
    %p129 = scmp.eq.s32.totalorder %s15, 3
    %p130 = por %p128, %p129
    %p132 = scmp.ne.s32.totalorder %s115, %s131
    %p133 = scmp.eq.s32.totalorder %s15, 0
    %p134 = por %p132, %p133
    %p135 = scmp.le.s32.totalorder 1, %s9
    %p136 = scmp.lt.s32.totalorder %s9, 5
    %p137 = pnand %p135, %p136
    %p138 = pneg %p137
    // Predicated region
    $region9: #{deeplabv3plus_forward.12} parent=5 // pred_check
      _
    $region10: #{deeplabv3plus_forward.12} parent=5 // pred_check_branch
      %140 = sbr.rel (%p137) target = $region12
    $region11: #{deeplabv3plus_forward.12} parent=5 // pred_region
      %s141 = ssub.s32 %s9, 1
      // Predicated region
      $region13: #{deeplabv3plus_forward.12} parent=11 // pred_check
        %p142 = pneg %p73
      $region14: #{deeplabv3plus_forward.12} parent=11 // pred_check_branch
        %144 = sbr.rel (%p142) target = $region16
      $region15: #{deeplabv3plus_forward.12} parent=11 // pred_region
        %p145 = scmp.lt.s32.totalorder %s19, 0
        %s146 = scalar_select %p145, %s19, 0
        %s147 = smul.addr %s146, 4
        %s148 = scalar_lea.vmem %s1, %s147
      $region16: #{deeplabv3plus_forward.12} parent=11 // pred_fallthru
        _
      // Predicated region
      $region17: #{deeplabv3plus_forward.12} parent=11 // pred_check
        %p149 = pneg %p99
      $region18: #{deeplabv3plus_forward.12} parent=11 // pred_check_branch
        %151 = sbr.rel (%p149) target = $region20
      $region19: #{deeplabv3plus_forward.12} parent=11 // pred_region
        %p152 = scmp.lt.s32.totalorder %s19, 0
        %s153 = scalar_select %p152, %s19, 0
        %s154 = scalar_lea.vmem %s2, %s153
      $region20: #{deeplabv3plus_forward.12} parent=11 // pred_fallthru
        _
    $region12: #{deeplabv3plus_forward.12} parent=5 // pred_fallthru
      _
    %p155 = scmp.lt.s32.totalorder %s9, 4
    // Predicated region
    $region21: #{deeplabv3plus_forward.12} parent=5 // pred_check
      %p156 = pneg %p155
    $region22: #{deeplabv3plus_forward.12} parent=5 // pred_check_branch
      %158 = sbr.rel (%p156) target = $region24
    $region23: #{deeplabv3plus_forward.12} parent=5 // pred_region
      // Predicated region
      $region25: #{deeplabv3plus_forward.12} parent=23 // pred_check
        %p159 = pneg %p41
      $region26: #{deeplabv3plus_forward.12} parent=23 // pred_check_branch
        %161 = sbr.rel (%p159) target = $region28
      $region27: #{deeplabv3plus_forward.12} parent=23 // pred_region
        %s162 = smul.u32 64, %s16
        %p163 = scmp.lt.s32.totalorder %s162, 255
        %s164 = scalar_select %p163, %s162, 255
        %s165 = smul.addr %s164, 4
        %s166 = scalar_lea.vmem %s0, %s165
        %s167 = smul.u32 64, %s16
      $region28: #{deeplabv3plus_forward.12} parent=23 // pred_fallthru
        _
    $region24: #{deeplabv3plus_forward.12} parent=5 // pred_fallthru
      _
    %p168 = scmp.le.s32.totalorder 1, %s9
    %p169 = scmp.lt.s32.totalorder %s9, 5
    %p170 = pnand %p168, %p169
    %p171 = pneg %p170
    // Predicated region
    $region29: #{deeplabv3plus_forward.12} parent=5 // pred_check
      _
    $region30: #{deeplabv3plus_forward.12} parent=5 // pred_check_branch
      %173 = sbr.rel (%p170) target = $region32
    $region31: #{deeplabv3plus_forward.12} parent=5 // pred_region
      %s174 = ssub.s32 %s9, 1
      %s175 = smul.u32 64, %s18
      %p176 = scmp.lt.s32.totalorder %s175, 255
      %s177 = scalar_select %p176, %s175, 255
      %s178 = smul.addr %s177, 4
      %s179 = scalar_lea.vmem %s0, %s178
      %p180 = pneg %p47
      %p181 = pneg %p44
      %p182 = scmp.lt.s32.totalorder %s19, 0
      %s183 = scalar_select %p182, %s19, 0
      %s184 = smul.addr %s183, 4
      %s185 = scalar_lea.vmem %s1, %s184
      %p186 = pneg %p73
      %p187 = pneg %p70
      %p188 = scmp.lt.s32.totalorder %s19, 0
      %s189 = scalar_select %p188, %s19, 0
      %s190 = scalar_lea.vmem %s2, %s189
      %p191 = pneg %p99
      %p192 = pneg %p96
      %p193 = pneg %p127
      %p194 = pneg %p124
      %s195 = smul.u32 64, %s18
      %p196 = scmp.lt.s32.totalorder %s195, 255
      %s197 = scalar_select %p196, %s195, 255
      %p198 = scmp.lt.s32.totalorder %s19, 0
      %s199 = scalar_select %p198, %s19, 0
      %s200 = sadd.s32 %s199, %s197
      %s201 = smul.addr %s200, 4
      %s202 = scalar_lea.vmem %s3, %s201
      %s203 = smul.u32 64, %s18
      %p204 = scmp.lt.s32.totalorder %s203, 255
      %s205 = scalar_select %p204, %s203, 255
      %s206 = smul.addr %s205, 4
      %s207 = scalar_lea.vmem %s0, %s206
      %s208 = smul.u32 64, %s18
      %p209 = scmp.lt.s32.totalorder %s19, 0
      %s210 = scalar_select %p209, %s19, 0
      %s211 = smul.addr %s210, 4
      %s212 = scalar_lea.vmem %s1, %s211
      %p213 = scmp.lt.s32.totalorder %s19, 0
      %s214 = scalar_select %p213, %s19, 0
      %s215 = scalar_lea.vmem %s2, %s214
      %s216 = smul.u32 64, %s18
      %p217 = scmp.lt.s32.totalorder %s216, 255
      %s218 = scalar_select %p217, %s216, 255
      %p219 = scmp.lt.s32.totalorder %s19, 0
      %s220 = scalar_select %p219, %s19, 0
      %s221 = sadd.s32 %s220, %s218
      %s222 = smul.addr %s221, 4
      %s223 = scalar_lea.vmem %s3, %s222
      %s224 = smul.u32 64, %s18
      %v226 = vld [vmem:[%s207] sm:$0xf]
      %v227 = vld [vmem:[%s207 + $0x4] sm:$0xf]
      %v228 = vld [vmem:[%s207 + $0x8] sm:$0xf]
      %v229 = vld [vmem:[%s207 + $0xc] sm:$0xf]
      %v230 = vld [vmem:[%s207 + $0x10] sm:$0xf]
      %v231 = vld [vmem:[%s207 + $0x14] sm:$0xf]
      %v232 = vld [vmem:[%s207 + $0x18] sm:$0xf]
      %v233 = vld [vmem:[%s207 + $0x1c] sm:$0xf]
      %v234 = vld [vmem:[%s207 + $0x20] sm:$0xf]
      %v235 = vld [vmem:[%s207 + $0x24] sm:$0xf]
      %v236 = vld [vmem:[%s207 + $0x28] sm:$0xf]
      %v237 = vld [vmem:[%s207 + $0x2c] sm:$0xf]
      %v238 = vld [vmem:[%s207 + $0x30] sm:$0xf]
      %v239 = vld [vmem:[%s207 + $0x34] sm:$0xf]
      %v240 = vld [vmem:[%s207 + $0x38] sm:$0xf]
      %v241 = vld [vmem:[%s207 + $0x3c] sm:$0xf]
      %v242 = vld [vmem:[%s207 + $0x40] sm:$0xf]
      %v243 = vld [vmem:[%s207 + $0x44] sm:$0xf]
      %v244 = vld [vmem:[%s207 + $0x48] sm:$0xf]
      %v245 = vld [vmem:[%s207 + $0x4c] sm:$0xf]
      %v246 = vld [vmem:[%s207 + $0x50] sm:$0xf]
      %v247 = vld [vmem:[%s207 + $0x54] sm:$0xf]
      %v248 = vld [vmem:[%s207 + $0x58] sm:$0xf]
      %v249 = vld [vmem:[%s207 + $0x5c] sm:$0xf]
      %v250 = vld [vmem:[%s207 + $0x60] sm:$0xf]
      %v251 = vld [vmem:[%s207 + $0x64] sm:$0xf]
      %v252 = vld [vmem:[%s207 + $0x68] sm:$0xf]
      %v253 = vld [vmem:[%s207 + $0x6c] sm:$0xf]
      %v254 = vld [vmem:[%s207 + $0x70] sm:$0xf]
      %v255 = vld [vmem:[%s207 + $0x74] sm:$0xf]
      %v256 = vld [vmem:[%s207 + $0x78] sm:$0xf]
      %v257 = vld [vmem:[%s207 + $0x7c] sm:$0xf]
      %v258 = vld [vmem:[%s207 + $0x80] sm:$0xf]
      %v259 = vld [vmem:[%s207 + $0x84] sm:$0xf]
      %v260 = vld [vmem:[%s207 + $0x88] sm:$0xf]
      %v261 = vld [vmem:[%s207 + $0x8c] sm:$0xf]
      %v262 = vld [vmem:[%s207 + $0x90] sm:$0xf]
      %v263 = vld [vmem:[%s207 + $0x94] sm:$0xf]
      %v264 = vld [vmem:[%s207 + $0x98] sm:$0xf]
      %v265 = vld [vmem:[%s207 + $0x9c] sm:$0xf]
      %v266 = vld [vmem:[%s207 + $0xa0] sm:$0xf]
      %v267 = vld [vmem:[%s207 + $0xa4] sm:$0xf]
      %v268 = vld [vmem:[%s207 + $0xa8] sm:$0xf]
      %v269 = vld [vmem:[%s207 + $0xac] sm:$0xf]
      %v270 = vld [vmem:[%s207 + $0xb0] sm:$0xf]
      %v271 = vld [vmem:[%s207 + $0xb4] sm:$0xf]
      %v272 = vld [vmem:[%s207 + $0xb8] sm:$0xf]
      %v273 = vld [vmem:[%s207 + $0xbc] sm:$0xf]
      %v274 = vld [vmem:[%s207 + $0xc0] sm:$0xf]
      %v275 = vld [vmem:[%s207 + $0xc4] sm:$0xf]
      %v276 = vld [vmem:[%s207 + $0xc8] sm:$0xf]
      %v277 = vld [vmem:[%s207 + $0xcc] sm:$0xf]
      %v278 = vld [vmem:[%s207 + $0xd0] sm:$0xf]
      %v279 = vld [vmem:[%s207 + $0xd4] sm:$0xf]
      %v280 = vld [vmem:[%s207 + $0xd8] sm:$0xf]
      %v281 = vld [vmem:[%s207 + $0xdc] sm:$0xf]
      %v282 = vld [vmem:[%s207 + $0xe0] sm:$0xf]
      %v283 = vld [vmem:[%s207 + $0xe4] sm:$0xf]
      %v284 = vld [vmem:[%s207 + $0xe8] sm:$0xf]
      %v285 = vld [vmem:[%s207 + $0xec] sm:$0xf]
      %v286 = vld [vmem:[%s207 + $0xf0] sm:$0xf]
      %v287 = vld [vmem:[%s207 + $0xf4] sm:$0xf]
      %v288 = vld [vmem:[%s207 + $0xf8] sm:$0xf]
      %v289 = vld [vmem:[%s207 + $0xfc] sm:$0xf]
      %v290 = vld [vmem:[%s212] sm:$0xf]
      %v291 = vld [vmem:[%s212 + $0x4] sm:$0xf]
      %v292 = vld [vmem:[%s212 + $0x8] sm:$0xf]
      %v293 = vld [vmem:[%s212 + $0xc] sm:$0x3]
      %v294 = vld [vmem:[%s215] sm:$0x1]
      %v296 = vperm.slane %v294, 0
      %v362 = vunpack.c.l.b16 %v226
      %v363 = vunpack.c.l.b16 %v227
      %v364 = vunpack.c.l.b16 %v228
      %v365 = vunpack.c.l.b16 %v229
      %v366 = vunpack.c.l.b16 %v230
      %v367 = vunpack.c.l.b16 %v231
      %v368 = vunpack.c.l.b16 %v232
      %v369 = vunpack.c.l.b16 %v233
      %v370 = vunpack.c.l.b16 %v234
      %v371 = vunpack.c.l.b16 %v235
      %v372 = vunpack.c.l.b16 %v236
      %v373 = vunpack.c.l.b16 %v237
      %v374 = vunpack.c.l.b16 %v238
      %v375 = vunpack.c.l.b16 %v239
      %v376 = vunpack.c.l.b16 %v240
      %v377 = vunpack.c.l.b16 %v241
      %v378 = vunpack.c.l.b16 %v242
      %v379 = vunpack.c.l.b16 %v243
      %v380 = vunpack.c.l.b16 %v244
      %v381 = vunpack.c.l.b16 %v245
      %v382 = vunpack.c.l.b16 %v246
      %v383 = vunpack.c.l.b16 %v247
      %v384 = vunpack.c.l.b16 %v248
      %v385 = vunpack.c.l.b16 %v249
      %v386 = vunpack.c.l.b16 %v250
      %v387 = vunpack.c.l.b16 %v251
      %v388 = vunpack.c.l.b16 %v252
      %v389 = vunpack.c.l.b16 %v253
      %v390 = vunpack.c.l.b16 %v254
      %v391 = vunpack.c.l.b16 %v255
      %v392 = vunpack.c.l.b16 %v256
      %v393 = vunpack.c.l.b16 %v257
      %v394 = vunpack.c.l.b16 %v258
      %v395 = vunpack.c.l.b16 %v259
      %v396 = vunpack.c.l.b16 %v260
      %v397 = vunpack.c.l.b16 %v261
      %v398 = vunpack.c.l.b16 %v262
      %v399 = vunpack.c.l.b16 %v263
      %v400 = vunpack.c.l.b16 %v264
      %v401 = vunpack.c.l.b16 %v265
      %v402 = vunpack.c.l.b16 %v266
      %v403 = vunpack.c.l.b16 %v267
      %v404 = vunpack.c.l.b16 %v268
      %v405 = vunpack.c.l.b16 %v269
      %v406 = vunpack.c.l.b16 %v270
      %v407 = vunpack.c.l.b16 %v271
      %v408 = vunpack.c.l.b16 %v272
      %v409 = vunpack.c.l.b16 %v273
      %v410 = vunpack.c.l.b16 %v274
      %v411 = vunpack.c.l.b16 %v275
      %v412 = vunpack.c.l.b16 %v276
      %v413 = vunpack.c.l.b16 %v277
      %v414 = vunpack.c.l.b16 %v278
      %v415 = vunpack.c.l.b16 %v279
      %v416 = vunpack.c.l.b16 %v280
      %v417 = vunpack.c.l.b16 %v281
      %v418 = vunpack.c.l.b16 %v282
      %v419 = vunpack.c.l.b16 %v283
      %v420 = vunpack.c.l.b16 %v284
      %v421 = vunpack.c.l.b16 %v285
      %v422 = vunpack.c.l.b16 %v286
      %v423 = vunpack.c.l.b16 %v287
      %v424 = vunpack.c.l.b16 %v288
      %v425 = vunpack.c.l.b16 %v289
      %v426 = vpack.c.b16 %v363, %v362
      %v427 = vpack.c.b16 %v365, %v364
      %v428 = vpack.c.b16 %v367, %v366
      %v429 = vpack.c.b16 %v369, %v368
      %v430 = vpack.c.b16 %v371, %v370
      %v431 = vpack.c.b16 %v373, %v372
      %v432 = vpack.c.b16 %v375, %v374
      %v433 = vpack.c.b16 %v377, %v376
      %v434 = vpack.c.b16 %v379, %v378
      %v435 = vpack.c.b16 %v381, %v380
      %v436 = vpack.c.b16 %v383, %v382
      %v437 = vpack.c.b16 %v385, %v384
      %v438 = vpack.c.b16 %v387, %v386
      %v439 = vpack.c.b16 %v389, %v388
      %v440 = vpack.c.b16 %v391, %v390
      %v441 = vpack.c.b16 %v393, %v392
      %v442 = vpack.c.b16 %v395, %v394
      %v443 = vpack.c.b16 %v397, %v396
      %v444 = vpack.c.b16 %v399, %v398
      %v445 = vpack.c.b16 %v401, %v400
      %v446 = vpack.c.b16 %v403, %v402
      %v447 = vpack.c.b16 %v405, %v404
      %v448 = vpack.c.b16 %v407, %v406
      %v449 = vpack.c.b16 %v409, %v408
      %v450 = vpack.c.b16 %v411, %v410
      %v451 = vpack.c.b16 %v413, %v412
      %v452 = vpack.c.b16 %v415, %v414
      %v453 = vpack.c.b16 %v417, %v416
      %v454 = vpack.c.b16 %v419, %v418
      %v455 = vpack.c.b16 %v421, %v420
      %v456 = vpack.c.b16 %v423, %v422
      %v457 = vpack.c.b16 %v425, %v424
      %v462 = vunpack.c.l.b16 %v290
      %v463 = vunpack.c.l.b16 %v291
      %v464 = vunpack.c.l.b16 %v292
      %v465 = vunpack.c.l.b16 %v293
      %v466 = vpack.c.b16 %v463, %v462
      %v467 = vpack.c.b16 %v465, %v464
      %vm469 = vcmask 220160
      %v471 = vsel %vm469, %v426, 0
      %v474 = vsel %vm469, %v427, 0
      %v477 = vsel %vm469, %v428, 0
      %v480 = vsel %vm469, %v429, 0
      %v483 = vsel %vm469, %v430, 0
      %v486 = vsel %vm469, %v431, 0
      %v489 = vsel %vm469, %v432, 0
      %v492 = vsel %vm469, %v433, 0
      %v495 = vsel %vm469, %v434, 0
      %v498 = vsel %vm469, %v435, 0
      %v501 = vsel %vm469, %v436, 0
      %v504 = vsel %vm469, %v437, 0
      %v507 = vsel %vm469, %v438, 0
      %v510 = vsel %vm469, %v439, 0
      %v513 = vsel %vm469, %v440, 0
      %v516 = vsel %vm469, %v441, 0
      %v519 = vsel %vm469, %v442, 0
      %v522 = vsel %vm469, %v443, 0
      %v525 = vsel %vm469, %v444, 0
      %v528 = vsel %vm469, %v445, 0
      %v531 = vsel %vm469, %v446, 0
      %v534 = vsel %vm469, %v447, 0
      %v537 = vsel %vm469, %v448, 0
      %v540 = vsel %vm469, %v449, 0
      %v543 = vsel %vm469, %v450, 0
      %v546 = vsel %vm469, %v451, 0
      %v549 = vsel %vm469, %v452, 0
      %v552 = vsel %vm469, %v453, 0
      %v555 = vsel %vm469, %v454, 0
      %v558 = vsel %vm469, %v455, 0
      %v561 = vsel %vm469, %v456, 0
      %v564 = vsel %vm469, %v457, 0
      %vm566 = vcmask 1044480
      %vm567 = vcmask 1045504
      %v568 = vsel %vm566, 4294967295, 65535
      %v569 = vsel %vm567, %v568, 0
      %v571 = vand.u32 %v467, %v569
      %573 = vmatpush.bf16.msra.mxu0 0
      %574 = vmatpush.bf16.msra.mxu0 0
      %575 = vmatpush.bf16.msra.mxu0 0
      %576 = vmatpush.bf16.msra.mxu0 0
      %577 = vmatpush.bf16.msra.mxu0 0
      %578 = vmatpush.bf16.msra.mxu0 0
      %579 = vmatpush.bf16.msra.mxu0 %v571
      %580 = vmatpush.bf16.msra.mxu0 %v466
      %581 = vmatmul.bf16.gmra.mxu0 %v471
      %v582 = vpop.f32.mrf.mxu0
      %v583 = vadd.f32 %v296, %v582
      %v584 = vpop.f32.mrf.mxu0
      %v585 = vadd.f32 %v296, %v584
      %586 = vmatmul.bf16.gmra.mxu0 %v474
      %v587 = vpop.f32.mrf.mxu0
      %v588 = vadd.f32 %v296, %v587
      %v589 = vpop.f32.mrf.mxu0
      %v590 = vadd.f32 %v296, %v589
      %591 = vmatmul.bf16.gmra.mxu0 %v477
      %v592 = vpop.f32.mrf.mxu0
      %v593 = vadd.f32 %v296, %v592
      %v594 = vpop.f32.mrf.mxu0
      %v595 = vadd.f32 %v296, %v594
      %596 = vmatmul.bf16.gmra.mxu0 %v480
      %v597 = vpop.f32.mrf.mxu0
      %v598 = vadd.f32 %v296, %v597
      %v599 = vpop.f32.mrf.mxu0
      %v600 = vadd.f32 %v296, %v599
      %601 = vmatmul.bf16.gmra.mxu0 %v483
      %v602 = vpop.f32.mrf.mxu0
      %v603 = vadd.f32 %v296, %v602
      %v604 = vpop.f32.mrf.mxu0
      %v605 = vadd.f32 %v296, %v604
      %606 = vmatmul.bf16.gmra.mxu0 %v486
      %v607 = vpop.f32.mrf.mxu0
      %v608 = vadd.f32 %v296, %v607
      %v609 = vpop.f32.mrf.mxu0
      %v610 = vadd.f32 %v296, %v609
      %611 = vmatmul.bf16.gmra.mxu0 %v489
      %v612 = vpop.f32.mrf.mxu0
      %v613 = vadd.f32 %v296, %v612
      %v614 = vpop.f32.mrf.mxu0
      %v615 = vadd.f32 %v296, %v614
      %616 = vmatmul.bf16.gmra.mxu0 %v492
      %v617 = vpop.f32.mrf.mxu0
      %v618 = vadd.f32 %v296, %v617
      %v619 = vpop.f32.mrf.mxu0
      %v620 = vadd.f32 %v296, %v619
      %621 = vmatmul.bf16.gmra.mxu0 %v495
      %v622 = vpop.f32.mrf.mxu0
      %v623 = vadd.f32 %v296, %v622
      %v624 = vpop.f32.mrf.mxu0
      %v625 = vadd.f32 %v296, %v624
      %626 = vmatmul.bf16.gmra.mxu0 %v498
      %v627 = vpop.f32.mrf.mxu0
      %v628 = vadd.f32 %v296, %v627
      %v629 = vpop.f32.mrf.mxu0
      %v630 = vadd.f32 %v296, %v629
      %631 = vmatmul.bf16.gmra.mxu0 %v501
      %v632 = vpop.f32.mrf.mxu0
      %v633 = vadd.f32 %v296, %v632
      %v634 = vpop.f32.mrf.mxu0
      %v635 = vadd.f32 %v296, %v634
      %636 = vmatmul.bf16.gmra.mxu0 %v504
      %v637 = vpop.f32.mrf.mxu0
      %v638 = vadd.f32 %v296, %v637
      %v639 = vpop.f32.mrf.mxu0
      %v640 = vadd.f32 %v296, %v639
      %641 = vmatmul.bf16.gmra.mxu0 %v507
      %v642 = vpop.f32.mrf.mxu0
      %v643 = vadd.f32 %v296, %v642
      %v644 = vpop.f32.mrf.mxu0
      %v645 = vadd.f32 %v296, %v644
      %646 = vmatmul.bf16.gmra.mxu0 %v510
      %v647 = vpop.f32.mrf.mxu0
      %v648 = vadd.f32 %v296, %v647
      %v649 = vpop.f32.mrf.mxu0
      %v650 = vadd.f32 %v296, %v649
      %651 = vmatmul.bf16.gmra.mxu0 %v513
      %v652 = vpop.f32.mrf.mxu0
      %v653 = vadd.f32 %v296, %v652
      %v654 = vpop.f32.mrf.mxu0
      %v655 = vadd.f32 %v296, %v654
      %656 = vmatmul.bf16.gmra.mxu0 %v516
      %v657 = vpop.f32.mrf.mxu0
      %v658 = vadd.f32 %v296, %v657
      %v659 = vpop.f32.mrf.mxu0
      %v660 = vadd.f32 %v296, %v659
      %661 = vmatmul.bf16.gmra.mxu0 %v519
      %v662 = vpop.f32.mrf.mxu0
      %v663 = vadd.f32 %v296, %v662
      %v664 = vpop.f32.mrf.mxu0
      %v665 = vadd.f32 %v296, %v664
      %666 = vmatmul.bf16.gmra.mxu0 %v522
      %v667 = vpop.f32.mrf.mxu0
      %v668 = vadd.f32 %v296, %v667
      %v669 = vpop.f32.mrf.mxu0
      %v670 = vadd.f32 %v296, %v669
      %671 = vmatmul.bf16.gmra.mxu0 %v525
      %v672 = vpop.f32.mrf.mxu0
      %v673 = vadd.f32 %v296, %v672
      %v674 = vpop.f32.mrf.mxu0
      %v675 = vadd.f32 %v296, %v674
      %676 = vmatmul.bf16.gmra.mxu0 %v528
      %v677 = vpop.f32.mrf.mxu0
      %v678 = vadd.f32 %v296, %v677
      %v679 = vpop.f32.mrf.mxu0
      %v680 = vadd.f32 %v296, %v679
      %681 = vmatmul.bf16.gmra.mxu0 %v531
      %v682 = vpop.f32.mrf.mxu0
      %v683 = vadd.f32 %v296, %v682
      %v684 = vpop.f32.mrf.mxu0
      %v685 = vadd.f32 %v296, %v684
      %686 = vmatmul.bf16.gmra.mxu0 %v534
      %v687 = vpop.f32.mrf.mxu0
      %v688 = vadd.f32 %v296, %v687
      %v689 = vpop.f32.mrf.mxu0
      %v690 = vadd.f32 %v296, %v689
      %691 = vmatmul.bf16.gmra.mxu0 %v537
      %v692 = vpop.f32.mrf.mxu0
      %v693 = vadd.f32 %v296, %v692
      %v694 = vpop.f32.mrf.mxu0
      %v695 = vadd.f32 %v296, %v694
      %696 = vmatmul.bf16.gmra.mxu0 %v540
      %v697 = vpop.f32.mrf.mxu0
      %v698 = vadd.f32 %v296, %v697
      %v699 = vpop.f32.mrf.mxu0
      %v700 = vadd.f32 %v296, %v699
      %701 = vmatmul.bf16.gmra.mxu0 %v543
      %v702 = vpop.f32.mrf.mxu0
      %v703 = vadd.f32 %v296, %v702
      %v704 = vpop.f32.mrf.mxu0
      %v705 = vadd.f32 %v296, %v704
      %706 = vmatmul.bf16.gmra.mxu0 %v546
      %v707 = vpop.f32.mrf.mxu0
      %v708 = vadd.f32 %v296, %v707
      %v709 = vpop.f32.mrf.mxu0
      %v710 = vadd.f32 %v296, %v709
      %711 = vmatmul.bf16.gmra.mxu0 %v549
      %v712 = vpop.f32.mrf.mxu0
      %v713 = vadd.f32 %v296, %v712
      %v714 = vpop.f32.mrf.mxu0
      %v715 = vadd.f32 %v296, %v714
      %716 = vmatmul.bf16.gmra.mxu0 %v552
      %v717 = vpop.f32.mrf.mxu0
      %v718 = vadd.f32 %v296, %v717
      %v719 = vpop.f32.mrf.mxu0
      %v720 = vadd.f32 %v296, %v719
      %721 = vmatmul.bf16.gmra.mxu0 %v555
      %v722 = vpop.f32.mrf.mxu0
      %v723 = vadd.f32 %v296, %v722
      %v724 = vpop.f32.mrf.mxu0
      %v725 = vadd.f32 %v296, %v724
      %726 = vmatmul.bf16.gmra.mxu0 %v558
      %v727 = vpop.f32.mrf.mxu0
      %v728 = vadd.f32 %v296, %v727
      %v729 = vpop.f32.mrf.mxu0
      %v730 = vadd.f32 %v296, %v729
      %731 = vmatmul.bf16.gmra.mxu0 %v561
      %v732 = vpop.f32.mrf.mxu0
      %v733 = vadd.f32 %v296, %v732
      %v734 = vpop.f32.mrf.mxu0
      %v735 = vadd.f32 %v296, %v734
      %736 = vmatmul.bf16.gmra.mxu0 %v564
      %v737 = vpop.f32.mrf.mxu0
      %v738 = vadd.f32 %v296, %v737
      %v739 = vpop.f32.mrf.mxu0
      %v740 = vadd.f32 %v296, %v739
      %741 = vdwg.mxu0
      %v742 = vmax.f32 %v583, 0.0
      %v743 = vmax.f32 %v585, 0.0
      %v744 = vmax.f32 %v588, 0.0
      %v745 = vmax.f32 %v590, 0.0
      %v746 = vmax.f32 %v593, 0.0
      %v747 = vmax.f32 %v595, 0.0
      %v748 = vmax.f32 %v598, 0.0
      %v749 = vmax.f32 %v600, 0.0
      %v750 = vmax.f32 %v603, 0.0
      %v751 = vmax.f32 %v605, 0.0
      %v752 = vmax.f32 %v608, 0.0
      %v753 = vmax.f32 %v610, 0.0
      %v754 = vmax.f32 %v613, 0.0
      %v755 = vmax.f32 %v615, 0.0
      %v756 = vmax.f32 %v618, 0.0
      %v757 = vmax.f32 %v620, 0.0
      %v758 = vmax.f32 %v623, 0.0
      %v759 = vmax.f32 %v625, 0.0
      %v760 = vmax.f32 %v628, 0.0
      %v761 = vmax.f32 %v630, 0.0
      %v762 = vmax.f32 %v633, 0.0
      %v763 = vmax.f32 %v635, 0.0
      %v764 = vmax.f32 %v638, 0.0
      %v765 = vmax.f32 %v640, 0.0
      %v766 = vmax.f32 %v643, 0.0
      %v767 = vmax.f32 %v645, 0.0
      %v768 = vmax.f32 %v648, 0.0
      %v769 = vmax.f32 %v650, 0.0
      %v770 = vmax.f32 %v653, 0.0
      %v771 = vmax.f32 %v655, 0.0
      %v772 = vmax.f32 %v658, 0.0
      %v773 = vmax.f32 %v660, 0.0
      %v774 = vmax.f32 %v663, 0.0
      %v775 = vmax.f32 %v665, 0.0
      %v776 = vmax.f32 %v668, 0.0
      %v777 = vmax.f32 %v670, 0.0
      %v778 = vmax.f32 %v673, 0.0
      %v779 = vmax.f32 %v675, 0.0
      %v780 = vmax.f32 %v678, 0.0
      %v781 = vmax.f32 %v680, 0.0
      %v782 = vmax.f32 %v683, 0.0
      %v783 = vmax.f32 %v685, 0.0
      %v784 = vmax.f32 %v688, 0.0
      %v785 = vmax.f32 %v690, 0.0
      %v786 = vmax.f32 %v693, 0.0
      %v787 = vmax.f32 %v695, 0.0
      %v788 = vmax.f32 %v698, 0.0
      %v789 = vmax.f32 %v700, 0.0
      %v790 = vmax.f32 %v703, 0.0
      %v791 = vmax.f32 %v705, 0.0
      %v792 = vmax.f32 %v708, 0.0
      %v793 = vmax.f32 %v710, 0.0
      %v794 = vmax.f32 %v713, 0.0
      %v795 = vmax.f32 %v715, 0.0
      %v796 = vmax.f32 %v718, 0.0
      %v797 = vmax.f32 %v720, 0.0
      %v798 = vmax.f32 %v723, 0.0
      %v799 = vmax.f32 %v725, 0.0
      %v800 = vmax.f32 %v728, 0.0
      %v801 = vmax.f32 %v730, 0.0
      %v802 = vmax.f32 %v733, 0.0
      %v803 = vmax.f32 %v735, 0.0
      %v804 = vmax.f32 %v738, 0.0
      %v805 = vmax.f32 %v740, 0.0
      %v806 = vpack.c.bf16 %v742, %v742
      %v807 = vpack.c.bf16 %v743, %v743
      %v808 = vpack.c.bf16 %v744, %v744
      %v809 = vpack.c.bf16 %v745, %v745
      %v810 = vpack.c.bf16 %v746, %v746
      %v811 = vpack.c.bf16 %v747, %v747
      %v812 = vpack.c.bf16 %v748, %v748
      %v813 = vpack.c.bf16 %v749, %v749
      %v814 = vpack.c.bf16 %v750, %v750
      %v815 = vpack.c.bf16 %v751, %v751
      %v816 = vpack.c.bf16 %v752, %v752
      %v817 = vpack.c.bf16 %v753, %v753
      %v818 = vpack.c.bf16 %v754, %v754
      %v819 = vpack.c.bf16 %v755, %v755
      %v820 = vpack.c.bf16 %v756, %v756
      %v821 = vpack.c.bf16 %v757, %v757
      %v822 = vpack.c.bf16 %v758, %v758
      %v823 = vpack.c.bf16 %v759, %v759
      %v824 = vpack.c.bf16 %v760, %v760
      %v825 = vpack.c.bf16 %v761, %v761
      %v826 = vpack.c.bf16 %v762, %v762
      %v827 = vpack.c.bf16 %v763, %v763
      %v828 = vpack.c.bf16 %v764, %v764
      %v829 = vpack.c.bf16 %v765, %v765
      %v830 = vpack.c.bf16 %v766, %v766
      %v831 = vpack.c.bf16 %v767, %v767
      %v832 = vpack.c.bf16 %v768, %v768
      %v833 = vpack.c.bf16 %v769, %v769
      %v834 = vpack.c.bf16 %v770, %v770
      %v835 = vpack.c.bf16 %v771, %v771
      %v836 = vpack.c.bf16 %v772, %v772
      %v837 = vpack.c.bf16 %v773, %v773
      %v838 = vpack.c.bf16 %v774, %v774
      %v839 = vpack.c.bf16 %v775, %v775
      %v840 = vpack.c.bf16 %v776, %v776
      %v841 = vpack.c.bf16 %v777, %v777
      %v842 = vpack.c.bf16 %v778, %v778
      %v843 = vpack.c.bf16 %v779, %v779
      %v844 = vpack.c.bf16 %v780, %v780
      %v845 = vpack.c.bf16 %v781, %v781
      %v846 = vpack.c.bf16 %v782, %v782
      %v847 = vpack.c.bf16 %v783, %v783
      %v848 = vpack.c.bf16 %v784, %v784
      %v849 = vpack.c.bf16 %v785, %v785
      %v850 = vpack.c.bf16 %v786, %v786
      %v851 = vpack.c.bf16 %v787, %v787
      %v852 = vpack.c.bf16 %v788, %v788
      %v853 = vpack.c.bf16 %v789, %v789
      %v854 = vpack.c.bf16 %v790, %v790
      %v855 = vpack.c.bf16 %v791, %v791
      %v856 = vpack.c.bf16 %v792, %v792
      %v857 = vpack.c.bf16 %v793, %v793
      %v858 = vpack.c.bf16 %v794, %v794
      %v859 = vpack.c.bf16 %v795, %v795
      %v860 = vpack.c.bf16 %v796, %v796
      %v861 = vpack.c.bf16 %v797, %v797
      %v862 = vpack.c.bf16 %v798, %v798
      %v863 = vpack.c.bf16 %v799, %v799
      %v864 = vpack.c.bf16 %v800, %v800
      %v865 = vpack.c.bf16 %v801, %v801
      %v866 = vpack.c.bf16 %v802, %v802
      %v867 = vpack.c.bf16 %v803, %v803
      %v868 = vpack.c.bf16 %v804, %v804
      %v869 = vpack.c.bf16 %v805, %v805
      %870 = vst [vmem:[%s223] sm:$0xf] %v806
      %871 = vst [vmem:[%s223 + $0x4] sm:$0xf] %v807
      %872 = vst [vmem:[%s223 + $0x8] sm:$0xf] %v808
      %873 = vst [vmem:[%s223 + $0xc] sm:$0xf] %v809
      %874 = vst [vmem:[%s223 + $0x10] sm:$0xf] %v810
      %875 = vst [vmem:[%s223 + $0x14] sm:$0xf] %v811
      %876 = vst [vmem:[%s223 + $0x18] sm:$0xf] %v812
      %877 = vst [vmem:[%s223 + $0x1c] sm:$0xf] %v813
      %878 = vst [vmem:[%s223 + $0x20] sm:$0xf] %v814
      %879 = vst [vmem:[%s223 + $0x24] sm:$0xf] %v815
      %880 = vst [vmem:[%s223 + $0x28] sm:$0xf] %v816
      %881 = vst [vmem:[%s223 + $0x2c] sm:$0xf] %v817
      %882 = vst [vmem:[%s223 + $0x30] sm:$0xf] %v818
      %883 = vst [vmem:[%s223 + $0x34] sm:$0xf] %v819
      %884 = vst [vmem:[%s223 + $0x38] sm:$0xf] %v820
      %885 = vst [vmem:[%s223 + $0x3c] sm:$0xf] %v821
      %886 = vst [vmem:[%s223 + $0x40] sm:$0xf] %v822
      %887 = vst [vmem:[%s223 + $0x44] sm:$0xf] %v823
      %888 = vst [vmem:[%s223 + $0x48] sm:$0xf] %v824
      %889 = vst [vmem:[%s223 + $0x4c] sm:$0xf] %v825
      %890 = vst [vmem:[%s223 + $0x50] sm:$0xf] %v826
      %891 = vst [vmem:[%s223 + $0x54] sm:$0xf] %v827
      %892 = vst [vmem:[%s223 + $0x58] sm:$0xf] %v828
      %893 = vst [vmem:[%s223 + $0x5c] sm:$0xf] %v829
      %894 = vst [vmem:[%s223 + $0x60] sm:$0xf] %v830
      %895 = vst [vmem:[%s223 + $0x64] sm:$0xf] %v831
      %896 = vst [vmem:[%s223 + $0x68] sm:$0xf] %v832
      %897 = vst [vmem:[%s223 + $0x6c] sm:$0xf] %v833
      %898 = vst [vmem:[%s223 + $0x70] sm:$0xf] %v834
      %899 = vst [vmem:[%s223 + $0x74] sm:$0xf] %v835
      %900 = vst [vmem:[%s223 + $0x78] sm:$0xf] %v836
      %901 = vst [vmem:[%s223 + $0x7c] sm:$0xf] %v837
      %902 = vst [vmem:[%s223 + $0x80] sm:$0xf] %v838
      %903 = vst [vmem:[%s223 + $0x84] sm:$0xf] %v839
      %904 = vst [vmem:[%s223 + $0x88] sm:$0xf] %v840
      %905 = vst [vmem:[%s223 + $0x8c] sm:$0xf] %v841
      %906 = vst [vmem:[%s223 + $0x90] sm:$0xf] %v842
      %907 = vst [vmem:[%s223 + $0x94] sm:$0xf] %v843
      %908 = vst [vmem:[%s223 + $0x98] sm:$0xf] %v844
      %909 = vst [vmem:[%s223 + $0x9c] sm:$0xf] %v845
      %910 = vst [vmem:[%s223 + $0xa0] sm:$0xf] %v846
      %911 = vst [vmem:[%s223 + $0xa4] sm:$0xf] %v847
      %912 = vst [vmem:[%s223 + $0xa8] sm:$0xf] %v848
      %913 = vst [vmem:[%s223 + $0xac] sm:$0xf] %v849
      %914 = vst [vmem:[%s223 + $0xb0] sm:$0xf] %v850
      %915 = vst [vmem:[%s223 + $0xb4] sm:$0xf] %v851
      %916 = vst [vmem:[%s223 + $0xb8] sm:$0xf] %v852
      %917 = vst [vmem:[%s223 + $0xbc] sm:$0xf] %v853
      %918 = vst [vmem:[%s223 + $0xc0] sm:$0xf] %v854
      %919 = vst [vmem:[%s223 + $0xc4] sm:$0xf] %v855
      %920 = vst [vmem:[%s223 + $0xc8] sm:$0xf] %v856
      %921 = vst [vmem:[%s223 + $0xcc] sm:$0xf] %v857
      %922 = vst [vmem:[%s223 + $0xd0] sm:$0xf] %v858
      %923 = vst [vmem:[%s223 + $0xd4] sm:$0xf] %v859
      %924 = vst [vmem:[%s223 + $0xd8] sm:$0xf] %v860
      %925 = vst [vmem:[%s223 + $0xdc] sm:$0xf] %v861
      %926 = vst [vmem:[%s223 + $0xe0] sm:$0xf] %v862
      %927 = vst [vmem:[%s223 + $0xe4] sm:$0xf] %v863
      %928 = vst [vmem:[%s223 + $0xe8] sm:$0xf] %v864
      %929 = vst [vmem:[%s223 + $0xec] sm:$0xf] %v865
      %930 = vst [vmem:[%s223 + $0xf0] sm:$0xf] %v866
      %931 = vst [vmem:[%s223 + $0xf4] sm:$0xf] %v867
      %932 = vst [vmem:[%s223 + $0xf8] sm:$0xf] %v868
      %933 = vst [vmem:[%s223 + $0xfc] sm:$0xf] %v869
      %s934 = smul.u32 64, %s18
      %p935 = scmp.lt.s32.totalorder %s934, 255
      %s936 = scalar_select %p935, %s934, 255
      %p937 = scmp.lt.s32.totalorder %s19, 0
      %s938 = scalar_select %p937, %s19, 0
      %s939 = sadd.s32 %s938, %s936
      %s940 = smul.addr %s939, 4
      %s941 = scalar_lea.vmem %s3, %s940
      // Predicated region
      $region33: #{deeplabv3plus_forward.12} parent=31 // pred_check
        %p942 = pneg %p124
      $region34: #{deeplabv3plus_forward.12} parent=31 // pred_check_branch
        %944 = sbr.rel (%p942) target = $region36
      $region35: #{deeplabv3plus_forward.12} parent=31 // pred_region
        %s945 = smul.u32 64, %s18
      $region36: #{deeplabv3plus_forward.12} parent=31 // pred_fallthru
        _
    $region32: #{deeplabv3plus_forward.12} parent=5 // pred_fallthru
      _
    %p946 = scmp.le.s32.totalorder 2, %s9
    // Predicated region
    $region37: #{deeplabv3plus_forward.12} parent=5 // pred_check
      %p947 = pneg %p946
    $region38: #{deeplabv3plus_forward.12} parent=5 // pred_check_branch
      %949 = sbr.rel (%p947) target = $region40
    $region39: #{deeplabv3plus_forward.12} parent=5 // pred_region
      %s950 = ssub.s32 %s9, 2
      // Predicated region
      $region41: #{deeplabv3plus_forward.12} parent=39 // pred_check
        %p951 = pneg %p130
      $region42: #{deeplabv3plus_forward.12} parent=39 // pred_check_branch
        %953 = sbr.rel (%p951) target = $region44
      $region43: #{deeplabv3plus_forward.12} parent=39 // pred_region
        %s954 = smul.u32 64, %s20
        %p955 = scmp.lt.s32.totalorder %s954, 255
        %s956 = scalar_select %p955, %s954, 255
        %p957 = scmp.lt.s32.totalorder %s21, 0
        %s958 = scalar_select %p957, %s21, 0
        %s959 = sadd.s32 %s958, %s956
        %s960 = smul.addr %s959, 4
        %s961 = scalar_lea.vmem %s3, %s960
      $region44: #{deeplabv3plus_forward.12} parent=39 // pred_fallthru
        _
    $region40: #{deeplabv3plus_forward.12} parent=5 // pred_fallthru
      _
  $region6: #{deeplabv3plus_forward.12} parent=0 // loop_footer
    %s13 = sadd.s32 1, %s9
  $region7: #{deeplabv3plus_forward.12} parent=0 // loop_footer_branch
    %8 = sbr.rel target = $region3
  $region8: #{deeplabv3plus_forward.12} parent=0 // loop_exit
    _

// kernel: deeplabv3plus_forward.13
$region0: #{deeplabv3plus_forward.13}
  #allocation0 [shape = 'u32[]', space=smem, size = 0x4, offset = 0x4, fixed_abs, tag = 'smem constant byte address 0x4 - core index']
  #allocation1 [shape = 'u32[72,128]{1,0:T(1,128)}', space=vmem, size = 0x9000, scoped, tag = 'internal scratch']
  %s0 = inlined_call_operand.vmem [shape: bf16[512,144], index: 0, kind: input, shape index: {}]
  %s1 = inlined_call_operand.vmem [shape: bf16[144,128], index: 1, kind: input, shape index: {}]
  %s2 = inlined_call_operand.vmem [shape: f32[1,128], index: 2, kind: input, shape index: {}]
  %s3 = inlined_call_operand.vmem [shape: bf16[512,128], index: 3, kind: output, shape index: {}]
  %s4 = sld [smem:[#allocation0]]
  $region22: #{deeplabv3plus_forward.13} parent=0
    _
  %s6 = ssub.s32 1, %s4
  %s7 = scalar_select 0, %s6, %s4
  // Predicated region
  $region2: #{deeplabv3plus_forward.13} parent=0 // pred_check
    _
  $region3: #{deeplabv3plus_forward.13} parent=0 // pred_check_branch
    %9 = sbr.rel (0) target = $region5
  $region4: #{deeplabv3plus_forward.13} parent=0 // pred_region
    _
  $region5: #{deeplabv3plus_forward.13} parent=0 // pred_fallthru
    _
  // Predicated region
  $region6: #{deeplabv3plus_forward.13} parent=0 // pred_check
    _
  $region7: #{deeplabv3plus_forward.13} parent=0 // pred_check_branch
    %11 = sbr.rel (0) target = $region9
  $region8: #{deeplabv3plus_forward.13} parent=0 // pred_region
    _
  $region9: #{deeplabv3plus_forward.13} parent=0 // pred_fallthru
    _
  // Predicated region
  $region10: #{deeplabv3plus_forward.13} parent=0 // pred_check
    _
  $region11: #{deeplabv3plus_forward.13} parent=0 // pred_check_branch
    %13 = sbr.rel (0) target = $region13
  $region12: #{deeplabv3plus_forward.13} parent=0 // pred_region
    _
  $region13: #{deeplabv3plus_forward.13} parent=0 // pred_fallthru
    _
  %v15 = vld [vmem:[%s0] sm:$0xff]
  %v16 = vld [vmem:[%s0 + $0x8] sm:$0xff]
  %v17 = vld [vmem:[%s0 + $0x10] sm:$0xff]
  %v18 = vld [vmem:[%s0 + $0x18] sm:$0xff]
  %v19 = vld [vmem:[%s0 + $0x20] sm:$0xff]
  %v20 = vld [vmem:[%s0 + $0x28] sm:$0xff]
  %v21 = vld [vmem:[%s0 + $0x30] sm:$0xff]
  %v22 = vld [vmem:[%s0 + $0x38] sm:$0xff]
  %v23 = vld [vmem:[%s0 + $0x40] sm:$0xff]
  %v24 = vld [vmem:[%s0 + $0x48] sm:$0xff]
  %v25 = vld [vmem:[%s0 + $0x50] sm:$0xff]
  %v26 = vld [vmem:[%s0 + $0x58] sm:$0xff]
  %v27 = vld [vmem:[%s0 + $0x60] sm:$0xff]
  %v28 = vld [vmem:[%s0 + $0x68] sm:$0xff]
  %v29 = vld [vmem:[%s0 + $0x70] sm:$0xff]
  %v30 = vld [vmem:[%s0 + $0x78] sm:$0xff]
  %v31 = vld [vmem:[%s0 + $0x80] sm:$0xff]
  %v32 = vld [vmem:[%s0 + $0x88] sm:$0xff]
  %v33 = vld [vmem:[%s0 + $0x90] sm:$0xff]
  %v34 = vld [vmem:[%s0 + $0x98] sm:$0xff]
  %v35 = vld [vmem:[%s0 + $0xa0] sm:$0xff]
  %v36 = vld [vmem:[%s0 + $0xa8] sm:$0xff]
  %v37 = vld [vmem:[%s0 + $0xb0] sm:$0xff]
  %v38 = vld [vmem:[%s0 + $0xb8] sm:$0xff]
  %v39 = vld [vmem:[%s0 + $0xc0] sm:$0xff]
  %v40 = vld [vmem:[%s0 + $0xc8] sm:$0xff]
  %v41 = vld [vmem:[%s0 + $0xd0] sm:$0xff]
  %v42 = vld [vmem:[%s0 + $0xd8] sm:$0xff]
  %v43 = vld [vmem:[%s0 + $0xe0] sm:$0xff]
  %v44 = vld [vmem:[%s0 + $0xe8] sm:$0xff]
  %v45 = vld [vmem:[%s0 + $0xf0] sm:$0xff]
  %v46 = vld [vmem:[%s0 + $0xf8] sm:$0xff]
  %v47 = vld [vmem:[%s0 + $0x100] sm:$0xff]
  %v48 = vld [vmem:[%s0 + $0x108] sm:$0xff]
  %v49 = vld [vmem:[%s0 + $0x110] sm:$0xff]
  %v50 = vld [vmem:[%s0 + $0x118] sm:$0xff]
  %v51 = vld [vmem:[%s0 + $0x120] sm:$0xff]
  %v52 = vld [vmem:[%s0 + $0x128] sm:$0xff]
  %v53 = vld [vmem:[%s0 + $0x130] sm:$0xff]
  %v54 = vld [vmem:[%s0 + $0x138] sm:$0xff]
  %v55 = vld [vmem:[%s0 + $0x140] sm:$0xff]
  %v56 = vld [vmem:[%s0 + $0x148] sm:$0xff]
  %v57 = vld [vmem:[%s0 + $0x150] sm:$0xff]
  %v58 = vld [vmem:[%s0 + $0x158] sm:$0xff]
  %v59 = vld [vmem:[%s0 + $0x160] sm:$0xff]
  %v60 = vld [vmem:[%s0 + $0x168] sm:$0xff]
  %v61 = vld [vmem:[%s0 + $0x170] sm:$0xff]
  %v62 = vld [vmem:[%s0 + $0x178] sm:$0xff]
  %v63 = vld [vmem:[%s0 + $0x180] sm:$0xff]
  %v64 = vld [vmem:[%s0 + $0x188] sm:$0xff]
  %v65 = vld [vmem:[%s0 + $0x190] sm:$0xff]
  %v66 = vld [vmem:[%s0 + $0x198] sm:$0xff]
  %v67 = vld [vmem:[%s0 + $0x1a0] sm:$0xff]
  %v68 = vld [vmem:[%s0 + $0x1a8] sm:$0xff]
  %v69 = vld [vmem:[%s0 + $0x1b0] sm:$0xff]
  %v70 = vld [vmem:[%s0 + $0x1b8] sm:$0xff]
  %v71 = vld [vmem:[%s0 + $0x1c0] sm:$0xff]
  %v72 = vld [vmem:[%s0 + $0x1c8] sm:$0xff]
  %v73 = vld [vmem:[%s0 + $0x1d0] sm:$0xff]
  %v74 = vld [vmem:[%s0 + $0x1d8] sm:$0xff]
  %v75 = vld [vmem:[%s0 + $0x1e0] sm:$0xff]
  %v76 = vld [vmem:[%s0 + $0x1e8] sm:$0xff]
  %v77 = vld [vmem:[%s0 + $0x1f0] sm:$0xff]
  %v78 = vld [vmem:[%s0 + $0x1f8] sm:$0xff]
  %v79 = vld [vmem:[%s1] sm:$0xf]
  %v80 = vld [vmem:[%s1 + $0x4] sm:$0xf]
  %v81 = vld [vmem:[%s1 + $0x8] sm:$0xf]
  %v82 = vld [vmem:[%s1 + $0xc] sm:$0xf]
  %v83 = vld [vmem:[%s1 + $0x10] sm:$0xf]
  %v84 = vld [vmem:[%s1 + $0x14] sm:$0xf]
  %v85 = vld [vmem:[%s1 + $0x18] sm:$0xf]
  %v86 = vld [vmem:[%s1 + $0x1c] sm:$0xf]
  %v87 = vld [vmem:[%s1 + $0x20] sm:$0xf]
  %v88 = vld [vmem:[%s1 + $0x24] sm:$0xf]
  %v89 = vld [vmem:[%s1 + $0x28] sm:$0xf]
  %v90 = vld [vmem:[%s1 + $0x2c] sm:$0xf]
  %v91 = vld [vmem:[%s1 + $0x30] sm:$0xf]
  %v92 = vld [vmem:[%s1 + $0x34] sm:$0xf]
  %v93 = vld [vmem:[%s1 + $0x38] sm:$0xf]
  %v94 = vld [vmem:[%s1 + $0x3c] sm:$0xf]
  %v95 = vld [vmem:[%s1 + $0x40] sm:$0xf]
  %v96 = vld [vmem:[%s1 + $0x44] sm:$0xf]
  %v97 = vld [vmem:[%s2] sm:$0x1]
  %v99 = vperm.slane %v97, 0
  %v165 = vunpack.c.l.b16 %v15
  %v166 = vunpack.c.h.b16 %v15
  %v167 = vunpack.c.l.b16 %v16
  %v168 = vunpack.c.h.b16 %v16
  %v169 = vunpack.c.l.b16 %v17
  %v170 = vunpack.c.h.b16 %v17
  %v171 = vunpack.c.l.b16 %v18
  %v172 = vunpack.c.h.b16 %v18
  %v173 = vunpack.c.l.b16 %v19
  %v174 = vunpack.c.h.b16 %v19
  %v175 = vunpack.c.l.b16 %v20
  %v176 = vunpack.c.h.b16 %v20
  %v177 = vunpack.c.l.b16 %v21
  %v178 = vunpack.c.h.b16 %v21
  %v179 = vunpack.c.l.b16 %v22
  %v180 = vunpack.c.h.b16 %v22
  %v181 = vunpack.c.l.b16 %v23
  %v182 = vunpack.c.h.b16 %v23
  %v183 = vunpack.c.l.b16 %v24
  %v184 = vunpack.c.h.b16 %v24
  %v185 = vunpack.c.l.b16 %v25
  %v186 = vunpack.c.h.b16 %v25
  %v187 = vunpack.c.l.b16 %v26
  %v188 = vunpack.c.h.b16 %v26
  %v189 = vunpack.c.l.b16 %v27
  %v190 = vunpack.c.h.b16 %v27
  %v191 = vunpack.c.l.b16 %v28
  %v192 = vunpack.c.h.b16 %v28
  %v193 = vunpack.c.l.b16 %v29
  %v194 = vunpack.c.h.b16 %v29
  %v195 = vunpack.c.l.b16 %v30
  %v196 = vunpack.c.h.b16 %v30
  %v197 = vunpack.c.l.b16 %v31
  %v198 = vunpack.c.h.b16 %v31
  %v199 = vunpack.c.l.b16 %v32
  %v200 = vunpack.c.h.b16 %v32
  %v201 = vunpack.c.l.b16 %v33
  %v202 = vunpack.c.h.b16 %v33
  %v203 = vunpack.c.l.b16 %v34
  %v204 = vunpack.c.h.b16 %v34
  %v205 = vunpack.c.l.b16 %v35
  %v206 = vunpack.c.h.b16 %v35
  %v207 = vunpack.c.l.b16 %v36
  %v208 = vunpack.c.h.b16 %v36
  %v209 = vunpack.c.l.b16 %v37
  %v210 = vunpack.c.h.b16 %v37
  %v211 = vunpack.c.l.b16 %v38
  %v212 = vunpack.c.h.b16 %v38
  %v213 = vunpack.c.l.b16 %v39
  %v214 = vunpack.c.h.b16 %v39
  %v215 = vunpack.c.l.b16 %v40
  %v216 = vunpack.c.h.b16 %v40
  %v217 = vunpack.c.l.b16 %v41
  %v218 = vunpack.c.h.b16 %v41
  %v219 = vunpack.c.l.b16 %v42
  %v220 = vunpack.c.h.b16 %v42
  %v221 = vunpack.c.l.b16 %v43
  %v222 = vunpack.c.h.b16 %v43
  %v223 = vunpack.c.l.b16 %v44
  %v224 = vunpack.c.h.b16 %v44
  %v225 = vunpack.c.l.b16 %v45
  %v226 = vunpack.c.h.b16 %v45
  %v227 = vunpack.c.l.b16 %v46
  %v228 = vunpack.c.h.b16 %v46
  %v229 = vunpack.c.l.b16 %v47
  %v230 = vunpack.c.h.b16 %v47
  %v231 = vunpack.c.l.b16 %v48
  %v232 = vunpack.c.h.b16 %v48
  %v233 = vunpack.c.l.b16 %v49
  %v234 = vunpack.c.h.b16 %v49
  %v235 = vunpack.c.l.b16 %v50
  %v236 = vunpack.c.h.b16 %v50
  %v237 = vunpack.c.l.b16 %v51
  %v238 = vunpack.c.h.b16 %v51
  %v239 = vunpack.c.l.b16 %v52
  %v240 = vunpack.c.h.b16 %v52
  %v241 = vunpack.c.l.b16 %v53
  %v242 = vunpack.c.h.b16 %v53
  %v243 = vunpack.c.l.b16 %v54
  %v244 = vunpack.c.h.b16 %v54
  %v245 = vunpack.c.l.b16 %v55
  %v246 = vunpack.c.h.b16 %v55
  %v247 = vunpack.c.l.b16 %v56
  %v248 = vunpack.c.h.b16 %v56
  %v249 = vunpack.c.l.b16 %v57
  %v250 = vunpack.c.h.b16 %v57
  %v251 = vunpack.c.l.b16 %v58
  %v252 = vunpack.c.h.b16 %v58
  %v253 = vunpack.c.l.b16 %v59
  %v254 = vunpack.c.h.b16 %v59
  %v255 = vunpack.c.l.b16 %v60
  %v256 = vunpack.c.h.b16 %v60
  %v257 = vunpack.c.l.b16 %v61
  %v258 = vunpack.c.h.b16 %v61
  %v259 = vunpack.c.l.b16 %v62
  %v260 = vunpack.c.h.b16 %v62
  %v261 = vunpack.c.l.b16 %v63
  %v262 = vunpack.c.h.b16 %v63
  %v263 = vunpack.c.l.b16 %v64
  %v264 = vunpack.c.h.b16 %v64
  %v265 = vunpack.c.l.b16 %v65
  %v266 = vunpack.c.h.b16 %v65
  %v267 = vunpack.c.l.b16 %v66
  %v268 = vunpack.c.h.b16 %v66
  %v269 = vunpack.c.l.b16 %v67
  %v270 = vunpack.c.h.b16 %v67
  %v271 = vunpack.c.l.b16 %v68
  %v272 = vunpack.c.h.b16 %v68
  %v273 = vunpack.c.l.b16 %v69
  %v274 = vunpack.c.h.b16 %v69
  %v275 = vunpack.c.l.b16 %v70
  %v276 = vunpack.c.h.b16 %v70
  %v277 = vunpack.c.l.b16 %v71
  %v278 = vunpack.c.h.b16 %v71
  %v279 = vunpack.c.l.b16 %v72
  %v280 = vunpack.c.h.b16 %v72
  %v281 = vunpack.c.l.b16 %v73
  %v282 = vunpack.c.h.b16 %v73
  %v283 = vunpack.c.l.b16 %v74
  %v284 = vunpack.c.h.b16 %v74
  %v285 = vunpack.c.l.b16 %v75
  %v286 = vunpack.c.h.b16 %v75
  %v287 = vunpack.c.l.b16 %v76
  %v288 = vunpack.c.h.b16 %v76
  %v289 = vunpack.c.l.b16 %v77
  %v290 = vunpack.c.h.b16 %v77
  %v291 = vunpack.c.l.b16 %v78
  %v292 = vunpack.c.h.b16 %v78
  %v293 = vpack.c.b16 %v167, %v165
  %v294 = vpack.c.b16 %v168, %v166
  %v295 = vpack.c.b16 %v171, %v169
  %v296 = vpack.c.b16 %v172, %v170
  %v297 = vpack.c.b16 %v175, %v173
  %v298 = vpack.c.b16 %v176, %v174
  %v299 = vpack.c.b16 %v179, %v177
  %v300 = vpack.c.b16 %v180, %v178
  %v301 = vpack.c.b16 %v183, %v181
  %v302 = vpack.c.b16 %v184, %v182
  %v303 = vpack.c.b16 %v187, %v185
  %v304 = vpack.c.b16 %v188, %v186
  %v305 = vpack.c.b16 %v191, %v189
  %v306 = vpack.c.b16 %v192, %v190
  %v307 = vpack.c.b16 %v195, %v193
  %v308 = vpack.c.b16 %v196, %v194
  %v309 = vpack.c.b16 %v199, %v197
  %v310 = vpack.c.b16 %v200, %v198
  %v311 = vpack.c.b16 %v203, %v201
  %v312 = vpack.c.b16 %v204, %v202
  %v313 = vpack.c.b16 %v207, %v205
  %v314 = vpack.c.b16 %v208, %v206
  %v315 = vpack.c.b16 %v211, %v209
  %v316 = vpack.c.b16 %v212, %v210
  %v317 = vpack.c.b16 %v215, %v213
  %v318 = vpack.c.b16 %v216, %v214
  %v319 = vpack.c.b16 %v219, %v217
  %v320 = vpack.c.b16 %v220, %v218
  %v321 = vpack.c.b16 %v223, %v221
  %v322 = vpack.c.b16 %v224, %v222
  %v323 = vpack.c.b16 %v227, %v225
  %v324 = vpack.c.b16 %v228, %v226
  %v325 = vpack.c.b16 %v231, %v229
  %v326 = vpack.c.b16 %v232, %v230
  %v327 = vpack.c.b16 %v235, %v233
  %v328 = vpack.c.b16 %v236, %v234
  %v329 = vpack.c.b16 %v239, %v237
  %v330 = vpack.c.b16 %v240, %v238
  %v331 = vpack.c.b16 %v243, %v241
  %v332 = vpack.c.b16 %v244, %v242
  %v333 = vpack.c.b16 %v247, %v245
  %v334 = vpack.c.b16 %v248, %v246
  %v335 = vpack.c.b16 %v251, %v249
  %v336 = vpack.c.b16 %v252, %v250
  %v337 = vpack.c.b16 %v255, %v253
  %v338 = vpack.c.b16 %v256, %v254
  %v339 = vpack.c.b16 %v259, %v257
  %v340 = vpack.c.b16 %v260, %v258
  %v341 = vpack.c.b16 %v263, %v261
  %v342 = vpack.c.b16 %v264, %v262
  %v343 = vpack.c.b16 %v267, %v265
  %v344 = vpack.c.b16 %v268, %v266
  %v345 = vpack.c.b16 %v271, %v269
  %v346 = vpack.c.b16 %v272, %v270
  %v347 = vpack.c.b16 %v275, %v273
  %v348 = vpack.c.b16 %v276, %v274
  %v349 = vpack.c.b16 %v279, %v277
  %v350 = vpack.c.b16 %v280, %v278
  %v351 = vpack.c.b16 %v283, %v281
  %v352 = vpack.c.b16 %v284, %v282
  %v353 = vpack.c.b16 %v287, %v285
  %v354 = vpack.c.b16 %v288, %v286
  %v355 = vpack.c.b16 %v291, %v289
  %v356 = vpack.c.b16 %v292, %v290
  %v407 = vunpack.c.l.b16 %v79
  %v408 = vunpack.c.l.b16 %v80
  %v409 = vunpack.c.l.b16 %v81
  %v410 = vunpack.c.l.b16 %v82
  %v411 = vunpack.c.l.b16 %v83
  %v412 = vunpack.c.l.b16 %v84
  %v413 = vunpack.c.l.b16 %v85
  %v414 = vunpack.c.l.b16 %v86
  %v415 = vunpack.c.l.b16 %v87
  %v416 = vunpack.c.l.b16 %v88
  %v417 = vunpack.c.l.b16 %v89
  %v418 = vunpack.c.l.b16 %v90
  %v419 = vunpack.c.l.b16 %v91
  %v420 = vunpack.c.l.b16 %v92
  %v421 = vunpack.c.l.b16 %v93
  %v422 = vunpack.c.l.b16 %v94
  %v423 = vunpack.c.l.b16 %v95
  %v424 = vunpack.c.l.b16 %v96
  %v425 = vpack.c.b16 %v408, %v407
  %v426 = vpack.c.b16 %v410, %v409
  %v427 = vpack.c.b16 %v412, %v411
  %v428 = vpack.c.b16 %v414, %v413
  %v429 = vpack.c.b16 %v416, %v415
  %v430 = vpack.c.b16 %v418, %v417
  %v431 = vpack.c.b16 %v420, %v419
  %v432 = vpack.c.b16 %v422, %v421
  %v433 = vpack.c.b16 %v424, %v423
  %vm443 = vcmask 130048
  %v445 = vsel %vm443, %v294, 0
  %v448 = vsel %vm443, %v296, 0
  %v451 = vsel %vm443, %v298, 0
  %v454 = vsel %vm443, %v300, 0
  %v457 = vsel %vm443, %v302, 0
  %v460 = vsel %vm443, %v304, 0
  %v463 = vsel %vm443, %v306, 0
  %v466 = vsel %vm443, %v308, 0
  %v469 = vsel %vm443, %v310, 0
  %v472 = vsel %vm443, %v312, 0
  %v475 = vsel %vm443, %v314, 0
  %v478 = vsel %vm443, %v316, 0
  %v481 = vsel %vm443, %v318, 0
  %v484 = vsel %vm443, %v320, 0
  %v487 = vsel %vm443, %v322, 0
  %v490 = vsel %vm443, %v324, 0
  %v493 = vsel %vm443, %v326, 0
  %v496 = vsel %vm443, %v328, 0
  %v499 = vsel %vm443, %v330, 0
  %v502 = vsel %vm443, %v332, 0
  %v505 = vsel %vm443, %v334, 0
  %v508 = vsel %vm443, %v336, 0
  %v511 = vsel %vm443, %v338, 0
  %v514 = vsel %vm443, %v340, 0
  %v517 = vsel %vm443, %v342, 0
  %v520 = vsel %vm443, %v344, 0
  %v523 = vsel %vm443, %v346, 0
  %v526 = vsel %vm443, %v348, 0
  %v529 = vsel %vm443, %v350, 0
  %v532 = vsel %vm443, %v352, 0
  %v535 = vsel %vm443, %v354, 0
  %v538 = vsel %vm443, %v356, 0
  %540 = vmatpush.bf16.msra.mxu0 %v432
  %541 = vmatpush.bf16.msra.mxu0 %v431
  %542 = vmatpush.bf16.msra.mxu0 %v430
  %543 = vmatpush.bf16.msra.mxu0 %v429
  %544 = vmatpush.bf16.msra.mxu0 %v428
  %545 = vmatpush.bf16.msra.mxu0 %v427
  %546 = vmatpush.bf16.msra.mxu0 %v426
  %547 = vmatpush.bf16.msra.mxu0 %v425
  %548 = vmatmul.bf16.gmra.mxu0 %v293
  %v549 = vpop.f32.mrf.mxu0
  %v550 = vadd.f32 %v99, %v549
  %v551 = vpop.f32.mrf.mxu0
  %v552 = vadd.f32 %v99, %v551
  %553 = vmatmul.bf16.gmra.mxu0 %v295
  %v554 = vpop.f32.mrf.mxu0
  %v555 = vadd.f32 %v99, %v554
  %v556 = vpop.f32.mrf.mxu0
  %v557 = vadd.f32 %v99, %v556
  %558 = vmatmul.bf16.gmra.mxu0 %v297
  %v559 = vpop.f32.mrf.mxu0
  %v560 = vadd.f32 %v99, %v559
  %v561 = vpop.f32.mrf.mxu0
  %v562 = vadd.f32 %v99, %v561
  %563 = vmatmul.bf16.gmra.mxu0 %v299
  %v564 = vpop.f32.mrf.mxu0
  %v565 = vadd.f32 %v99, %v564
  %v566 = vpop.f32.mrf.mxu0
  %v567 = vadd.f32 %v99, %v566
  %568 = vmatmul.bf16.gmra.mxu0 %v301
  %v569 = vpop.f32.mrf.mxu0
  %v570 = vadd.f32 %v99, %v569
  %v571 = vpop.f32.mrf.mxu0
  %v572 = vadd.f32 %v99, %v571
  %573 = vmatmul.bf16.gmra.mxu0 %v303
  %v574 = vpop.f32.mrf.mxu0
  %v575 = vadd.f32 %v99, %v574
  %v576 = vpop.f32.mrf.mxu0
  %v577 = vadd.f32 %v99, %v576
  %578 = vmatmul.bf16.gmra.mxu0 %v305
  %v579 = vpop.f32.mrf.mxu0
  %v580 = vadd.f32 %v99, %v579
  %v581 = vpop.f32.mrf.mxu0
  %v582 = vadd.f32 %v99, %v581
  %583 = vmatmul.bf16.gmra.mxu0 %v307
  %v584 = vpop.f32.mrf.mxu0
  %v585 = vadd.f32 %v99, %v584
  %v586 = vpop.f32.mrf.mxu0
  %v587 = vadd.f32 %v99, %v586
  %588 = vmatmul.bf16.gmra.mxu0 %v309
  %v589 = vpop.f32.mrf.mxu0
  %v590 = vadd.f32 %v99, %v589
  %v591 = vpop.f32.mrf.mxu0
  %v592 = vadd.f32 %v99, %v591
  %593 = vmatmul.bf16.gmra.mxu0 %v311
  %v594 = vpop.f32.mrf.mxu0
  %v595 = vadd.f32 %v99, %v594
  %v596 = vpop.f32.mrf.mxu0
  %v597 = vadd.f32 %v99, %v596
  %598 = vmatmul.bf16.gmra.mxu0 %v313
  %v599 = vpop.f32.mrf.mxu0
  %v600 = vadd.f32 %v99, %v599
  %v601 = vpop.f32.mrf.mxu0
  %v602 = vadd.f32 %v99, %v601
  %603 = vmatmul.bf16.gmra.mxu0 %v315
  %v604 = vpop.f32.mrf.mxu0
  %v605 = vadd.f32 %v99, %v604
  %v606 = vpop.f32.mrf.mxu0
  %v607 = vadd.f32 %v99, %v606
  %608 = vmatmul.bf16.gmra.mxu0 %v317
  %v609 = vpop.f32.mrf.mxu0
  %v610 = vadd.f32 %v99, %v609
  %v611 = vpop.f32.mrf.mxu0
  %v612 = vadd.f32 %v99, %v611
  %613 = vmatmul.bf16.gmra.mxu0 %v319
  %v614 = vpop.f32.mrf.mxu0
  %v615 = vadd.f32 %v99, %v614
  %v616 = vpop.f32.mrf.mxu0
  %v617 = vadd.f32 %v99, %v616
  %618 = vmatmul.bf16.gmra.mxu0 %v321
  %v619 = vpop.f32.mrf.mxu0
  %v620 = vadd.f32 %v99, %v619
  %v621 = vpop.f32.mrf.mxu0
  %v622 = vadd.f32 %v99, %v621
  %623 = vmatmul.bf16.gmra.mxu0 %v323
  %v624 = vpop.f32.mrf.mxu0
  %v625 = vadd.f32 %v99, %v624
  %v626 = vpop.f32.mrf.mxu0
  %v627 = vadd.f32 %v99, %v626
  %628 = vmatmul.bf16.gmra.mxu0 %v325
  %v629 = vpop.f32.mrf.mxu0
  %v630 = vadd.f32 %v99, %v629
  %v631 = vpop.f32.mrf.mxu0
  %v632 = vadd.f32 %v99, %v631
  %633 = vmatmul.bf16.gmra.mxu0 %v327
  %v634 = vpop.f32.mrf.mxu0
  %v635 = vadd.f32 %v99, %v634
  %v636 = vpop.f32.mrf.mxu0
  %v637 = vadd.f32 %v99, %v636
  %638 = vmatmul.bf16.gmra.mxu0 %v329
  %v639 = vpop.f32.mrf.mxu0
  %v640 = vadd.f32 %v99, %v639
  %v641 = vpop.f32.mrf.mxu0
  %v642 = vadd.f32 %v99, %v641
  %643 = vmatmul.bf16.gmra.mxu0 %v331
  %v644 = vpop.f32.mrf.mxu0
  %v645 = vadd.f32 %v99, %v644
  %v646 = vpop.f32.mrf.mxu0
  %v647 = vadd.f32 %v99, %v646
  %648 = vmatmul.bf16.gmra.mxu0 %v333
  %v649 = vpop.f32.mrf.mxu0
  %v650 = vadd.f32 %v99, %v649
  %v651 = vpop.f32.mrf.mxu0
  %v652 = vadd.f32 %v99, %v651
  %653 = vmatmul.bf16.gmra.mxu0 %v335
  %v654 = vpop.f32.mrf.mxu0
  %v655 = vadd.f32 %v99, %v654
  %v656 = vpop.f32.mrf.mxu0
  %v657 = vadd.f32 %v99, %v656
  %658 = vmatmul.bf16.gmra.mxu0 %v337
  %v659 = vpop.f32.mrf.mxu0
  %v660 = vadd.f32 %v99, %v659
  %v661 = vpop.f32.mrf.mxu0
  %v662 = vadd.f32 %v99, %v661
  %663 = vmatmul.bf16.gmra.mxu0 %v339
  %v664 = vpop.f32.mrf.mxu0
  %v665 = vadd.f32 %v99, %v664
  %v666 = vpop.f32.mrf.mxu0
  %v667 = vadd.f32 %v99, %v666
  %668 = vmatmul.bf16.gmra.mxu0 %v341
  %v669 = vpop.f32.mrf.mxu0
  %v670 = vadd.f32 %v99, %v669
  %v671 = vpop.f32.mrf.mxu0
  %v672 = vadd.f32 %v99, %v671
  %673 = vmatmul.bf16.gmra.mxu0 %v343
  %v674 = vpop.f32.mrf.mxu0
  %v675 = vadd.f32 %v99, %v674
  %v676 = vpop.f32.mrf.mxu0
  %v677 = vadd.f32 %v99, %v676
  %678 = vmatmul.bf16.gmra.mxu0 %v345
  %v679 = vpop.f32.mrf.mxu0
  %v680 = vadd.f32 %v99, %v679
  %v681 = vpop.f32.mrf.mxu0
  %v682 = vadd.f32 %v99, %v681
  %683 = vmatmul.bf16.gmra.mxu0 %v347
  %v684 = vpop.f32.mrf.mxu0
  %v685 = vadd.f32 %v99, %v684
  %v686 = vpop.f32.mrf.mxu0
  %v687 = vadd.f32 %v99, %v686
  %688 = vmatmul.bf16.gmra.mxu0 %v349
  %v689 = vpop.f32.mrf.mxu0
  %v690 = vadd.f32 %v99, %v689
  %v691 = vpop.f32.mrf.mxu0
  %v692 = vadd.f32 %v99, %v691
  %693 = vmatmul.bf16.gmra.mxu0 %v351
  %v694 = vpop.f32.mrf.mxu0
  %v695 = vadd.f32 %v99, %v694
  %v696 = vpop.f32.mrf.mxu0
  %v697 = vadd.f32 %v99, %v696
  %698 = vmatmul.bf16.gmra.mxu0 %v353
  %v699 = vpop.f32.mrf.mxu0
  %v700 = vadd.f32 %v99, %v699
  %v701 = vpop.f32.mrf.mxu0
  %v702 = vadd.f32 %v99, %v701
  %703 = vmatmul.bf16.gmra.mxu0 %v355
  %v704 = vpop.f32.mrf.mxu0
  %v705 = vadd.f32 %v99, %v704
  %v706 = vpop.f32.mrf.mxu0
  %v707 = vadd.f32 %v99, %v706
  %708 = vdwg.mxu0
  %709 = vmatpush.bf16.msra.mxu0 0
  %710 = vmatpush.bf16.msra.mxu0 0
  %711 = vmatpush.bf16.msra.mxu0 0
  %712 = vmatpush.bf16.msra.mxu0 0
  %713 = vmatpush.bf16.msra.mxu0 0
  %714 = vmatpush.bf16.msra.mxu0 0
  %715 = vmatpush.bf16.msra.mxu0 0
  %716 = vmatpush.bf16.msra.mxu0 %v433
  %717 = vmatmul.bf16.gmra.mxu0 %v445
  %v718 = vpop.f32.mrf.mxu0
  %v719 = vadd.f32 %v550, %v718
  %v720 = vpop.f32.mrf.mxu0
  %v721 = vadd.f32 %v552, %v720
  %722 = vmatmul.bf16.gmra.mxu0 %v448
  %v723 = vpop.f32.mrf.mxu0
  %v724 = vadd.f32 %v555, %v723
  %v725 = vpop.f32.mrf.mxu0
  %v726 = vadd.f32 %v557, %v725
  %727 = vmatmul.bf16.gmra.mxu0 %v451
  %v728 = vpop.f32.mrf.mxu0
  %v729 = vadd.f32 %v560, %v728
  %v730 = vpop.f32.mrf.mxu0
  %v731 = vadd.f32 %v562, %v730
  %732 = vmatmul.bf16.gmra.mxu0 %v454
  %v733 = vpop.f32.mrf.mxu0
  %v734 = vadd.f32 %v565, %v733
  %v735 = vpop.f32.mrf.mxu0
  %v736 = vadd.f32 %v567, %v735
  %737 = vmatmul.bf16.gmra.mxu0 %v457
  %v738 = vpop.f32.mrf.mxu0
  %v739 = vadd.f32 %v570, %v738
  %v740 = vpop.f32.mrf.mxu0
  %v741 = vadd.f32 %v572, %v740
  %742 = vmatmul.bf16.gmra.mxu0 %v460
  %v743 = vpop.f32.mrf.mxu0
  %v744 = vadd.f32 %v575, %v743
  %v745 = vpop.f32.mrf.mxu0
  %v746 = vadd.f32 %v577, %v745
  %747 = vmatmul.bf16.gmra.mxu0 %v463
  %v748 = vpop.f32.mrf.mxu0
  %v749 = vadd.f32 %v580, %v748
  %v750 = vpop.f32.mrf.mxu0
  %v751 = vadd.f32 %v582, %v750
  %752 = vmatmul.bf16.gmra.mxu0 %v466
  %v753 = vpop.f32.mrf.mxu0
  %v754 = vadd.f32 %v585, %v753
  %v755 = vpop.f32.mrf.mxu0
  %v756 = vadd.f32 %v587, %v755
  %757 = vmatmul.bf16.gmra.mxu0 %v469
  %v758 = vpop.f32.mrf.mxu0
  %v759 = vadd.f32 %v590, %v758
  %v760 = vpop.f32.mrf.mxu0
  %v761 = vadd.f32 %v592, %v760
  %762 = vmatmul.bf16.gmra.mxu0 %v472
  %v763 = vpop.f32.mrf.mxu0
  %v764 = vadd.f32 %v595, %v763
  %v765 = vpop.f32.mrf.mxu0
  %v766 = vadd.f32 %v597, %v765
  %767 = vmatmul.bf16.gmra.mxu0 %v475
  %v768 = vpop.f32.mrf.mxu0
  %v769 = vadd.f32 %v600, %v768
  %v770 = vpop.f32.mrf.mxu0
  %v771 = vadd.f32 %v602, %v770
  %772 = vmatmul.bf16.gmra.mxu0 %v478
  %v773 = vpop.f32.mrf.mxu0
  %v774 = vadd.f32 %v605, %v773
  %v775 = vpop.f32.mrf.mxu0
  %v776 = vadd.f32 %v607, %v775
  %777 = vmatmul.bf16.gmra.mxu0 %v481
  %v778 = vpop.f32.mrf.mxu0
  %v779 = vadd.f32 %v610, %v778
  %v780 = vpop.f32.mrf.mxu0
  %v781 = vadd.f32 %v612, %v780
  %782 = vmatmul.bf16.gmra.mxu0 %v484
  %v783 = vpop.f32.mrf.mxu0
  %v784 = vadd.f32 %v615, %v783
  %v785 = vpop.f32.mrf.mxu0
  %v786 = vadd.f32 %v617, %v785
  %787 = vmatmul.bf16.gmra.mxu0 %v487
  %v788 = vpop.f32.mrf.mxu0
  %v789 = vadd.f32 %v620, %v788
  %v790 = vpop.f32.mrf.mxu0
  %v791 = vadd.f32 %v622, %v790
  %792 = vmatmul.bf16.gmra.mxu0 %v490
  %v793 = vpop.f32.mrf.mxu0
  %v794 = vadd.f32 %v625, %v793
  %v795 = vpop.f32.mrf.mxu0
  %v796 = vadd.f32 %v627, %v795
  %797 = vmatmul.bf16.gmra.mxu0 %v493
  %v798 = vpop.f32.mrf.mxu0
  %v799 = vadd.f32 %v630, %v798
  %v800 = vpop.f32.mrf.mxu0
  %v801 = vadd.f32 %v632, %v800
  %802 = vmatmul.bf16.gmra.mxu0 %v496
  %v803 = vpop.f32.mrf.mxu0
  %v804 = vadd.f32 %v635, %v803
  %v805 = vpop.f32.mrf.mxu0
  %v806 = vadd.f32 %v637, %v805
  %807 = vmatmul.bf16.gmra.mxu0 %v499
  %v808 = vpop.f32.mrf.mxu0
  %v809 = vadd.f32 %v640, %v808
  %v810 = vpop.f32.mrf.mxu0
  %v811 = vadd.f32 %v642, %v810
  %812 = vmatmul.bf16.gmra.mxu0 %v502
  %v813 = vpop.f32.mrf.mxu0
  %v814 = vadd.f32 %v645, %v813
  %v815 = vpop.f32.mrf.mxu0
  %v816 = vadd.f32 %v647, %v815
  %817 = vmatmul.bf16.gmra.mxu0 %v505
  %v818 = vpop.f32.mrf.mxu0
  %v819 = vadd.f32 %v650, %v818
  %v820 = vpop.f32.mrf.mxu0
  %v821 = vadd.f32 %v652, %v820
  %822 = vmatmul.bf16.gmra.mxu0 %v508
  %v823 = vpop.f32.mrf.mxu0
  %v824 = vadd.f32 %v655, %v823
  %v825 = vpop.f32.mrf.mxu0
  %v826 = vadd.f32 %v657, %v825
  %827 = vmatmul.bf16.gmra.mxu0 %v511
  %v828 = vpop.f32.mrf.mxu0
  %v829 = vadd.f32 %v660, %v828
  %v830 = vpop.f32.mrf.mxu0
  %v831 = vadd.f32 %v662, %v830
  %832 = vmatmul.bf16.gmra.mxu0 %v514
  %v833 = vpop.f32.mrf.mxu0
  %v834 = vadd.f32 %v665, %v833
  %v835 = vpop.f32.mrf.mxu0
  %v836 = vadd.f32 %v667, %v835
  %837 = vmatmul.bf16.gmra.mxu0 %v517
  %v838 = vpop.f32.mrf.mxu0
  %v839 = vadd.f32 %v670, %v838
  %v840 = vpop.f32.mrf.mxu0
  %v841 = vadd.f32 %v672, %v840
  %842 = vmatmul.bf16.gmra.mxu0 %v520
  %v843 = vpop.f32.mrf.mxu0
  %v844 = vadd.f32 %v675, %v843
  %v845 = vpop.f32.mrf.mxu0
  %v846 = vadd.f32 %v677, %v845
  %847 = vmatmul.bf16.gmra.mxu0 %v523
  %v848 = vpop.f32.mrf.mxu0
  %v849 = vadd.f32 %v680, %v848
  %v850 = vpop.f32.mrf.mxu0
  %v851 = vadd.f32 %v682, %v850
  %852 = vmatmul.bf16.gmra.mxu0 %v526
  %v853 = vpop.f32.mrf.mxu0
  %v854 = vadd.f32 %v685, %v853
  %v855 = vpop.f32.mrf.mxu0
  %v856 = vadd.f32 %v687, %v855
  %857 = vmatmul.bf16.gmra.mxu0 %v529
  %v858 = vpop.f32.mrf.mxu0
  %v859 = vadd.f32 %v690, %v858
  %v860 = vpop.f32.mrf.mxu0
  %v861 = vadd.f32 %v692, %v860
  %862 = vmatmul.bf16.gmra.mxu0 %v532
  %v863 = vpop.f32.mrf.mxu0
  %v864 = vadd.f32 %v695, %v863
  %v865 = vpop.f32.mrf.mxu0
  %v866 = vadd.f32 %v697, %v865
  %867 = vmatmul.bf16.gmra.mxu0 %v535
  %v868 = vpop.f32.mrf.mxu0
  %v869 = vadd.f32 %v700, %v868
  %v870 = vpop.f32.mrf.mxu0
  %v871 = vadd.f32 %v702, %v870
  %872 = vmatmul.bf16.gmra.mxu0 %v538
  %v873 = vpop.f32.mrf.mxu0
  %v874 = vadd.f32 %v705, %v873
  %v875 = vpop.f32.mrf.mxu0
  %v876 = vadd.f32 %v707, %v875
  %877 = vdwg.mxu0
  %v878 = vmax.f32 %v719, 0.0
  %v879 = vmax.f32 %v721, 0.0
  %v880 = vmax.f32 %v724, 0.0
  %v881 = vmax.f32 %v726, 0.0
  %v882 = vmax.f32 %v729, 0.0
  %v883 = vmax.f32 %v731, 0.0
  %v884 = vmax.f32 %v734, 0.0
  %v885 = vmax.f32 %v736, 0.0
  %v886 = vmax.f32 %v739, 0.0
  %v887 = vmax.f32 %v741, 0.0
  %v888 = vmax.f32 %v744, 0.0
  %v889 = vmax.f32 %v746, 0.0
  %v890 = vmax.f32 %v749, 0.0
  %v891 = vmax.f32 %v751, 0.0
  %v892 = vmax.f32 %v754, 0.0
  %v893 = vmax.f32 %v756, 0.0
  %v894 = vmax.f32 %v759, 0.0
  %v895 = vmax.f32 %v761, 0.0
  %v896 = vmax.f32 %v764, 0.0
  %v897 = vmax.f32 %v766, 0.0
  %v898 = vmax.f32 %v769, 0.0
  %v899 = vmax.f32 %v771, 0.0
  %v900 = vmax.f32 %v774, 0.0
  %v901 = vmax.f32 %v776, 0.0
  %v902 = vmax.f32 %v779, 0.0
  %v903 = vmax.f32 %v781, 0.0
  %v904 = vmax.f32 %v784, 0.0
  %v905 = vmax.f32 %v786, 0.0
  %v906 = vmax.f32 %v789, 0.0
  %v907 = vmax.f32 %v791, 0.0
  %v908 = vmax.f32 %v794, 0.0
  %v909 = vmax.f32 %v796, 0.0
  %v910 = vmax.f32 %v799, 0.0
  %v911 = vmax.f32 %v801, 0.0
  %v912 = vmax.f32 %v804, 0.0
  %v913 = vmax.f32 %v806, 0.0
  %v914 = vmax.f32 %v809, 0.0
  %v915 = vmax.f32 %v811, 0.0
  %v916 = vmax.f32 %v814, 0.0
  %v917 = vmax.f32 %v816, 0.0
  %v918 = vmax.f32 %v819, 0.0
  %v919 = vmax.f32 %v821, 0.0
  %v920 = vmax.f32 %v824, 0.0
  %v921 = vmax.f32 %v826, 0.0
  %v922 = vmax.f32 %v829, 0.0
  %v923 = vmax.f32 %v831, 0.0
  %v924 = vmax.f32 %v834, 0.0
  %v925 = vmax.f32 %v836, 0.0
  %v926 = vmax.f32 %v839, 0.0
  %v927 = vmax.f32 %v841, 0.0
  %v928 = vmax.f32 %v844, 0.0
  %v929 = vmax.f32 %v846, 0.0
  %v930 = vmax.f32 %v849, 0.0
  %v931 = vmax.f32 %v851, 0.0
  %v932 = vmax.f32 %v854, 0.0
  %v933 = vmax.f32 %v856, 0.0
  %v934 = vmax.f32 %v859, 0.0
  %v935 = vmax.f32 %v861, 0.0
  %v936 = vmax.f32 %v864, 0.0
  %v937 = vmax.f32 %v866, 0.0
  %v938 = vmax.f32 %v869, 0.0
  %v939 = vmax.f32 %v871, 0.0
  %v940 = vmax.f32 %v874, 0.0
  %v941 = vmax.f32 %v876, 0.0
  %v942 = vpack.c.bf16 %v878, %v878
  %v943 = vpack.c.bf16 %v879, %v879
  %v944 = vpack.c.bf16 %v880, %v880
  %v945 = vpack.c.bf16 %v881, %v881
  %v946 = vpack.c.bf16 %v882, %v882
  %v947 = vpack.c.bf16 %v883, %v883
  %v948 = vpack.c.bf16 %v884, %v884
  %v949 = vpack.c.bf16 %v885, %v885
  %v950 = vpack.c.bf16 %v886, %v886
  %v951 = vpack.c.bf16 %v887, %v887
  %v952 = vpack.c.bf16 %v888, %v888
  %v953 = vpack.c.bf16 %v889, %v889
  %v954 = vpack.c.bf16 %v890, %v890
  %v955 = vpack.c.bf16 %v891, %v891
  %v956 = vpack.c.bf16 %v892, %v892
  %v957 = vpack.c.bf16 %v893, %v893
  %v958 = vpack.c.bf16 %v894, %v894
  %v959 = vpack.c.bf16 %v895, %v895
  %v960 = vpack.c.bf16 %v896, %v896
  %v961 = vpack.c.bf16 %v897, %v897
  %v962 = vpack.c.bf16 %v898, %v898
  %v963 = vpack.c.bf16 %v899, %v899
  %v964 = vpack.c.bf16 %v900, %v900
  %v965 = vpack.c.bf16 %v901, %v901
  %v966 = vpack.c.bf16 %v902, %v902
  %v967 = vpack.c.bf16 %v903, %v903
  %v968 = vpack.c.bf16 %v904, %v904
  %v969 = vpack.c.bf16 %v905, %v905
  %v970 = vpack.c.bf16 %v906, %v906
  %v971 = vpack.c.bf16 %v907, %v907
  %v972 = vpack.c.bf16 %v908, %v908
  %v973 = vpack.c.bf16 %v909, %v909
  %v974 = vpack.c.bf16 %v910, %v910
  %v975 = vpack.c.bf16 %v911, %v911
  %v976 = vpack.c.bf16 %v912, %v912
  %v977 = vpack.c.bf16 %v913, %v913
  %v978 = vpack.c.bf16 %v914, %v914
  %v979 = vpack.c.bf16 %v915, %v915
  %v980 = vpack.c.bf16 %v916, %v916
  %v981 = vpack.c.bf16 %v917, %v917
  %v982 = vpack.c.bf16 %v918, %v918
  %v983 = vpack.c.bf16 %v919, %v919
  %v984 = vpack.c.bf16 %v920, %v920
  %v985 = vpack.c.bf16 %v921, %v921
  %v986 = vpack.c.bf16 %v922, %v922
  %v987 = vpack.c.bf16 %v923, %v923
  %v988 = vpack.c.bf16 %v924, %v924
  %v989 = vpack.c.bf16 %v925, %v925
  %v990 = vpack.c.bf16 %v926, %v926
  %v991 = vpack.c.bf16 %v927, %v927
  %v992 = vpack.c.bf16 %v928, %v928
  %v993 = vpack.c.bf16 %v929, %v929
  %v994 = vpack.c.bf16 %v930, %v930
  %v995 = vpack.c.bf16 %v931, %v931
  %v996 = vpack.c.bf16 %v932, %v932
  %v997 = vpack.c.bf16 %v933, %v933
  %v998 = vpack.c.bf16 %v934, %v934
  %v999 = vpack.c.bf16 %v935, %v935
  %v1000 = vpack.c.bf16 %v936, %v936
  %v1001 = vpack.c.bf16 %v937, %v937
  %v1002 = vpack.c.bf16 %v938, %v938
  %v1003 = vpack.c.bf16 %v939, %v939
  %v1004 = vpack.c.bf16 %v940, %v940
  %v1005 = vpack.c.bf16 %v941, %v941
  %1006 = vst [vmem:[%s3] sm:$0xf] %v942
  %1007 = vst [vmem:[%s3 + $0x4] sm:$0xf] %v943
  %1008 = vst [vmem:[%s3 + $0x8] sm:$0xf] %v944
  %1009 = vst [vmem:[%s3 + $0xc] sm:$0xf] %v945
  %1010 = vst [vmem:[%s3 + $0x10] sm:$0xf] %v946
  %1011 = vst [vmem:[%s3 + $0x14] sm:$0xf] %v947
  %1012 = vst [vmem:[%s3 + $0x18] sm:$0xf] %v948
  %1013 = vst [vmem:[%s3 + $0x1c] sm:$0xf] %v949
  %1014 = vst [vmem:[%s3 + $0x20] sm:$0xf] %v950
  %1015 = vst [vmem:[%s3 + $0x24] sm:$0xf] %v951
  %1016 = vst [vmem:[%s3 + $0x28] sm:$0xf] %v952
  %1017 = vst [vmem:[%s3 + $0x2c] sm:$0xf] %v953
  %1018 = vst [vmem:[%s3 + $0x30] sm:$0xf] %v954
  %1019 = vst [vmem:[%s3 + $0x34] sm:$0xf] %v955
  %1020 = vst [vmem:[%s3 + $0x38] sm:$0xf] %v956
  %1021 = vst [vmem:[%s3 + $0x3c] sm:$0xf] %v957
  %1022 = vst [vmem:[%s3 + $0x40] sm:$0xf] %v958
  %1023 = vst [vmem:[%s3 + $0x44] sm:$0xf] %v959
  %1024 = vst [vmem:[%s3 + $0x48] sm:$0xf] %v960
  %1025 = vst [vmem:[%s3 + $0x4c] sm:$0xf] %v961
  %1026 = vst [vmem:[%s3 + $0x50] sm:$0xf] %v962
  %1027 = vst [vmem:[%s3 + $0x54] sm:$0xf] %v963
  %1028 = vst [vmem:[%s3 + $0x58] sm:$0xf] %v964
  %1029 = vst [vmem:[%s3 + $0x5c] sm:$0xf] %v965
  %1030 = vst [vmem:[%s3 + $0x60] sm:$0xf] %v966
  %1031 = vst [vmem:[%s3 + $0x64] sm:$0xf] %v967
  %1032 = vst [vmem:[%s3 + $0x68] sm:$0xf] %v968
  %1033 = vst [vmem:[%s3 + $0x6c] sm:$0xf] %v969
  %1034 = vst [vmem:[%s3 + $0x70] sm:$0xf] %v970
  %1035 = vst [vmem:[%s3 + $0x74] sm:$0xf] %v971
  %1036 = vst [vmem:[%s3 + $0x78] sm:$0xf] %v972
  %1037 = vst [vmem:[%s3 + $0x7c] sm:$0xf] %v973
  %1038 = vst [vmem:[%s3 + $0x80] sm:$0xf] %v974
  %1039 = vst [vmem:[%s3 + $0x84] sm:$0xf] %v975
  %1040 = vst [vmem:[%s3 + $0x88] sm:$0xf] %v976
  %1041 = vst [vmem:[%s3 + $0x8c] sm:$0xf] %v977
  %1042 = vst [vmem:[%s3 + $0x90] sm:$0xf] %v978
  %1043 = vst [vmem:[%s3 + $0x94] sm:$0xf] %v979
  %1044 = vst [vmem:[%s3 + $0x98] sm:$0xf] %v980
  %1045 = vst [vmem:[%s3 + $0x9c] sm:$0xf] %v981
  %1046 = vst [vmem:[%s3 + $0xa0] sm:$0xf] %v982
  %1047 = vst [vmem:[%s3 + $0xa4] sm:$0xf] %v983
  %1048 = vst [vmem:[%s3 + $0xa8] sm:$0xf] %v984
  %1049 = vst [vmem:[%s3 + $0xac] sm:$0xf] %v985
  %1050 = vst [vmem:[%s3 + $0xb0] sm:$0xf] %v986
  %1051 = vst [vmem:[%s3 + $0xb4] sm:$0xf] %v987
  %1052 = vst [vmem:[%s3 + $0xb8] sm:$0xf] %v988
  %1053 = vst [vmem:[%s3 + $0xbc] sm:$0xf] %v989
  %1054 = vst [vmem:[%s3 + $0xc0] sm:$0xf] %v990
  %1055 = vst [vmem:[%s3 + $0xc4] sm:$0xf] %v991
  %1056 = vst [vmem:[%s3 + $0xc8] sm:$0xf] %v992
  %1057 = vst [vmem:[%s3 + $0xcc] sm:$0xf] %v993
  %1058 = vst [vmem:[%s3 + $0xd0] sm:$0xf] %v994
  %1059 = vst [vmem:[%s3 + $0xd4] sm:$0xf] %v995
  %1060 = vst [vmem:[%s3 + $0xd8] sm:$0xf] %v996
  %1061 = vst [vmem:[%s3 + $0xdc] sm:$0xf] %v997
  %1062 = vst [vmem:[%s3 + $0xe0] sm:$0xf] %v998
  %1063 = vst [vmem:[%s3 + $0xe4] sm:$0xf] %v999
  %1064 = vst [vmem:[%s3 + $0xe8] sm:$0xf] %v1000
  %1065 = vst [vmem:[%s3 + $0xec] sm:$0xf] %v1001
  %1066 = vst [vmem:[%s3 + $0xf0] sm:$0xf] %v1002
  %1067 = vst [vmem:[%s3 + $0xf4] sm:$0xf] %v1003
  %1068 = vst [vmem:[%s3 + $0xf8] sm:$0xf] %v1004
  %1069 = vst [vmem:[%s3 + $0xfc] sm:$0xf] %v1005
  // Predicated region
  $region14: #{deeplabv3plus_forward.13} parent=0 // pred_check
    _
  $region15: #{deeplabv3plus_forward.13} parent=0 // pred_check_branch
    %1071 = sbr.rel (0) target = $region17
  $region16: #{deeplabv3plus_forward.13} parent=0 // pred_region
    _
  $region17: #{deeplabv3plus_forward.13} parent=0 // pred_fallthru
    _
  // Predicated region
  $region18: #{deeplabv3plus_forward.13} parent=0 // pred_check
    _
  $region19: #{deeplabv3plus_forward.13} parent=0 // pred_check_branch
    %1073 = sbr.rel (0) target = $region21
  $region20: #{deeplabv3plus_forward.13} parent=0 // pred_region
    _
  $region21: #{deeplabv3plus_forward.13} parent=0 // pred_fallthru
    _

// kernel: deeplabv3plus_forward.14
$region0: #{deeplabv3plus_forward.14}
  #allocation0 [shape = 'u32[]', space=smem, size = 0x4, offset = 0x4, fixed_abs, tag = 'smem constant byte address 0x4 - core index']
  #allocation1 [shape = 'u32[72,128]{1,0:T(1,128)}', space=vmem, size = 0x9000, scoped, tag = 'internal scratch']
  %s0 = inlined_call_operand.vmem [shape: bf16[128,216], index: 0, kind: input, shape index: {}]
  %s1 = inlined_call_operand.vmem [shape: bf16[216,128], index: 1, kind: input, shape index: {}]
  %s2 = inlined_call_operand.vmem [shape: f32[1,128], index: 2, kind: input, shape index: {}]
  %s3 = inlined_call_operand.vmem [shape: bf16[128,128], index: 3, kind: output, shape index: {}]
  %s4 = sld [smem:[#allocation0]]
  $region22: #{deeplabv3plus_forward.14} parent=0
    _
  %s6 = ssub.s32 1, %s4
  %s7 = scalar_select 0, %s6, %s4
  // Predicated region
  $region2: #{deeplabv3plus_forward.14} parent=0 // pred_check
    _
  $region3: #{deeplabv3plus_forward.14} parent=0 // pred_check_branch
    %9 = sbr.rel (0) target = $region5
  $region4: #{deeplabv3plus_forward.14} parent=0 // pred_region
    _
  $region5: #{deeplabv3plus_forward.14} parent=0 // pred_fallthru
    _
  // Predicated region
  $region6: #{deeplabv3plus_forward.14} parent=0 // pred_check
    _
  $region7: #{deeplabv3plus_forward.14} parent=0 // pred_check_branch
    %11 = sbr.rel (0) target = $region9
  $region8: #{deeplabv3plus_forward.14} parent=0 // pred_region
    _
  $region9: #{deeplabv3plus_forward.14} parent=0 // pred_fallthru
    _
  // Predicated region
  $region10: #{deeplabv3plus_forward.14} parent=0 // pred_check
    _
  $region11: #{deeplabv3plus_forward.14} parent=0 // pred_check_branch
    %13 = sbr.rel (0) target = $region13
  $region12: #{deeplabv3plus_forward.14} parent=0 // pred_region
    _
  $region13: #{deeplabv3plus_forward.14} parent=0 // pred_fallthru
    _
  %v15 = vld [vmem:[%s0] sm:$0xff]
  %v16 = vld [vmem:[%s0 + $0x8] sm:$0xff]
  %v17 = vld [vmem:[%s0 + $0x10] sm:$0xff]
  %v18 = vld [vmem:[%s0 + $0x18] sm:$0xff]
  %v19 = vld [vmem:[%s0 + $0x20] sm:$0xff]
  %v20 = vld [vmem:[%s0 + $0x28] sm:$0xff]
  %v21 = vld [vmem:[%s0 + $0x30] sm:$0xff]
  %v22 = vld [vmem:[%s0 + $0x38] sm:$0xff]
  %v23 = vld [vmem:[%s0 + $0x40] sm:$0xff]
  %v24 = vld [vmem:[%s0 + $0x48] sm:$0xff]
  %v25 = vld [vmem:[%s0 + $0x50] sm:$0xff]
  %v26 = vld [vmem:[%s0 + $0x58] sm:$0xff]
  %v27 = vld [vmem:[%s0 + $0x60] sm:$0xff]
  %v28 = vld [vmem:[%s0 + $0x68] sm:$0xff]
  %v29 = vld [vmem:[%s0 + $0x70] sm:$0xff]
  %v30 = vld [vmem:[%s0 + $0x78] sm:$0xff]
  %v31 = vld [vmem:[%s1] sm:$0xf]
  %v32 = vld [vmem:[%s1 + $0x4] sm:$0xf]
  %v33 = vld [vmem:[%s1 + $0x8] sm:$0xf]
  %v34 = vld [vmem:[%s1 + $0xc] sm:$0xf]
  %v35 = vld [vmem:[%s1 + $0x10] sm:$0xf]
  %v36 = vld [vmem:[%s1 + $0x14] sm:$0xf]
  %v37 = vld [vmem:[%s1 + $0x18] sm:$0xf]
  %v38 = vld [vmem:[%s1 + $0x1c] sm:$0xf]
  %v39 = vld [vmem:[%s1 + $0x20] sm:$0xf]
  %v40 = vld [vmem:[%s1 + $0x24] sm:$0xf]
  %v41 = vld [vmem:[%s1 + $0x28] sm:$0xf]
  %v42 = vld [vmem:[%s1 + $0x2c] sm:$0xf]
  %v43 = vld [vmem:[%s1 + $0x30] sm:$0xf]
  %v44 = vld [vmem:[%s1 + $0x34] sm:$0xf]
  %v45 = vld [vmem:[%s1 + $0x38] sm:$0xf]
  %v46 = vld [vmem:[%s1 + $0x3c] sm:$0xf]
  %v47 = vld [vmem:[%s1 + $0x40] sm:$0xf]
  %v48 = vld [vmem:[%s1 + $0x44] sm:$0xf]
  %v49 = vld [vmem:[%s1 + $0x48] sm:$0xf]
  %v50 = vld [vmem:[%s1 + $0x4c] sm:$0xf]
  %v51 = vld [vmem:[%s1 + $0x50] sm:$0xf]
  %v52 = vld [vmem:[%s1 + $0x54] sm:$0xf]
  %v53 = vld [vmem:[%s1 + $0x58] sm:$0xf]
  %v54 = vld [vmem:[%s1 + $0x5c] sm:$0xf]
  %v55 = vld [vmem:[%s1 + $0x60] sm:$0xf]
  %v56 = vld [vmem:[%s1 + $0x64] sm:$0xf]
  %v57 = vld [vmem:[%s1 + $0x68] sm:$0xf]
  %v58 = vld [vmem:[%s2] sm:$0x1]
  %v60 = vperm.slane %v58, 0
  %v78 = vunpack.c.l.b16 %v15
  %v79 = vunpack.c.h.b16 %v15
  %v80 = vunpack.c.l.b16 %v16
  %v81 = vunpack.c.h.b16 %v16
  %v82 = vunpack.c.l.b16 %v17
  %v83 = vunpack.c.h.b16 %v17
  %v84 = vunpack.c.l.b16 %v18
  %v85 = vunpack.c.h.b16 %v18
  %v86 = vunpack.c.l.b16 %v19
  %v87 = vunpack.c.h.b16 %v19
  %v88 = vunpack.c.l.b16 %v20
  %v89 = vunpack.c.h.b16 %v20
  %v90 = vunpack.c.l.b16 %v21
  %v91 = vunpack.c.h.b16 %v21
  %v92 = vunpack.c.l.b16 %v22
  %v93 = vunpack.c.h.b16 %v22
  %v94 = vunpack.c.l.b16 %v23
  %v95 = vunpack.c.h.b16 %v23
  %v96 = vunpack.c.l.b16 %v24
  %v97 = vunpack.c.h.b16 %v24
  %v98 = vunpack.c.l.b16 %v25
  %v99 = vunpack.c.h.b16 %v25
  %v100 = vunpack.c.l.b16 %v26
  %v101 = vunpack.c.h.b16 %v26
  %v102 = vunpack.c.l.b16 %v27
  %v103 = vunpack.c.h.b16 %v27
  %v104 = vunpack.c.l.b16 %v28
  %v105 = vunpack.c.h.b16 %v28
  %v106 = vunpack.c.l.b16 %v29
  %v107 = vunpack.c.h.b16 %v29
  %v108 = vunpack.c.l.b16 %v30
  %v109 = vunpack.c.h.b16 %v30
  %v110 = vpack.c.b16 %v80, %v78
  %v111 = vpack.c.b16 %v81, %v79
  %v112 = vpack.c.b16 %v84, %v82
  %v113 = vpack.c.b16 %v85, %v83
  %v114 = vpack.c.b16 %v88, %v86
  %v115 = vpack.c.b16 %v89, %v87
  %v116 = vpack.c.b16 %v92, %v90
  %v117 = vpack.c.b16 %v93, %v91
  %v118 = vpack.c.b16 %v96, %v94
  %v119 = vpack.c.b16 %v97, %v95
  %v120 = vpack.c.b16 %v100, %v98
  %v121 = vpack.c.b16 %v101, %v99
  %v122 = vpack.c.b16 %v104, %v102
  %v123 = vpack.c.b16 %v105, %v103
  %v124 = vpack.c.b16 %v108, %v106
  %v125 = vpack.c.b16 %v109, %v107
  %v161 = vunpack.c.l.b16 %v31
  %v162 = vunpack.c.l.b16 %v32
  %v163 = vunpack.c.l.b16 %v33
  %v164 = vunpack.c.l.b16 %v34
  %v165 = vunpack.c.l.b16 %v35
  %v166 = vunpack.c.l.b16 %v36
  %v167 = vunpack.c.l.b16 %v37
  %v168 = vunpack.c.l.b16 %v38
  %v169 = vunpack.c.l.b16 %v39
  %v170 = vunpack.c.l.b16 %v40
  %v171 = vunpack.c.l.b16 %v41
  %v172 = vunpack.c.l.b16 %v42
  %v173 = vunpack.c.l.b16 %v43
  %v174 = vunpack.c.l.b16 %v44
  %v175 = vunpack.c.l.b16 %v45
  %v176 = vunpack.c.l.b16 %v46
  %v177 = vunpack.c.l.b16 %v47
  %v178 = vunpack.c.l.b16 %v48
  %v179 = vunpack.c.l.b16 %v49
  %v180 = vunpack.c.l.b16 %v50
  %v181 = vunpack.c.l.b16 %v51
  %v182 = vunpack.c.l.b16 %v52
  %v183 = vunpack.c.l.b16 %v53
  %v184 = vunpack.c.l.b16 %v54
  %v185 = vunpack.c.l.b16 %v55
  %v186 = vunpack.c.l.b16 %v56
  %v187 = vunpack.c.l.b16 %v57
  %v188 = vpack.c.b16 %v162, %v161
  %v189 = vpack.c.b16 %v164, %v163
  %v190 = vpack.c.b16 %v166, %v165
  %v191 = vpack.c.b16 %v168, %v167
  %v192 = vpack.c.b16 %v170, %v169
  %v193 = vpack.c.b16 %v172, %v171
  %v194 = vpack.c.b16 %v174, %v173
  %v195 = vpack.c.b16 %v176, %v175
  %v196 = vpack.c.b16 %v178, %v177
  %v197 = vpack.c.b16 %v180, %v179
  %v198 = vpack.c.b16 %v182, %v181
  %v199 = vpack.c.b16 %v184, %v183
  %v200 = vpack.c.b16 %v186, %v185
  %v201 = vpack.c.b16 %v187, %v187
  %vm215 = vcmask 719872
  %v217 = vsel %vm215, %v111, 0
  %v220 = vsel %vm215, %v113, 0
  %v223 = vsel %vm215, %v115, 0
  %v226 = vsel %vm215, %v117, 0
  %v229 = vsel %vm215, %v119, 0
  %v232 = vsel %vm215, %v121, 0
  %v235 = vsel %vm215, %v123, 0
  %v238 = vsel %vm215, %v125, 0
  %vm240 = vcmask 1043456
  %v242 = vsel %vm240, %v201, 0
  %244 = vmatpush.bf16.msra.mxu0 %v195
  %245 = vmatpush.bf16.msra.mxu0 %v194
  %246 = vmatpush.bf16.msra.mxu0 %v193
  %247 = vmatpush.bf16.msra.mxu0 %v192
  %248 = vmatpush.bf16.msra.mxu0 %v191
  %249 = vmatpush.bf16.msra.mxu0 %v190
  %250 = vmatpush.bf16.msra.mxu0 %v189
  %251 = vmatpush.bf16.msra.mxu0 %v188
  %252 = vmatmul.bf16.gmra.mxu0 %v110
  %v253 = vpop.f32.mrf.mxu0
  %v254 = vadd.f32 %v60, %v253
  %v255 = vpop.f32.mrf.mxu0
  %v256 = vadd.f32 %v60, %v255
  %257 = vmatmul.bf16.gmra.mxu0 %v112
  %v258 = vpop.f32.mrf.mxu0
  %v259 = vadd.f32 %v60, %v258
  %v260 = vpop.f32.mrf.mxu0
  %v261 = vadd.f32 %v60, %v260
  %262 = vmatmul.bf16.gmra.mxu0 %v114
  %v263 = vpop.f32.mrf.mxu0
  %v264 = vadd.f32 %v60, %v263
  %v265 = vpop.f32.mrf.mxu0
  %v266 = vadd.f32 %v60, %v265
  %267 = vmatmul.bf16.gmra.mxu0 %v116
  %v268 = vpop.f32.mrf.mxu0
  %v269 = vadd.f32 %v60, %v268
  %v270 = vpop.f32.mrf.mxu0
  %v271 = vadd.f32 %v60, %v270
  %272 = vmatmul.bf16.gmra.mxu0 %v118
  %v273 = vpop.f32.mrf.mxu0
  %v274 = vadd.f32 %v60, %v273
  %v275 = vpop.f32.mrf.mxu0
  %v276 = vadd.f32 %v60, %v275
  %277 = vmatmul.bf16.gmra.mxu0 %v120
  %v278 = vpop.f32.mrf.mxu0
  %v279 = vadd.f32 %v60, %v278
  %v280 = vpop.f32.mrf.mxu0
  %v281 = vadd.f32 %v60, %v280
  %282 = vmatmul.bf16.gmra.mxu0 %v122
  %v283 = vpop.f32.mrf.mxu0
  %v284 = vadd.f32 %v60, %v283
  %v285 = vpop.f32.mrf.mxu0
  %v286 = vadd.f32 %v60, %v285
  %287 = vmatmul.bf16.gmra.mxu0 %v124
  %v288 = vpop.f32.mrf.mxu0
  %v289 = vadd.f32 %v60, %v288
  %v290 = vpop.f32.mrf.mxu0
  %v291 = vadd.f32 %v60, %v290
  %292 = vdwg.mxu0
  %293 = vmatpush.bf16.msra.mxu0 0
  %294 = vmatpush.bf16.msra.mxu0 0
  %295 = vmatpush.bf16.msra.mxu0 %v242
  %296 = vmatpush.bf16.msra.mxu0 %v200
  %297 = vmatpush.bf16.msra.mxu0 %v199
  %298 = vmatpush.bf16.msra.mxu0 %v198
  %299 = vmatpush.bf16.msra.mxu0 %v197
  %300 = vmatpush.bf16.msra.mxu0 %v196
  %301 = vmatmul.bf16.gmra.mxu0 %v217
  %v302 = vpop.f32.mrf.mxu0
  %v303 = vadd.f32 %v254, %v302
  %v304 = vpop.f32.mrf.mxu0
  %v305 = vadd.f32 %v256, %v304
  %306 = vmatmul.bf16.gmra.mxu0 %v220
  %v307 = vpop.f32.mrf.mxu0
  %v308 = vadd.f32 %v259, %v307
  %v309 = vpop.f32.mrf.mxu0
  %v310 = vadd.f32 %v261, %v309
  %311 = vmatmul.bf16.gmra.mxu0 %v223
  %v312 = vpop.f32.mrf.mxu0
  %v313 = vadd.f32 %v264, %v312
  %v314 = vpop.f32.mrf.mxu0
  %v315 = vadd.f32 %v266, %v314
  %316 = vmatmul.bf16.gmra.mxu0 %v226
  %v317 = vpop.f32.mrf.mxu0
  %v318 = vadd.f32 %v269, %v317
  %v319 = vpop.f32.mrf.mxu0
  %v320 = vadd.f32 %v271, %v319
  %321 = vmatmul.bf16.gmra.mxu0 %v229
  %v322 = vpop.f32.mrf.mxu0
  %v323 = vadd.f32 %v274, %v322
  %v324 = vpop.f32.mrf.mxu0
  %v325 = vadd.f32 %v276, %v324
  %326 = vmatmul.bf16.gmra.mxu0 %v232
  %v327 = vpop.f32.mrf.mxu0
  %v328 = vadd.f32 %v279, %v327
  %v329 = vpop.f32.mrf.mxu0
  %v330 = vadd.f32 %v281, %v329
  %331 = vmatmul.bf16.gmra.mxu0 %v235
  %v332 = vpop.f32.mrf.mxu0
  %v333 = vadd.f32 %v284, %v332
  %v334 = vpop.f32.mrf.mxu0
  %v335 = vadd.f32 %v286, %v334
  %336 = vmatmul.bf16.gmra.mxu0 %v238
  %v337 = vpop.f32.mrf.mxu0
  %v338 = vadd.f32 %v289, %v337
  %v339 = vpop.f32.mrf.mxu0
  %v340 = vadd.f32 %v291, %v339
  %341 = vdwg.mxu0
  %v342 = vmax.f32 %v303, 0.0
  %v343 = vmax.f32 %v305, 0.0
  %v344 = vmax.f32 %v308, 0.0
  %v345 = vmax.f32 %v310, 0.0
  %v346 = vmax.f32 %v313, 0.0
  %v347 = vmax.f32 %v315, 0.0
  %v348 = vmax.f32 %v318, 0.0
  %v349 = vmax.f32 %v320, 0.0
  %v350 = vmax.f32 %v323, 0.0
  %v351 = vmax.f32 %v325, 0.0
  %v352 = vmax.f32 %v328, 0.0
  %v353 = vmax.f32 %v330, 0.0
  %v354 = vmax.f32 %v333, 0.0
  %v355 = vmax.f32 %v335, 0.0
  %v356 = vmax.f32 %v338, 0.0
  %v357 = vmax.f32 %v340, 0.0
  %v358 = vpack.c.bf16 %v342, %v342
  %v359 = vpack.c.bf16 %v343, %v343
  %v360 = vpack.c.bf16 %v344, %v344
  %v361 = vpack.c.bf16 %v345, %v345
  %v362 = vpack.c.bf16 %v346, %v346
  %v363 = vpack.c.bf16 %v347, %v347
  %v364 = vpack.c.bf16 %v348, %v348
  %v365 = vpack.c.bf16 %v349, %v349
  %v366 = vpack.c.bf16 %v350, %v350
  %v367 = vpack.c.bf16 %v351, %v351
  %v368 = vpack.c.bf16 %v352, %v352
  %v369 = vpack.c.bf16 %v353, %v353
  %v370 = vpack.c.bf16 %v354, %v354
  %v371 = vpack.c.bf16 %v355, %v355
  %v372 = vpack.c.bf16 %v356, %v356
  %v373 = vpack.c.bf16 %v357, %v357
  %374 = vst [vmem:[%s3] sm:$0xf] %v358
  %375 = vst [vmem:[%s3 + $0x4] sm:$0xf] %v359
  %376 = vst [vmem:[%s3 + $0x8] sm:$0xf] %v360
  %377 = vst [vmem:[%s3 + $0xc] sm:$0xf] %v361
  %378 = vst [vmem:[%s3 + $0x10] sm:$0xf] %v362
  %379 = vst [vmem:[%s3 + $0x14] sm:$0xf] %v363
  %380 = vst [vmem:[%s3 + $0x18] sm:$0xf] %v364
  %381 = vst [vmem:[%s3 + $0x1c] sm:$0xf] %v365
  %382 = vst [vmem:[%s3 + $0x20] sm:$0xf] %v366
  %383 = vst [vmem:[%s3 + $0x24] sm:$0xf] %v367
  %384 = vst [vmem:[%s3 + $0x28] sm:$0xf] %v368
  %385 = vst [vmem:[%s3 + $0x2c] sm:$0xf] %v369
  %386 = vst [vmem:[%s3 + $0x30] sm:$0xf] %v370
  %387 = vst [vmem:[%s3 + $0x34] sm:$0xf] %v371
  %388 = vst [vmem:[%s3 + $0x38] sm:$0xf] %v372
  %389 = vst [vmem:[%s3 + $0x3c] sm:$0xf] %v373
  // Predicated region
  $region14: #{deeplabv3plus_forward.14} parent=0 // pred_check
    _
  $region15: #{deeplabv3plus_forward.14} parent=0 // pred_check_branch
    %391 = sbr.rel (0) target = $region17
  $region16: #{deeplabv3plus_forward.14} parent=0 // pred_region
    _
  $region17: #{deeplabv3plus_forward.14} parent=0 // pred_fallthru
    _
  // Predicated region
  $region18: #{deeplabv3plus_forward.14} parent=0 // pred_check
    _
  $region19: #{deeplabv3plus_forward.14} parent=0 // pred_check_branch
    %393 = sbr.rel (0) target = $region21
  $region20: #{deeplabv3plus_forward.14} parent=0 // pred_region
    _
  $region21: #{deeplabv3plus_forward.14} parent=0 // pred_fallthru
    _

// kernel: deeplabv3plus_forward.15
$region0: #{deeplabv3plus_forward.15}
  #allocation0 [shape = 'u32[]', space=smem, size = 0x4, offset = 0x4, fixed_abs, tag = 'smem constant byte address 0x4 - core index']
  #allocation1 [shape = 'u32[72,128]{1,0:T(1,128)}', space=vmem, size = 0x9000, scoped, tag = 'internal scratch']
  %s0 = inlined_call_operand.vmem [shape: bf16[32,288], index: 0, kind: input, shape index: {}]
  %s1 = inlined_call_operand.vmem [shape: bf16[288,128], index: 1, kind: input, shape index: {}]
  %s2 = inlined_call_operand.vmem [shape: f32[1,128], index: 2, kind: input, shape index: {}]
  %s3 = inlined_call_operand.vmem [shape: bf16[32,128], index: 3, kind: output, shape index: {}]
  %s4 = sld [smem:[#allocation0]]
  $region22: #{deeplabv3plus_forward.15} parent=0
    _
  %s6 = ssub.s32 1, %s4
  %s7 = scalar_select 0, %s6, %s4
  // Predicated region
  $region2: #{deeplabv3plus_forward.15} parent=0 // pred_check
    _
  $region3: #{deeplabv3plus_forward.15} parent=0 // pred_check_branch
    %9 = sbr.rel (0) target = $region5
  $region4: #{deeplabv3plus_forward.15} parent=0 // pred_region
    _
  $region5: #{deeplabv3plus_forward.15} parent=0 // pred_fallthru
    _
  // Predicated region
  $region6: #{deeplabv3plus_forward.15} parent=0 // pred_check
    _
  $region7: #{deeplabv3plus_forward.15} parent=0 // pred_check_branch
    %11 = sbr.rel (0) target = $region9
  $region8: #{deeplabv3plus_forward.15} parent=0 // pred_region
    _
  $region9: #{deeplabv3plus_forward.15} parent=0 // pred_fallthru
    _
  // Predicated region
  $region10: #{deeplabv3plus_forward.15} parent=0 // pred_check
    _
  $region11: #{deeplabv3plus_forward.15} parent=0 // pred_check_branch
    %13 = sbr.rel (0) target = $region13
  $region12: #{deeplabv3plus_forward.15} parent=0 // pred_region
    _
  $region13: #{deeplabv3plus_forward.15} parent=0 // pred_fallthru
    _
  %v15 = vld [vmem:[%s0] sm:$0xff]
  %v16 = vld [vmem:[%s0 + $0x8] sm:$0xf]
  %v17 = vld [vmem:[%s0 + $0xc] sm:$0xff]
  %v18 = vld [vmem:[%s0 + $0x14] sm:$0xf]
  %v19 = vld [vmem:[%s0 + $0x18] sm:$0xff]
  %v20 = vld [vmem:[%s0 + $0x20] sm:$0xf]
  %v21 = vld [vmem:[%s0 + $0x24] sm:$0xff]
  %v22 = vld [vmem:[%s0 + $0x2c] sm:$0xf]
  %v23 = vld [vmem:[%s1] sm:$0xf]
  %v24 = vld [vmem:[%s1 + $0x4] sm:$0xf]
  %v25 = vld [vmem:[%s1 + $0x8] sm:$0xf]
  %v26 = vld [vmem:[%s1 + $0xc] sm:$0xf]
  %v27 = vld [vmem:[%s1 + $0x10] sm:$0xf]
  %v28 = vld [vmem:[%s1 + $0x14] sm:$0xf]
  %v29 = vld [vmem:[%s1 + $0x18] sm:$0xf]
  %v30 = vld [vmem:[%s1 + $0x1c] sm:$0xf]
  %v31 = vld [vmem:[%s1 + $0x20] sm:$0xf]
  %v32 = vld [vmem:[%s1 + $0x24] sm:$0xf]
  %v33 = vld [vmem:[%s1 + $0x28] sm:$0xf]
  %v34 = vld [vmem:[%s1 + $0x2c] sm:$0xf]
  %v35 = vld [vmem:[%s1 + $0x30] sm:$0xf]
  %v36 = vld [vmem:[%s1 + $0x34] sm:$0xf]
  %v37 = vld [vmem:[%s1 + $0x38] sm:$0xf]
  %v38 = vld [vmem:[%s1 + $0x3c] sm:$0xf]
  %v39 = vld [vmem:[%s1 + $0x40] sm:$0xf]
  %v40 = vld [vmem:[%s1 + $0x44] sm:$0xf]
  %v41 = vld [vmem:[%s1 + $0x48] sm:$0xf]
  %v42 = vld [vmem:[%s1 + $0x4c] sm:$0xf]
  %v43 = vld [vmem:[%s1 + $0x50] sm:$0xf]
  %v44 = vld [vmem:[%s1 + $0x54] sm:$0xf]
  %v45 = vld [vmem:[%s1 + $0x58] sm:$0xf]
  %v46 = vld [vmem:[%s1 + $0x5c] sm:$0xf]
  %v47 = vld [vmem:[%s1 + $0x60] sm:$0xf]
  %v48 = vld [vmem:[%s1 + $0x64] sm:$0xf]
  %v49 = vld [vmem:[%s1 + $0x68] sm:$0xf]
  %v50 = vld [vmem:[%s1 + $0x6c] sm:$0xf]
  %v51 = vld [vmem:[%s1 + $0x70] sm:$0xf]
  %v52 = vld [vmem:[%s1 + $0x74] sm:$0xf]
  %v53 = vld [vmem:[%s1 + $0x78] sm:$0xf]
  %v54 = vld [vmem:[%s1 + $0x7c] sm:$0xf]
  %v55 = vld [vmem:[%s1 + $0x80] sm:$0xf]
  %v56 = vld [vmem:[%s1 + $0x84] sm:$0xf]
  %v57 = vld [vmem:[%s1 + $0x88] sm:$0xf]
  %v58 = vld [vmem:[%s1 + $0x8c] sm:$0xf]
  %v59 = vld [vmem:[%s2] sm:$0x1]
  %v61 = vperm.slane %v59, 0
  %v71 = vunpack.c.l.b16 %v15
  %v72 = vunpack.c.h.b16 %v15
  %v73 = vunpack.c.l.b16 %v16
  %v74 = vunpack.c.l.b16 %v17
  %v75 = vunpack.c.h.b16 %v17
  %v76 = vunpack.c.l.b16 %v18
  %v77 = vunpack.c.l.b16 %v19
  %v78 = vunpack.c.h.b16 %v19
  %v79 = vunpack.c.l.b16 %v20
  %v80 = vunpack.c.l.b16 %v21
  %v81 = vunpack.c.h.b16 %v21
  %v82 = vunpack.c.l.b16 %v22
  %v83 = vpack.c.b16 %v74, %v71
  %v84 = vpack.c.b16 %v75, %v72
  %v85 = vpack.c.b16 %v76, %v73
  %v86 = vpack.c.b16 %v80, %v77
  %v87 = vpack.c.b16 %v81, %v78
  %v88 = vpack.c.b16 %v82, %v79
  %v129 = vunpack.c.l.b16 %v23
  %v130 = vunpack.c.l.b16 %v24
  %v131 = vunpack.c.l.b16 %v25
  %v132 = vunpack.c.l.b16 %v26
  %v133 = vunpack.c.l.b16 %v27
  %v134 = vunpack.c.l.b16 %v28
  %v135 = vunpack.c.l.b16 %v29
  %v136 = vunpack.c.l.b16 %v30
  %v137 = vunpack.c.l.b16 %v31
  %v138 = vunpack.c.l.b16 %v32
  %v139 = vunpack.c.l.b16 %v33
  %v140 = vunpack.c.l.b16 %v34
  %v141 = vunpack.c.l.b16 %v35
  %v142 = vunpack.c.l.b16 %v36
  %v143 = vunpack.c.l.b16 %v37
  %v144 = vunpack.c.l.b16 %v38
  %v145 = vunpack.c.l.b16 %v39
  %v146 = vunpack.c.l.b16 %v40
  %v147 = vunpack.c.l.b16 %v41
  %v148 = vunpack.c.l.b16 %v42
  %v149 = vunpack.c.l.b16 %v43
  %v150 = vunpack.c.l.b16 %v44
  %v151 = vunpack.c.l.b16 %v45
  %v152 = vunpack.c.l.b16 %v46
  %v153 = vunpack.c.l.b16 %v47
  %v154 = vunpack.c.l.b16 %v48
  %v155 = vunpack.c.l.b16 %v49
  %v156 = vunpack.c.l.b16 %v50
  %v157 = vunpack.c.l.b16 %v51
  %v158 = vunpack.c.l.b16 %v52
  %v159 = vunpack.c.l.b16 %v53
  %v160 = vunpack.c.l.b16 %v54
  %v161 = vunpack.c.l.b16 %v55
  %v162 = vunpack.c.l.b16 %v56
  %v163 = vunpack.c.l.b16 %v57
  %v164 = vunpack.c.l.b16 %v58
  %v165 = vpack.c.b16 %v130, %v129
  %v166 = vpack.c.b16 %v132, %v131
  %v167 = vpack.c.b16 %v134, %v133
  %v168 = vpack.c.b16 %v136, %v135
  %v169 = vpack.c.b16 %v138, %v137
  %v170 = vpack.c.b16 %v140, %v139
  %v171 = vpack.c.b16 %v142, %v141
  %v172 = vpack.c.b16 %v144, %v143
  %v173 = vpack.c.b16 %v146, %v145
  %v174 = vpack.c.b16 %v148, %v147
  %v175 = vpack.c.b16 %v150, %v149
  %v176 = vpack.c.b16 %v152, %v151
  %v177 = vpack.c.b16 %v154, %v153
  %v178 = vpack.c.b16 %v156, %v155
  %v179 = vpack.c.b16 %v158, %v157
  %v180 = vpack.c.b16 %v160, %v159
  %v181 = vpack.c.b16 %v162, %v161
  %v182 = vpack.c.b16 %v164, %v163
  %vm201 = vcmask 261120
  %v203 = vsel %vm201, %v85, 0
  %v206 = vsel %vm201, %v88, 0
  %208 = vmatpush.bf16.msra.mxu0 %v172
  %209 = vmatpush.bf16.msra.mxu0 %v171
  %210 = vmatpush.bf16.msra.mxu0 %v170
  %211 = vmatpush.bf16.msra.mxu0 %v169
  %212 = vmatpush.bf16.msra.mxu0 %v168
  %213 = vmatpush.bf16.msra.mxu0 %v167
  %214 = vmatpush.bf16.msra.mxu0 %v166
  %215 = vmatpush.bf16.msra.mxu0 %v165
  %216 = vmatmul.bf16.gmra.mxu0 %v83
  %v217 = vpop.f32.mrf.mxu0
  %v218 = vadd.f32 %v61, %v217
  %v219 = vpop.f32.mrf.mxu0
  %v220 = vadd.f32 %v61, %v219
  %221 = vmatmul.bf16.gmra.mxu0 %v86
  %v222 = vpop.f32.mrf.mxu0
  %v223 = vadd.f32 %v61, %v222
  %v224 = vpop.f32.mrf.mxu0
  %v225 = vadd.f32 %v61, %v224
  %226 = vdwg.mxu0
  %227 = vmatpush.bf16.msra.mxu0 %v180
  %228 = vmatpush.bf16.msra.mxu0 %v179
  %229 = vmatpush.bf16.msra.mxu0 %v178
  %230 = vmatpush.bf16.msra.mxu0 %v177
  %231 = vmatpush.bf16.msra.mxu0 %v176
  %232 = vmatpush.bf16.msra.mxu0 %v175
  %233 = vmatpush.bf16.msra.mxu0 %v174
  %234 = vmatpush.bf16.msra.mxu0 %v173
  %235 = vmatmul.bf16.gmra.mxu0 %v84
  %v236 = vpop.f32.mrf.mxu0
  %v237 = vadd.f32 %v218, %v236
  %v238 = vpop.f32.mrf.mxu0
  %v239 = vadd.f32 %v220, %v238
  %240 = vmatmul.bf16.gmra.mxu0 %v87
  %v241 = vpop.f32.mrf.mxu0
  %v242 = vadd.f32 %v223, %v241
  %v243 = vpop.f32.mrf.mxu0
  %v244 = vadd.f32 %v225, %v243
  %245 = vdwg.mxu0
  %246 = vmatpush.bf16.msra.mxu0 0
  %247 = vmatpush.bf16.msra.mxu0 0
  %248 = vmatpush.bf16.msra.mxu0 0
  %249 = vmatpush.bf16.msra.mxu0 0
  %250 = vmatpush.bf16.msra.mxu0 0
  %251 = vmatpush.bf16.msra.mxu0 0
  %252 = vmatpush.bf16.msra.mxu0 %v182
  %253 = vmatpush.bf16.msra.mxu0 %v181
  %254 = vmatmul.bf16.gmra.mxu0 %v203
  %v255 = vpop.f32.mrf.mxu0
  %v256 = vadd.f32 %v237, %v255
  %v257 = vpop.f32.mrf.mxu0
  %v258 = vadd.f32 %v239, %v257
  %259 = vmatmul.bf16.gmra.mxu0 %v206
  %v260 = vpop.f32.mrf.mxu0
  %v261 = vadd.f32 %v242, %v260
  %v262 = vpop.f32.mrf.mxu0
  %v263 = vadd.f32 %v244, %v262
  %264 = vdwg.mxu0
  %v265 = vmax.f32 %v256, 0.0
  %v266 = vmax.f32 %v258, 0.0
  %v267 = vmax.f32 %v261, 0.0
  %v268 = vmax.f32 %v263, 0.0
  %v269 = vpack.c.bf16 %v265, %v265
  %v270 = vpack.c.bf16 %v266, %v266
  %v271 = vpack.c.bf16 %v267, %v267
  %v272 = vpack.c.bf16 %v268, %v268
  %273 = vst [vmem:[%s3] sm:$0xf] %v269
  %274 = vst [vmem:[%s3 + $0x4] sm:$0xf] %v270
  %275 = vst [vmem:[%s3 + $0x8] sm:$0xf] %v271
  %276 = vst [vmem:[%s3 + $0xc] sm:$0xf] %v272
  // Predicated region
  $region14: #{deeplabv3plus_forward.15} parent=0 // pred_check
    _
  $region15: #{deeplabv3plus_forward.15} parent=0 // pred_check_branch
    %278 = sbr.rel (0) target = $region17
  $region16: #{deeplabv3plus_forward.15} parent=0 // pred_region
    _
  $region17: #{deeplabv3plus_forward.15} parent=0 // pred_fallthru
    _
  // Predicated region
  $region18: #{deeplabv3plus_forward.15} parent=0 // pred_check
    _
  $region19: #{deeplabv3plus_forward.15} parent=0 // pred_check_branch
    %280 = sbr.rel (0) target = $region21
  $region20: #{deeplabv3plus_forward.15} parent=0 // pred_region
    _
  $region21: #{deeplabv3plus_forward.15} parent=0 // pred_fallthru
    _

// kernel: deeplabv3plus_forward.17
$region0: #{deeplabv3plus_forward.17}
  #allocation0 [shape = 'u32[]', space=smem, size = 0x4, offset = 0x4, fixed_abs, tag = 'smem constant byte address 0x4 - core index']
  #allocation1 [shape = 'u32[72,128]{1,0:T(1,128)}', space=vmem, size = 0x9000, scoped, tag = 'internal scratch']
  %s0 = inlined_call_operand.vmem [shape: bf16[2,16,64], index: 0, kind: input, shape index: {}]
  %s1 = inlined_call_operand.vmem [shape: f32[2,1,64], index: 1, kind: output, shape index: {}]
  %s2 = sld [smem:[#allocation0]]
  $region37: #{deeplabv3plus_forward.17} parent=0
    _
  %s4 = ssub.s32 1, %s2
  %s5 = scalar_select 0, %s4, %s2
  loop: start=0, step=1, limit=4
  $region2: #{deeplabv3plus_forward.17} parent=0 // loop_pre_header
    _
  $region3: #{deeplabv3plus_forward.17} parent=0 // loop_header
    %s7 = sphi 0, %s11
    %p8 = scmp.ge.s32.totalorder %s7, 4
    %s17 = sphi 0, %s19
    %s20 = sphi 0, %s17
    %s21 = sphi 0, %s20
    %s37 = sphi 0, %s21
    %s43 = sphi 0, %s45
    %s46 = sphi 0, %s43
    %s47 = sphi 0, %s46
    %s63 = sphi 0, %s47
  $region4: #{deeplabv3plus_forward.17} parent=0 // loop_header_branch
    %10 = sbr.rel (%p8) target = $region8
  $region5: #{deeplabv3plus_forward.17} parent=0 // loop_body
    %s12 = ssub.s32 %s7, 1
    %s13 = ssub.s32 %s7, 2
    %s14 = sadd.s32 %s7, 1
    %s15 = ssub.s32 %s7, %s14
    %p16 = scmp.eq.s32.totalorder %s15, 0
    %s18 = sadd.s32 %s17, 1
    %s19 = scalar_select %p16, %s17, %s18
    %p22 = pneg %p16
    %p23 = scmp.eq.s32.totalorder %s7, 1
    %p24 = por %p22, %p23
    %p25 = scmp.ne.s32.totalorder %s17, %s20
    %p26 = scmp.eq.s32.totalorder %s7, 0
    %p27 = por %p25, %p26
    %p28 = scmp.ne.s32.totalorder %s17, %s20
    %p29 = scmp.eq.s32.totalorder %s12, 1
    %p30 = por %p28, %p29
    %p31 = scmp.ne.s32.totalorder %s20, %s21
    %p32 = scmp.eq.s32.totalorder %s12, 0
    %p33 = por %p31, %p32
    %p34 = scmp.ne.s32.totalorder %s20, %s21
    %p35 = scmp.eq.s32.totalorder %s13, 1
    %p36 = por %p34, %p35
    %p38 = scmp.ne.s32.totalorder %s21, %s37
    %p39 = scmp.eq.s32.totalorder %s13, 0
    %p40 = por %p38, %p39
    %s41 = ssub.s32 %s7, %s14
    %p42 = scmp.eq.s32.totalorder %s41, 0
    %s44 = sadd.s32 %s43, 1
    %s45 = scalar_select %p42, %s43, %s44
    %p48 = pneg %p42
    %p49 = scmp.eq.s32.totalorder %s7, 1
    %p50 = por %p48, %p49
    %p51 = scmp.ne.s32.totalorder %s43, %s46
    %p52 = scmp.eq.s32.totalorder %s7, 0
    %p53 = por %p51, %p52
    %p54 = scmp.ne.s32.totalorder %s43, %s46
    %p55 = scmp.eq.s32.totalorder %s12, 1
    %p56 = por %p54, %p55
    %p57 = scmp.ne.s32.totalorder %s46, %s47
    %p58 = scmp.eq.s32.totalorder %s12, 0
    %p59 = por %p57, %p58
    %p60 = scmp.ne.s32.totalorder %s46, %s47
    %p61 = scmp.eq.s32.totalorder %s13, 1
    %p62 = por %p60, %p61
    %p64 = scmp.ne.s32.totalorder %s47, %s63
    %p65 = scmp.eq.s32.totalorder %s13, 0
    %p66 = por %p64, %p65
    %p67 = scmp.le.s32.totalorder 1, %s7
    %p68 = scmp.lt.s32.totalorder %s7, 3
    %p69 = pnand %p67, %p68
    %p70 = pneg %p69
    // Predicated region
    $region9: #{deeplabv3plus_forward.17} parent=5 // pred_check
      _
    $region10: #{deeplabv3plus_forward.17} parent=5 // pred_check_branch
      %72 = sbr.rel (%p69) target = $region12
    $region11: #{deeplabv3plus_forward.17} parent=5 // pred_region
      %s73 = ssub.s32 %s7, 1
    $region12: #{deeplabv3plus_forward.17} parent=5 // pred_fallthru
      _
    %p74 = scmp.lt.s32.totalorder %s7, 2
    // Predicated region
    $region13: #{deeplabv3plus_forward.17} parent=5 // pred_check
      %p75 = pneg %p74
    $region14: #{deeplabv3plus_forward.17} parent=5 // pred_check_branch
      %77 = sbr.rel (%p75) target = $region16
    $region15: #{deeplabv3plus_forward.17} parent=5 // pred_region
      // Predicated region
      $region17: #{deeplabv3plus_forward.17} parent=15 // pred_check
        %p78 = pneg %p27
      $region18: #{deeplabv3plus_forward.17} parent=15 // pred_check_branch
        %80 = sbr.rel (%p78) target = $region20
      $region19: #{deeplabv3plus_forward.17} parent=15 // pred_region
        %p81 = scmp.lt.s32.totalorder %s7, 1
        %s82 = scalar_select %p81, %s7, 1
        %s83 = smul.addr %s82, 2
        %s84 = smul.addr %s83, 4
        %s85 = scalar_lea.vmem %s0, %s84
      $region20: #{deeplabv3plus_forward.17} parent=15 // pred_fallthru
        _
    $region16: #{deeplabv3plus_forward.17} parent=5 // pred_fallthru
      _
    %p86 = scmp.le.s32.totalorder 1, %s7
    %p87 = scmp.lt.s32.totalorder %s7, 3
    %p88 = pnand %p86, %p87
    %p89 = pneg %p88
    // Predicated region
    $region21: #{deeplabv3plus_forward.17} parent=5 // pred_check
      _
    $region22: #{deeplabv3plus_forward.17} parent=5 // pred_check_branch
      %91 = sbr.rel (%p88) target = $region24
    $region23: #{deeplabv3plus_forward.17} parent=5 // pred_region
      %s92 = ssub.s32 %s7, 1
      %p93 = scmp.lt.s32.totalorder %s12, 1
      %s94 = scalar_select %p93, %s12, 1
      %s95 = smul.addr %s94, 2
      %s96 = smul.addr %s95, 4
      %s97 = scalar_lea.vmem %s0, %s96
      %p98 = pneg %p33
      %p99 = pneg %p30
      %p100 = pneg %p59
      %p101 = pneg %p56
      %p102 = scmp.lt.s32.totalorder %s12, 1
      %s103 = scalar_select %p102, %s12, 1
      %s104 = scalar_lea.vmem %s1, %s103
      %p105 = scmp.lt.s32.totalorder %s12, 1
      %s106 = scalar_select %p105, %s12, 1
      %s107 = smul.addr %s106, 2
      %s108 = smul.addr %s107, 4
      %s109 = scalar_lea.vmem %s0, %s108
      %p110 = scmp.lt.s32.totalorder %s12, 1
      %s111 = scalar_select %p110, %s12, 1
      %s112 = scalar_lea.vmem %s1, %s111
      %v113 = vld [vmem:[%s109] sm:$0xf]
      %v114 = vld [vmem:[%s109 + $0x4] sm:$0xf]
      %v115 = vunpack.c.l.bf16 %v113
      %v116 = vunpack.c.l.bf16 %v114
      %vm117 = vcmask 523264
      %v118 = vsel %vm117, %v115, 0.0
      %v119 = vsel %vm117, %v116, 0.0
      %v120 = vadd.f32 %v118, %v119
      %v121 = vrot.slane %v120, 4
      %v122 = vadd.f32 %v120, %v121
      %v123 = vrot.slane %v122, 2
      %v124 = vadd.f32 %v122, %v123
      %v125 = vrot.slane %v124, 1
      %v126 = vadd.f32 %v124, %v125
      %v127 = vrcp.pop 16.0
      %v128 = vmul.f32 16.0, %v127
      %v129 = vsub.f32 1.0, %v128
      %v130 = vmul.f32 %v127, %v129
      %v131 = vadd.f32 %v127, %v130
      %vm132 = vweird.f32 %v127
      %v133 = vsel %vm132, %v127, %v131
      %v134 = vmul.f32 %v126, %v133
      %vm135 = vcmask 516096
      %136 = vst.msk [vmem:[%s112] sm:$0x1] %vm135, %v134
      %p137 = scmp.lt.s32.totalorder %s12, 1
      %s138 = scalar_select %p137, %s12, 1
      %s139 = scalar_lea.vmem %s1, %s138
      // Predicated region
      $region25: #{deeplabv3plus_forward.17} parent=23 // pred_check
        %p140 = pneg %p56
      $region26: #{deeplabv3plus_forward.17} parent=23 // pred_check_branch
        %142 = sbr.rel (%p140) target = $region28
      $region27: #{deeplabv3plus_forward.17} parent=23 // pred_region
        _
      $region28: #{deeplabv3plus_forward.17} parent=23 // pred_fallthru
        _
    $region24: #{deeplabv3plus_forward.17} parent=5 // pred_fallthru
      _
    %p143 = scmp.le.s32.totalorder 2, %s7
    // Predicated region
    $region29: #{deeplabv3plus_forward.17} parent=5 // pred_check
      %p144 = pneg %p143
    $region30: #{deeplabv3plus_forward.17} parent=5 // pred_check_branch
      %146 = sbr.rel (%p144) target = $region32
    $region31: #{deeplabv3plus_forward.17} parent=5 // pred_region
      %s147 = ssub.s32 %s7, 2
      // Predicated region
      $region33: #{deeplabv3plus_forward.17} parent=31 // pred_check
        %p148 = pneg %p62
      $region34: #{deeplabv3plus_forward.17} parent=31 // pred_check_branch
        %150 = sbr.rel (%p148) target = $region36
      $region35: #{deeplabv3plus_forward.17} parent=31 // pred_region
        %p151 = scmp.lt.s32.totalorder %s13, 1
        %s152 = scalar_select %p151, %s13, 1
        %s153 = scalar_lea.vmem %s1, %s152
      $region36: #{deeplabv3plus_forward.17} parent=31 // pred_fallthru
        _
    $region32: #{deeplabv3plus_forward.17} parent=5 // pred_fallthru
      _
  $region6: #{deeplabv3plus_forward.17} parent=0 // loop_footer
    %s11 = sadd.s32 1, %s7
  $region7: #{deeplabv3plus_forward.17} parent=0 // loop_footer_branch
    %6 = sbr.rel target = $region3
  $region8: #{deeplabv3plus_forward.17} parent=0 // loop_exit
    _

// kernel: deeplabv3plus_forward.18
$region0: #{deeplabv3plus_forward.18}
  #allocation0 [shape = 'u32[]', space=smem, size = 0x4, offset = 0x4, fixed_abs, tag = 'smem constant byte address 0x4 - core index']
  #allocation1 [shape = 'u32[72,128]{1,0:T(1,128)}', space=vmem, size = 0x9000, scoped, tag = 'internal scratch']
  %s0 = inlined_call_operand.vmem [shape: bf16[16,64], index: 0, kind: input, shape index: {}]
  %s1 = inlined_call_operand.vmem [shape: bf16[64,128], index: 1, kind: input, shape index: {}]
  %s2 = inlined_call_operand.vmem [shape: f32[1,128], index: 2, kind: input, shape index: {}]
  %s3 = inlined_call_operand.vmem [shape: bf16[16,128], index: 3, kind: output, shape index: {}]
  %s4 = sld [smem:[#allocation0]]
  $region22: #{deeplabv3plus_forward.18} parent=0
    _
  %s6 = ssub.s32 1, %s4
  %s7 = scalar_select 0, %s6, %s4
  // Predicated region
  $region2: #{deeplabv3plus_forward.18} parent=0 // pred_check
    _
  $region3: #{deeplabv3plus_forward.18} parent=0 // pred_check_branch
    %9 = sbr.rel (0) target = $region5
  $region4: #{deeplabv3plus_forward.18} parent=0 // pred_region
    _
  $region5: #{deeplabv3plus_forward.18} parent=0 // pred_fallthru
    _
  // Predicated region
  $region6: #{deeplabv3plus_forward.18} parent=0 // pred_check
    _
  $region7: #{deeplabv3plus_forward.18} parent=0 // pred_check_branch
    %11 = sbr.rel (0) target = $region9
  $region8: #{deeplabv3plus_forward.18} parent=0 // pred_region
    _
  $region9: #{deeplabv3plus_forward.18} parent=0 // pred_fallthru
    _
  // Predicated region
  $region10: #{deeplabv3plus_forward.18} parent=0 // pred_check
    _
  $region11: #{deeplabv3plus_forward.18} parent=0 // pred_check_branch
    %13 = sbr.rel (0) target = $region13
  $region12: #{deeplabv3plus_forward.18} parent=0 // pred_region
    _
  $region13: #{deeplabv3plus_forward.18} parent=0 // pred_fallthru
    _
  %v15 = vld [vmem:[%s0] sm:$0xf]
  %v16 = vld [vmem:[%s0 + $0x4] sm:$0xf]
  %v17 = vld [vmem:[%s1] sm:$0xf]
  %v18 = vld [vmem:[%s1 + $0x4] sm:$0xf]
  %v19 = vld [vmem:[%s1 + $0x8] sm:$0xf]
  %v20 = vld [vmem:[%s1 + $0xc] sm:$0xf]
  %v21 = vld [vmem:[%s1 + $0x10] sm:$0xf]
  %v22 = vld [vmem:[%s1 + $0x14] sm:$0xf]
  %v23 = vld [vmem:[%s1 + $0x18] sm:$0xf]
  %v24 = vld [vmem:[%s1 + $0x1c] sm:$0xf]
  %v25 = vld [vmem:[%s2] sm:$0x1]
  %v27 = vperm.slane %v25, 0
  %v31 = vunpack.c.l.b16 %v15
  %v32 = vunpack.c.l.b16 %v16
  %v33 = vpack.c.b16 %v32, %v31
  %v42 = vunpack.c.l.b16 %v17
  %v43 = vunpack.c.l.b16 %v18
  %v44 = vunpack.c.l.b16 %v19
  %v45 = vunpack.c.l.b16 %v20
  %v46 = vunpack.c.l.b16 %v21
  %v47 = vunpack.c.l.b16 %v22
  %v48 = vunpack.c.l.b16 %v23
  %v49 = vunpack.c.l.b16 %v24
  %v50 = vpack.c.b16 %v43, %v42
  %v51 = vpack.c.b16 %v45, %v44
  %v52 = vpack.c.b16 %v47, %v46
  %v53 = vpack.c.b16 %v49, %v48
  %vm58 = vcmask 523264
  %v60 = vsel %vm58, %v33, 0
  %62 = vmatpush.bf16.msra.mxu0 0
  %63 = vmatpush.bf16.msra.mxu0 0
  %64 = vmatpush.bf16.msra.mxu0 0
  %65 = vmatpush.bf16.msra.mxu0 0
  %66 = vmatpush.bf16.msra.mxu0 %v53
  %67 = vmatpush.bf16.msra.mxu0 %v52
  %68 = vmatpush.bf16.msra.mxu0 %v51
  %69 = vmatpush.bf16.msra.mxu0 %v50
  %70 = vmatmul.bf16.gmra.mxu0 %v60
  %v71 = vpop.f32.mrf.mxu0
  %v72 = vadd.f32 %v27, %v71
  %v73 = vpop.f32.mrf.mxu0
  %v74 = vadd.f32 %v27, %v73
  %75 = vdwg.mxu0
  %v76 = vmax.f32 %v72, 0.0
  %v77 = vmax.f32 %v74, 0.0
  %v78 = vpack.c.bf16 %v76, %v76
  %v79 = vpack.c.bf16 %v77, %v77
  %80 = vst [vmem:[%s3] sm:$0xf] %v78
  %81 = vst [vmem:[%s3 + $0x4] sm:$0xf] %v79
  // Predicated region
  $region14: #{deeplabv3plus_forward.18} parent=0 // pred_check
    _
  $region15: #{deeplabv3plus_forward.18} parent=0 // pred_check_branch
    %83 = sbr.rel (0) target = $region17
  $region16: #{deeplabv3plus_forward.18} parent=0 // pred_region
    _
  $region17: #{deeplabv3plus_forward.18} parent=0 // pred_fallthru
    _
  // Predicated region
  $region18: #{deeplabv3plus_forward.18} parent=0 // pred_check
    _
  $region19: #{deeplabv3plus_forward.18} parent=0 // pred_check_branch
    %85 = sbr.rel (0) target = $region21
  $region20: #{deeplabv3plus_forward.18} parent=0 // pred_region
    _
  $region21: #{deeplabv3plus_forward.18} parent=0 // pred_fallthru
    _

// kernel: deeplabv3plus_forward.19
$region0: #{deeplabv3plus_forward.19}
  #allocation0 [shape = 'u32[]', space=smem, size = 0x4, offset = 0x4, fixed_abs, tag = 'smem constant byte address 0x4 - core index']
  #allocation1 [shape = 'u32[72,128]{1,0:T(1,128)}', space=vmem, size = 0x9000, scoped, tag = 'internal scratch']
  %s0 = inlined_call_operand.vmem [shape: bf16[32,320], index: 0, kind: input, shape index: {}]
  %s1 = inlined_call_operand.vmem [shape: bf16[320,128], index: 1, kind: input, shape index: {}]
  %s2 = inlined_call_operand.vmem [shape: f32[1,128], index: 2, kind: input, shape index: {}]
  %s3 = inlined_call_operand.vmem [shape: bf16[32,128], index: 3, kind: output, shape index: {}]
  %s4 = sld [smem:[#allocation0]]
  $region22: #{deeplabv3plus_forward.19} parent=0
    _
  %s6 = ssub.s32 1, %s4
  %s7 = scalar_select 0, %s6, %s4
  // Predicated region
  $region2: #{deeplabv3plus_forward.19} parent=0 // pred_check
    _
  $region3: #{deeplabv3plus_forward.19} parent=0 // pred_check_branch
    %9 = sbr.rel (0) target = $region5
  $region4: #{deeplabv3plus_forward.19} parent=0 // pred_region
    _
  $region5: #{deeplabv3plus_forward.19} parent=0 // pred_fallthru
    _
  // Predicated region
  $region6: #{deeplabv3plus_forward.19} parent=0 // pred_check
    _
  $region7: #{deeplabv3plus_forward.19} parent=0 // pred_check_branch
    %11 = sbr.rel (0) target = $region9
  $region8: #{deeplabv3plus_forward.19} parent=0 // pred_region
    _
  $region9: #{deeplabv3plus_forward.19} parent=0 // pred_fallthru
    _
  // Predicated region
  $region10: #{deeplabv3plus_forward.19} parent=0 // pred_check
    _
  $region11: #{deeplabv3plus_forward.19} parent=0 // pred_check_branch
    %13 = sbr.rel (0) target = $region13
  $region12: #{deeplabv3plus_forward.19} parent=0 // pred_region
    _
  $region13: #{deeplabv3plus_forward.19} parent=0 // pred_fallthru
    _
  %v15 = vld [vmem:[%s0] sm:$0xff]
  %v16 = vld [vmem:[%s0 + $0x8] sm:$0xf]
  %v17 = vld [vmem:[%s0 + $0xc] sm:$0xff]
  %v18 = vld [vmem:[%s0 + $0x14] sm:$0xf]
  %v19 = vld [vmem:[%s0 + $0x18] sm:$0xff]
  %v20 = vld [vmem:[%s0 + $0x20] sm:$0xf]
  %v21 = vld [vmem:[%s0 + $0x24] sm:$0xff]
  %v22 = vld [vmem:[%s0 + $0x2c] sm:$0xf]
  %v23 = vld [vmem:[%s1] sm:$0xf]
  %v24 = vld [vmem:[%s1 + $0x4] sm:$0xf]
  %v25 = vld [vmem:[%s1 + $0x8] sm:$0xf]
  %v26 = vld [vmem:[%s1 + $0xc] sm:$0xf]
  %v27 = vld [vmem:[%s1 + $0x10] sm:$0xf]
  %v28 = vld [vmem:[%s1 + $0x14] sm:$0xf]
  %v29 = vld [vmem:[%s1 + $0x18] sm:$0xf]
  %v30 = vld [vmem:[%s1 + $0x1c] sm:$0xf]
  %v31 = vld [vmem:[%s1 + $0x20] sm:$0xf]
  %v32 = vld [vmem:[%s1 + $0x24] sm:$0xf]
  %v33 = vld [vmem:[%s1 + $0x28] sm:$0xf]
  %v34 = vld [vmem:[%s1 + $0x2c] sm:$0xf]
  %v35 = vld [vmem:[%s1 + $0x30] sm:$0xf]
  %v36 = vld [vmem:[%s1 + $0x34] sm:$0xf]
  %v37 = vld [vmem:[%s1 + $0x38] sm:$0xf]
  %v38 = vld [vmem:[%s1 + $0x3c] sm:$0xf]
  %v39 = vld [vmem:[%s1 + $0x40] sm:$0xf]
  %v40 = vld [vmem:[%s1 + $0x44] sm:$0xf]
  %v41 = vld [vmem:[%s1 + $0x48] sm:$0xf]
  %v42 = vld [vmem:[%s1 + $0x4c] sm:$0xf]
  %v43 = vld [vmem:[%s1 + $0x50] sm:$0xf]
  %v44 = vld [vmem:[%s1 + $0x54] sm:$0xf]
  %v45 = vld [vmem:[%s1 + $0x58] sm:$0xf]
  %v46 = vld [vmem:[%s1 + $0x5c] sm:$0xf]
  %v47 = vld [vmem:[%s1 + $0x60] sm:$0xf]
  %v48 = vld [vmem:[%s1 + $0x64] sm:$0xf]
  %v49 = vld [vmem:[%s1 + $0x68] sm:$0xf]
  %v50 = vld [vmem:[%s1 + $0x6c] sm:$0xf]
  %v51 = vld [vmem:[%s1 + $0x70] sm:$0xf]
  %v52 = vld [vmem:[%s1 + $0x74] sm:$0xf]
  %v53 = vld [vmem:[%s1 + $0x78] sm:$0xf]
  %v54 = vld [vmem:[%s1 + $0x7c] sm:$0xf]
  %v55 = vld [vmem:[%s1 + $0x80] sm:$0xf]
  %v56 = vld [vmem:[%s1 + $0x84] sm:$0xf]
  %v57 = vld [vmem:[%s1 + $0x88] sm:$0xf]
  %v58 = vld [vmem:[%s1 + $0x8c] sm:$0xf]
  %v59 = vld [vmem:[%s1 + $0x90] sm:$0xf]
  %v60 = vld [vmem:[%s1 + $0x94] sm:$0xf]
  %v61 = vld [vmem:[%s1 + $0x98] sm:$0xf]
  %v62 = vld [vmem:[%s1 + $0x9c] sm:$0xf]
  %v63 = vld [vmem:[%s2] sm:$0x1]
  %v65 = vperm.slane %v63, 0
  %v75 = vunpack.c.l.b16 %v15
  %v76 = vunpack.c.h.b16 %v15
  %v77 = vunpack.c.l.b16 %v16
  %v78 = vunpack.c.l.b16 %v17
  %v79 = vunpack.c.h.b16 %v17
  %v80 = vunpack.c.l.b16 %v18
  %v81 = vunpack.c.l.b16 %v19
  %v82 = vunpack.c.h.b16 %v19
  %v83 = vunpack.c.l.b16 %v20
  %v84 = vunpack.c.l.b16 %v21
  %v85 = vunpack.c.h.b16 %v21
  %v86 = vunpack.c.l.b16 %v22
  %v87 = vpack.c.b16 %v78, %v75
  %v88 = vpack.c.b16 %v79, %v76
  %v89 = vpack.c.b16 %v80, %v77
  %v90 = vpack.c.b16 %v84, %v81
  %v91 = vpack.c.b16 %v85, %v82
  %v92 = vpack.c.b16 %v86, %v83
  %v137 = vunpack.c.l.b16 %v23
  %v138 = vunpack.c.l.b16 %v24
  %v139 = vunpack.c.l.b16 %v25
  %v140 = vunpack.c.l.b16 %v26
  %v141 = vunpack.c.l.b16 %v27
  %v142 = vunpack.c.l.b16 %v28
  %v143 = vunpack.c.l.b16 %v29
  %v144 = vunpack.c.l.b16 %v30
  %v145 = vunpack.c.l.b16 %v31
  %v146 = vunpack.c.l.b16 %v32
  %v147 = vunpack.c.l.b16 %v33
  %v148 = vunpack.c.l.b16 %v34
  %v149 = vunpack.c.l.b16 %v35
  %v150 = vunpack.c.l.b16 %v36
  %v151 = vunpack.c.l.b16 %v37
  %v152 = vunpack.c.l.b16 %v38
  %v153 = vunpack.c.l.b16 %v39
  %v154 = vunpack.c.l.b16 %v40
  %v155 = vunpack.c.l.b16 %v41
  %v156 = vunpack.c.l.b16 %v42
  %v157 = vunpack.c.l.b16 %v43
  %v158 = vunpack.c.l.b16 %v44
  %v159 = vunpack.c.l.b16 %v45
  %v160 = vunpack.c.l.b16 %v46
  %v161 = vunpack.c.l.b16 %v47
  %v162 = vunpack.c.l.b16 %v48
  %v163 = vunpack.c.l.b16 %v49
  %v164 = vunpack.c.l.b16 %v50
  %v165 = vunpack.c.l.b16 %v51
  %v166 = vunpack.c.l.b16 %v52
  %v167 = vunpack.c.l.b16 %v53
  %v168 = vunpack.c.l.b16 %v54
  %v169 = vunpack.c.l.b16 %v55
  %v170 = vunpack.c.l.b16 %v56
  %v171 = vunpack.c.l.b16 %v57
  %v172 = vunpack.c.l.b16 %v58
  %v173 = vunpack.c.l.b16 %v59
  %v174 = vunpack.c.l.b16 %v60
  %v175 = vunpack.c.l.b16 %v61
  %v176 = vunpack.c.l.b16 %v62
  %v177 = vpack.c.b16 %v138, %v137
  %v178 = vpack.c.b16 %v140, %v139
  %v179 = vpack.c.b16 %v142, %v141
  %v180 = vpack.c.b16 %v144, %v143
  %v181 = vpack.c.b16 %v146, %v145
  %v182 = vpack.c.b16 %v148, %v147
  %v183 = vpack.c.b16 %v150, %v149
  %v184 = vpack.c.b16 %v152, %v151
  %v185 = vpack.c.b16 %v154, %v153
  %v186 = vpack.c.b16 %v156, %v155
  %v187 = vpack.c.b16 %v158, %v157
  %v188 = vpack.c.b16 %v160, %v159
  %v189 = vpack.c.b16 %v162, %v161
  %v190 = vpack.c.b16 %v164, %v163
  %v191 = vpack.c.b16 %v166, %v165
  %v192 = vpack.c.b16 %v168, %v167
  %v193 = vpack.c.b16 %v170, %v169
  %v194 = vpack.c.b16 %v172, %v171
  %v195 = vpack.c.b16 %v174, %v173
  %v196 = vpack.c.b16 %v176, %v175
  %vm217 = vcmask 523264
  %v219 = vsel %vm217, %v89, 0
  %v222 = vsel %vm217, %v92, 0
  %224 = vmatpush.bf16.msra.mxu0 %v184
  %225 = vmatpush.bf16.msra.mxu0 %v183
  %226 = vmatpush.bf16.msra.mxu0 %v182
  %227 = vmatpush.bf16.msra.mxu0 %v181
  %228 = vmatpush.bf16.msra.mxu0 %v180
  %229 = vmatpush.bf16.msra.mxu0 %v179
  %230 = vmatpush.bf16.msra.mxu0 %v178
  %231 = vmatpush.bf16.msra.mxu0 %v177
  %232 = vmatmul.bf16.gmra.mxu0 %v87
  %v233 = vpop.f32.mrf.mxu0
  %v234 = vadd.f32 %v65, %v233
  %v235 = vpop.f32.mrf.mxu0
  %v236 = vadd.f32 %v65, %v235
  %237 = vmatmul.bf16.gmra.mxu0 %v90
  %v238 = vpop.f32.mrf.mxu0
  %v239 = vadd.f32 %v65, %v238
  %v240 = vpop.f32.mrf.mxu0
  %v241 = vadd.f32 %v65, %v240
  %242 = vdwg.mxu0
  %243 = vmatpush.bf16.msra.mxu0 %v192
  %244 = vmatpush.bf16.msra.mxu0 %v191
  %245 = vmatpush.bf16.msra.mxu0 %v190
  %246 = vmatpush.bf16.msra.mxu0 %v189
  %247 = vmatpush.bf16.msra.mxu0 %v188
  %248 = vmatpush.bf16.msra.mxu0 %v187
  %249 = vmatpush.bf16.msra.mxu0 %v186
  %250 = vmatpush.bf16.msra.mxu0 %v185
  %251 = vmatmul.bf16.gmra.mxu0 %v88
  %v252 = vpop.f32.mrf.mxu0
  %v253 = vadd.f32 %v234, %v252
  %v254 = vpop.f32.mrf.mxu0
  %v255 = vadd.f32 %v236, %v254
  %256 = vmatmul.bf16.gmra.mxu0 %v91
  %v257 = vpop.f32.mrf.mxu0
  %v258 = vadd.f32 %v239, %v257
  %v259 = vpop.f32.mrf.mxu0
  %v260 = vadd.f32 %v241, %v259
  %261 = vdwg.mxu0
  %262 = vmatpush.bf16.msra.mxu0 0
  %263 = vmatpush.bf16.msra.mxu0 0
  %264 = vmatpush.bf16.msra.mxu0 0
  %265 = vmatpush.bf16.msra.mxu0 0
  %266 = vmatpush.bf16.msra.mxu0 %v196
  %267 = vmatpush.bf16.msra.mxu0 %v195
  %268 = vmatpush.bf16.msra.mxu0 %v194
  %269 = vmatpush.bf16.msra.mxu0 %v193
  %270 = vmatmul.bf16.gmra.mxu0 %v219
  %v271 = vpop.f32.mrf.mxu0
  %v272 = vadd.f32 %v253, %v271
  %v273 = vpop.f32.mrf.mxu0
  %v274 = vadd.f32 %v255, %v273
  %275 = vmatmul.bf16.gmra.mxu0 %v222
  %v276 = vpop.f32.mrf.mxu0
  %v277 = vadd.f32 %v258, %v276
  %v278 = vpop.f32.mrf.mxu0
  %v279 = vadd.f32 %v260, %v278
  %280 = vdwg.mxu0
  %v281 = vmax.f32 %v272, 0.0
  %v282 = vmax.f32 %v274, 0.0
  %v283 = vmax.f32 %v277, 0.0
  %v284 = vmax.f32 %v279, 0.0
  %v285 = vpack.c.bf16 %v281, %v281
  %v286 = vpack.c.bf16 %v282, %v282
  %v287 = vpack.c.bf16 %v283, %v283
  %v288 = vpack.c.bf16 %v284, %v284
  %289 = vst [vmem:[%s3] sm:$0xf] %v285
  %290 = vst [vmem:[%s3 + $0x4] sm:$0xf] %v286
  %291 = vst [vmem:[%s3 + $0x8] sm:$0xf] %v287
  %292 = vst [vmem:[%s3 + $0xc] sm:$0xf] %v288
  // Predicated region
  $region14: #{deeplabv3plus_forward.19} parent=0 // pred_check
    _
  $region15: #{deeplabv3plus_forward.19} parent=0 // pred_check_branch
    %294 = sbr.rel (0) target = $region17
  $region16: #{deeplabv3plus_forward.19} parent=0 // pred_region
    _
  $region17: #{deeplabv3plus_forward.19} parent=0 // pred_fallthru
    _
  // Predicated region
  $region18: #{deeplabv3plus_forward.19} parent=0 // pred_check
    _
  $region19: #{deeplabv3plus_forward.19} parent=0 // pred_check_branch
    %296 = sbr.rel (0) target = $region21
  $region20: #{deeplabv3plus_forward.19} parent=0 // pred_region
    _
  $region21: #{deeplabv3plus_forward.19} parent=0 // pred_fallthru
    _

// kernel: deeplabv3plus_forward.16
$region0: #{deeplabv3plus_forward.16}
  #allocation0 [shape = 'u32[]', space=smem, size = 0x4, offset = 0x4, fixed_abs, tag = 'smem constant byte address 0x4 - core index']
  #allocation1 [shape = 'u32[72,128]{1,0:T(1,128)}', space=vmem, size = 0x9000, scoped, tag = 'internal scratch']
  %s0 = inlined_call_operand.vmem [shape: bf16[32,64], index: 0, kind: input, shape index: {}]
  %s1 = inlined_call_operand.vmem [shape: bf16[64,256], index: 1, kind: input, shape index: {}]
  %s2 = inlined_call_operand.vmem [shape: f32[1,256], index: 2, kind: input, shape index: {}]
  %s3 = inlined_call_operand.vmem [shape: bf16[32,256], index: 3, kind: output, shape index: {}]
  %s4 = sld [smem:[#allocation0]]
  $region22: #{deeplabv3plus_forward.16} parent=0
    _
  %s6 = ssub.s32 1, %s4
  %s7 = scalar_select 0, %s6, %s4
  // Predicated region
  $region2: #{deeplabv3plus_forward.16} parent=0 // pred_check
    _
  $region3: #{deeplabv3plus_forward.16} parent=0 // pred_check_branch
    %9 = sbr.rel (0) target = $region5
  $region4: #{deeplabv3plus_forward.16} parent=0 // pred_region
    _
  $region5: #{deeplabv3plus_forward.16} parent=0 // pred_fallthru
    _
  // Predicated region
  $region6: #{deeplabv3plus_forward.16} parent=0 // pred_check
    _
  $region7: #{deeplabv3plus_forward.16} parent=0 // pred_check_branch
    %11 = sbr.rel (0) target = $region9
  $region8: #{deeplabv3plus_forward.16} parent=0 // pred_region
    _
  $region9: #{deeplabv3plus_forward.16} parent=0 // pred_fallthru
    _
  // Predicated region
  $region10: #{deeplabv3plus_forward.16} parent=0 // pred_check
    _
  $region11: #{deeplabv3plus_forward.16} parent=0 // pred_check_branch
    %13 = sbr.rel (0) target = $region13
  $region12: #{deeplabv3plus_forward.16} parent=0 // pred_region
    _
  $region13: #{deeplabv3plus_forward.16} parent=0 // pred_fallthru
    _
  %v15 = vld [vmem:[%s0] sm:$0xf]
  %v16 = vld [vmem:[%s0 + $0x4] sm:$0xf]
  %v17 = vld [vmem:[%s0 + $0x8] sm:$0xf]
  %v18 = vld [vmem:[%s0 + $0xc] sm:$0xf]
  %v19 = vld [vmem:[%s1] sm:$0xff]
  %v20 = vld [vmem:[%s1 + $0x8] sm:$0xff]
  %v21 = vld [vmem:[%s1 + $0x10] sm:$0xff]
  %v22 = vld [vmem:[%s1 + $0x18] sm:$0xff]
  %v23 = vld [vmem:[%s1 + $0x20] sm:$0xff]
  %v24 = vld [vmem:[%s1 + $0x28] sm:$0xff]
  %v25 = vld [vmem:[%s1 + $0x30] sm:$0xff]
  %v26 = vld [vmem:[%s1 + $0x38] sm:$0xff]
  %v27 = vld [vmem:[%s2] sm:$0x3]
  %v29 = vperm.slane %v27, 0
  %v30 = vperm.slane %v27, 1
  %v37 = vunpack.c.l.b16 %v15
  %v38 = vunpack.c.l.b16 %v16
  %v39 = vunpack.c.l.b16 %v17
  %v40 = vunpack.c.l.b16 %v18
  %v41 = vpack.c.b16 %v38, %v37
  %v42 = vpack.c.b16 %v40, %v39
  %v51 = vunpack.c.l.b16 %v19
  %v52 = vunpack.c.h.b16 %v19
  %v53 = vunpack.c.l.b16 %v20
  %v54 = vunpack.c.h.b16 %v20
  %v55 = vunpack.c.l.b16 %v21
  %v56 = vunpack.c.h.b16 %v21
  %v57 = vunpack.c.l.b16 %v22
  %v58 = vunpack.c.h.b16 %v22
  %v59 = vunpack.c.l.b16 %v23
  %v60 = vunpack.c.h.b16 %v23
  %v61 = vunpack.c.l.b16 %v24
  %v62 = vunpack.c.h.b16 %v24
  %v63 = vunpack.c.l.b16 %v25
  %v64 = vunpack.c.h.b16 %v25
  %v65 = vunpack.c.l.b16 %v26
  %v66 = vunpack.c.h.b16 %v26
  %v67 = vpack.c.b16 %v53, %v51
  %v68 = vpack.c.b16 %v54, %v52
  %v69 = vpack.c.b16 %v57, %v55
  %v70 = vpack.c.b16 %v58, %v56
  %v71 = vpack.c.b16 %v61, %v59
  %v72 = vpack.c.b16 %v62, %v60
  %v73 = vpack.c.b16 %v65, %v63
  %v74 = vpack.c.b16 %v66, %v64
  %vm83 = vcmask 523264
  %v85 = vsel %vm83, %v41, 0
  %v88 = vsel %vm83, %v42, 0
  %90 = vmatpush.bf16.msra.mxu0 0
  %91 = vmatpush.bf16.msra.mxu0 0
  %92 = vmatpush.bf16.msra.mxu0 0
  %93 = vmatpush.bf16.msra.mxu0 0
  %94 = vmatpush.bf16.msra.mxu0 %v73
  %95 = vmatpush.bf16.msra.mxu0 %v71
  %96 = vmatpush.bf16.msra.mxu0 %v69
  %97 = vmatpush.bf16.msra.mxu0 %v67
  %98 = vmatmul.bf16.gmra.mxu0 %v85
  %v99 = vpop.f32.mrf.mxu0
  %v100 = vadd.f32 %v29, %v99
  %v101 = vpop.f32.mrf.mxu0
  %v102 = vadd.f32 %v29, %v101
  %103 = vmatmul.bf16.gmra.mxu0 %v88
  %v104 = vpop.f32.mrf.mxu0
  %v105 = vadd.f32 %v29, %v104
  %v106 = vpop.f32.mrf.mxu0
  %v107 = vadd.f32 %v29, %v106
  %108 = vdwg.mxu0
  %109 = vmatpush.bf16.msra.mxu0 0
  %110 = vmatpush.bf16.msra.mxu0 0
  %111 = vmatpush.bf16.msra.mxu0 0
  %112 = vmatpush.bf16.msra.mxu0 0
  %113 = vmatpush.bf16.msra.mxu0 %v74
  %114 = vmatpush.bf16.msra.mxu0 %v72
  %115 = vmatpush.bf16.msra.mxu0 %v70
  %116 = vmatpush.bf16.msra.mxu0 %v68
  %117 = vmatmul.bf16.gmra.mxu0 %v85
  %v118 = vpop.f32.mrf.mxu0
  %v119 = vadd.f32 %v30, %v118
  %v120 = vpop.f32.mrf.mxu0
  %v121 = vadd.f32 %v30, %v120
  %122 = vmatmul.bf16.gmra.mxu0 %v88
  %v123 = vpop.f32.mrf.mxu0
  %v124 = vadd.f32 %v30, %v123
  %v125 = vpop.f32.mrf.mxu0
  %v126 = vadd.f32 %v30, %v125
  %127 = vdwg.mxu0
  %v128 = vmax.f32 %v100, 0.0
  %v129 = vmax.f32 %v119, 0.0
  %v130 = vmax.f32 %v102, 0.0
  %v131 = vmax.f32 %v121, 0.0
  %v132 = vmax.f32 %v105, 0.0
  %v133 = vmax.f32 %v124, 0.0
  %v134 = vmax.f32 %v107, 0.0
  %v135 = vmax.f32 %v126, 0.0
  %v136 = vpack.c.bf16 %v129, %v128
  %v137 = vpack.c.bf16 %v131, %v130
  %v138 = vpack.c.bf16 %v133, %v132
  %v139 = vpack.c.bf16 %v135, %v134
  %140 = vst [vmem:[%s3] sm:$0xff] %v136
  %141 = vst [vmem:[%s3 + $0x8] sm:$0xff] %v137
  %142 = vst [vmem:[%s3 + $0x10] sm:$0xff] %v138
  %143 = vst [vmem:[%s3 + $0x18] sm:$0xff] %v139
  // Predicated region
  $region14: #{deeplabv3plus_forward.16} parent=0 // pred_check
    _
  $region15: #{deeplabv3plus_forward.16} parent=0 // pred_check_branch
    %145 = sbr.rel (0) target = $region17
  $region16: #{deeplabv3plus_forward.16} parent=0 // pred_region
    _
  $region17: #{deeplabv3plus_forward.16} parent=0 // pred_fallthru
    _
  // Predicated region
  $region18: #{deeplabv3plus_forward.16} parent=0 // pred_check
    _
  $region19: #{deeplabv3plus_forward.16} parent=0 // pred_check_branch
    %147 = sbr.rel (0) target = $region21
  $region20: #{deeplabv3plus_forward.16} parent=0 // pred_region
    _
  $region21: #{deeplabv3plus_forward.16} parent=0 // pred_fallthru
    _

// kernel: deeplabv3plus_forward.20
$region0: #{deeplabv3plus_forward.20}
  #allocation0 [shape = 'u32[]', space=smem, size = 0x4, offset = 0x4, fixed_abs, tag = 'smem constant byte address 0x4 - core index']
  #allocation1 [shape = 'u32[72,128]{1,0:T(1,128)}', space=vmem, size = 0x9000, scoped, tag = 'internal scratch']
  %s0 = inlined_call_operand.vmem [shape: bf16[32,576], index: 0, kind: input, shape index: {}]
  %s1 = inlined_call_operand.vmem [shape: bf16[576,128], index: 1, kind: input, shape index: {}]
  %s2 = inlined_call_operand.vmem [shape: f32[1,128], index: 2, kind: input, shape index: {}]
  %s3 = inlined_call_operand.vmem [shape: bf16[32,128], index: 3, kind: output, shape index: {}]
  %s4 = sld [smem:[#allocation0]]
  $region22: #{deeplabv3plus_forward.20} parent=0
    _
  %s6 = ssub.s32 1, %s4
  %s7 = scalar_select 0, %s6, %s4
  // Predicated region
  $region2: #{deeplabv3plus_forward.20} parent=0 // pred_check
    _
  $region3: #{deeplabv3plus_forward.20} parent=0 // pred_check_branch
    %9 = sbr.rel (0) target = $region5
  $region4: #{deeplabv3plus_forward.20} parent=0 // pred_region
    _
  $region5: #{deeplabv3plus_forward.20} parent=0 // pred_fallthru
    _
  // Predicated region
  $region6: #{deeplabv3plus_forward.20} parent=0 // pred_check
    _
  $region7: #{deeplabv3plus_forward.20} parent=0 // pred_check_branch
    %11 = sbr.rel (0) target = $region9
  $region8: #{deeplabv3plus_forward.20} parent=0 // pred_region
    _
  $region9: #{deeplabv3plus_forward.20} parent=0 // pred_fallthru
    _
  // Predicated region
  $region10: #{deeplabv3plus_forward.20} parent=0 // pred_check
    _
  $region11: #{deeplabv3plus_forward.20} parent=0 // pred_check_branch
    %13 = sbr.rel (0) target = $region13
  $region12: #{deeplabv3plus_forward.20} parent=0 // pred_region
    _
  $region13: #{deeplabv3plus_forward.20} parent=0 // pred_fallthru
    _
  %v15 = vld [vmem:[%s0] sm:$0xff]
  %v16 = vld [vmem:[%s0 + $0x8] sm:$0xff]
  %v17 = vld [vmem:[%s0 + $0x10] sm:$0xf]
  %v18 = vld [vmem:[%s0 + $0x14] sm:$0xff]
  %v19 = vld [vmem:[%s0 + $0x1c] sm:$0xff]
  %v20 = vld [vmem:[%s0 + $0x24] sm:$0xf]
  %v21 = vld [vmem:[%s0 + $0x28] sm:$0xff]
  %v22 = vld [vmem:[%s0 + $0x30] sm:$0xff]
  %v23 = vld [vmem:[%s0 + $0x38] sm:$0xf]
  %v24 = vld [vmem:[%s0 + $0x3c] sm:$0xff]
  %v25 = vld [vmem:[%s0 + $0x44] sm:$0xff]
  %v26 = vld [vmem:[%s0 + $0x4c] sm:$0xf]
  %v27 = vld [vmem:[%s1] sm:$0xf]
  %v28 = vld [vmem:[%s1 + $0x4] sm:$0xf]
  %v29 = vld [vmem:[%s1 + $0x8] sm:$0xf]
  %v30 = vld [vmem:[%s1 + $0xc] sm:$0xf]
  %v31 = vld [vmem:[%s1 + $0x10] sm:$0xf]
  %v32 = vld [vmem:[%s1 + $0x14] sm:$0xf]
  %v33 = vld [vmem:[%s1 + $0x18] sm:$0xf]
  %v34 = vld [vmem:[%s1 + $0x1c] sm:$0xf]
  %v35 = vld [vmem:[%s1 + $0x20] sm:$0xf]
  %v36 = vld [vmem:[%s1 + $0x24] sm:$0xf]
  %v37 = vld [vmem:[%s1 + $0x28] sm:$0xf]
  %v38 = vld [vmem:[%s1 + $0x2c] sm:$0xf]
  %v39 = vld [vmem:[%s1 + $0x30] sm:$0xf]
  %v40 = vld [vmem:[%s1 + $0x34] sm:$0xf]
  %v41 = vld [vmem:[%s1 + $0x38] sm:$0xf]
  %v42 = vld [vmem:[%s1 + $0x3c] sm:$0xf]
  %v43 = vld [vmem:[%s1 + $0x40] sm:$0xf]
  %v44 = vld [vmem:[%s1 + $0x44] sm:$0xf]
  %v45 = vld [vmem:[%s1 + $0x48] sm:$0xf]
  %v46 = vld [vmem:[%s1 + $0x4c] sm:$0xf]
  %v47 = vld [vmem:[%s1 + $0x50] sm:$0xf]
  %v48 = vld [vmem:[%s1 + $0x54] sm:$0xf]
  %v49 = vld [vmem:[%s1 + $0x58] sm:$0xf]
  %v50 = vld [vmem:[%s1 + $0x5c] sm:$0xf]
  %v51 = vld [vmem:[%s1 + $0x60] sm:$0xf]
  %v52 = vld [vmem:[%s1 + $0x64] sm:$0xf]
  %v53 = vld [vmem:[%s1 + $0x68] sm:$0xf]
  %v54 = vld [vmem:[%s1 + $0x6c] sm:$0xf]
  %v55 = vld [vmem:[%s1 + $0x70] sm:$0xf]
  %v56 = vld [vmem:[%s1 + $0x74] sm:$0xf]
  %v57 = vld [vmem:[%s1 + $0x78] sm:$0xf]
  %v58 = vld [vmem:[%s1 + $0x7c] sm:$0xf]
  %v59 = vld [vmem:[%s1 + $0x80] sm:$0xf]
  %v60 = vld [vmem:[%s1 + $0x84] sm:$0xf]
  %v61 = vld [vmem:[%s1 + $0x88] sm:$0xf]
  %v62 = vld [vmem:[%s1 + $0x8c] sm:$0xf]
  %v63 = vld [vmem:[%s1 + $0x90] sm:$0xf]
  %v64 = vld [vmem:[%s1 + $0x94] sm:$0xf]
  %v65 = vld [vmem:[%s1 + $0x98] sm:$0xf]
  %v66 = vld [vmem:[%s1 + $0x9c] sm:$0xf]
  %v67 = vld [vmem:[%s1 + $0xa0] sm:$0xf]
  %v68 = vld [vmem:[%s1 + $0xa4] sm:$0xf]
  %v69 = vld [vmem:[%s1 + $0xa8] sm:$0xf]
  %v70 = vld [vmem:[%s1 + $0xac] sm:$0xf]
  %v71 = vld [vmem:[%s1 + $0xb0] sm:$0xf]
  %v72 = vld [vmem:[%s1 + $0xb4] sm:$0xf]
  %v73 = vld [vmem:[%s1 + $0xb8] sm:$0xf]
  %v74 = vld [vmem:[%s1 + $0xbc] sm:$0xf]
  %v75 = vld [vmem:[%s1 + $0xc0] sm:$0xf]
  %v76 = vld [vmem:[%s1 + $0xc4] sm:$0xf]
  %v77 = vld [vmem:[%s1 + $0xc8] sm:$0xf]
  %v78 = vld [vmem:[%s1 + $0xcc] sm:$0xf]
  %v79 = vld [vmem:[%s1 + $0xd0] sm:$0xf]
  %v80 = vld [vmem:[%s1 + $0xd4] sm:$0xf]
  %v81 = vld [vmem:[%s1 + $0xd8] sm:$0xf]
  %v82 = vld [vmem:[%s1 + $0xdc] sm:$0xf]
  %v83 = vld [vmem:[%s1 + $0xe0] sm:$0xf]
  %v84 = vld [vmem:[%s1 + $0xe4] sm:$0xf]
  %v85 = vld [vmem:[%s1 + $0xe8] sm:$0xf]
  %v86 = vld [vmem:[%s1 + $0xec] sm:$0xf]
  %v87 = vld [vmem:[%s1 + $0xf0] sm:$0xf]
  %v88 = vld [vmem:[%s1 + $0xf4] sm:$0xf]
  %v89 = vld [vmem:[%s1 + $0xf8] sm:$0xf]
  %v90 = vld [vmem:[%s1 + $0xfc] sm:$0xf]
  %v91 = vld [vmem:[%s1 + $0x100] sm:$0xf]
  %v92 = vld [vmem:[%s1 + $0x104] sm:$0xf]
  %v93 = vld [vmem:[%s1 + $0x108] sm:$0xf]
  %v94 = vld [vmem:[%s1 + $0x10c] sm:$0xf]
  %v95 = vld [vmem:[%s1 + $0x110] sm:$0xf]
  %v96 = vld [vmem:[%s1 + $0x114] sm:$0xf]
  %v97 = vld [vmem:[%s1 + $0x118] sm:$0xf]
  %v98 = vld [vmem:[%s1 + $0x11c] sm:$0xf]
  %v99 = vld [vmem:[%s2] sm:$0x1]
  %v101 = vperm.slane %v99, 0
  %v115 = vunpack.c.l.b16 %v15
  %v116 = vunpack.c.h.b16 %v15
  %v117 = vunpack.c.l.b16 %v16
  %v118 = vunpack.c.h.b16 %v16
  %v119 = vunpack.c.l.b16 %v17
  %v120 = vunpack.c.l.b16 %v18
  %v121 = vunpack.c.h.b16 %v18
  %v122 = vunpack.c.l.b16 %v19
  %v123 = vunpack.c.h.b16 %v19
  %v124 = vunpack.c.l.b16 %v20
  %v125 = vunpack.c.l.b16 %v21
  %v126 = vunpack.c.h.b16 %v21
  %v127 = vunpack.c.l.b16 %v22
  %v128 = vunpack.c.h.b16 %v22
  %v129 = vunpack.c.l.b16 %v23
  %v130 = vunpack.c.l.b16 %v24
  %v131 = vunpack.c.h.b16 %v24
  %v132 = vunpack.c.l.b16 %v25
  %v133 = vunpack.c.h.b16 %v25
  %v134 = vunpack.c.l.b16 %v26
  %v135 = vpack.c.b16 %v120, %v115
  %v136 = vpack.c.b16 %v121, %v116
  %v137 = vpack.c.b16 %v122, %v117
  %v138 = vpack.c.b16 %v123, %v118
  %v139 = vpack.c.b16 %v124, %v119
  %v140 = vpack.c.b16 %v130, %v125
  %v141 = vpack.c.b16 %v131, %v126
  %v142 = vpack.c.b16 %v132, %v127
  %v143 = vpack.c.b16 %v133, %v128
  %v144 = vpack.c.b16 %v134, %v129
  %v225 = vunpack.c.l.b16 %v27
  %v226 = vunpack.c.l.b16 %v28
  %v227 = vunpack.c.l.b16 %v29
  %v228 = vunpack.c.l.b16 %v30
  %v229 = vunpack.c.l.b16 %v31
  %v230 = vunpack.c.l.b16 %v32
  %v231 = vunpack.c.l.b16 %v33
  %v232 = vunpack.c.l.b16 %v34
  %v233 = vunpack.c.l.b16 %v35
  %v234 = vunpack.c.l.b16 %v36
  %v235 = vunpack.c.l.b16 %v37
  %v236 = vunpack.c.l.b16 %v38
  %v237 = vunpack.c.l.b16 %v39
  %v238 = vunpack.c.l.b16 %v40
  %v239 = vunpack.c.l.b16 %v41
  %v240 = vunpack.c.l.b16 %v42
  %v241 = vunpack.c.l.b16 %v43
  %v242 = vunpack.c.l.b16 %v44
  %v243 = vunpack.c.l.b16 %v45
  %v244 = vunpack.c.l.b16 %v46
  %v245 = vunpack.c.l.b16 %v47
  %v246 = vunpack.c.l.b16 %v48
  %v247 = vunpack.c.l.b16 %v49
  %v248 = vunpack.c.l.b16 %v50
  %v249 = vunpack.c.l.b16 %v51
  %v250 = vunpack.c.l.b16 %v52
  %v251 = vunpack.c.l.b16 %v53
  %v252 = vunpack.c.l.b16 %v54
  %v253 = vunpack.c.l.b16 %v55
  %v254 = vunpack.c.l.b16 %v56
  %v255 = vunpack.c.l.b16 %v57
  %v256 = vunpack.c.l.b16 %v58
  %v257 = vunpack.c.l.b16 %v59
  %v258 = vunpack.c.l.b16 %v60
  %v259 = vunpack.c.l.b16 %v61
  %v260 = vunpack.c.l.b16 %v62
  %v261 = vunpack.c.l.b16 %v63
  %v262 = vunpack.c.l.b16 %v64
  %v263 = vunpack.c.l.b16 %v65
  %v264 = vunpack.c.l.b16 %v66
  %v265 = vunpack.c.l.b16 %v67
  %v266 = vunpack.c.l.b16 %v68
  %v267 = vunpack.c.l.b16 %v69
  %v268 = vunpack.c.l.b16 %v70
  %v269 = vunpack.c.l.b16 %v71
  %v270 = vunpack.c.l.b16 %v72
  %v271 = vunpack.c.l.b16 %v73
  %v272 = vunpack.c.l.b16 %v74
  %v273 = vunpack.c.l.b16 %v75
  %v274 = vunpack.c.l.b16 %v76
  %v275 = vunpack.c.l.b16 %v77
  %v276 = vunpack.c.l.b16 %v78
  %v277 = vunpack.c.l.b16 %v79
  %v278 = vunpack.c.l.b16 %v80
  %v279 = vunpack.c.l.b16 %v81
  %v280 = vunpack.c.l.b16 %v82
  %v281 = vunpack.c.l.b16 %v83
  %v282 = vunpack.c.l.b16 %v84
  %v283 = vunpack.c.l.b16 %v85
  %v284 = vunpack.c.l.b16 %v86
  %v285 = vunpack.c.l.b16 %v87
  %v286 = vunpack.c.l.b16 %v88
  %v287 = vunpack.c.l.b16 %v89
  %v288 = vunpack.c.l.b16 %v90
  %v289 = vunpack.c.l.b16 %v91
  %v290 = vunpack.c.l.b16 %v92
  %v291 = vunpack.c.l.b16 %v93
  %v292 = vunpack.c.l.b16 %v94
  %v293 = vunpack.c.l.b16 %v95
  %v294 = vunpack.c.l.b16 %v96
  %v295 = vunpack.c.l.b16 %v97
  %v296 = vunpack.c.l.b16 %v98
  %v297 = vpack.c.b16 %v226, %v225
  %v298 = vpack.c.b16 %v228, %v227
  %v299 = vpack.c.b16 %v230, %v229
  %v300 = vpack.c.b16 %v232, %v231
  %v301 = vpack.c.b16 %v234, %v233
  %v302 = vpack.c.b16 %v236, %v235
  %v303 = vpack.c.b16 %v238, %v237
  %v304 = vpack.c.b16 %v240, %v239
  %v305 = vpack.c.b16 %v242, %v241
  %v306 = vpack.c.b16 %v244, %v243
  %v307 = vpack.c.b16 %v246, %v245
  %v308 = vpack.c.b16 %v248, %v247
  %v309 = vpack.c.b16 %v250, %v249
  %v310 = vpack.c.b16 %v252, %v251
  %v311 = vpack.c.b16 %v254, %v253
  %v312 = vpack.c.b16 %v256, %v255
  %v313 = vpack.c.b16 %v258, %v257
  %v314 = vpack.c.b16 %v260, %v259
  %v315 = vpack.c.b16 %v262, %v261
  %v316 = vpack.c.b16 %v264, %v263
  %v317 = vpack.c.b16 %v266, %v265
  %v318 = vpack.c.b16 %v268, %v267
  %v319 = vpack.c.b16 %v270, %v269
  %v320 = vpack.c.b16 %v272, %v271
  %v321 = vpack.c.b16 %v274, %v273
  %v322 = vpack.c.b16 %v276, %v275
  %v323 = vpack.c.b16 %v278, %v277
  %v324 = vpack.c.b16 %v280, %v279
  %v325 = vpack.c.b16 %v282, %v281
  %v326 = vpack.c.b16 %v284, %v283
  %v327 = vpack.c.b16 %v286, %v285
  %v328 = vpack.c.b16 %v288, %v287
  %v329 = vpack.c.b16 %v290, %v289
  %v330 = vpack.c.b16 %v292, %v291
  %v331 = vpack.c.b16 %v294, %v293
  %v332 = vpack.c.b16 %v296, %v295
  %vm369 = vcmask 523264
  %v371 = vsel %vm369, %v139, 0
  %v374 = vsel %vm369, %v144, 0
  %376 = vmatpush.bf16.msra.mxu0 %v304
  %377 = vmatpush.bf16.msra.mxu0 %v303
  %378 = vmatpush.bf16.msra.mxu0 %v302
  %379 = vmatpush.bf16.msra.mxu0 %v301
  %380 = vmatpush.bf16.msra.mxu0 %v300
  %381 = vmatpush.bf16.msra.mxu0 %v299
  %382 = vmatpush.bf16.msra.mxu0 %v298
  %383 = vmatpush.bf16.msra.mxu0 %v297
  %384 = vmatmul.bf16.gmra.mxu0 %v135
  %v385 = vpop.f32.mrf.mxu0
  %v386 = vadd.f32 %v101, %v385
  %v387 = vpop.f32.mrf.mxu0
  %v388 = vadd.f32 %v101, %v387
  %389 = vmatmul.bf16.gmra.mxu0 %v140
  %v390 = vpop.f32.mrf.mxu0
  %v391 = vadd.f32 %v101, %v390
  %v392 = vpop.f32.mrf.mxu0
  %v393 = vadd.f32 %v101, %v392
  %394 = vdwg.mxu0
  %395 = vmatpush.bf16.msra.mxu0 %v312
  %396 = vmatpush.bf16.msra.mxu0 %v311
  %397 = vmatpush.bf16.msra.mxu0 %v310
  %398 = vmatpush.bf16.msra.mxu0 %v309
  %399 = vmatpush.bf16.msra.mxu0 %v308
  %400 = vmatpush.bf16.msra.mxu0 %v307
  %401 = vmatpush.bf16.msra.mxu0 %v306
  %402 = vmatpush.bf16.msra.mxu0 %v305
  %403 = vmatmul.bf16.gmra.mxu0 %v136
  %v404 = vpop.f32.mrf.mxu0
  %v405 = vadd.f32 %v386, %v404
  %v406 = vpop.f32.mrf.mxu0
  %v407 = vadd.f32 %v388, %v406
  %408 = vmatmul.bf16.gmra.mxu0 %v141
  %v409 = vpop.f32.mrf.mxu0
  %v410 = vadd.f32 %v391, %v409
  %v411 = vpop.f32.mrf.mxu0
  %v412 = vadd.f32 %v393, %v411
  %413 = vdwg.mxu0
  %414 = vmatpush.bf16.msra.mxu0 %v320
  %415 = vmatpush.bf16.msra.mxu0 %v319
  %416 = vmatpush.bf16.msra.mxu0 %v318
  %417 = vmatpush.bf16.msra.mxu0 %v317
  %418 = vmatpush.bf16.msra.mxu0 %v316
  %419 = vmatpush.bf16.msra.mxu0 %v315
  %420 = vmatpush.bf16.msra.mxu0 %v314
  %421 = vmatpush.bf16.msra.mxu0 %v313
  %422 = vmatmul.bf16.gmra.mxu0 %v137
  %v423 = vpop.f32.mrf.mxu0
  %v424 = vadd.f32 %v405, %v423
  %v425 = vpop.f32.mrf.mxu0
  %v426 = vadd.f32 %v407, %v425
  %427 = vmatmul.bf16.gmra.mxu0 %v142
  %v428 = vpop.f32.mrf.mxu0
  %v429 = vadd.f32 %v410, %v428
  %v430 = vpop.f32.mrf.mxu0
  %v431 = vadd.f32 %v412, %v430
  %432 = vdwg.mxu0
  %433 = vmatpush.bf16.msra.mxu0 %v328
  %434 = vmatpush.bf16.msra.mxu0 %v327
  %435 = vmatpush.bf16.msra.mxu0 %v326
  %436 = vmatpush.bf16.msra.mxu0 %v325
  %437 = vmatpush.bf16.msra.mxu0 %v324
  %438 = vmatpush.bf16.msra.mxu0 %v323
  %439 = vmatpush.bf16.msra.mxu0 %v322
  %440 = vmatpush.bf16.msra.mxu0 %v321
  %441 = vmatmul.bf16.gmra.mxu0 %v138
  %v442 = vpop.f32.mrf.mxu0
  %v443 = vadd.f32 %v424, %v442
  %v444 = vpop.f32.mrf.mxu0
  %v445 = vadd.f32 %v426, %v444
  %446 = vmatmul.bf16.gmra.mxu0 %v143
  %v447 = vpop.f32.mrf.mxu0
  %v448 = vadd.f32 %v429, %v447
  %v449 = vpop.f32.mrf.mxu0
  %v450 = vadd.f32 %v431, %v449
  %451 = vdwg.mxu0
  %452 = vmatpush.bf16.msra.mxu0 0
  %453 = vmatpush.bf16.msra.mxu0 0
  %454 = vmatpush.bf16.msra.mxu0 0
  %455 = vmatpush.bf16.msra.mxu0 0
  %456 = vmatpush.bf16.msra.mxu0 %v332
  %457 = vmatpush.bf16.msra.mxu0 %v331
  %458 = vmatpush.bf16.msra.mxu0 %v330
  %459 = vmatpush.bf16.msra.mxu0 %v329
  %460 = vmatmul.bf16.gmra.mxu0 %v371
  %v461 = vpop.f32.mrf.mxu0
  %v462 = vadd.f32 %v443, %v461
  %v463 = vpop.f32.mrf.mxu0
  %v464 = vadd.f32 %v445, %v463
  %465 = vmatmul.bf16.gmra.mxu0 %v374
  %v466 = vpop.f32.mrf.mxu0
  %v467 = vadd.f32 %v448, %v466
  %v468 = vpop.f32.mrf.mxu0
  %v469 = vadd.f32 %v450, %v468
  %470 = vdwg.mxu0
  %v471 = vmax.f32 %v462, 0.0
  %v472 = vmax.f32 %v464, 0.0
  %v473 = vmax.f32 %v467, 0.0
  %v474 = vmax.f32 %v469, 0.0
  %v475 = vpack.c.bf16 %v471, %v471
  %v476 = vpack.c.bf16 %v472, %v472
  %v477 = vpack.c.bf16 %v473, %v473
  %v478 = vpack.c.bf16 %v474, %v474
  %479 = vst [vmem:[%s3] sm:$0xf] %v475
  %480 = vst [vmem:[%s3 + $0x4] sm:$0xf] %v476
  %481 = vst [vmem:[%s3 + $0x8] sm:$0xf] %v477
  %482 = vst [vmem:[%s3 + $0xc] sm:$0xf] %v478
  // Predicated region
  $region14: #{deeplabv3plus_forward.20} parent=0 // pred_check
    _
  $region15: #{deeplabv3plus_forward.20} parent=0 // pred_check_branch
    %484 = sbr.rel (0) target = $region17
  $region16: #{deeplabv3plus_forward.20} parent=0 // pred_region
    _
  $region17: #{deeplabv3plus_forward.20} parent=0 // pred_fallthru
    _
  // Predicated region
  $region18: #{deeplabv3plus_forward.20} parent=0 // pred_check
    _
  $region19: #{deeplabv3plus_forward.20} parent=0 // pred_check_branch
    %486 = sbr.rel (0) target = $region21
  $region20: #{deeplabv3plus_forward.20} parent=0 // pred_region
    _
  $region21: #{deeplabv3plus_forward.20} parent=0 // pred_fallthru
    _

// kernel: deeplabv3plus_forward.21
$region0: #{deeplabv3plus_forward.21}
  #allocation0 [shape = 'u32[]', space=smem, size = 0x4, offset = 0x4, fixed_abs, tag = 'smem constant byte address 0x4 - core index']
  #allocation1 [shape = 'u32[72,128]{1,0:T(1,128)}', space=vmem, size = 0x9000, scoped, tag = 'internal scratch']
  %s0 = inlined_call_operand.vmem [shape: bf16[512,24], index: 0, kind: input, shape index: {}]
  %s1 = inlined_call_operand.vmem [shape: bf16[24,128], index: 1, kind: input, shape index: {}]
  %s2 = inlined_call_operand.vmem [shape: f32[1,128], index: 2, kind: input, shape index: {}]
  %s3 = inlined_call_operand.vmem [shape: bf16[512,128], index: 3, kind: output, shape index: {}]
  %s4 = sld [smem:[#allocation0]]
  $region22: #{deeplabv3plus_forward.21} parent=0
    _
  %s6 = ssub.s32 1, %s4
  %s7 = scalar_select 0, %s6, %s4
  // Predicated region
  $region2: #{deeplabv3plus_forward.21} parent=0 // pred_check
    _
  $region3: #{deeplabv3plus_forward.21} parent=0 // pred_check_branch
    %9 = sbr.rel (0) target = $region5
  $region4: #{deeplabv3plus_forward.21} parent=0 // pred_region
    _
  $region5: #{deeplabv3plus_forward.21} parent=0 // pred_fallthru
    _
  // Predicated region
  $region6: #{deeplabv3plus_forward.21} parent=0 // pred_check
    _
  $region7: #{deeplabv3plus_forward.21} parent=0 // pred_check_branch
    %11 = sbr.rel (0) target = $region9
  $region8: #{deeplabv3plus_forward.21} parent=0 // pred_region
    _
  $region9: #{deeplabv3plus_forward.21} parent=0 // pred_fallthru
    _
  // Predicated region
  $region10: #{deeplabv3plus_forward.21} parent=0 // pred_check
    _
  $region11: #{deeplabv3plus_forward.21} parent=0 // pred_check_branch
    %13 = sbr.rel (0) target = $region13
  $region12: #{deeplabv3plus_forward.21} parent=0 // pred_region
    _
  $region13: #{deeplabv3plus_forward.21} parent=0 // pred_fallthru
    _
  %v15 = vld [vmem:[%s0] sm:$0xf]
  %v16 = vld [vmem:[%s0 + $0x4] sm:$0xf]
  %v17 = vld [vmem:[%s0 + $0x8] sm:$0xf]
  %v18 = vld [vmem:[%s0 + $0xc] sm:$0xf]
  %v19 = vld [vmem:[%s0 + $0x10] sm:$0xf]
  %v20 = vld [vmem:[%s0 + $0x14] sm:$0xf]
  %v21 = vld [vmem:[%s0 + $0x18] sm:$0xf]
  %v22 = vld [vmem:[%s0 + $0x1c] sm:$0xf]
  %v23 = vld [vmem:[%s0 + $0x20] sm:$0xf]
  %v24 = vld [vmem:[%s0 + $0x24] sm:$0xf]
  %v25 = vld [vmem:[%s0 + $0x28] sm:$0xf]
  %v26 = vld [vmem:[%s0 + $0x2c] sm:$0xf]
  %v27 = vld [vmem:[%s0 + $0x30] sm:$0xf]
  %v28 = vld [vmem:[%s0 + $0x34] sm:$0xf]
  %v29 = vld [vmem:[%s0 + $0x38] sm:$0xf]
  %v30 = vld [vmem:[%s0 + $0x3c] sm:$0xf]
  %v31 = vld [vmem:[%s0 + $0x40] sm:$0xf]
  %v32 = vld [vmem:[%s0 + $0x44] sm:$0xf]
  %v33 = vld [vmem:[%s0 + $0x48] sm:$0xf]
  %v34 = vld [vmem:[%s0 + $0x4c] sm:$0xf]
  %v35 = vld [vmem:[%s0 + $0x50] sm:$0xf]
  %v36 = vld [vmem:[%s0 + $0x54] sm:$0xf]
  %v37 = vld [vmem:[%s0 + $0x58] sm:$0xf]
  %v38 = vld [vmem:[%s0 + $0x5c] sm:$0xf]
  %v39 = vld [vmem:[%s0 + $0x60] sm:$0xf]
  %v40 = vld [vmem:[%s0 + $0x64] sm:$0xf]
  %v41 = vld [vmem:[%s0 + $0x68] sm:$0xf]
  %v42 = vld [vmem:[%s0 + $0x6c] sm:$0xf]
  %v43 = vld [vmem:[%s0 + $0x70] sm:$0xf]
  %v44 = vld [vmem:[%s0 + $0x74] sm:$0xf]
  %v45 = vld [vmem:[%s0 + $0x78] sm:$0xf]
  %v46 = vld [vmem:[%s0 + $0x7c] sm:$0xf]
  %v47 = vld [vmem:[%s0 + $0x80] sm:$0xf]
  %v48 = vld [vmem:[%s0 + $0x84] sm:$0xf]
  %v49 = vld [vmem:[%s0 + $0x88] sm:$0xf]
  %v50 = vld [vmem:[%s0 + $0x8c] sm:$0xf]
  %v51 = vld [vmem:[%s0 + $0x90] sm:$0xf]
  %v52 = vld [vmem:[%s0 + $0x94] sm:$0xf]
  %v53 = vld [vmem:[%s0 + $0x98] sm:$0xf]
  %v54 = vld [vmem:[%s0 + $0x9c] sm:$0xf]
  %v55 = vld [vmem:[%s0 + $0xa0] sm:$0xf]
  %v56 = vld [vmem:[%s0 + $0xa4] sm:$0xf]
  %v57 = vld [vmem:[%s0 + $0xa8] sm:$0xf]
  %v58 = vld [vmem:[%s0 + $0xac] sm:$0xf]
  %v59 = vld [vmem:[%s0 + $0xb0] sm:$0xf]
  %v60 = vld [vmem:[%s0 + $0xb4] sm:$0xf]
  %v61 = vld [vmem:[%s0 + $0xb8] sm:$0xf]
  %v62 = vld [vmem:[%s0 + $0xbc] sm:$0xf]
  %v63 = vld [vmem:[%s0 + $0xc0] sm:$0xf]
  %v64 = vld [vmem:[%s0 + $0xc4] sm:$0xf]
  %v65 = vld [vmem:[%s0 + $0xc8] sm:$0xf]
  %v66 = vld [vmem:[%s0 + $0xcc] sm:$0xf]
  %v67 = vld [vmem:[%s0 + $0xd0] sm:$0xf]
  %v68 = vld [vmem:[%s0 + $0xd4] sm:$0xf]
  %v69 = vld [vmem:[%s0 + $0xd8] sm:$0xf]
  %v70 = vld [vmem:[%s0 + $0xdc] sm:$0xf]
  %v71 = vld [vmem:[%s0 + $0xe0] sm:$0xf]
  %v72 = vld [vmem:[%s0 + $0xe4] sm:$0xf]
  %v73 = vld [vmem:[%s0 + $0xe8] sm:$0xf]
  %v74 = vld [vmem:[%s0 + $0xec] sm:$0xf]
  %v75 = vld [vmem:[%s0 + $0xf0] sm:$0xf]
  %v76 = vld [vmem:[%s0 + $0xf4] sm:$0xf]
  %v77 = vld [vmem:[%s0 + $0xf8] sm:$0xf]
  %v78 = vld [vmem:[%s0 + $0xfc] sm:$0xf]
  %v79 = vld [vmem:[%s1] sm:$0xf]
  %v80 = vld [vmem:[%s1 + $0x4] sm:$0xf]
  %v81 = vld [vmem:[%s1 + $0x8] sm:$0xf]
  %v82 = vld [vmem:[%s2] sm:$0x1]
  %v84 = vperm.slane %v82, 0
  %v150 = vunpack.c.l.b16 %v15
  %v151 = vunpack.c.l.b16 %v16
  %v152 = vunpack.c.l.b16 %v17
  %v153 = vunpack.c.l.b16 %v18
  %v154 = vunpack.c.l.b16 %v19
  %v155 = vunpack.c.l.b16 %v20
  %v156 = vunpack.c.l.b16 %v21
  %v157 = vunpack.c.l.b16 %v22
  %v158 = vunpack.c.l.b16 %v23
  %v159 = vunpack.c.l.b16 %v24
  %v160 = vunpack.c.l.b16 %v25
  %v161 = vunpack.c.l.b16 %v26
  %v162 = vunpack.c.l.b16 %v27
  %v163 = vunpack.c.l.b16 %v28
  %v164 = vunpack.c.l.b16 %v29
  %v165 = vunpack.c.l.b16 %v30
  %v166 = vunpack.c.l.b16 %v31
  %v167 = vunpack.c.l.b16 %v32
  %v168 = vunpack.c.l.b16 %v33
  %v169 = vunpack.c.l.b16 %v34
  %v170 = vunpack.c.l.b16 %v35
  %v171 = vunpack.c.l.b16 %v36
  %v172 = vunpack.c.l.b16 %v37
  %v173 = vunpack.c.l.b16 %v38
  %v174 = vunpack.c.l.b16 %v39
  %v175 = vunpack.c.l.b16 %v40
  %v176 = vunpack.c.l.b16 %v41
  %v177 = vunpack.c.l.b16 %v42
  %v178 = vunpack.c.l.b16 %v43
  %v179 = vunpack.c.l.b16 %v44
  %v180 = vunpack.c.l.b16 %v45
  %v181 = vunpack.c.l.b16 %v46
  %v182 = vunpack.c.l.b16 %v47
  %v183 = vunpack.c.l.b16 %v48
  %v184 = vunpack.c.l.b16 %v49
  %v185 = vunpack.c.l.b16 %v50
  %v186 = vunpack.c.l.b16 %v51
  %v187 = vunpack.c.l.b16 %v52
  %v188 = vunpack.c.l.b16 %v53
  %v189 = vunpack.c.l.b16 %v54
  %v190 = vunpack.c.l.b16 %v55
  %v191 = vunpack.c.l.b16 %v56
  %v192 = vunpack.c.l.b16 %v57
  %v193 = vunpack.c.l.b16 %v58
  %v194 = vunpack.c.l.b16 %v59
  %v195 = vunpack.c.l.b16 %v60
  %v196 = vunpack.c.l.b16 %v61
  %v197 = vunpack.c.l.b16 %v62
  %v198 = vunpack.c.l.b16 %v63
  %v199 = vunpack.c.l.b16 %v64
  %v200 = vunpack.c.l.b16 %v65
  %v201 = vunpack.c.l.b16 %v66
  %v202 = vunpack.c.l.b16 %v67
  %v203 = vunpack.c.l.b16 %v68
  %v204 = vunpack.c.l.b16 %v69
  %v205 = vunpack.c.l.b16 %v70
  %v206 = vunpack.c.l.b16 %v71
  %v207 = vunpack.c.l.b16 %v72
  %v208 = vunpack.c.l.b16 %v73
  %v209 = vunpack.c.l.b16 %v74
  %v210 = vunpack.c.l.b16 %v75
  %v211 = vunpack.c.l.b16 %v76
  %v212 = vunpack.c.l.b16 %v77
  %v213 = vunpack.c.l.b16 %v78
  %v214 = vpack.c.b16 %v151, %v150
  %v215 = vpack.c.b16 %v153, %v152
  %v216 = vpack.c.b16 %v155, %v154
  %v217 = vpack.c.b16 %v157, %v156
  %v218 = vpack.c.b16 %v159, %v158
  %v219 = vpack.c.b16 %v161, %v160
  %v220 = vpack.c.b16 %v163, %v162
  %v221 = vpack.c.b16 %v165, %v164
  %v222 = vpack.c.b16 %v167, %v166
  %v223 = vpack.c.b16 %v169, %v168
  %v224 = vpack.c.b16 %v171, %v170
  %v225 = vpack.c.b16 %v173, %v172
  %v226 = vpack.c.b16 %v175, %v174
  %v227 = vpack.c.b16 %v177, %v176
  %v228 = vpack.c.b16 %v179, %v178
  %v229 = vpack.c.b16 %v181, %v180
  %v230 = vpack.c.b16 %v183, %v182
  %v231 = vpack.c.b16 %v185, %v184
  %v232 = vpack.c.b16 %v187, %v186
  %v233 = vpack.c.b16 %v189, %v188
  %v234 = vpack.c.b16 %v191, %v190
  %v235 = vpack.c.b16 %v193, %v192
  %v236 = vpack.c.b16 %v195, %v194
  %v237 = vpack.c.b16 %v197, %v196
  %v238 = vpack.c.b16 %v199, %v198
  %v239 = vpack.c.b16 %v201, %v200
  %v240 = vpack.c.b16 %v203, %v202
  %v241 = vpack.c.b16 %v205, %v204
  %v242 = vpack.c.b16 %v207, %v206
  %v243 = vpack.c.b16 %v209, %v208
  %v244 = vpack.c.b16 %v211, %v210
  %v245 = vpack.c.b16 %v213, %v212
  %v249 = vunpack.c.l.b16 %v79
  %v250 = vunpack.c.l.b16 %v80
  %v251 = vunpack.c.l.b16 %v81
  %v252 = vpack.c.b16 %v250, %v249
  %v253 = vpack.c.b16 %v251, %v251
  %vm255 = vcmask 195584
  %v257 = vsel %vm255, %v214, 0
  %v260 = vsel %vm255, %v215, 0
  %v263 = vsel %vm255, %v216, 0
  %v266 = vsel %vm255, %v217, 0
  %v269 = vsel %vm255, %v218, 0
  %v272 = vsel %vm255, %v219, 0
  %v275 = vsel %vm255, %v220, 0
  %v278 = vsel %vm255, %v221, 0
  %v281 = vsel %vm255, %v222, 0
  %v284 = vsel %vm255, %v223, 0
  %v287 = vsel %vm255, %v224, 0
  %v290 = vsel %vm255, %v225, 0
  %v293 = vsel %vm255, %v226, 0
  %v296 = vsel %vm255, %v227, 0
  %v299 = vsel %vm255, %v228, 0
  %v302 = vsel %vm255, %v229, 0
  %v305 = vsel %vm255, %v230, 0
  %v308 = vsel %vm255, %v231, 0
  %v311 = vsel %vm255, %v232, 0
  %v314 = vsel %vm255, %v233, 0
  %v317 = vsel %vm255, %v234, 0
  %v320 = vsel %vm255, %v235, 0
  %v323 = vsel %vm255, %v236, 0
  %v326 = vsel %vm255, %v237, 0
  %v329 = vsel %vm255, %v238, 0
  %v332 = vsel %vm255, %v239, 0
  %v335 = vsel %vm255, %v240, 0
  %v338 = vsel %vm255, %v241, 0
  %v341 = vsel %vm255, %v242, 0
  %v344 = vsel %vm255, %v243, 0
  %v347 = vsel %vm255, %v244, 0
  %v350 = vsel %vm255, %v245, 0
  %vm352 = vcmask 1043456
  %v354 = vsel %vm352, %v253, 0
  %356 = vmatpush.bf16.msra.mxu0 0
  %357 = vmatpush.bf16.msra.mxu0 0
  %358 = vmatpush.bf16.msra.mxu0 0
  %359 = vmatpush.bf16.msra.mxu0 0
  %360 = vmatpush.bf16.msra.mxu0 0
  %361 = vmatpush.bf16.msra.mxu0 0
  %362 = vmatpush.bf16.msra.mxu0 %v354
  %363 = vmatpush.bf16.msra.mxu0 %v252
  %364 = vmatmul.bf16.gmra.mxu0 %v257
  %v365 = vpop.f32.mrf.mxu0
  %v366 = vadd.f32 %v84, %v365
  %v367 = vpop.f32.mrf.mxu0
  %v368 = vadd.f32 %v84, %v367
  %369 = vmatmul.bf16.gmra.mxu0 %v260
  %v370 = vpop.f32.mrf.mxu0
  %v371 = vadd.f32 %v84, %v370
  %v372 = vpop.f32.mrf.mxu0
  %v373 = vadd.f32 %v84, %v372
  %374 = vmatmul.bf16.gmra.mxu0 %v263
  %v375 = vpop.f32.mrf.mxu0
  %v376 = vadd.f32 %v84, %v375
  %v377 = vpop.f32.mrf.mxu0
  %v378 = vadd.f32 %v84, %v377
  %379 = vmatmul.bf16.gmra.mxu0 %v266
  %v380 = vpop.f32.mrf.mxu0
  %v381 = vadd.f32 %v84, %v380
  %v382 = vpop.f32.mrf.mxu0
  %v383 = vadd.f32 %v84, %v382
  %384 = vmatmul.bf16.gmra.mxu0 %v269
  %v385 = vpop.f32.mrf.mxu0
  %v386 = vadd.f32 %v84, %v385
  %v387 = vpop.f32.mrf.mxu0
  %v388 = vadd.f32 %v84, %v387
  %389 = vmatmul.bf16.gmra.mxu0 %v272
  %v390 = vpop.f32.mrf.mxu0
  %v391 = vadd.f32 %v84, %v390
  %v392 = vpop.f32.mrf.mxu0
  %v393 = vadd.f32 %v84, %v392
  %394 = vmatmul.bf16.gmra.mxu0 %v275
  %v395 = vpop.f32.mrf.mxu0
  %v396 = vadd.f32 %v84, %v395
  %v397 = vpop.f32.mrf.mxu0
  %v398 = vadd.f32 %v84, %v397
  %399 = vmatmul.bf16.gmra.mxu0 %v278
  %v400 = vpop.f32.mrf.mxu0
  %v401 = vadd.f32 %v84, %v400
  %v402 = vpop.f32.mrf.mxu0
  %v403 = vadd.f32 %v84, %v402
  %404 = vmatmul.bf16.gmra.mxu0 %v281
  %v405 = vpop.f32.mrf.mxu0
  %v406 = vadd.f32 %v84, %v405
  %v407 = vpop.f32.mrf.mxu0
  %v408 = vadd.f32 %v84, %v407
  %409 = vmatmul.bf16.gmra.mxu0 %v284
  %v410 = vpop.f32.mrf.mxu0
  %v411 = vadd.f32 %v84, %v410
  %v412 = vpop.f32.mrf.mxu0
  %v413 = vadd.f32 %v84, %v412
  %414 = vmatmul.bf16.gmra.mxu0 %v287
  %v415 = vpop.f32.mrf.mxu0
  %v416 = vadd.f32 %v84, %v415
  %v417 = vpop.f32.mrf.mxu0
  %v418 = vadd.f32 %v84, %v417
  %419 = vmatmul.bf16.gmra.mxu0 %v290
  %v420 = vpop.f32.mrf.mxu0
  %v421 = vadd.f32 %v84, %v420
  %v422 = vpop.f32.mrf.mxu0
  %v423 = vadd.f32 %v84, %v422
  %424 = vmatmul.bf16.gmra.mxu0 %v293
  %v425 = vpop.f32.mrf.mxu0
  %v426 = vadd.f32 %v84, %v425
  %v427 = vpop.f32.mrf.mxu0
  %v428 = vadd.f32 %v84, %v427
  %429 = vmatmul.bf16.gmra.mxu0 %v296
  %v430 = vpop.f32.mrf.mxu0
  %v431 = vadd.f32 %v84, %v430
  %v432 = vpop.f32.mrf.mxu0
  %v433 = vadd.f32 %v84, %v432
  %434 = vmatmul.bf16.gmra.mxu0 %v299
  %v435 = vpop.f32.mrf.mxu0
  %v436 = vadd.f32 %v84, %v435
  %v437 = vpop.f32.mrf.mxu0
  %v438 = vadd.f32 %v84, %v437
  %439 = vmatmul.bf16.gmra.mxu0 %v302
  %v440 = vpop.f32.mrf.mxu0
  %v441 = vadd.f32 %v84, %v440
  %v442 = vpop.f32.mrf.mxu0
  %v443 = vadd.f32 %v84, %v442
  %444 = vmatmul.bf16.gmra.mxu0 %v305
  %v445 = vpop.f32.mrf.mxu0
  %v446 = vadd.f32 %v84, %v445
  %v447 = vpop.f32.mrf.mxu0
  %v448 = vadd.f32 %v84, %v447
  %449 = vmatmul.bf16.gmra.mxu0 %v308
  %v450 = vpop.f32.mrf.mxu0
  %v451 = vadd.f32 %v84, %v450
  %v452 = vpop.f32.mrf.mxu0
  %v453 = vadd.f32 %v84, %v452
  %454 = vmatmul.bf16.gmra.mxu0 %v311
  %v455 = vpop.f32.mrf.mxu0
  %v456 = vadd.f32 %v84, %v455
  %v457 = vpop.f32.mrf.mxu0
  %v458 = vadd.f32 %v84, %v457
  %459 = vmatmul.bf16.gmra.mxu0 %v314
  %v460 = vpop.f32.mrf.mxu0
  %v461 = vadd.f32 %v84, %v460
  %v462 = vpop.f32.mrf.mxu0
  %v463 = vadd.f32 %v84, %v462
  %464 = vmatmul.bf16.gmra.mxu0 %v317
  %v465 = vpop.f32.mrf.mxu0
  %v466 = vadd.f32 %v84, %v465
  %v467 = vpop.f32.mrf.mxu0
  %v468 = vadd.f32 %v84, %v467
  %469 = vmatmul.bf16.gmra.mxu0 %v320
  %v470 = vpop.f32.mrf.mxu0
  %v471 = vadd.f32 %v84, %v470
  %v472 = vpop.f32.mrf.mxu0
  %v473 = vadd.f32 %v84, %v472
  %474 = vmatmul.bf16.gmra.mxu0 %v323
  %v475 = vpop.f32.mrf.mxu0
  %v476 = vadd.f32 %v84, %v475
  %v477 = vpop.f32.mrf.mxu0
  %v478 = vadd.f32 %v84, %v477
  %479 = vmatmul.bf16.gmra.mxu0 %v326
  %v480 = vpop.f32.mrf.mxu0
  %v481 = vadd.f32 %v84, %v480
  %v482 = vpop.f32.mrf.mxu0
  %v483 = vadd.f32 %v84, %v482
  %484 = vmatmul.bf16.gmra.mxu0 %v329
  %v485 = vpop.f32.mrf.mxu0
  %v486 = vadd.f32 %v84, %v485
  %v487 = vpop.f32.mrf.mxu0
  %v488 = vadd.f32 %v84, %v487
  %489 = vmatmul.bf16.gmra.mxu0 %v332
  %v490 = vpop.f32.mrf.mxu0
  %v491 = vadd.f32 %v84, %v490
  %v492 = vpop.f32.mrf.mxu0
  %v493 = vadd.f32 %v84, %v492
  %494 = vmatmul.bf16.gmra.mxu0 %v335
  %v495 = vpop.f32.mrf.mxu0
  %v496 = vadd.f32 %v84, %v495
  %v497 = vpop.f32.mrf.mxu0
  %v498 = vadd.f32 %v84, %v497
  %499 = vmatmul.bf16.gmra.mxu0 %v338
  %v500 = vpop.f32.mrf.mxu0
  %v501 = vadd.f32 %v84, %v500
  %v502 = vpop.f32.mrf.mxu0
  %v503 = vadd.f32 %v84, %v502
  %504 = vmatmul.bf16.gmra.mxu0 %v341
  %v505 = vpop.f32.mrf.mxu0
  %v506 = vadd.f32 %v84, %v505
  %v507 = vpop.f32.mrf.mxu0
  %v508 = vadd.f32 %v84, %v507
  %509 = vmatmul.bf16.gmra.mxu0 %v344
  %v510 = vpop.f32.mrf.mxu0
  %v511 = vadd.f32 %v84, %v510
  %v512 = vpop.f32.mrf.mxu0
  %v513 = vadd.f32 %v84, %v512
  %514 = vmatmul.bf16.gmra.mxu0 %v347
  %v515 = vpop.f32.mrf.mxu0
  %v516 = vadd.f32 %v84, %v515
  %v517 = vpop.f32.mrf.mxu0
  %v518 = vadd.f32 %v84, %v517
  %519 = vmatmul.bf16.gmra.mxu0 %v350
  %v520 = vpop.f32.mrf.mxu0
  %v521 = vadd.f32 %v84, %v520
  %v522 = vpop.f32.mrf.mxu0
  %v523 = vadd.f32 %v84, %v522
  %524 = vdwg.mxu0
  %v525 = vmax.f32 %v366, 0.0
  %v526 = vmax.f32 %v368, 0.0
  %v527 = vmax.f32 %v371, 0.0
  %v528 = vmax.f32 %v373, 0.0
  %v529 = vmax.f32 %v376, 0.0
  %v530 = vmax.f32 %v378, 0.0
  %v531 = vmax.f32 %v381, 0.0
  %v532 = vmax.f32 %v383, 0.0
  %v533 = vmax.f32 %v386, 0.0
  %v534 = vmax.f32 %v388, 0.0
  %v535 = vmax.f32 %v391, 0.0
  %v536 = vmax.f32 %v393, 0.0
  %v537 = vmax.f32 %v396, 0.0
  %v538 = vmax.f32 %v398, 0.0
  %v539 = vmax.f32 %v401, 0.0
  %v540 = vmax.f32 %v403, 0.0
  %v541 = vmax.f32 %v406, 0.0
  %v542 = vmax.f32 %v408, 0.0
  %v543 = vmax.f32 %v411, 0.0
  %v544 = vmax.f32 %v413, 0.0
  %v545 = vmax.f32 %v416, 0.0
  %v546 = vmax.f32 %v418, 0.0
  %v547 = vmax.f32 %v421, 0.0
  %v548 = vmax.f32 %v423, 0.0
  %v549 = vmax.f32 %v426, 0.0
  %v550 = vmax.f32 %v428, 0.0
  %v551 = vmax.f32 %v431, 0.0
  %v552 = vmax.f32 %v433, 0.0
  %v553 = vmax.f32 %v436, 0.0
  %v554 = vmax.f32 %v438, 0.0
  %v555 = vmax.f32 %v441, 0.0
  %v556 = vmax.f32 %v443, 0.0
  %v557 = vmax.f32 %v446, 0.0
  %v558 = vmax.f32 %v448, 0.0
  %v559 = vmax.f32 %v451, 0.0
  %v560 = vmax.f32 %v453, 0.0
  %v561 = vmax.f32 %v456, 0.0
  %v562 = vmax.f32 %v458, 0.0
  %v563 = vmax.f32 %v461, 0.0
  %v564 = vmax.f32 %v463, 0.0
  %v565 = vmax.f32 %v466, 0.0
  %v566 = vmax.f32 %v468, 0.0
  %v567 = vmax.f32 %v471, 0.0
  %v568 = vmax.f32 %v473, 0.0
  %v569 = vmax.f32 %v476, 0.0
  %v570 = vmax.f32 %v478, 0.0
  %v571 = vmax.f32 %v481, 0.0
  %v572 = vmax.f32 %v483, 0.0
  %v573 = vmax.f32 %v486, 0.0
  %v574 = vmax.f32 %v488, 0.0
  %v575 = vmax.f32 %v491, 0.0
  %v576 = vmax.f32 %v493, 0.0
  %v577 = vmax.f32 %v496, 0.0
  %v578 = vmax.f32 %v498, 0.0
  %v579 = vmax.f32 %v501, 0.0
  %v580 = vmax.f32 %v503, 0.0
  %v581 = vmax.f32 %v506, 0.0
  %v582 = vmax.f32 %v508, 0.0
  %v583 = vmax.f32 %v511, 0.0
  %v584 = vmax.f32 %v513, 0.0
  %v585 = vmax.f32 %v516, 0.0
  %v586 = vmax.f32 %v518, 0.0
  %v587 = vmax.f32 %v521, 0.0
  %v588 = vmax.f32 %v523, 0.0
  %v589 = vpack.c.bf16 %v525, %v525
  %v590 = vpack.c.bf16 %v526, %v526
  %v591 = vpack.c.bf16 %v527, %v527
  %v592 = vpack.c.bf16 %v528, %v528
  %v593 = vpack.c.bf16 %v529, %v529
  %v594 = vpack.c.bf16 %v530, %v530
  %v595 = vpack.c.bf16 %v531, %v531
  %v596 = vpack.c.bf16 %v532, %v532
  %v597 = vpack.c.bf16 %v533, %v533
  %v598 = vpack.c.bf16 %v534, %v534
  %v599 = vpack.c.bf16 %v535, %v535
  %v600 = vpack.c.bf16 %v536, %v536
  %v601 = vpack.c.bf16 %v537, %v537
  %v602 = vpack.c.bf16 %v538, %v538
  %v603 = vpack.c.bf16 %v539, %v539
  %v604 = vpack.c.bf16 %v540, %v540
  %v605 = vpack.c.bf16 %v541, %v541
  %v606 = vpack.c.bf16 %v542, %v542
  %v607 = vpack.c.bf16 %v543, %v543
  %v608 = vpack.c.bf16 %v544, %v544
  %v609 = vpack.c.bf16 %v545, %v545
  %v610 = vpack.c.bf16 %v546, %v546
  %v611 = vpack.c.bf16 %v547, %v547
  %v612 = vpack.c.bf16 %v548, %v548
  %v613 = vpack.c.bf16 %v549, %v549
  %v614 = vpack.c.bf16 %v550, %v550
  %v615 = vpack.c.bf16 %v551, %v551
  %v616 = vpack.c.bf16 %v552, %v552
  %v617 = vpack.c.bf16 %v553, %v553
  %v618 = vpack.c.bf16 %v554, %v554
  %v619 = vpack.c.bf16 %v555, %v555
  %v620 = vpack.c.bf16 %v556, %v556
  %v621 = vpack.c.bf16 %v557, %v557
  %v622 = vpack.c.bf16 %v558, %v558
  %v623 = vpack.c.bf16 %v559, %v559
  %v624 = vpack.c.bf16 %v560, %v560
  %v625 = vpack.c.bf16 %v561, %v561
  %v626 = vpack.c.bf16 %v562, %v562
  %v627 = vpack.c.bf16 %v563, %v563
  %v628 = vpack.c.bf16 %v564, %v564
  %v629 = vpack.c.bf16 %v565, %v565
  %v630 = vpack.c.bf16 %v566, %v566
  %v631 = vpack.c.bf16 %v567, %v567
  %v632 = vpack.c.bf16 %v568, %v568
  %v633 = vpack.c.bf16 %v569, %v569
  %v634 = vpack.c.bf16 %v570, %v570
  %v635 = vpack.c.bf16 %v571, %v571
  %v636 = vpack.c.bf16 %v572, %v572
  %v637 = vpack.c.bf16 %v573, %v573
  %v638 = vpack.c.bf16 %v574, %v574
  %v639 = vpack.c.bf16 %v575, %v575
  %v640 = vpack.c.bf16 %v576, %v576
  %v641 = vpack.c.bf16 %v577, %v577
  %v642 = vpack.c.bf16 %v578, %v578
  %v643 = vpack.c.bf16 %v579, %v579
  %v644 = vpack.c.bf16 %v580, %v580
  %v645 = vpack.c.bf16 %v581, %v581
  %v646 = vpack.c.bf16 %v582, %v582
  %v647 = vpack.c.bf16 %v583, %v583
  %v648 = vpack.c.bf16 %v584, %v584
  %v649 = vpack.c.bf16 %v585, %v585
  %v650 = vpack.c.bf16 %v586, %v586
  %v651 = vpack.c.bf16 %v587, %v587
  %v652 = vpack.c.bf16 %v588, %v588
  %653 = vst [vmem:[%s3] sm:$0xf] %v589
  %654 = vst [vmem:[%s3 + $0x4] sm:$0xf] %v590
  %655 = vst [vmem:[%s3 + $0x8] sm:$0xf] %v591
  %656 = vst [vmem:[%s3 + $0xc] sm:$0xf] %v592
  %657 = vst [vmem:[%s3 + $0x10] sm:$0xf] %v593
  %658 = vst [vmem:[%s3 + $0x14] sm:$0xf] %v594
  %659 = vst [vmem:[%s3 + $0x18] sm:$0xf] %v595
  %660 = vst [vmem:[%s3 + $0x1c] sm:$0xf] %v596
  %661 = vst [vmem:[%s3 + $0x20] sm:$0xf] %v597
  %662 = vst [vmem:[%s3 + $0x24] sm:$0xf] %v598
  %663 = vst [vmem:[%s3 + $0x28] sm:$0xf] %v599
  %664 = vst [vmem:[%s3 + $0x2c] sm:$0xf] %v600
  %665 = vst [vmem:[%s3 + $0x30] sm:$0xf] %v601
  %666 = vst [vmem:[%s3 + $0x34] sm:$0xf] %v602
  %667 = vst [vmem:[%s3 + $0x38] sm:$0xf] %v603
  %668 = vst [vmem:[%s3 + $0x3c] sm:$0xf] %v604
  %669 = vst [vmem:[%s3 + $0x40] sm:$0xf] %v605
  %670 = vst [vmem:[%s3 + $0x44] sm:$0xf] %v606
  %671 = vst [vmem:[%s3 + $0x48] sm:$0xf] %v607
  %672 = vst [vmem:[%s3 + $0x4c] sm:$0xf] %v608
  %673 = vst [vmem:[%s3 + $0x50] sm:$0xf] %v609
  %674 = vst [vmem:[%s3 + $0x54] sm:$0xf] %v610
  %675 = vst [vmem:[%s3 + $0x58] sm:$0xf] %v611
  %676 = vst [vmem:[%s3 + $0x5c] sm:$0xf] %v612
  %677 = vst [vmem:[%s3 + $0x60] sm:$0xf] %v613
  %678 = vst [vmem:[%s3 + $0x64] sm:$0xf] %v614
  %679 = vst [vmem:[%s3 + $0x68] sm:$0xf] %v615
  %680 = vst [vmem:[%s3 + $0x6c] sm:$0xf] %v616
  %681 = vst [vmem:[%s3 + $0x70] sm:$0xf] %v617
  %682 = vst [vmem:[%s3 + $0x74] sm:$0xf] %v618
  %683 = vst [vmem:[%s3 + $0x78] sm:$0xf] %v619
  %684 = vst [vmem:[%s3 + $0x7c] sm:$0xf] %v620
  %685 = vst [vmem:[%s3 + $0x80] sm:$0xf] %v621
  %686 = vst [vmem:[%s3 + $0x84] sm:$0xf] %v622
  %687 = vst [vmem:[%s3 + $0x88] sm:$0xf] %v623
  %688 = vst [vmem:[%s3 + $0x8c] sm:$0xf] %v624
  %689 = vst [vmem:[%s3 + $0x90] sm:$0xf] %v625
  %690 = vst [vmem:[%s3 + $0x94] sm:$0xf] %v626
  %691 = vst [vmem:[%s3 + $0x98] sm:$0xf] %v627
  %692 = vst [vmem:[%s3 + $0x9c] sm:$0xf] %v628
  %693 = vst [vmem:[%s3 + $0xa0] sm:$0xf] %v629
  %694 = vst [vmem:[%s3 + $0xa4] sm:$0xf] %v630
  %695 = vst [vmem:[%s3 + $0xa8] sm:$0xf] %v631
  %696 = vst [vmem:[%s3 + $0xac] sm:$0xf] %v632
  %697 = vst [vmem:[%s3 + $0xb0] sm:$0xf] %v633
  %698 = vst [vmem:[%s3 + $0xb4] sm:$0xf] %v634
  %699 = vst [vmem:[%s3 + $0xb8] sm:$0xf] %v635
  %700 = vst [vmem:[%s3 + $0xbc] sm:$0xf] %v636
  %701 = vst [vmem:[%s3 + $0xc0] sm:$0xf] %v637
  %702 = vst [vmem:[%s3 + $0xc4] sm:$0xf] %v638
  %703 = vst [vmem:[%s3 + $0xc8] sm:$0xf] %v639
  %704 = vst [vmem:[%s3 + $0xcc] sm:$0xf] %v640
  %705 = vst [vmem:[%s3 + $0xd0] sm:$0xf] %v641
  %706 = vst [vmem:[%s3 + $0xd4] sm:$0xf] %v642
  %707 = vst [vmem:[%s3 + $0xd8] sm:$0xf] %v643
  %708 = vst [vmem:[%s3 + $0xdc] sm:$0xf] %v644
  %709 = vst [vmem:[%s3 + $0xe0] sm:$0xf] %v645
  %710 = vst [vmem:[%s3 + $0xe4] sm:$0xf] %v646
  %711 = vst [vmem:[%s3 + $0xe8] sm:$0xf] %v647
  %712 = vst [vmem:[%s3 + $0xec] sm:$0xf] %v648
  %713 = vst [vmem:[%s3 + $0xf0] sm:$0xf] %v649
  %714 = vst [vmem:[%s3 + $0xf4] sm:$0xf] %v650
  %715 = vst [vmem:[%s3 + $0xf8] sm:$0xf] %v651
  %716 = vst [vmem:[%s3 + $0xfc] sm:$0xf] %v652
  // Predicated region
  $region14: #{deeplabv3plus_forward.21} parent=0 // pred_check
    _
  $region15: #{deeplabv3plus_forward.21} parent=0 // pred_check_branch
    %718 = sbr.rel (0) target = $region17
  $region16: #{deeplabv3plus_forward.21} parent=0 // pred_region
    _
  $region17: #{deeplabv3plus_forward.21} parent=0 // pred_fallthru
    _
  // Predicated region
  $region18: #{deeplabv3plus_forward.21} parent=0 // pred_check
    _
  $region19: #{deeplabv3plus_forward.21} parent=0 // pred_check_branch
    %720 = sbr.rel (0) target = $region21
  $region20: #{deeplabv3plus_forward.21} parent=0 // pred_region
    _
  $region21: #{deeplabv3plus_forward.21} parent=0 // pred_fallthru
    _

// kernel: deeplabv3plus_forward.22
$region0: #{deeplabv3plus_forward.22}
  #allocation0 [shape = 'u32[]', space=smem, size = 0x4, offset = 0x4, fixed_abs, tag = 'smem constant byte address 0x4 - core index']
  #allocation1 [shape = 'u32[72,128]{1,0:T(1,128)}', space=vmem, size = 0x9000, scoped, tag = 'internal scratch']
  %s0 = inlined_call_operand.vmem [shape: bf16[512,1008], index: 0, kind: input, shape index: {}]
  %s1 = inlined_call_operand.vmem [shape: bf16[1008,128], index: 1, kind: input, shape index: {}]
  %s2 = inlined_call_operand.vmem [shape: f32[1,128], index: 2, kind: input, shape index: {}]
  %s3 = inlined_call_operand.vmem [shape: bf16[512,128], index: 3, kind: output, shape index: {}]
  %s4 = sld [smem:[#allocation0]]
  $region22: #{deeplabv3plus_forward.22} parent=0
    _
  %s6 = ssub.s32 1, %s4
  %s7 = scalar_select 0, %s6, %s4
  // Predicated region
  $region2: #{deeplabv3plus_forward.22} parent=0 // pred_check
    _
  $region3: #{deeplabv3plus_forward.22} parent=0 // pred_check_branch
    %9 = sbr.rel (0) target = $region5
  $region4: #{deeplabv3plus_forward.22} parent=0 // pred_region
    _
  $region5: #{deeplabv3plus_forward.22} parent=0 // pred_fallthru
    _
  // Predicated region
  $region6: #{deeplabv3plus_forward.22} parent=0 // pred_check
    _
  $region7: #{deeplabv3plus_forward.22} parent=0 // pred_check_branch
    %11 = sbr.rel (0) target = $region9
  $region8: #{deeplabv3plus_forward.22} parent=0 // pred_region
    _
  $region9: #{deeplabv3plus_forward.22} parent=0 // pred_fallthru
    _
  // Predicated region
  $region10: #{deeplabv3plus_forward.22} parent=0 // pred_check
    _
  $region11: #{deeplabv3plus_forward.22} parent=0 // pred_check_branch
    %13 = sbr.rel (0) target = $region13
  $region12: #{deeplabv3plus_forward.22} parent=0 // pred_region
    _
  $region13: #{deeplabv3plus_forward.22} parent=0 // pred_fallthru
    _
  %v15 = vld [vmem:[%s0] sm:$0xff]
  %v16 = vld [vmem:[%s0 + $0x8] sm:$0xff]
  %v17 = vld [vmem:[%s0 + $0x10] sm:$0xff]
  %v18 = vld [vmem:[%s0 + $0x18] sm:$0xff]
  %v19 = vld [vmem:[%s0 + $0x20] sm:$0xff]
  %v20 = vld [vmem:[%s0 + $0x28] sm:$0xff]
  %v21 = vld [vmem:[%s0 + $0x30] sm:$0xff]
  %v22 = vld [vmem:[%s0 + $0x38] sm:$0xff]
  %v23 = vld [vmem:[%s0 + $0x40] sm:$0xff]
  %v24 = vld [vmem:[%s0 + $0x48] sm:$0xff]
  %v25 = vld [vmem:[%s0 + $0x50] sm:$0xff]
  %v26 = vld [vmem:[%s0 + $0x58] sm:$0xff]
  %v27 = vld [vmem:[%s0 + $0x60] sm:$0xff]
  %v28 = vld [vmem:[%s0 + $0x68] sm:$0xff]
  %v29 = vld [vmem:[%s0 + $0x70] sm:$0xff]
  %v30 = vld [vmem:[%s0 + $0x78] sm:$0xff]
  %v31 = vld [vmem:[%s0 + $0x80] sm:$0xff]
  %v32 = vld [vmem:[%s0 + $0x88] sm:$0xff]
  %v33 = vld [vmem:[%s0 + $0x90] sm:$0xff]
  %v34 = vld [vmem:[%s0 + $0x98] sm:$0xff]
  %v35 = vld [vmem:[%s0 + $0xa0] sm:$0xff]
  %v36 = vld [vmem:[%s0 + $0xa8] sm:$0xff]
  %v37 = vld [vmem:[%s0 + $0xb0] sm:$0xff]
  %v38 = vld [vmem:[%s0 + $0xb8] sm:$0xff]
  %v39 = vld [vmem:[%s0 + $0xc0] sm:$0xff]
  %v40 = vld [vmem:[%s0 + $0xc8] sm:$0xff]
  %v41 = vld [vmem:[%s0 + $0xd0] sm:$0xff]
  %v42 = vld [vmem:[%s0 + $0xd8] sm:$0xff]
  %v43 = vld [vmem:[%s0 + $0xe0] sm:$0xff]
  %v44 = vld [vmem:[%s0 + $0xe8] sm:$0xff]
  %v45 = vld [vmem:[%s0 + $0xf0] sm:$0xff]
  %v46 = vld [vmem:[%s0 + $0xf8] sm:$0xff]
  %v47 = vld [vmem:[%s0 + $0x100] sm:$0xff]
  %v48 = vld [vmem:[%s0 + $0x108] sm:$0xff]
  %v49 = vld [vmem:[%s0 + $0x110] sm:$0xff]
  %v50 = vld [vmem:[%s0 + $0x118] sm:$0xff]
  %v51 = vld [vmem:[%s0 + $0x120] sm:$0xff]
  %v52 = vld [vmem:[%s0 + $0x128] sm:$0xff]
  %v53 = vld [vmem:[%s0 + $0x130] sm:$0xff]
  %v54 = vld [vmem:[%s0 + $0x138] sm:$0xff]
  %v55 = vld [vmem:[%s0 + $0x140] sm:$0xff]
  %v56 = vld [vmem:[%s0 + $0x148] sm:$0xff]
  %v57 = vld [vmem:[%s0 + $0x150] sm:$0xff]
  %v58 = vld [vmem:[%s0 + $0x158] sm:$0xff]
  %v59 = vld [vmem:[%s0 + $0x160] sm:$0xff]
  %v60 = vld [vmem:[%s0 + $0x168] sm:$0xff]
  %v61 = vld [vmem:[%s0 + $0x170] sm:$0xff]
  %v62 = vld [vmem:[%s0 + $0x178] sm:$0xff]
  %v63 = vld [vmem:[%s0 + $0x180] sm:$0xff]
  %v64 = vld [vmem:[%s0 + $0x188] sm:$0xff]
  %v65 = vld [vmem:[%s0 + $0x190] sm:$0xff]
  %v66 = vld [vmem:[%s0 + $0x198] sm:$0xff]
  %v67 = vld [vmem:[%s0 + $0x1a0] sm:$0xff]
  %v68 = vld [vmem:[%s0 + $0x1a8] sm:$0xff]
  %v69 = vld [vmem:[%s0 + $0x1b0] sm:$0xff]
  %v70 = vld [vmem:[%s0 + $0x1b8] sm:$0xff]
  %v71 = vld [vmem:[%s0 + $0x1c0] sm:$0xff]
  %v72 = vld [vmem:[%s0 + $0x1c8] sm:$0xff]
  %v73 = vld [vmem:[%s0 + $0x1d0] sm:$0xff]
  %v74 = vld [vmem:[%s0 + $0x1d8] sm:$0xff]
  %v75 = vld [vmem:[%s0 + $0x1e0] sm:$0xff]
  %v76 = vld [vmem:[%s0 + $0x1e8] sm:$0xff]
  %v77 = vld [vmem:[%s0 + $0x1f0] sm:$0xff]
  %v78 = vld [vmem:[%s0 + $0x1f8] sm:$0xff]
  %v79 = vld [vmem:[%s0 + $0x200] sm:$0xff]
  %v80 = vld [vmem:[%s0 + $0x208] sm:$0xff]
  %v81 = vld [vmem:[%s0 + $0x210] sm:$0xff]
  %v82 = vld [vmem:[%s0 + $0x218] sm:$0xff]
  %v83 = vld [vmem:[%s0 + $0x220] sm:$0xff]
  %v84 = vld [vmem:[%s0 + $0x228] sm:$0xff]
  %v85 = vld [vmem:[%s0 + $0x230] sm:$0xff]
  %v86 = vld [vmem:[%s0 + $0x238] sm:$0xff]
  %v87 = vld [vmem:[%s0 + $0x240] sm:$0xff]
  %v88 = vld [vmem:[%s0 + $0x248] sm:$0xff]
  %v89 = vld [vmem:[%s0 + $0x250] sm:$0xff]
  %v90 = vld [vmem:[%s0 + $0x258] sm:$0xff]
  %v91 = vld [vmem:[%s0 + $0x260] sm:$0xff]
  %v92 = vld [vmem:[%s0 + $0x268] sm:$0xff]
  %v93 = vld [vmem:[%s0 + $0x270] sm:$0xff]
  %v94 = vld [vmem:[%s0 + $0x278] sm:$0xff]
  %v95 = vld [vmem:[%s0 + $0x280] sm:$0xff]
  %v96 = vld [vmem:[%s0 + $0x288] sm:$0xff]
  %v97 = vld [vmem:[%s0 + $0x290] sm:$0xff]
  %v98 = vld [vmem:[%s0 + $0x298] sm:$0xff]
  %v99 = vld [vmem:[%s0 + $0x2a0] sm:$0xff]
  %v100 = vld [vmem:[%s0 + $0x2a8] sm:$0xff]
  %v101 = vld [vmem:[%s0 + $0x2b0] sm:$0xff]
  %v102 = vld [vmem:[%s0 + $0x2b8] sm:$0xff]
  %v103 = vld [vmem:[%s0 + $0x2c0] sm:$0xff]
  %v104 = vld [vmem:[%s0 + $0x2c8] sm:$0xff]
  %v105 = vld [vmem:[%s0 + $0x2d0] sm:$0xff]
  %v106 = vld [vmem:[%s0 + $0x2d8] sm:$0xff]
  %v107 = vld [vmem:[%s0 + $0x2e0] sm:$0xff]
  %v108 = vld [vmem:[%s0 + $0x2e8] sm:$0xff]
  %v109 = vld [vmem:[%s0 + $0x2f0] sm:$0xff]
  %v110 = vld [vmem:[%s0 + $0x2f8] sm:$0xff]
  %v111 = vld [vmem:[%s0 + $0x300] sm:$0xff]
  %v112 = vld [vmem:[%s0 + $0x308] sm:$0xff]
  %v113 = vld [vmem:[%s0 + $0x310] sm:$0xff]
  %v114 = vld [vmem:[%s0 + $0x318] sm:$0xff]
  %v115 = vld [vmem:[%s0 + $0x320] sm:$0xff]
  %v116 = vld [vmem:[%s0 + $0x328] sm:$0xff]
  %v117 = vld [vmem:[%s0 + $0x330] sm:$0xff]
  %v118 = vld [vmem:[%s0 + $0x338] sm:$0xff]
  %v119 = vld [vmem:[%s0 + $0x340] sm:$0xff]
  %v120 = vld [vmem:[%s0 + $0x348] sm:$0xff]
  %v121 = vld [vmem:[%s0 + $0x350] sm:$0xff]
  %v122 = vld [vmem:[%s0 + $0x358] sm:$0xff]
  %v123 = vld [vmem:[%s0 + $0x360] sm:$0xff]
  %v124 = vld [vmem:[%s0 + $0x368] sm:$0xff]
  %v125 = vld [vmem:[%s0 + $0x370] sm:$0xff]
  %v126 = vld [vmem:[%s0 + $0x378] sm:$0xff]
  %v127 = vld [vmem:[%s0 + $0x380] sm:$0xff]
  %v128 = vld [vmem:[%s0 + $0x388] sm:$0xff]
  %v129 = vld [vmem:[%s0 + $0x390] sm:$0xff]
  %v130 = vld [vmem:[%s0 + $0x398] sm:$0xff]
  %v131 = vld [vmem:[%s0 + $0x3a0] sm:$0xff]
  %v132 = vld [vmem:[%s0 + $0x3a8] sm:$0xff]
  %v133 = vld [vmem:[%s0 + $0x3b0] sm:$0xff]
  %v134 = vld [vmem:[%s0 + $0x3b8] sm:$0xff]
  %v135 = vld [vmem:[%s0 + $0x3c0] sm:$0xff]
  %v136 = vld [vmem:[%s0 + $0x3c8] sm:$0xff]
  %v137 = vld [vmem:[%s0 + $0x3d0] sm:$0xff]
  %v138 = vld [vmem:[%s0 + $0x3d8] sm:$0xff]
  %v139 = vld [vmem:[%s0 + $0x3e0] sm:$0xff]
  %v140 = vld [vmem:[%s0 + $0x3e8] sm:$0xff]
  %v141 = vld [vmem:[%s0 + $0x3f0] sm:$0xff]
  %v142 = vld [vmem:[%s0 + $0x3f8] sm:$0xff]
  %v143 = vld [vmem:[%s0 + $0x400] sm:$0xff]
  %v144 = vld [vmem:[%s0 + $0x408] sm:$0xff]
  %v145 = vld [vmem:[%s0 + $0x410] sm:$0xff]
  %v146 = vld [vmem:[%s0 + $0x418] sm:$0xff]
  %v147 = vld [vmem:[%s0 + $0x420] sm:$0xff]
  %v148 = vld [vmem:[%s0 + $0x428] sm:$0xff]
  %v149 = vld [vmem:[%s0 + $0x430] sm:$0xff]
  %v150 = vld [vmem:[%s0 + $0x438] sm:$0xff]
  %v151 = vld [vmem:[%s0 + $0x440] sm:$0xff]
  %v152 = vld [vmem:[%s0 + $0x448] sm:$0xff]
  %v153 = vld [vmem:[%s0 + $0x450] sm:$0xff]
  %v154 = vld [vmem:[%s0 + $0x458] sm:$0xff]
  %v155 = vld [vmem:[%s0 + $0x460] sm:$0xff]
  %v156 = vld [vmem:[%s0 + $0x468] sm:$0xff]
  %v157 = vld [vmem:[%s0 + $0x470] sm:$0xff]
  %v158 = vld [vmem:[%s0 + $0x478] sm:$0xff]
  %v159 = vld [vmem:[%s0 + $0x480] sm:$0xff]
  %v160 = vld [vmem:[%s0 + $0x488] sm:$0xff]
  %v161 = vld [vmem:[%s0 + $0x490] sm:$0xff]
  %v162 = vld [vmem:[%s0 + $0x498] sm:$0xff]
  %v163 = vld [vmem:[%s0 + $0x4a0] sm:$0xff]
  %v164 = vld [vmem:[%s0 + $0x4a8] sm:$0xff]
  %v165 = vld [vmem:[%s0 + $0x4b0] sm:$0xff]
  %v166 = vld [vmem:[%s0 + $0x4b8] sm:$0xff]
  %v167 = vld [vmem:[%s0 + $0x4c0] sm:$0xff]
  %v168 = vld [vmem:[%s0 + $0x4c8] sm:$0xff]
  %v169 = vld [vmem:[%s0 + $0x4d0] sm:$0xff]
  %v170 = vld [vmem:[%s0 + $0x4d8] sm:$0xff]
  %v171 = vld [vmem:[%s0 + $0x4e0] sm:$0xff]
  %v172 = vld [vmem:[%s0 + $0x4e8] sm:$0xff]
  %v173 = vld [vmem:[%s0 + $0x4f0] sm:$0xff]
  %v174 = vld [vmem:[%s0 + $0x4f8] sm:$0xff]
  %v175 = vld [vmem:[%s0 + $0x500] sm:$0xff]
  %v176 = vld [vmem:[%s0 + $0x508] sm:$0xff]
  %v177 = vld [vmem:[%s0 + $0x510] sm:$0xff]
  %v178 = vld [vmem:[%s0 + $0x518] sm:$0xff]
  %v179 = vld [vmem:[%s0 + $0x520] sm:$0xff]
  %v180 = vld [vmem:[%s0 + $0x528] sm:$0xff]
  %v181 = vld [vmem:[%s0 + $0x530] sm:$0xff]
  %v182 = vld [vmem:[%s0 + $0x538] sm:$0xff]
  %v183 = vld [vmem:[%s0 + $0x540] sm:$0xff]
  %v184 = vld [vmem:[%s0 + $0x548] sm:$0xff]
  %v185 = vld [vmem:[%s0 + $0x550] sm:$0xff]
  %v186 = vld [vmem:[%s0 + $0x558] sm:$0xff]
  %v187 = vld [vmem:[%s0 + $0x560] sm:$0xff]
  %v188 = vld [vmem:[%s0 + $0x568] sm:$0xff]
  %v189 = vld [vmem:[%s0 + $0x570] sm:$0xff]
  %v190 = vld [vmem:[%s0 + $0x578] sm:$0xff]
  %v191 = vld [vmem:[%s0 + $0x580] sm:$0xff]
  %v192 = vld [vmem:[%s0 + $0x588] sm:$0xff]
  %v193 = vld [vmem:[%s0 + $0x590] sm:$0xff]
  %v194 = vld [vmem:[%s0 + $0x598] sm:$0xff]
  %v195 = vld [vmem:[%s0 + $0x5a0] sm:$0xff]
  %v196 = vld [vmem:[%s0 + $0x5a8] sm:$0xff]
  %v197 = vld [vmem:[%s0 + $0x5b0] sm:$0xff]
  %v198 = vld [vmem:[%s0 + $0x5b8] sm:$0xff]
  %v199 = vld [vmem:[%s0 + $0x5c0] sm:$0xff]
  %v200 = vld [vmem:[%s0 + $0x5c8] sm:$0xff]
  %v201 = vld [vmem:[%s0 + $0x5d0] sm:$0xff]
  %v202 = vld [vmem:[%s0 + $0x5d8] sm:$0xff]
  %v203 = vld [vmem:[%s0 + $0x5e0] sm:$0xff]
  %v204 = vld [vmem:[%s0 + $0x5e8] sm:$0xff]
  %v205 = vld [vmem:[%s0 + $0x5f0] sm:$0xff]
  %v206 = vld [vmem:[%s0 + $0x5f8] sm:$0xff]
  %v207 = vld [vmem:[%s0 + $0x600] sm:$0xff]
  %v208 = vld [vmem:[%s0 + $0x608] sm:$0xff]
  %v209 = vld [vmem:[%s0 + $0x610] sm:$0xff]
  %v210 = vld [vmem:[%s0 + $0x618] sm:$0xff]
  %v211 = vld [vmem:[%s0 + $0x620] sm:$0xff]
  %v212 = vld [vmem:[%s0 + $0x628] sm:$0xff]
  %v213 = vld [vmem:[%s0 + $0x630] sm:$0xff]
  %v214 = vld [vmem:[%s0 + $0x638] sm:$0xff]
  %v215 = vld [vmem:[%s0 + $0x640] sm:$0xff]
  %v216 = vld [vmem:[%s0 + $0x648] sm:$0xff]
  %v217 = vld [vmem:[%s0 + $0x650] sm:$0xff]
  %v218 = vld [vmem:[%s0 + $0x658] sm:$0xff]
  %v219 = vld [vmem:[%s0 + $0x660] sm:$0xff]
  %v220 = vld [vmem:[%s0 + $0x668] sm:$0xff]
  %v221 = vld [vmem:[%s0 + $0x670] sm:$0xff]
  %v222 = vld [vmem:[%s0 + $0x678] sm:$0xff]
  %v223 = vld [vmem:[%s0 + $0x680] sm:$0xff]
  %v224 = vld [vmem:[%s0 + $0x688] sm:$0xff]
  %v225 = vld [vmem:[%s0 + $0x690] sm:$0xff]
  %v226 = vld [vmem:[%s0 + $0x698] sm:$0xff]
  %v227 = vld [vmem:[%s0 + $0x6a0] sm:$0xff]
  %v228 = vld [vmem:[%s0 + $0x6a8] sm:$0xff]
  %v229 = vld [vmem:[%s0 + $0x6b0] sm:$0xff]
  %v230 = vld [vmem:[%s0 + $0x6b8] sm:$0xff]
  %v231 = vld [vmem:[%s0 + $0x6c0] sm:$0xff]
  %v232 = vld [vmem:[%s0 + $0x6c8] sm:$0xff]
  %v233 = vld [vmem:[%s0 + $0x6d0] sm:$0xff]
  %v234 = vld [vmem:[%s0 + $0x6d8] sm:$0xff]
  %v235 = vld [vmem:[%s0 + $0x6e0] sm:$0xff]
  %v236 = vld [vmem:[%s0 + $0x6e8] sm:$0xff]
  %v237 = vld [vmem:[%s0 + $0x6f0] sm:$0xff]
  %v238 = vld [vmem:[%s0 + $0x6f8] sm:$0xff]
  %v239 = vld [vmem:[%s0 + $0x700] sm:$0xff]
  %v240 = vld [vmem:[%s0 + $0x708] sm:$0xff]
  %v241 = vld [vmem:[%s0 + $0x710] sm:$0xff]
  %v242 = vld [vmem:[%s0 + $0x718] sm:$0xff]
  %v243 = vld [vmem:[%s0 + $0x720] sm:$0xff]
  %v244 = vld [vmem:[%s0 + $0x728] sm:$0xff]
  %v245 = vld [vmem:[%s0 + $0x730] sm:$0xff]
  %v246 = vld [vmem:[%s0 + $0x738] sm:$0xff]
  %v247 = vld [vmem:[%s0 + $0x740] sm:$0xff]
  %v248 = vld [vmem:[%s0 + $0x748] sm:$0xff]
  %v249 = vld [vmem:[%s0 + $0x750] sm:$0xff]
  %v250 = vld [vmem:[%s0 + $0x758] sm:$0xff]
  %v251 = vld [vmem:[%s0 + $0x760] sm:$0xff]
  %v252 = vld [vmem:[%s0 + $0x768] sm:$0xff]
  %v253 = vld [vmem:[%s0 + $0x770] sm:$0xff]
  %v254 = vld [vmem:[%s0 + $0x778] sm:$0xff]
  %v255 = vld [vmem:[%s0 + $0x780] sm:$0xff]
  %v256 = vld [vmem:[%s0 + $0x788] sm:$0xff]
  %v257 = vld [vmem:[%s0 + $0x790] sm:$0xff]
  %v258 = vld [vmem:[%s0 + $0x798] sm:$0xff]
  %v259 = vld [vmem:[%s0 + $0x7a0] sm:$0xff]
  %v260 = vld [vmem:[%s0 + $0x7a8] sm:$0xff]
  %v261 = vld [vmem:[%s0 + $0x7b0] sm:$0xff]
  %v262 = vld [vmem:[%s0 + $0x7b8] sm:$0xff]
  %v263 = vld [vmem:[%s0 + $0x7c0] sm:$0xff]
  %v264 = vld [vmem:[%s0 + $0x7c8] sm:$0xff]
  %v265 = vld [vmem:[%s0 + $0x7d0] sm:$0xff]
  %v266 = vld [vmem:[%s0 + $0x7d8] sm:$0xff]
  %v267 = vld [vmem:[%s0 + $0x7e0] sm:$0xff]
  %v268 = vld [vmem:[%s0 + $0x7e8] sm:$0xff]
  %v269 = vld [vmem:[%s0 + $0x7f0] sm:$0xff]
  %v270 = vld [vmem:[%s0 + $0x7f8] sm:$0xff]
  %v271 = vld [vmem:[%s1] sm:$0xf]
  %v272 = vld [vmem:[%s1 + $0x4] sm:$0xf]
  %v273 = vld [vmem:[%s1 + $0x8] sm:$0xf]
  %v274 = vld [vmem:[%s1 + $0xc] sm:$0xf]
  %v275 = vld [vmem:[%s1 + $0x10] sm:$0xf]
  %v276 = vld [vmem:[%s1 + $0x14] sm:$0xf]
  %v277 = vld [vmem:[%s1 + $0x18] sm:$0xf]
  %v278 = vld [vmem:[%s1 + $0x1c] sm:$0xf]
  %v279 = vld [vmem:[%s1 + $0x20] sm:$0xf]
  %v280 = vld [vmem:[%s1 + $0x24] sm:$0xf]
  %v281 = vld [vmem:[%s1 + $0x28] sm:$0xf]
  %v282 = vld [vmem:[%s1 + $0x2c] sm:$0xf]
  %v283 = vld [vmem:[%s1 + $0x30] sm:$0xf]
  %v284 = vld [vmem:[%s1 + $0x34] sm:$0xf]
  %v285 = vld [vmem:[%s1 + $0x38] sm:$0xf]
  %v286 = vld [vmem:[%s1 + $0x3c] sm:$0xf]
  %v287 = vld [vmem:[%s1 + $0x40] sm:$0xf]
  %v288 = vld [vmem:[%s1 + $0x44] sm:$0xf]
  %v289 = vld [vmem:[%s1 + $0x48] sm:$0xf]
  %v290 = vld [vmem:[%s1 + $0x4c] sm:$0xf]
  %v291 = vld [vmem:[%s1 + $0x50] sm:$0xf]
  %v292 = vld [vmem:[%s1 + $0x54] sm:$0xf]
  %v293 = vld [vmem:[%s1 + $0x58] sm:$0xf]
  %v294 = vld [vmem:[%s1 + $0x5c] sm:$0xf]
  %v295 = vld [vmem:[%s1 + $0x60] sm:$0xf]
  %v296 = vld [vmem:[%s1 + $0x64] sm:$0xf]
  %v297 = vld [vmem:[%s1 + $0x68] sm:$0xf]
  %v298 = vld [vmem:[%s1 + $0x6c] sm:$0xf]
  %v299 = vld [vmem:[%s1 + $0x70] sm:$0xf]
  %v300 = vld [vmem:[%s1 + $0x74] sm:$0xf]
  %v301 = vld [vmem:[%s1 + $0x78] sm:$0xf]
  %v302 = vld [vmem:[%s1 + $0x7c] sm:$0xf]
  %v303 = vld [vmem:[%s1 + $0x80] sm:$0xf]
  %v304 = vld [vmem:[%s1 + $0x84] sm:$0xf]
  %v305 = vld [vmem:[%s1 + $0x88] sm:$0xf]
  %v306 = vld [vmem:[%s1 + $0x8c] sm:$0xf]
  %v307 = vld [vmem:[%s1 + $0x90] sm:$0xf]
  %v308 = vld [vmem:[%s1 + $0x94] sm:$0xf]
  %v309 = vld [vmem:[%s1 + $0x98] sm:$0xf]
  %v310 = vld [vmem:[%s1 + $0x9c] sm:$0xf]
  %v311 = vld [vmem:[%s1 + $0xa0] sm:$0xf]
  %v312 = vld [vmem:[%s1 + $0xa4] sm:$0xf]
  %v313 = vld [vmem:[%s1 + $0xa8] sm:$0xf]
  %v314 = vld [vmem:[%s1 + $0xac] sm:$0xf]
  %v315 = vld [vmem:[%s1 + $0xb0] sm:$0xf]
  %v316 = vld [vmem:[%s1 + $0xb4] sm:$0xf]
  %v317 = vld [vmem:[%s1 + $0xb8] sm:$0xf]
  %v318 = vld [vmem:[%s1 + $0xbc] sm:$0xf]
  %v319 = vld [vmem:[%s1 + $0xc0] sm:$0xf]
  %v320 = vld [vmem:[%s1 + $0xc4] sm:$0xf]
  %v321 = vld [vmem:[%s1 + $0xc8] sm:$0xf]
  %v322 = vld [vmem:[%s1 + $0xcc] sm:$0xf]
  %v323 = vld [vmem:[%s1 + $0xd0] sm:$0xf]
  %v324 = vld [vmem:[%s1 + $0xd4] sm:$0xf]
  %v325 = vld [vmem:[%s1 + $0xd8] sm:$0xf]
  %v326 = vld [vmem:[%s1 + $0xdc] sm:$0xf]
  %v327 = vld [vmem:[%s1 + $0xe0] sm:$0xf]
  %v328 = vld [vmem:[%s1 + $0xe4] sm:$0xf]
  %v329 = vld [vmem:[%s1 + $0xe8] sm:$0xf]
  %v330 = vld [vmem:[%s1 + $0xec] sm:$0xf]
  %v331 = vld [vmem:[%s1 + $0xf0] sm:$0xf]
  %v332 = vld [vmem:[%s1 + $0xf4] sm:$0xf]
  %v333 = vld [vmem:[%s1 + $0xf8] sm:$0xf]
  %v334 = vld [vmem:[%s1 + $0xfc] sm:$0xf]
  %v335 = vld [vmem:[%s1 + $0x100] sm:$0xf]
  %v336 = vld [vmem:[%s1 + $0x104] sm:$0xf]
  %v337 = vld [vmem:[%s1 + $0x108] sm:$0xf]
  %v338 = vld [vmem:[%s1 + $0x10c] sm:$0xf]
  %v339 = vld [vmem:[%s1 + $0x110] sm:$0xf]
  %v340 = vld [vmem:[%s1 + $0x114] sm:$0xf]
  %v341 = vld [vmem:[%s1 + $0x118] sm:$0xf]
  %v342 = vld [vmem:[%s1 + $0x11c] sm:$0xf]
  %v343 = vld [vmem:[%s1 + $0x120] sm:$0xf]
  %v344 = vld [vmem:[%s1 + $0x124] sm:$0xf]
  %v345 = vld [vmem:[%s1 + $0x128] sm:$0xf]
  %v346 = vld [vmem:[%s1 + $0x12c] sm:$0xf]
  %v347 = vld [vmem:[%s1 + $0x130] sm:$0xf]
  %v348 = vld [vmem:[%s1 + $0x134] sm:$0xf]
  %v349 = vld [vmem:[%s1 + $0x138] sm:$0xf]
  %v350 = vld [vmem:[%s1 + $0x13c] sm:$0xf]
  %v351 = vld [vmem:[%s1 + $0x140] sm:$0xf]
  %v352 = vld [vmem:[%s1 + $0x144] sm:$0xf]
  %v353 = vld [vmem:[%s1 + $0x148] sm:$0xf]
  %v354 = vld [vmem:[%s1 + $0x14c] sm:$0xf]
  %v355 = vld [vmem:[%s1 + $0x150] sm:$0xf]
  %v356 = vld [vmem:[%s1 + $0x154] sm:$0xf]
  %v357 = vld [vmem:[%s1 + $0x158] sm:$0xf]
  %v358 = vld [vmem:[%s1 + $0x15c] sm:$0xf]
  %v359 = vld [vmem:[%s1 + $0x160] sm:$0xf]
  %v360 = vld [vmem:[%s1 + $0x164] sm:$0xf]
  %v361 = vld [vmem:[%s1 + $0x168] sm:$0xf]
  %v362 = vld [vmem:[%s1 + $0x16c] sm:$0xf]
  %v363 = vld [vmem:[%s1 + $0x170] sm:$0xf]
  %v364 = vld [vmem:[%s1 + $0x174] sm:$0xf]
  %v365 = vld [vmem:[%s1 + $0x178] sm:$0xf]
  %v366 = vld [vmem:[%s1 + $0x17c] sm:$0xf]
  %v367 = vld [vmem:[%s1 + $0x180] sm:$0xf]
  %v368 = vld [vmem:[%s1 + $0x184] sm:$0xf]
  %v369 = vld [vmem:[%s1 + $0x188] sm:$0xf]
  %v370 = vld [vmem:[%s1 + $0x18c] sm:$0xf]
  %v371 = vld [vmem:[%s1 + $0x190] sm:$0xf]
  %v372 = vld [vmem:[%s1 + $0x194] sm:$0xf]
  %v373 = vld [vmem:[%s1 + $0x198] sm:$0xf]
  %v374 = vld [vmem:[%s1 + $0x19c] sm:$0xf]
  %v375 = vld [vmem:[%s1 + $0x1a0] sm:$0xf]
  %v376 = vld [vmem:[%s1 + $0x1a4] sm:$0xf]
  %v377 = vld [vmem:[%s1 + $0x1a8] sm:$0xf]
  %v378 = vld [vmem:[%s1 + $0x1ac] sm:$0xf]
  %v379 = vld [vmem:[%s1 + $0x1b0] sm:$0xf]
  %v380 = vld [vmem:[%s1 + $0x1b4] sm:$0xf]
  %v381 = vld [vmem:[%s1 + $0x1b8] sm:$0xf]
  %v382 = vld [vmem:[%s1 + $0x1bc] sm:$0xf]
  %v383 = vld [vmem:[%s1 + $0x1c0] sm:$0xf]
  %v384 = vld [vmem:[%s1 + $0x1c4] sm:$0xf]
  %v385 = vld [vmem:[%s1 + $0x1c8] sm:$0xf]
  %v386 = vld [vmem:[%s1 + $0x1cc] sm:$0xf]
  %v387 = vld [vmem:[%s1 + $0x1d0] sm:$0xf]
  %v388 = vld [vmem:[%s1 + $0x1d4] sm:$0xf]
  %v389 = vld [vmem:[%s1 + $0x1d8] sm:$0xf]
  %v390 = vld [vmem:[%s1 + $0x1dc] sm:$0xf]
  %v391 = vld [vmem:[%s1 + $0x1e0] sm:$0xf]
  %v392 = vld [vmem:[%s1 + $0x1e4] sm:$0xf]
  %v393 = vld [vmem:[%s1 + $0x1e8] sm:$0xf]
  %v394 = vld [vmem:[%s1 + $0x1ec] sm:$0xf]
  %v395 = vld [vmem:[%s1 + $0x1f0] sm:$0xf]
  %v396 = vld [vmem:[%s1 + $0x1f4] sm:$0xf]
  %v397 = vld [vmem:[%s2] sm:$0x1]
  %v399 = vperm.slane %v397, 0
  %v657 = vunpack.c.l.b16 %v15
  %v658 = vunpack.c.h.b16 %v15
  %v659 = vunpack.c.l.b16 %v16
  %v660 = vunpack.c.h.b16 %v16
  %v661 = vunpack.c.l.b16 %v17
  %v662 = vunpack.c.h.b16 %v17
  %v663 = vunpack.c.l.b16 %v18
  %v664 = vunpack.c.h.b16 %v18
  %v665 = vunpack.c.l.b16 %v19
  %v666 = vunpack.c.h.b16 %v19
  %v667 = vunpack.c.l.b16 %v20
  %v668 = vunpack.c.h.b16 %v20
  %v669 = vunpack.c.l.b16 %v21
  %v670 = vunpack.c.h.b16 %v21
  %v671 = vunpack.c.l.b16 %v22
  %v672 = vunpack.c.h.b16 %v22
  %v673 = vunpack.c.l.b16 %v23
  %v674 = vunpack.c.h.b16 %v23
  %v675 = vunpack.c.l.b16 %v24
  %v676 = vunpack.c.h.b16 %v24
  %v677 = vunpack.c.l.b16 %v25
  %v678 = vunpack.c.h.b16 %v25
  %v679 = vunpack.c.l.b16 %v26
  %v680 = vunpack.c.h.b16 %v26
  %v681 = vunpack.c.l.b16 %v27
  %v682 = vunpack.c.h.b16 %v27
  %v683 = vunpack.c.l.b16 %v28
  %v684 = vunpack.c.h.b16 %v28
  %v685 = vunpack.c.l.b16 %v29
  %v686 = vunpack.c.h.b16 %v29
  %v687 = vunpack.c.l.b16 %v30
  %v688 = vunpack.c.h.b16 %v30
  %v689 = vunpack.c.l.b16 %v31
  %v690 = vunpack.c.h.b16 %v31
  %v691 = vunpack.c.l.b16 %v32
  %v692 = vunpack.c.h.b16 %v32
  %v693 = vunpack.c.l.b16 %v33
  %v694 = vunpack.c.h.b16 %v33
  %v695 = vunpack.c.l.b16 %v34
  %v696 = vunpack.c.h.b16 %v34
  %v697 = vunpack.c.l.b16 %v35
  %v698 = vunpack.c.h.b16 %v35
  %v699 = vunpack.c.l.b16 %v36
  %v700 = vunpack.c.h.b16 %v36
  %v701 = vunpack.c.l.b16 %v37
  %v702 = vunpack.c.h.b16 %v37
  %v703 = vunpack.c.l.b16 %v38
  %v704 = vunpack.c.h.b16 %v38
  %v705 = vunpack.c.l.b16 %v39
  %v706 = vunpack.c.h.b16 %v39
  %v707 = vunpack.c.l.b16 %v40
  %v708 = vunpack.c.h.b16 %v40
  %v709 = vunpack.c.l.b16 %v41
  %v710 = vunpack.c.h.b16 %v41
  %v711 = vunpack.c.l.b16 %v42
  %v712 = vunpack.c.h.b16 %v42
  %v713 = vunpack.c.l.b16 %v43
  %v714 = vunpack.c.h.b16 %v43
  %v715 = vunpack.c.l.b16 %v44
  %v716 = vunpack.c.h.b16 %v44
  %v717 = vunpack.c.l.b16 %v45
  %v718 = vunpack.c.h.b16 %v45
  %v719 = vunpack.c.l.b16 %v46
  %v720 = vunpack.c.h.b16 %v46
  %v721 = vunpack.c.l.b16 %v47
  %v722 = vunpack.c.h.b16 %v47
  %v723 = vunpack.c.l.b16 %v48
  %v724 = vunpack.c.h.b16 %v48
  %v725 = vunpack.c.l.b16 %v49
  %v726 = vunpack.c.h.b16 %v49
  %v727 = vunpack.c.l.b16 %v50
  %v728 = vunpack.c.h.b16 %v50
  %v729 = vunpack.c.l.b16 %v51
  %v730 = vunpack.c.h.b16 %v51
  %v731 = vunpack.c.l.b16 %v52
  %v732 = vunpack.c.h.b16 %v52
  %v733 = vunpack.c.l.b16 %v53
  %v734 = vunpack.c.h.b16 %v53
  %v735 = vunpack.c.l.b16 %v54
  %v736 = vunpack.c.h.b16 %v54
  %v737 = vunpack.c.l.b16 %v55
  %v738 = vunpack.c.h.b16 %v55
  %v739 = vunpack.c.l.b16 %v56
  %v740 = vunpack.c.h.b16 %v56
  %v741 = vunpack.c.l.b16 %v57
  %v742 = vunpack.c.h.b16 %v57
  %v743 = vunpack.c.l.b16 %v58
  %v744 = vunpack.c.h.b16 %v58
  %v745 = vunpack.c.l.b16 %v59
  %v746 = vunpack.c.h.b16 %v59
  %v747 = vunpack.c.l.b16 %v60
  %v748 = vunpack.c.h.b16 %v60
  %v749 = vunpack.c.l.b16 %v61
  %v750 = vunpack.c.h.b16 %v61
  %v751 = vunpack.c.l.b16 %v62
  %v752 = vunpack.c.h.b16 %v62
  %v753 = vunpack.c.l.b16 %v63
  %v754 = vunpack.c.h.b16 %v63
  %v755 = vunpack.c.l.b16 %v64
  %v756 = vunpack.c.h.b16 %v64
  %v757 = vunpack.c.l.b16 %v65
  %v758 = vunpack.c.h.b16 %v65
  %v759 = vunpack.c.l.b16 %v66
  %v760 = vunpack.c.h.b16 %v66
  %v761 = vunpack.c.l.b16 %v67
  %v762 = vunpack.c.h.b16 %v67
  %v763 = vunpack.c.l.b16 %v68
  %v764 = vunpack.c.h.b16 %v68
  %v765 = vunpack.c.l.b16 %v69
  %v766 = vunpack.c.h.b16 %v69
  %v767 = vunpack.c.l.b16 %v70
  %v768 = vunpack.c.h.b16 %v70
  %v769 = vunpack.c.l.b16 %v71
  %v770 = vunpack.c.h.b16 %v71
  %v771 = vunpack.c.l.b16 %v72
  %v772 = vunpack.c.h.b16 %v72
  %v773 = vunpack.c.l.b16 %v73
  %v774 = vunpack.c.h.b16 %v73
  %v775 = vunpack.c.l.b16 %v74
  %v776 = vunpack.c.h.b16 %v74
  %v777 = vunpack.c.l.b16 %v75
  %v778 = vunpack.c.h.b16 %v75
  %v779 = vunpack.c.l.b16 %v76
  %v780 = vunpack.c.h.b16 %v76
  %v781 = vunpack.c.l.b16 %v77
  %v782 = vunpack.c.h.b16 %v77
  %v783 = vunpack.c.l.b16 %v78
  %v784 = vunpack.c.h.b16 %v78
  %v785 = vunpack.c.l.b16 %v79
  %v786 = vunpack.c.h.b16 %v79
  %v787 = vunpack.c.l.b16 %v80
  %v788 = vunpack.c.h.b16 %v80
  %v789 = vunpack.c.l.b16 %v81
  %v790 = vunpack.c.h.b16 %v81
  %v791 = vunpack.c.l.b16 %v82
  %v792 = vunpack.c.h.b16 %v82
  %v793 = vunpack.c.l.b16 %v83
  %v794 = vunpack.c.h.b16 %v83
  %v795 = vunpack.c.l.b16 %v84
  %v796 = vunpack.c.h.b16 %v84
  %v797 = vunpack.c.l.b16 %v85
  %v798 = vunpack.c.h.b16 %v85
  %v799 = vunpack.c.l.b16 %v86
  %v800 = vunpack.c.h.b16 %v86
  %v801 = vunpack.c.l.b16 %v87
  %v802 = vunpack.c.h.b16 %v87
  %v803 = vunpack.c.l.b16 %v88
  %v804 = vunpack.c.h.b16 %v88
  %v805 = vunpack.c.l.b16 %v89
  %v806 = vunpack.c.h.b16 %v89
  %v807 = vunpack.c.l.b16 %v90
  %v808 = vunpack.c.h.b16 %v90
  %v809 = vunpack.c.l.b16 %v91
  %v810 = vunpack.c.h.b16 %v91
  %v811 = vunpack.c.l.b16 %v92
  %v812 = vunpack.c.h.b16 %v92
  %v813 = vunpack.c.l.b16 %v93
  %v814 = vunpack.c.h.b16 %v93
  %v815 = vunpack.c.l.b16 %v94
  %v816 = vunpack.c.h.b16 %v94
  %v817 = vunpack.c.l.b16 %v95
  %v818 = vunpack.c.h.b16 %v95
  %v819 = vunpack.c.l.b16 %v96
  %v820 = vunpack.c.h.b16 %v96
  %v821 = vunpack.c.l.b16 %v97
  %v822 = vunpack.c.h.b16 %v97
  %v823 = vunpack.c.l.b16 %v98
  %v824 = vunpack.c.h.b16 %v98
  %v825 = vunpack.c.l.b16 %v99
  %v826 = vunpack.c.h.b16 %v99
  %v827 = vunpack.c.l.b16 %v100
  %v828 = vunpack.c.h.b16 %v100
  %v829 = vunpack.c.l.b16 %v101
  %v830 = vunpack.c.h.b16 %v101
  %v831 = vunpack.c.l.b16 %v102
  %v832 = vunpack.c.h.b16 %v102
  %v833 = vunpack.c.l.b16 %v103
  %v834 = vunpack.c.h.b16 %v103
  %v835 = vunpack.c.l.b16 %v104
  %v836 = vunpack.c.h.b16 %v104
  %v837 = vunpack.c.l.b16 %v105
  %v838 = vunpack.c.h.b16 %v105
  %v839 = vunpack.c.l.b16 %v106
  %v840 = vunpack.c.h.b16 %v106
  %v841 = vunpack.c.l.b16 %v107
  %v842 = vunpack.c.h.b16 %v107
  %v843 = vunpack.c.l.b16 %v108
  %v844 = vunpack.c.h.b16 %v108
  %v845 = vunpack.c.l.b16 %v109
  %v846 = vunpack.c.h.b16 %v109
  %v847 = vunpack.c.l.b16 %v110
  %v848 = vunpack.c.h.b16 %v110
  %v849 = vunpack.c.l.b16 %v111
  %v850 = vunpack.c.h.b16 %v111
  %v851 = vunpack.c.l.b16 %v112
  %v852 = vunpack.c.h.b16 %v112
  %v853 = vunpack.c.l.b16 %v113
  %v854 = vunpack.c.h.b16 %v113
  %v855 = vunpack.c.l.b16 %v114
  %v856 = vunpack.c.h.b16 %v114
  %v857 = vunpack.c.l.b16 %v115
  %v858 = vunpack.c.h.b16 %v115
  %v859 = vunpack.c.l.b16 %v116
  %v860 = vunpack.c.h.b16 %v116
  %v861 = vunpack.c.l.b16 %v117
  %v862 = vunpack.c.h.b16 %v117
  %v863 = vunpack.c.l.b16 %v118
  %v864 = vunpack.c.h.b16 %v118
  %v865 = vunpack.c.l.b16 %v119
  %v866 = vunpack.c.h.b16 %v119
  %v867 = vunpack.c.l.b16 %v120
  %v868 = vunpack.c.h.b16 %v120
  %v869 = vunpack.c.l.b16 %v121
  %v870 = vunpack.c.h.b16 %v121
  %v871 = vunpack.c.l.b16 %v122
  %v872 = vunpack.c.h.b16 %v122
  %v873 = vunpack.c.l.b16 %v123
  %v874 = vunpack.c.h.b16 %v123
  %v875 = vunpack.c.l.b16 %v124
  %v876 = vunpack.c.h.b16 %v124
  %v877 = vunpack.c.l.b16 %v125
  %v878 = vunpack.c.h.b16 %v125
  %v879 = vunpack.c.l.b16 %v126
  %v880 = vunpack.c.h.b16 %v126
  %v881 = vunpack.c.l.b16 %v127
  %v882 = vunpack.c.h.b16 %v127
  %v883 = vunpack.c.l.b16 %v128
  %v884 = vunpack.c.h.b16 %v128
  %v885 = vunpack.c.l.b16 %v129
  %v886 = vunpack.c.h.b16 %v129
  %v887 = vunpack.c.l.b16 %v130
  %v888 = vunpack.c.h.b16 %v130
  %v889 = vunpack.c.l.b16 %v131
  %v890 = vunpack.c.h.b16 %v131
  %v891 = vunpack.c.l.b16 %v132
  %v892 = vunpack.c.h.b16 %v132
  %v893 = vunpack.c.l.b16 %v133
  %v894 = vunpack.c.h.b16 %v133
  %v895 = vunpack.c.l.b16 %v134
  %v896 = vunpack.c.h.b16 %v134
  %v897 = vunpack.c.l.b16 %v135
  %v898 = vunpack.c.h.b16 %v135
  %v899 = vunpack.c.l.b16 %v136
  %v900 = vunpack.c.h.b16 %v136
  %v901 = vunpack.c.l.b16 %v137
  %v902 = vunpack.c.h.b16 %v137
  %v903 = vunpack.c.l.b16 %v138
  %v904 = vunpack.c.h.b16 %v138
  %v905 = vunpack.c.l.b16 %v139
  %v906 = vunpack.c.h.b16 %v139
  %v907 = vunpack.c.l.b16 %v140
  %v908 = vunpack.c.h.b16 %v140
  %v909 = vunpack.c.l.b16 %v141
  %v910 = vunpack.c.h.b16 %v141
  %v911 = vunpack.c.l.b16 %v142
  %v912 = vunpack.c.h.b16 %v142
  %v913 = vunpack.c.l.b16 %v143
  %v914 = vunpack.c.h.b16 %v143
  %v915 = vunpack.c.l.b16 %v144
  %v916 = vunpack.c.h.b16 %v144
  %v917 = vunpack.c.l.b16 %v145
  %v918 = vunpack.c.h.b16 %v145
  %v919 = vunpack.c.l.b16 %v146
  %v920 = vunpack.c.h.b16 %v146
  %v921 = vunpack.c.l.b16 %v147
  %v922 = vunpack.c.h.b16 %v147
  %v923 = vunpack.c.l.b16 %v148
  %v924 = vunpack.c.h.b16 %v148
  %v925 = vunpack.c.l.b16 %v149
  %v926 = vunpack.c.h.b16 %v149
  %v927 = vunpack.c.l.b16 %v150
  %v928 = vunpack.c.h.b16 %v150
  %v929 = vunpack.c.l.b16 %v151
  %v930 = vunpack.c.h.b16 %v151
  %v931 = vunpack.c.l.b16 %v152
  %v932 = vunpack.c.h.b16 %v152
  %v933 = vunpack.c.l.b16 %v153
  %v934 = vunpack.c.h.b16 %v153
  %v935 = vunpack.c.l.b16 %v154
  %v936 = vunpack.c.h.b16 %v154
  %v937 = vunpack.c.l.b16 %v155
  %v938 = vunpack.c.h.b16 %v155
  %v939 = vunpack.c.l.b16 %v156
  %v940 = vunpack.c.h.b16 %v156
  %v941 = vunpack.c.l.b16 %v157
  %v942 = vunpack.c.h.b16 %v157
  %v943 = vunpack.c.l.b16 %v158
  %v944 = vunpack.c.h.b16 %v158
  %v945 = vunpack.c.l.b16 %v159
  %v946 = vunpack.c.h.b16 %v159
  %v947 = vunpack.c.l.b16 %v160
  %v948 = vunpack.c.h.b16 %v160
  %v949 = vunpack.c.l.b16 %v161
  %v950 = vunpack.c.h.b16 %v161
  %v951 = vunpack.c.l.b16 %v162
  %v952 = vunpack.c.h.b16 %v162
  %v953 = vunpack.c.l.b16 %v163
  %v954 = vunpack.c.h.b16 %v163
  %v955 = vunpack.c.l.b16 %v164
  %v956 = vunpack.c.h.b16 %v164
  %v957 = vunpack.c.l.b16 %v165
  %v958 = vunpack.c.h.b16 %v165
  %v959 = vunpack.c.l.b16 %v166
  %v960 = vunpack.c.h.b16 %v166
  %v961 = vunpack.c.l.b16 %v167
  %v962 = vunpack.c.h.b16 %v167
  %v963 = vunpack.c.l.b16 %v168
  %v964 = vunpack.c.h.b16 %v168
  %v965 = vunpack.c.l.b16 %v169
  %v966 = vunpack.c.h.b16 %v169
  %v967 = vunpack.c.l.b16 %v170
  %v968 = vunpack.c.h.b16 %v170
  %v969 = vunpack.c.l.b16 %v171
  %v970 = vunpack.c.h.b16 %v171
  %v971 = vunpack.c.l.b16 %v172
  %v972 = vunpack.c.h.b16 %v172
  %v973 = vunpack.c.l.b16 %v173
  %v974 = vunpack.c.h.b16 %v173
  %v975 = vunpack.c.l.b16 %v174
  %v976 = vunpack.c.h.b16 %v174
  %v977 = vunpack.c.l.b16 %v175
  %v978 = vunpack.c.h.b16 %v175
  %v979 = vunpack.c.l.b16 %v176
  %v980 = vunpack.c.h.b16 %v176
  %v981 = vunpack.c.l.b16 %v177
  %v982 = vunpack.c.h.b16 %v177
  %v983 = vunpack.c.l.b16 %v178
  %v984 = vunpack.c.h.b16 %v178
  %v985 = vunpack.c.l.b16 %v179
  %v986 = vunpack.c.h.b16 %v179
  %v987 = vunpack.c.l.b16 %v180
  %v988 = vunpack.c.h.b16 %v180
  %v989 = vunpack.c.l.b16 %v181
  %v990 = vunpack.c.h.b16 %v181
  %v991 = vunpack.c.l.b16 %v182
  %v992 = vunpack.c.h.b16 %v182
  %v993 = vunpack.c.l.b16 %v183
  %v994 = vunpack.c.h.b16 %v183
  %v995 = vunpack.c.l.b16 %v184
  %v996 = vunpack.c.h.b16 %v184
  %v997 = vunpack.c.l.b16 %v185
  %v998 = vunpack.c.h.b16 %v185
  %v999 = vunpack.c.l.b16 %v186
  %v1000 = vunpack.c.h.b16 %v186
  %v1001 = vunpack.c.l.b16 %v187
  %v1002 = vunpack.c.h.b16 %v187
  %v1003 = vunpack.c.l.b16 %v188
  %v1004 = vunpack.c.h.b16 %v188
  %v1005 = vunpack.c.l.b16 %v189
  %v1006 = vunpack.c.h.b16 %v189
  %v1007 = vunpack.c.l.b16 %v190
  %v1008 = vunpack.c.h.b16 %v190
  %v1009 = vunpack.c.l.b16 %v191
  %v1010 = vunpack.c.h.b16 %v191
  %v1011 = vunpack.c.l.b16 %v192
  %v1012 = vunpack.c.h.b16 %v192
  %v1013 = vunpack.c.l.b16 %v193
  %v1014 = vunpack.c.h.b16 %v193
  %v1015 = vunpack.c.l.b16 %v194
  %v1016 = vunpack.c.h.b16 %v194
  %v1017 = vunpack.c.l.b16 %v195
  %v1018 = vunpack.c.h.b16 %v195
  %v1019 = vunpack.c.l.b16 %v196
  %v1020 = vunpack.c.h.b16 %v196
  %v1021 = vunpack.c.l.b16 %v197
  %v1022 = vunpack.c.h.b16 %v197
  %v1023 = vunpack.c.l.b16 %v198
  %v1024 = vunpack.c.h.b16 %v198
  %v1025 = vunpack.c.l.b16 %v199
  %v1026 = vunpack.c.h.b16 %v199
  %v1027 = vunpack.c.l.b16 %v200
  %v1028 = vunpack.c.h.b16 %v200
  %v1029 = vunpack.c.l.b16 %v201
  %v1030 = vunpack.c.h.b16 %v201
  %v1031 = vunpack.c.l.b16 %v202
  %v1032 = vunpack.c.h.b16 %v202
  %v1033 = vunpack.c.l.b16 %v203
  %v1034 = vunpack.c.h.b16 %v203
  %v1035 = vunpack.c.l.b16 %v204
  %v1036 = vunpack.c.h.b16 %v204
  %v1037 = vunpack.c.l.b16 %v205
  %v1038 = vunpack.c.h.b16 %v205
  %v1039 = vunpack.c.l.b16 %v206
  %v1040 = vunpack.c.h.b16 %v206
  %v1041 = vunpack.c.l.b16 %v207
  %v1042 = vunpack.c.h.b16 %v207
  %v1043 = vunpack.c.l.b16 %v208
  %v1044 = vunpack.c.h.b16 %v208
  %v1045 = vunpack.c.l.b16 %v209
  %v1046 = vunpack.c.h.b16 %v209
  %v1047 = vunpack.c.l.b16 %v210
  %v1048 = vunpack.c.h.b16 %v210
  %v1049 = vunpack.c.l.b16 %v211
  %v1050 = vunpack.c.h.b16 %v211
  %v1051 = vunpack.c.l.b16 %v212
  %v1052 = vunpack.c.h.b16 %v212
  %v1053 = vunpack.c.l.b16 %v213
  %v1054 = vunpack.c.h.b16 %v213
  %v1055 = vunpack.c.l.b16 %v214
  %v1056 = vunpack.c.h.b16 %v214
  %v1057 = vunpack.c.l.b16 %v215
  %v1058 = vunpack.c.h.b16 %v215
  %v1059 = vunpack.c.l.b16 %v216
  %v1060 = vunpack.c.h.b16 %v216
  %v1061 = vunpack.c.l.b16 %v217
  %v1062 = vunpack.c.h.b16 %v217
  %v1063 = vunpack.c.l.b16 %v218
  %v1064 = vunpack.c.h.b16 %v218
  %v1065 = vunpack.c.l.b16 %v219
  %v1066 = vunpack.c.h.b16 %v219
  %v1067 = vunpack.c.l.b16 %v220
  %v1068 = vunpack.c.h.b16 %v220
  %v1069 = vunpack.c.l.b16 %v221
  %v1070 = vunpack.c.h.b16 %v221
  %v1071 = vunpack.c.l.b16 %v222
  %v1072 = vunpack.c.h.b16 %v222
  %v1073 = vunpack.c.l.b16 %v223
  %v1074 = vunpack.c.h.b16 %v223
  %v1075 = vunpack.c.l.b16 %v224
  %v1076 = vunpack.c.h.b16 %v224
  %v1077 = vunpack.c.l.b16 %v225
  %v1078 = vunpack.c.h.b16 %v225
  %v1079 = vunpack.c.l.b16 %v226
  %v1080 = vunpack.c.h.b16 %v226
  %v1081 = vunpack.c.l.b16 %v227
  %v1082 = vunpack.c.h.b16 %v227
  %v1083 = vunpack.c.l.b16 %v228
  %v1084 = vunpack.c.h.b16 %v228
  %v1085 = vunpack.c.l.b16 %v229
  %v1086 = vunpack.c.h.b16 %v229
  %v1087 = vunpack.c.l.b16 %v230
  %v1088 = vunpack.c.h.b16 %v230
  %v1089 = vunpack.c.l.b16 %v231
  %v1090 = vunpack.c.h.b16 %v231
  %v1091 = vunpack.c.l.b16 %v232
  %v1092 = vunpack.c.h.b16 %v232
  %v1093 = vunpack.c.l.b16 %v233
  %v1094 = vunpack.c.h.b16 %v233
  %v1095 = vunpack.c.l.b16 %v234
  %v1096 = vunpack.c.h.b16 %v234
  %v1097 = vunpack.c.l.b16 %v235
  %v1098 = vunpack.c.h.b16 %v235
  %v1099 = vunpack.c.l.b16 %v236
  %v1100 = vunpack.c.h.b16 %v236
  %v1101 = vunpack.c.l.b16 %v237
  %v1102 = vunpack.c.h.b16 %v237
  %v1103 = vunpack.c.l.b16 %v238
  %v1104 = vunpack.c.h.b16 %v238
  %v1105 = vunpack.c.l.b16 %v239
  %v1106 = vunpack.c.h.b16 %v239
  %v1107 = vunpack.c.l.b16 %v240
  %v1108 = vunpack.c.h.b16 %v240
  %v1109 = vunpack.c.l.b16 %v241
  %v1110 = vunpack.c.h.b16 %v241
  %v1111 = vunpack.c.l.b16 %v242
  %v1112 = vunpack.c.h.b16 %v242
  %v1113 = vunpack.c.l.b16 %v243
  %v1114 = vunpack.c.h.b16 %v243
  %v1115 = vunpack.c.l.b16 %v244
  %v1116 = vunpack.c.h.b16 %v244
  %v1117 = vunpack.c.l.b16 %v245
  %v1118 = vunpack.c.h.b16 %v245
  %v1119 = vunpack.c.l.b16 %v246
  %v1120 = vunpack.c.h.b16 %v246
  %v1121 = vunpack.c.l.b16 %v247
  %v1122 = vunpack.c.h.b16 %v247
  %v1123 = vunpack.c.l.b16 %v248
  %v1124 = vunpack.c.h.b16 %v248
  %v1125 = vunpack.c.l.b16 %v249
  %v1126 = vunpack.c.h.b16 %v249
  %v1127 = vunpack.c.l.b16 %v250
  %v1128 = vunpack.c.h.b16 %v250
  %v1129 = vunpack.c.l.b16 %v251
  %v1130 = vunpack.c.h.b16 %v251
  %v1131 = vunpack.c.l.b16 %v252
  %v1132 = vunpack.c.h.b16 %v252
  %v1133 = vunpack.c.l.b16 %v253
  %v1134 = vunpack.c.h.b16 %v253
  %v1135 = vunpack.c.l.b16 %v254
  %v1136 = vunpack.c.h.b16 %v254
  %v1137 = vunpack.c.l.b16 %v255
  %v1138 = vunpack.c.h.b16 %v255
  %v1139 = vunpack.c.l.b16 %v256
  %v1140 = vunpack.c.h.b16 %v256
  %v1141 = vunpack.c.l.b16 %v257
  %v1142 = vunpack.c.h.b16 %v257
  %v1143 = vunpack.c.l.b16 %v258
  %v1144 = vunpack.c.h.b16 %v258
  %v1145 = vunpack.c.l.b16 %v259
  %v1146 = vunpack.c.h.b16 %v259
  %v1147 = vunpack.c.l.b16 %v260
  %v1148 = vunpack.c.h.b16 %v260
  %v1149 = vunpack.c.l.b16 %v261
  %v1150 = vunpack.c.h.b16 %v261
  %v1151 = vunpack.c.l.b16 %v262
  %v1152 = vunpack.c.h.b16 %v262
  %v1153 = vunpack.c.l.b16 %v263
  %v1154 = vunpack.c.h.b16 %v263
  %v1155 = vunpack.c.l.b16 %v264
  %v1156 = vunpack.c.h.b16 %v264
  %v1157 = vunpack.c.l.b16 %v265
  %v1158 = vunpack.c.h.b16 %v265
  %v1159 = vunpack.c.l.b16 %v266
  %v1160 = vunpack.c.h.b16 %v266
  %v1161 = vunpack.c.l.b16 %v267
  %v1162 = vunpack.c.h.b16 %v267
  %v1163 = vunpack.c.l.b16 %v268
  %v1164 = vunpack.c.h.b16 %v268
  %v1165 = vunpack.c.l.b16 %v269
  %v1166 = vunpack.c.h.b16 %v269
  %v1167 = vunpack.c.l.b16 %v270
  %v1168 = vunpack.c.h.b16 %v270
  %v1169 = vpack.c.b16 %v665, %v657
  %v1170 = vpack.c.b16 %v666, %v658
  %v1171 = vpack.c.b16 %v667, %v659
  %v1172 = vpack.c.b16 %v668, %v660
  %v1173 = vpack.c.b16 %v669, %v661
  %v1174 = vpack.c.b16 %v670, %v662
  %v1175 = vpack.c.b16 %v671, %v663
  %v1176 = vpack.c.b16 %v672, %v664
  %v1177 = vpack.c.b16 %v681, %v673
  %v1178 = vpack.c.b16 %v682, %v674
  %v1179 = vpack.c.b16 %v683, %v675
  %v1180 = vpack.c.b16 %v684, %v676
  %v1181 = vpack.c.b16 %v685, %v677
  %v1182 = vpack.c.b16 %v686, %v678
  %v1183 = vpack.c.b16 %v687, %v679
  %v1184 = vpack.c.b16 %v688, %v680
  %v1185 = vpack.c.b16 %v697, %v689
  %v1186 = vpack.c.b16 %v698, %v690
  %v1187 = vpack.c.b16 %v699, %v691
  %v1188 = vpack.c.b16 %v700, %v692
  %v1189 = vpack.c.b16 %v701, %v693
  %v1190 = vpack.c.b16 %v702, %v694
  %v1191 = vpack.c.b16 %v703, %v695
  %v1192 = vpack.c.b16 %v704, %v696
  %v1193 = vpack.c.b16 %v713, %v705
  %v1194 = vpack.c.b16 %v714, %v706
  %v1195 = vpack.c.b16 %v715, %v707
  %v1196 = vpack.c.b16 %v716, %v708
  %v1197 = vpack.c.b16 %v717, %v709
  %v1198 = vpack.c.b16 %v718, %v710
  %v1199 = vpack.c.b16 %v719, %v711
  %v1200 = vpack.c.b16 %v720, %v712
  %v1201 = vpack.c.b16 %v729, %v721
  %v1202 = vpack.c.b16 %v730, %v722
  %v1203 = vpack.c.b16 %v731, %v723
  %v1204 = vpack.c.b16 %v732, %v724
  %v1205 = vpack.c.b16 %v733, %v725
  %v1206 = vpack.c.b16 %v734, %v726
  %v1207 = vpack.c.b16 %v735, %v727
  %v1208 = vpack.c.b16 %v736, %v728
  %v1209 = vpack.c.b16 %v745, %v737
  %v1210 = vpack.c.b16 %v746, %v738
  %v1211 = vpack.c.b16 %v747, %v739
  %v1212 = vpack.c.b16 %v748, %v740
  %v1213 = vpack.c.b16 %v749, %v741
  %v1214 = vpack.c.b16 %v750, %v742
  %v1215 = vpack.c.b16 %v751, %v743
  %v1216 = vpack.c.b16 %v752, %v744
  %v1217 = vpack.c.b16 %v761, %v753
  %v1218 = vpack.c.b16 %v762, %v754
  %v1219 = vpack.c.b16 %v763, %v755
  %v1220 = vpack.c.b16 %v764, %v756
  %v1221 = vpack.c.b16 %v765, %v757
  %v1222 = vpack.c.b16 %v766, %v758
  %v1223 = vpack.c.b16 %v767, %v759
  %v1224 = vpack.c.b16 %v768, %v760
  %v1225 = vpack.c.b16 %v777, %v769
  %v1226 = vpack.c.b16 %v778, %v770
  %v1227 = vpack.c.b16 %v779, %v771
  %v1228 = vpack.c.b16 %v780, %v772
  %v1229 = vpack.c.b16 %v781, %v773
  %v1230 = vpack.c.b16 %v782, %v774
  %v1231 = vpack.c.b16 %v783, %v775
  %v1232 = vpack.c.b16 %v784, %v776
  %v1233 = vpack.c.b16 %v793, %v785
  %v1234 = vpack.c.b16 %v794, %v786
  %v1235 = vpack.c.b16 %v795, %v787
  %v1236 = vpack.c.b16 %v796, %v788
  %v1237 = vpack.c.b16 %v797, %v789
  %v1238 = vpack.c.b16 %v798, %v790
  %v1239 = vpack.c.b16 %v799, %v791
  %v1240 = vpack.c.b16 %v800, %v792
  %v1241 = vpack.c.b16 %v809, %v801
  %v1242 = vpack.c.b16 %v810, %v802
  %v1243 = vpack.c.b16 %v811, %v803
  %v1244 = vpack.c.b16 %v812, %v804
  %v1245 = vpack.c.b16 %v813, %v805
  %v1246 = vpack.c.b16 %v814, %v806
  %v1247 = vpack.c.b16 %v815, %v807
  %v1248 = vpack.c.b16 %v816, %v808
  %v1249 = vpack.c.b16 %v825, %v817
  %v1250 = vpack.c.b16 %v826, %v818
  %v1251 = vpack.c.b16 %v827, %v819
  %v1252 = vpack.c.b16 %v828, %v820
  %v1253 = vpack.c.b16 %v829, %v821
  %v1254 = vpack.c.b16 %v830, %v822
  %v1255 = vpack.c.b16 %v831, %v823
  %v1256 = vpack.c.b16 %v832, %v824
  %v1257 = vpack.c.b16 %v841, %v833
  %v1258 = vpack.c.b16 %v842, %v834
  %v1259 = vpack.c.b16 %v843, %v835
  %v1260 = vpack.c.b16 %v844, %v836
  %v1261 = vpack.c.b16 %v845, %v837
  %v1262 = vpack.c.b16 %v846, %v838
  %v1263 = vpack.c.b16 %v847, %v839
  %v1264 = vpack.c.b16 %v848, %v840
  %v1265 = vpack.c.b16 %v857, %v849
  %v1266 = vpack.c.b16 %v858, %v850
  %v1267 = vpack.c.b16 %v859, %v851
  %v1268 = vpack.c.b16 %v860, %v852
  %v1269 = vpack.c.b16 %v861, %v853
  %v1270 = vpack.c.b16 %v862, %v854
  %v1271 = vpack.c.b16 %v863, %v855
  %v1272 = vpack.c.b16 %v864, %v856
  %v1273 = vpack.c.b16 %v873, %v865
  %v1274 = vpack.c.b16 %v874, %v866
  %v1275 = vpack.c.b16 %v875, %v867
  %v1276 = vpack.c.b16 %v876, %v868
  %v1277 = vpack.c.b16 %v877, %v869
  %v1278 = vpack.c.b16 %v878, %v870
  %v1279 = vpack.c.b16 %v879, %v871
  %v1280 = vpack.c.b16 %v880, %v872
  %v1281 = vpack.c.b16 %v889, %v881
  %v1282 = vpack.c.b16 %v890, %v882
  %v1283 = vpack.c.b16 %v891, %v883
  %v1284 = vpack.c.b16 %v892, %v884
  %v1285 = vpack.c.b16 %v893, %v885
  %v1286 = vpack.c.b16 %v894, %v886
  %v1287 = vpack.c.b16 %v895, %v887
  %v1288 = vpack.c.b16 %v896, %v888
  %v1289 = vpack.c.b16 %v905, %v897
  %v1290 = vpack.c.b16 %v906, %v898
  %v1291 = vpack.c.b16 %v907, %v899
  %v1292 = vpack.c.b16 %v908, %v900
  %v1293 = vpack.c.b16 %v909, %v901
  %v1294 = vpack.c.b16 %v910, %v902
  %v1295 = vpack.c.b16 %v911, %v903
  %v1296 = vpack.c.b16 %v912, %v904
  %v1297 = vpack.c.b16 %v921, %v913
  %v1298 = vpack.c.b16 %v922, %v914
  %v1299 = vpack.c.b16 %v923, %v915
  %v1300 = vpack.c.b16 %v924, %v916
  %v1301 = vpack.c.b16 %v925, %v917
  %v1302 = vpack.c.b16 %v926, %v918
  %v1303 = vpack.c.b16 %v927, %v919
  %v1304 = vpack.c.b16 %v928, %v920
  %v1305 = vpack.c.b16 %v937, %v929
  %v1306 = vpack.c.b16 %v938, %v930
  %v1307 = vpack.c.b16 %v939, %v931
  %v1308 = vpack.c.b16 %v940, %v932
  %v1309 = vpack.c.b16 %v941, %v933
  %v1310 = vpack.c.b16 %v942, %v934
  %v1311 = vpack.c.b16 %v943, %v935
  %v1312 = vpack.c.b16 %v944, %v936
  %v1313 = vpack.c.b16 %v953, %v945
  %v1314 = vpack.c.b16 %v954, %v946
  %v1315 = vpack.c.b16 %v955, %v947
  %v1316 = vpack.c.b16 %v956, %v948
  %v1317 = vpack.c.b16 %v957, %v949
  %v1318 = vpack.c.b16 %v958, %v950
  %v1319 = vpack.c.b16 %v959, %v951
  %v1320 = vpack.c.b16 %v960, %v952
  %v1321 = vpack.c.b16 %v969, %v961
  %v1322 = vpack.c.b16 %v970, %v962
  %v1323 = vpack.c.b16 %v971, %v963
  %v1324 = vpack.c.b16 %v972, %v964
  %v1325 = vpack.c.b16 %v973, %v965
  %v1326 = vpack.c.b16 %v974, %v966
  %v1327 = vpack.c.b16 %v975, %v967
  %v1328 = vpack.c.b16 %v976, %v968
  %v1329 = vpack.c.b16 %v985, %v977
  %v1330 = vpack.c.b16 %v986, %v978
  %v1331 = vpack.c.b16 %v987, %v979
  %v1332 = vpack.c.b16 %v988, %v980
  %v1333 = vpack.c.b16 %v989, %v981
  %v1334 = vpack.c.b16 %v990, %v982
  %v1335 = vpack.c.b16 %v991, %v983
  %v1336 = vpack.c.b16 %v992, %v984
  %v1337 = vpack.c.b16 %v1001, %v993
  %v1338 = vpack.c.b16 %v1002, %v994
  %v1339 = vpack.c.b16 %v1003, %v995
  %v1340 = vpack.c.b16 %v1004, %v996
  %v1341 = vpack.c.b16 %v1005, %v997
  %v1342 = vpack.c.b16 %v1006, %v998
  %v1343 = vpack.c.b16 %v1007, %v999
  %v1344 = vpack.c.b16 %v1008, %v1000
  %v1345 = vpack.c.b16 %v1017, %v1009
  %v1346 = vpack.c.b16 %v1018, %v1010
  %v1347 = vpack.c.b16 %v1019, %v1011
  %v1348 = vpack.c.b16 %v1020, %v1012
  %v1349 = vpack.c.b16 %v1021, %v1013
  %v1350 = vpack.c.b16 %v1022, %v1014
  %v1351 = vpack.c.b16 %v1023, %v1015
  %v1352 = vpack.c.b16 %v1024, %v1016
  %v1353 = vpack.c.b16 %v1033, %v1025
  %v1354 = vpack.c.b16 %v1034, %v1026
  %v1355 = vpack.c.b16 %v1035, %v1027
  %v1356 = vpack.c.b16 %v1036, %v1028
  %v1357 = vpack.c.b16 %v1037, %v1029
  %v1358 = vpack.c.b16 %v1038, %v1030
  %v1359 = vpack.c.b16 %v1039, %v1031
  %v1360 = vpack.c.b16 %v1040, %v1032
  %v1361 = vpack.c.b16 %v1049, %v1041
  %v1362 = vpack.c.b16 %v1050, %v1042
  %v1363 = vpack.c.b16 %v1051, %v1043
  %v1364 = vpack.c.b16 %v1052, %v1044
  %v1365 = vpack.c.b16 %v1053, %v1045
  %v1366 = vpack.c.b16 %v1054, %v1046
  %v1367 = vpack.c.b16 %v1055, %v1047
  %v1368 = vpack.c.b16 %v1056, %v1048
  %v1369 = vpack.c.b16 %v1065, %v1057
  %v1370 = vpack.c.b16 %v1066, %v1058
  %v1371 = vpack.c.b16 %v1067, %v1059
  %v1372 = vpack.c.b16 %v1068, %v1060
  %v1373 = vpack.c.b16 %v1069, %v1061
  %v1374 = vpack.c.b16 %v1070, %v1062
  %v1375 = vpack.c.b16 %v1071, %v1063
  %v1376 = vpack.c.b16 %v1072, %v1064
  %v1377 = vpack.c.b16 %v1081, %v1073
  %v1378 = vpack.c.b16 %v1082, %v1074
  %v1379 = vpack.c.b16 %v1083, %v1075
  %v1380 = vpack.c.b16 %v1084, %v1076
  %v1381 = vpack.c.b16 %v1085, %v1077
  %v1382 = vpack.c.b16 %v1086, %v1078
  %v1383 = vpack.c.b16 %v1087, %v1079
  %v1384 = vpack.c.b16 %v1088, %v1080
  %v1385 = vpack.c.b16 %v1097, %v1089
  %v1386 = vpack.c.b16 %v1098, %v1090
  %v1387 = vpack.c.b16 %v1099, %v1091
  %v1388 = vpack.c.b16 %v1100, %v1092
  %v1389 = vpack.c.b16 %v1101, %v1093
  %v1390 = vpack.c.b16 %v1102, %v1094
  %v1391 = vpack.c.b16 %v1103, %v1095
  %v1392 = vpack.c.b16 %v1104, %v1096
  %v1393 = vpack.c.b16 %v1113, %v1105
  %v1394 = vpack.c.b16 %v1114, %v1106
  %v1395 = vpack.c.b16 %v1115, %v1107
  %v1396 = vpack.c.b16 %v1116, %v1108
  %v1397 = vpack.c.b16 %v1117, %v1109
  %v1398 = vpack.c.b16 %v1118, %v1110
  %v1399 = vpack.c.b16 %v1119, %v1111
  %v1400 = vpack.c.b16 %v1120, %v1112
  %v1401 = vpack.c.b16 %v1129, %v1121
  %v1402 = vpack.c.b16 %v1130, %v1122
  %v1403 = vpack.c.b16 %v1131, %v1123
  %v1404 = vpack.c.b16 %v1132, %v1124
  %v1405 = vpack.c.b16 %v1133, %v1125
  %v1406 = vpack.c.b16 %v1134, %v1126
  %v1407 = vpack.c.b16 %v1135, %v1127
  %v1408 = vpack.c.b16 %v1136, %v1128
  %v1409 = vpack.c.b16 %v1145, %v1137
  %v1410 = vpack.c.b16 %v1146, %v1138
  %v1411 = vpack.c.b16 %v1147, %v1139
  %v1412 = vpack.c.b16 %v1148, %v1140
  %v1413 = vpack.c.b16 %v1149, %v1141
  %v1414 = vpack.c.b16 %v1150, %v1142
  %v1415 = vpack.c.b16 %v1151, %v1143
  %v1416 = vpack.c.b16 %v1152, %v1144
  %v1417 = vpack.c.b16 %v1161, %v1153
  %v1418 = vpack.c.b16 %v1162, %v1154
  %v1419 = vpack.c.b16 %v1163, %v1155
  %v1420 = vpack.c.b16 %v1164, %v1156
  %v1421 = vpack.c.b16 %v1165, %v1157
  %v1422 = vpack.c.b16 %v1166, %v1158
  %v1423 = vpack.c.b16 %v1167, %v1159
  %v1424 = vpack.c.b16 %v1168, %v1160
  %v1775 = vunpack.c.l.b16 %v271
  %v1776 = vunpack.c.l.b16 %v272
  %v1777 = vunpack.c.l.b16 %v273
  %v1778 = vunpack.c.l.b16 %v274
  %v1779 = vunpack.c.l.b16 %v275
  %v1780 = vunpack.c.l.b16 %v276
  %v1781 = vunpack.c.l.b16 %v277
  %v1782 = vunpack.c.l.b16 %v278
  %v1783 = vunpack.c.l.b16 %v279
  %v1784 = vunpack.c.l.b16 %v280
  %v1785 = vunpack.c.l.b16 %v281
  %v1786 = vunpack.c.l.b16 %v282
  %v1787 = vunpack.c.l.b16 %v283
  %v1788 = vunpack.c.l.b16 %v284
  %v1789 = vunpack.c.l.b16 %v285
  %v1790 = vunpack.c.l.b16 %v286
  %v1791 = vunpack.c.l.b16 %v287
  %v1792 = vunpack.c.l.b16 %v288
  %v1793 = vunpack.c.l.b16 %v289
  %v1794 = vunpack.c.l.b16 %v290
  %v1795 = vunpack.c.l.b16 %v291
  %v1796 = vunpack.c.l.b16 %v292
  %v1797 = vunpack.c.l.b16 %v293
  %v1798 = vunpack.c.l.b16 %v294
  %v1799 = vunpack.c.l.b16 %v295
  %v1800 = vunpack.c.l.b16 %v296
  %v1801 = vunpack.c.l.b16 %v297
  %v1802 = vunpack.c.l.b16 %v298
  %v1803 = vunpack.c.l.b16 %v299
  %v1804 = vunpack.c.l.b16 %v300
  %v1805 = vunpack.c.l.b16 %v301
  %v1806 = vunpack.c.l.b16 %v302
  %v1807 = vunpack.c.l.b16 %v303
  %v1808 = vunpack.c.l.b16 %v304
  %v1809 = vunpack.c.l.b16 %v305
  %v1810 = vunpack.c.l.b16 %v306
  %v1811 = vunpack.c.l.b16 %v307
  %v1812 = vunpack.c.l.b16 %v308
  %v1813 = vunpack.c.l.b16 %v309
  %v1814 = vunpack.c.l.b16 %v310
  %v1815 = vunpack.c.l.b16 %v311
  %v1816 = vunpack.c.l.b16 %v312
  %v1817 = vunpack.c.l.b16 %v313
  %v1818 = vunpack.c.l.b16 %v314
  %v1819 = vunpack.c.l.b16 %v315
  %v1820 = vunpack.c.l.b16 %v316
  %v1821 = vunpack.c.l.b16 %v317
  %v1822 = vunpack.c.l.b16 %v318
  %v1823 = vunpack.c.l.b16 %v319
  %v1824 = vunpack.c.l.b16 %v320
  %v1825 = vunpack.c.l.b16 %v321
  %v1826 = vunpack.c.l.b16 %v322
  %v1827 = vunpack.c.l.b16 %v323
  %v1828 = vunpack.c.l.b16 %v324
  %v1829 = vunpack.c.l.b16 %v325
  %v1830 = vunpack.c.l.b16 %v326
  %v1831 = vunpack.c.l.b16 %v327
  %v1832 = vunpack.c.l.b16 %v328
  %v1833 = vunpack.c.l.b16 %v329
  %v1834 = vunpack.c.l.b16 %v330
  %v1835 = vunpack.c.l.b16 %v331
  %v1836 = vunpack.c.l.b16 %v332
  %v1837 = vunpack.c.l.b16 %v333
  %v1838 = vunpack.c.l.b16 %v334
  %v1839 = vunpack.c.l.b16 %v335
  %v1840 = vunpack.c.l.b16 %v336
  %v1841 = vunpack.c.l.b16 %v337
  %v1842 = vunpack.c.l.b16 %v338
  %v1843 = vunpack.c.l.b16 %v339
  %v1844 = vunpack.c.l.b16 %v340
  %v1845 = vunpack.c.l.b16 %v341
  %v1846 = vunpack.c.l.b16 %v342
  %v1847 = vunpack.c.l.b16 %v343
  %v1848 = vunpack.c.l.b16 %v344
  %v1849 = vunpack.c.l.b16 %v345
  %v1850 = vunpack.c.l.b16 %v346
  %v1851 = vunpack.c.l.b16 %v347
  %v1852 = vunpack.c.l.b16 %v348
  %v1853 = vunpack.c.l.b16 %v349
  %v1854 = vunpack.c.l.b16 %v350
  %v1855 = vunpack.c.l.b16 %v351
  %v1856 = vunpack.c.l.b16 %v352
  %v1857 = vunpack.c.l.b16 %v353
  %v1858 = vunpack.c.l.b16 %v354
  %v1859 = vunpack.c.l.b16 %v355
  %v1860 = vunpack.c.l.b16 %v356
  %v1861 = vunpack.c.l.b16 %v357
  %v1862 = vunpack.c.l.b16 %v358
  %v1863 = vunpack.c.l.b16 %v359
  %v1864 = vunpack.c.l.b16 %v360
  %v1865 = vunpack.c.l.b16 %v361
  %v1866 = vunpack.c.l.b16 %v362
  %v1867 = vunpack.c.l.b16 %v363
  %v1868 = vunpack.c.l.b16 %v364
  %v1869 = vunpack.c.l.b16 %v365
  %v1870 = vunpack.c.l.b16 %v366
  %v1871 = vunpack.c.l.b16 %v367
  %v1872 = vunpack.c.l.b16 %v368
  %v1873 = vunpack.c.l.b16 %v369
  %v1874 = vunpack.c.l.b16 %v370
  %v1875 = vunpack.c.l.b16 %v371
  %v1876 = vunpack.c.l.b16 %v372
  %v1877 = vunpack.c.l.b16 %v373
  %v1878 = vunpack.c.l.b16 %v374
  %v1879 = vunpack.c.l.b16 %v375
  %v1880 = vunpack.c.l.b16 %v376
  %v1881 = vunpack.c.l.b16 %v377
  %v1882 = vunpack.c.l.b16 %v378
  %v1883 = vunpack.c.l.b16 %v379
  %v1884 = vunpack.c.l.b16 %v380
  %v1885 = vunpack.c.l.b16 %v381
  %v1886 = vunpack.c.l.b16 %v382
  %v1887 = vunpack.c.l.b16 %v383
  %v1888 = vunpack.c.l.b16 %v384
  %v1889 = vunpack.c.l.b16 %v385
  %v1890 = vunpack.c.l.b16 %v386
  %v1891 = vunpack.c.l.b16 %v387
  %v1892 = vunpack.c.l.b16 %v388
  %v1893 = vunpack.c.l.b16 %v389
  %v1894 = vunpack.c.l.b16 %v390
  %v1895 = vunpack.c.l.b16 %v391
  %v1896 = vunpack.c.l.b16 %v392
  %v1897 = vunpack.c.l.b16 %v393
  %v1898 = vunpack.c.l.b16 %v394
  %v1899 = vunpack.c.l.b16 %v395
  %v1900 = vunpack.c.l.b16 %v396
  %v1901 = vpack.c.b16 %v1776, %v1775
  %v1902 = vpack.c.b16 %v1778, %v1777
  %v1903 = vpack.c.b16 %v1780, %v1779
  %v1904 = vpack.c.b16 %v1782, %v1781
  %v1905 = vpack.c.b16 %v1784, %v1783
  %v1906 = vpack.c.b16 %v1786, %v1785
  %v1907 = vpack.c.b16 %v1788, %v1787
  %v1908 = vpack.c.b16 %v1790, %v1789
  %v1909 = vpack.c.b16 %v1792, %v1791
  %v1910 = vpack.c.b16 %v1794, %v1793
  %v1911 = vpack.c.b16 %v1796, %v1795
  %v1912 = vpack.c.b16 %v1798, %v1797
  %v1913 = vpack.c.b16 %v1800, %v1799
  %v1914 = vpack.c.b16 %v1802, %v1801
  %v1915 = vpack.c.b16 %v1804, %v1803
  %v1916 = vpack.c.b16 %v1806, %v1805
  %v1917 = vpack.c.b16 %v1808, %v1807
  %v1918 = vpack.c.b16 %v1810, %v1809
  %v1919 = vpack.c.b16 %v1812, %v1811
  %v1920 = vpack.c.b16 %v1814, %v1813
  %v1921 = vpack.c.b16 %v1816, %v1815
  %v1922 = vpack.c.b16 %v1818, %v1817
  %v1923 = vpack.c.b16 %v1820, %v1819
  %v1924 = vpack.c.b16 %v1822, %v1821
  %v1925 = vpack.c.b16 %v1824, %v1823
  %v1926 = vpack.c.b16 %v1826, %v1825
  %v1927 = vpack.c.b16 %v1828, %v1827
  %v1928 = vpack.c.b16 %v1830, %v1829
  %v1929 = vpack.c.b16 %v1832, %v1831
  %v1930 = vpack.c.b16 %v1834, %v1833
  %v1931 = vpack.c.b16 %v1836, %v1835
  %v1932 = vpack.c.b16 %v1838, %v1837
  %v1933 = vpack.c.b16 %v1840, %v1839
  %v1934 = vpack.c.b16 %v1842, %v1841
  %v1935 = vpack.c.b16 %v1844, %v1843
  %v1936 = vpack.c.b16 %v1846, %v1845
  %v1937 = vpack.c.b16 %v1848, %v1847
  %v1938 = vpack.c.b16 %v1850, %v1849
  %v1939 = vpack.c.b16 %v1852, %v1851
  %v1940 = vpack.c.b16 %v1854, %v1853
  %v1941 = vpack.c.b16 %v1856, %v1855
  %v1942 = vpack.c.b16 %v1858, %v1857
  %v1943 = vpack.c.b16 %v1860, %v1859
  %v1944 = vpack.c.b16 %v1862, %v1861
  %v1945 = vpack.c.b16 %v1864, %v1863
  %v1946 = vpack.c.b16 %v1866, %v1865
  %v1947 = vpack.c.b16 %v1868, %v1867
  %v1948 = vpack.c.b16 %v1870, %v1869
  %v1949 = vpack.c.b16 %v1872, %v1871
  %v1950 = vpack.c.b16 %v1874, %v1873
  %v1951 = vpack.c.b16 %v1876, %v1875
  %v1952 = vpack.c.b16 %v1878, %v1877
  %v1953 = vpack.c.b16 %v1880, %v1879
  %v1954 = vpack.c.b16 %v1882, %v1881
  %v1955 = vpack.c.b16 %v1884, %v1883
  %v1956 = vpack.c.b16 %v1886, %v1885
  %v1957 = vpack.c.b16 %v1888, %v1887
  %v1958 = vpack.c.b16 %v1890, %v1889
  %v1959 = vpack.c.b16 %v1892, %v1891
  %v1960 = vpack.c.b16 %v1894, %v1893
  %v1961 = vpack.c.b16 %v1896, %v1895
  %v1962 = vpack.c.b16 %v1898, %v1897
  %v1963 = vpack.c.b16 %v1900, %v1899
  %vm2027 = vcmask 916480
  %v2029 = vsel %vm2027, %v1176, 0
  %v2032 = vsel %vm2027, %v1184, 0
  %v2035 = vsel %vm2027, %v1192, 0
  %v2038 = vsel %vm2027, %v1200, 0
  %v2041 = vsel %vm2027, %v1208, 0
  %v2044 = vsel %vm2027, %v1216, 0
  %v2047 = vsel %vm2027, %v1224, 0
  %v2050 = vsel %vm2027, %v1232, 0
  %v2053 = vsel %vm2027, %v1240, 0
  %v2056 = vsel %vm2027, %v1248, 0
  %v2059 = vsel %vm2027, %v1256, 0
  %v2062 = vsel %vm2027, %v1264, 0
  %v2065 = vsel %vm2027, %v1272, 0
  %v2068 = vsel %vm2027, %v1280, 0
  %v2071 = vsel %vm2027, %v1288, 0
  %v2074 = vsel %vm2027, %v1296, 0
  %v2077 = vsel %vm2027, %v1304, 0
  %v2080 = vsel %vm2027, %v1312, 0
  %v2083 = vsel %vm2027, %v1320, 0
  %v2086 = vsel %vm2027, %v1328, 0
  %v2089 = vsel %vm2027, %v1336, 0
  %v2092 = vsel %vm2027, %v1344, 0
  %v2095 = vsel %vm2027, %v1352, 0
  %v2098 = vsel %vm2027, %v1360, 0
  %v2101 = vsel %vm2027, %v1368, 0
  %v2104 = vsel %vm2027, %v1376, 0
  %v2107 = vsel %vm2027, %v1384, 0
  %v2110 = vsel %vm2027, %v1392, 0
  %v2113 = vsel %vm2027, %v1400, 0
  %v2116 = vsel %vm2027, %v1408, 0
  %v2119 = vsel %vm2027, %v1416, 0
  %v2122 = vsel %vm2027, %v1424, 0
  %2124 = vmatpush.bf16.msra.mxu0 %v1908
  %2125 = vmatpush.bf16.msra.mxu0 %v1907
  %2126 = vmatpush.bf16.msra.mxu0 %v1906
  %2127 = vmatpush.bf16.msra.mxu0 %v1905
  %2128 = vmatpush.bf16.msra.mxu0 %v1904
  %2129 = vmatpush.bf16.msra.mxu0 %v1903
  %2130 = vmatpush.bf16.msra.mxu0 %v1902
  %2131 = vmatpush.bf16.msra.mxu0 %v1901
  %2132 = vmatmul.bf16.gmra.mxu0 %v1169
  %v2133 = vpop.f32.mrf.mxu0
  %v2134 = vadd.f32 %v399, %v2133
  %v2135 = vpop.f32.mrf.mxu0
  %v2136 = vadd.f32 %v399, %v2135
  %2137 = vmatmul.bf16.gmra.mxu0 %v1177
  %v2138 = vpop.f32.mrf.mxu0
  %v2139 = vadd.f32 %v399, %v2138
  %v2140 = vpop.f32.mrf.mxu0
  %v2141 = vadd.f32 %v399, %v2140
  %2142 = vmatmul.bf16.gmra.mxu0 %v1185
  %v2143 = vpop.f32.mrf.mxu0
  %v2144 = vadd.f32 %v399, %v2143
  %v2145 = vpop.f32.mrf.mxu0
  %v2146 = vadd.f32 %v399, %v2145
  %2147 = vmatmul.bf16.gmra.mxu0 %v1193
  %v2148 = vpop.f32.mrf.mxu0
  %v2149 = vadd.f32 %v399, %v2148
  %v2150 = vpop.f32.mrf.mxu0
  %v2151 = vadd.f32 %v399, %v2150
  %2152 = vmatmul.bf16.gmra.mxu0 %v1201
  %v2153 = vpop.f32.mrf.mxu0
  %v2154 = vadd.f32 %v399, %v2153
  %v2155 = vpop.f32.mrf.mxu0
  %v2156 = vadd.f32 %v399, %v2155
  %2157 = vmatmul.bf16.gmra.mxu0 %v1209
  %v2158 = vpop.f32.mrf.mxu0
  %v2159 = vadd.f32 %v399, %v2158
  %v2160 = vpop.f32.mrf.mxu0
  %v2161 = vadd.f32 %v399, %v2160
  %2162 = vmatmul.bf16.gmra.mxu0 %v1217
  %v2163 = vpop.f32.mrf.mxu0
  %v2164 = vadd.f32 %v399, %v2163
  %v2165 = vpop.f32.mrf.mxu0
  %v2166 = vadd.f32 %v399, %v2165
  %2167 = vmatmul.bf16.gmra.mxu0 %v1225
  %v2168 = vpop.f32.mrf.mxu0
  %v2169 = vadd.f32 %v399, %v2168
  %v2170 = vpop.f32.mrf.mxu0
  %v2171 = vadd.f32 %v399, %v2170
  %2172 = vmatmul.bf16.gmra.mxu0 %v1233
  %v2173 = vpop.f32.mrf.mxu0
  %v2174 = vadd.f32 %v399, %v2173
  %v2175 = vpop.f32.mrf.mxu0
  %v2176 = vadd.f32 %v399, %v2175
  %2177 = vmatmul.bf16.gmra.mxu0 %v1241
  %v2178 = vpop.f32.mrf.mxu0
  %v2179 = vadd.f32 %v399, %v2178
  %v2180 = vpop.f32.mrf.mxu0
  %v2181 = vadd.f32 %v399, %v2180
  %2182 = vmatmul.bf16.gmra.mxu0 %v1249
  %v2183 = vpop.f32.mrf.mxu0
  %v2184 = vadd.f32 %v399, %v2183
  %v2185 = vpop.f32.mrf.mxu0
  %v2186 = vadd.f32 %v399, %v2185
  %2187 = vmatmul.bf16.gmra.mxu0 %v1257
  %v2188 = vpop.f32.mrf.mxu0
  %v2189 = vadd.f32 %v399, %v2188
  %v2190 = vpop.f32.mrf.mxu0
  %v2191 = vadd.f32 %v399, %v2190
  %2192 = vmatmul.bf16.gmra.mxu0 %v1265
  %v2193 = vpop.f32.mrf.mxu0
  %v2194 = vadd.f32 %v399, %v2193
  %v2195 = vpop.f32.mrf.mxu0
  %v2196 = vadd.f32 %v399, %v2195
  %2197 = vmatmul.bf16.gmra.mxu0 %v1273
  %v2198 = vpop.f32.mrf.mxu0
  %v2199 = vadd.f32 %v399, %v2198
  %v2200 = vpop.f32.mrf.mxu0
  %v2201 = vadd.f32 %v399, %v2200
  %2202 = vmatmul.bf16.gmra.mxu0 %v1281
  %v2203 = vpop.f32.mrf.mxu0
  %v2204 = vadd.f32 %v399, %v2203
  %v2205 = vpop.f32.mrf.mxu0
  %v2206 = vadd.f32 %v399, %v2205
  %2207 = vmatmul.bf16.gmra.mxu0 %v1289
  %v2208 = vpop.f32.mrf.mxu0
  %v2209 = vadd.f32 %v399, %v2208
  %v2210 = vpop.f32.mrf.mxu0
  %v2211 = vadd.f32 %v399, %v2210
  %2212 = vmatmul.bf16.gmra.mxu0 %v1297
  %v2213 = vpop.f32.mrf.mxu0
  %v2214 = vadd.f32 %v399, %v2213
  %v2215 = vpop.f32.mrf.mxu0
  %v2216 = vadd.f32 %v399, %v2215
  %2217 = vmatmul.bf16.gmra.mxu0 %v1305
  %v2218 = vpop.f32.mrf.mxu0
  %v2219 = vadd.f32 %v399, %v2218
  %v2220 = vpop.f32.mrf.mxu0
  %v2221 = vadd.f32 %v399, %v2220
  %2222 = vmatmul.bf16.gmra.mxu0 %v1313
  %v2223 = vpop.f32.mrf.mxu0
  %v2224 = vadd.f32 %v399, %v2223
  %v2225 = vpop.f32.mrf.mxu0
  %v2226 = vadd.f32 %v399, %v2225
  %2227 = vmatmul.bf16.gmra.mxu0 %v1321
  %v2228 = vpop.f32.mrf.mxu0
  %v2229 = vadd.f32 %v399, %v2228
  %v2230 = vpop.f32.mrf.mxu0
  %v2231 = vadd.f32 %v399, %v2230
  %2232 = vmatmul.bf16.gmra.mxu0 %v1329
  %v2233 = vpop.f32.mrf.mxu0
  %v2234 = vadd.f32 %v399, %v2233
  %v2235 = vpop.f32.mrf.mxu0
  %v2236 = vadd.f32 %v399, %v2235
  %2237 = vmatmul.bf16.gmra.mxu0 %v1337
  %v2238 = vpop.f32.mrf.mxu0
  %v2239 = vadd.f32 %v399, %v2238
  %v2240 = vpop.f32.mrf.mxu0
  %v2241 = vadd.f32 %v399, %v2240
  %2242 = vmatmul.bf16.gmra.mxu0 %v1345
  %v2243 = vpop.f32.mrf.mxu0
  %v2244 = vadd.f32 %v399, %v2243
  %v2245 = vpop.f32.mrf.mxu0
  %v2246 = vadd.f32 %v399, %v2245
  %2247 = vmatmul.bf16.gmra.mxu0 %v1353
  %v2248 = vpop.f32.mrf.mxu0
  %v2249 = vadd.f32 %v399, %v2248
  %v2250 = vpop.f32.mrf.mxu0
  %v2251 = vadd.f32 %v399, %v2250
  %2252 = vmatmul.bf16.gmra.mxu0 %v1361
  %v2253 = vpop.f32.mrf.mxu0
  %v2254 = vadd.f32 %v399, %v2253
  %v2255 = vpop.f32.mrf.mxu0
  %v2256 = vadd.f32 %v399, %v2255
  %2257 = vmatmul.bf16.gmra.mxu0 %v1369
  %v2258 = vpop.f32.mrf.mxu0
  %v2259 = vadd.f32 %v399, %v2258
  %v2260 = vpop.f32.mrf.mxu0
  %v2261 = vadd.f32 %v399, %v2260
  %2262 = vmatmul.bf16.gmra.mxu0 %v1377
  %v2263 = vpop.f32.mrf.mxu0
  %v2264 = vadd.f32 %v399, %v2263
  %v2265 = vpop.f32.mrf.mxu0
  %v2266 = vadd.f32 %v399, %v2265
  %2267 = vmatmul.bf16.gmra.mxu0 %v1385
  %v2268 = vpop.f32.mrf.mxu0
  %v2269 = vadd.f32 %v399, %v2268
  %v2270 = vpop.f32.mrf.mxu0
  %v2271 = vadd.f32 %v399, %v2270
  %2272 = vmatmul.bf16.gmra.mxu0 %v1393
  %v2273 = vpop.f32.mrf.mxu0
  %v2274 = vadd.f32 %v399, %v2273
  %v2275 = vpop.f32.mrf.mxu0
  %v2276 = vadd.f32 %v399, %v2275
  %2277 = vmatmul.bf16.gmra.mxu0 %v1401
  %v2278 = vpop.f32.mrf.mxu0
  %v2279 = vadd.f32 %v399, %v2278
  %v2280 = vpop.f32.mrf.mxu0
  %v2281 = vadd.f32 %v399, %v2280
  %2282 = vmatmul.bf16.gmra.mxu0 %v1409
  %v2283 = vpop.f32.mrf.mxu0
  %v2284 = vadd.f32 %v399, %v2283
  %v2285 = vpop.f32.mrf.mxu0
  %v2286 = vadd.f32 %v399, %v2285
  %2287 = vmatmul.bf16.gmra.mxu0 %v1417
  %v2288 = vpop.f32.mrf.mxu0
  %v2289 = vadd.f32 %v399, %v2288
  %v2290 = vpop.f32.mrf.mxu0
  %v2291 = vadd.f32 %v399, %v2290
  %2292 = vdwg.mxu0
  %2293 = vmatpush.bf16.msra.mxu0 %v1916
  %2294 = vmatpush.bf16.msra.mxu0 %v1915
  %2295 = vmatpush.bf16.msra.mxu0 %v1914
  %2296 = vmatpush.bf16.msra.mxu0 %v1913
  %2297 = vmatpush.bf16.msra.mxu0 %v1912
  %2298 = vmatpush.bf16.msra.mxu0 %v1911
  %2299 = vmatpush.bf16.msra.mxu0 %v1910
  %2300 = vmatpush.bf16.msra.mxu0 %v1909
  %2301 = vmatmul.bf16.gmra.mxu0 %v1170
  %v2302 = vpop.f32.mrf.mxu0
  %v2303 = vadd.f32 %v2134, %v2302
  %v2304 = vpop.f32.mrf.mxu0
  %v2305 = vadd.f32 %v2136, %v2304
  %2306 = vmatmul.bf16.gmra.mxu0 %v1178
  %v2307 = vpop.f32.mrf.mxu0
  %v2308 = vadd.f32 %v2139, %v2307
  %v2309 = vpop.f32.mrf.mxu0
  %v2310 = vadd.f32 %v2141, %v2309
  %2311 = vmatmul.bf16.gmra.mxu0 %v1186
  %v2312 = vpop.f32.mrf.mxu0
  %v2313 = vadd.f32 %v2144, %v2312
  %v2314 = vpop.f32.mrf.mxu0
  %v2315 = vadd.f32 %v2146, %v2314
  %2316 = vmatmul.bf16.gmra.mxu0 %v1194
  %v2317 = vpop.f32.mrf.mxu0
  %v2318 = vadd.f32 %v2149, %v2317
  %v2319 = vpop.f32.mrf.mxu0
  %v2320 = vadd.f32 %v2151, %v2319
  %2321 = vmatmul.bf16.gmra.mxu0 %v1202
  %v2322 = vpop.f32.mrf.mxu0
  %v2323 = vadd.f32 %v2154, %v2322
  %v2324 = vpop.f32.mrf.mxu0
  %v2325 = vadd.f32 %v2156, %v2324
  %2326 = vmatmul.bf16.gmra.mxu0 %v1210
  %v2327 = vpop.f32.mrf.mxu0
  %v2328 = vadd.f32 %v2159, %v2327
  %v2329 = vpop.f32.mrf.mxu0
  %v2330 = vadd.f32 %v2161, %v2329
  %2331 = vmatmul.bf16.gmra.mxu0 %v1218
  %v2332 = vpop.f32.mrf.mxu0
  %v2333 = vadd.f32 %v2164, %v2332
  %v2334 = vpop.f32.mrf.mxu0
  %v2335 = vadd.f32 %v2166, %v2334
  %2336 = vmatmul.bf16.gmra.mxu0 %v1226
  %v2337 = vpop.f32.mrf.mxu0
  %v2338 = vadd.f32 %v2169, %v2337
  %v2339 = vpop.f32.mrf.mxu0
  %v2340 = vadd.f32 %v2171, %v2339
  %2341 = vmatmul.bf16.gmra.mxu0 %v1234
  %v2342 = vpop.f32.mrf.mxu0
  %v2343 = vadd.f32 %v2174, %v2342
  %v2344 = vpop.f32.mrf.mxu0
  %v2345 = vadd.f32 %v2176, %v2344
  %2346 = vmatmul.bf16.gmra.mxu0 %v1242
  %v2347 = vpop.f32.mrf.mxu0
  %v2348 = vadd.f32 %v2179, %v2347
  %v2349 = vpop.f32.mrf.mxu0
  %v2350 = vadd.f32 %v2181, %v2349
  %2351 = vmatmul.bf16.gmra.mxu0 %v1250
  %v2352 = vpop.f32.mrf.mxu0
  %v2353 = vadd.f32 %v2184, %v2352
  %v2354 = vpop.f32.mrf.mxu0
  %v2355 = vadd.f32 %v2186, %v2354
  %2356 = vmatmul.bf16.gmra.mxu0 %v1258
  %v2357 = vpop.f32.mrf.mxu0
  %v2358 = vadd.f32 %v2189, %v2357
  %v2359 = vpop.f32.mrf.mxu0
  %v2360 = vadd.f32 %v2191, %v2359
  %2361 = vmatmul.bf16.gmra.mxu0 %v1266
  %v2362 = vpop.f32.mrf.mxu0
  %v2363 = vadd.f32 %v2194, %v2362
  %v2364 = vpop.f32.mrf.mxu0
  %v2365 = vadd.f32 %v2196, %v2364
  %2366 = vmatmul.bf16.gmra.mxu0 %v1274
  %v2367 = vpop.f32.mrf.mxu0
  %v2368 = vadd.f32 %v2199, %v2367
  %v2369 = vpop.f32.mrf.mxu0
  %v2370 = vadd.f32 %v2201, %v2369
  %2371 = vmatmul.bf16.gmra.mxu0 %v1282
  %v2372 = vpop.f32.mrf.mxu0
  %v2373 = vadd.f32 %v2204, %v2372
  %v2374 = vpop.f32.mrf.mxu0
  %v2375 = vadd.f32 %v2206, %v2374
  %2376 = vmatmul.bf16.gmra.mxu0 %v1290
  %v2377 = vpop.f32.mrf.mxu0
  %v2378 = vadd.f32 %v2209, %v2377
  %v2379 = vpop.f32.mrf.mxu0
  %v2380 = vadd.f32 %v2211, %v2379
  %2381 = vmatmul.bf16.gmra.mxu0 %v1298
  %v2382 = vpop.f32.mrf.mxu0
  %v2383 = vadd.f32 %v2214, %v2382
  %v2384 = vpop.f32.mrf.mxu0
  %v2385 = vadd.f32 %v2216, %v2384
  %2386 = vmatmul.bf16.gmra.mxu0 %v1306
  %v2387 = vpop.f32.mrf.mxu0
  %v2388 = vadd.f32 %v2219, %v2387
  %v2389 = vpop.f32.mrf.mxu0
  %v2390 = vadd.f32 %v2221, %v2389
  %2391 = vmatmul.bf16.gmra.mxu0 %v1314
  %v2392 = vpop.f32.mrf.mxu0
  %v2393 = vadd.f32 %v2224, %v2392
  %v2394 = vpop.f32.mrf.mxu0
  %v2395 = vadd.f32 %v2226, %v2394
  %2396 = vmatmul.bf16.gmra.mxu0 %v1322
  %v2397 = vpop.f32.mrf.mxu0
  %v2398 = vadd.f32 %v2229, %v2397
  %v2399 = vpop.f32.mrf.mxu0
  %v2400 = vadd.f32 %v2231, %v2399
  %2401 = vmatmul.bf16.gmra.mxu0 %v1330
  %v2402 = vpop.f32.mrf.mxu0
  %v2403 = vadd.f32 %v2234, %v2402
  %v2404 = vpop.f32.mrf.mxu0
  %v2405 = vadd.f32 %v2236, %v2404
  %2406 = vmatmul.bf16.gmra.mxu0 %v1338
  %v2407 = vpop.f32.mrf.mxu0
  %v2408 = vadd.f32 %v2239, %v2407
  %v2409 = vpop.f32.mrf.mxu0
  %v2410 = vadd.f32 %v2241, %v2409
  %2411 = vmatmul.bf16.gmra.mxu0 %v1346
  %v2412 = vpop.f32.mrf.mxu0
  %v2413 = vadd.f32 %v2244, %v2412
  %v2414 = vpop.f32.mrf.mxu0
  %v2415 = vadd.f32 %v2246, %v2414
  %2416 = vmatmul.bf16.gmra.mxu0 %v1354
  %v2417 = vpop.f32.mrf.mxu0
  %v2418 = vadd.f32 %v2249, %v2417
  %v2419 = vpop.f32.mrf.mxu0
  %v2420 = vadd.f32 %v2251, %v2419
  %2421 = vmatmul.bf16.gmra.mxu0 %v1362
  %v2422 = vpop.f32.mrf.mxu0
  %v2423 = vadd.f32 %v2254, %v2422
  %v2424 = vpop.f32.mrf.mxu0
  %v2425 = vadd.f32 %v2256, %v2424
  %2426 = vmatmul.bf16.gmra.mxu0 %v1370
  %v2427 = vpop.f32.mrf.mxu0
  %v2428 = vadd.f32 %v2259, %v2427
  %v2429 = vpop.f32.mrf.mxu0
  %v2430 = vadd.f32 %v2261, %v2429
  %2431 = vmatmul.bf16.gmra.mxu0 %v1378
  %v2432 = vpop.f32.mrf.mxu0
  %v2433 = vadd.f32 %v2264, %v2432
  %v2434 = vpop.f32.mrf.mxu0
  %v2435 = vadd.f32 %v2266, %v2434
  %2436 = vmatmul.bf16.gmra.mxu0 %v1386
  %v2437 = vpop.f32.mrf.mxu0
  %v2438 = vadd.f32 %v2269, %v2437
  %v2439 = vpop.f32.mrf.mxu0
  %v2440 = vadd.f32 %v2271, %v2439
  %2441 = vmatmul.bf16.gmra.mxu0 %v1394
  %v2442 = vpop.f32.mrf.mxu0
  %v2443 = vadd.f32 %v2274, %v2442
  %v2444 = vpop.f32.mrf.mxu0
  %v2445 = vadd.f32 %v2276, %v2444
  %2446 = vmatmul.bf16.gmra.mxu0 %v1402
  %v2447 = vpop.f32.mrf.mxu0
  %v2448 = vadd.f32 %v2279, %v2447
  %v2449 = vpop.f32.mrf.mxu0
  %v2450 = vadd.f32 %v2281, %v2449
  %2451 = vmatmul.bf16.gmra.mxu0 %v1410
  %v2452 = vpop.f32.mrf.mxu0
  %v2453 = vadd.f32 %v2284, %v2452
  %v2454 = vpop.f32.mrf.mxu0
  %v2455 = vadd.f32 %v2286, %v2454
  %2456 = vmatmul.bf16.gmra.mxu0 %v1418
  %v2457 = vpop.f32.mrf.mxu0
  %v2458 = vadd.f32 %v2289, %v2457
  %v2459 = vpop.f32.mrf.mxu0
  %v2460 = vadd.f32 %v2291, %v2459
  %2461 = vdwg.mxu0
  %2462 = vmatpush.bf16.msra.mxu0 %v1924
  %2463 = vmatpush.bf16.msra.mxu0 %v1923
  %2464 = vmatpush.bf16.msra.mxu0 %v1922
  %2465 = vmatpush.bf16.msra.mxu0 %v1921
  %2466 = vmatpush.bf16.msra.mxu0 %v1920
  %2467 = vmatpush.bf16.msra.mxu0 %v1919
  %2468 = vmatpush.bf16.msra.mxu0 %v1918
  %2469 = vmatpush.bf16.msra.mxu0 %v1917
  %2470 = vmatmul.bf16.gmra.mxu0 %v1171
  %v2471 = vpop.f32.mrf.mxu0
  %v2472 = vadd.f32 %v2303, %v2471
  %v2473 = vpop.f32.mrf.mxu0
  %v2474 = vadd.f32 %v2305, %v2473
  %2475 = vmatmul.bf16.gmra.mxu0 %v1179
  %v2476 = vpop.f32.mrf.mxu0
  %v2477 = vadd.f32 %v2308, %v2476
  %v2478 = vpop.f32.mrf.mxu0
  %v2479 = vadd.f32 %v2310, %v2478
  %2480 = vmatmul.bf16.gmra.mxu0 %v1187
  %v2481 = vpop.f32.mrf.mxu0
  %v2482 = vadd.f32 %v2313, %v2481
  %v2483 = vpop.f32.mrf.mxu0
  %v2484 = vadd.f32 %v2315, %v2483
  %2485 = vmatmul.bf16.gmra.mxu0 %v1195
  %v2486 = vpop.f32.mrf.mxu0
  %v2487 = vadd.f32 %v2318, %v2486
  %v2488 = vpop.f32.mrf.mxu0
  %v2489 = vadd.f32 %v2320, %v2488
  %2490 = vmatmul.bf16.gmra.mxu0 %v1203
  %v2491 = vpop.f32.mrf.mxu0
  %v2492 = vadd.f32 %v2323, %v2491
  %v2493 = vpop.f32.mrf.mxu0
  %v2494 = vadd.f32 %v2325, %v2493
  %2495 = vmatmul.bf16.gmra.mxu0 %v1211
  %v2496 = vpop.f32.mrf.mxu0
  %v2497 = vadd.f32 %v2328, %v2496
  %v2498 = vpop.f32.mrf.mxu0
  %v2499 = vadd.f32 %v2330, %v2498
  %2500 = vmatmul.bf16.gmra.mxu0 %v1219
  %v2501 = vpop.f32.mrf.mxu0
  %v2502 = vadd.f32 %v2333, %v2501
  %v2503 = vpop.f32.mrf.mxu0
  %v2504 = vadd.f32 %v2335, %v2503
  %2505 = vmatmul.bf16.gmra.mxu0 %v1227
  %v2506 = vpop.f32.mrf.mxu0
  %v2507 = vadd.f32 %v2338, %v2506
  %v2508 = vpop.f32.mrf.mxu0
  %v2509 = vadd.f32 %v2340, %v2508
  %2510 = vmatmul.bf16.gmra.mxu0 %v1235
  %v2511 = vpop.f32.mrf.mxu0
  %v2512 = vadd.f32 %v2343, %v2511
  %v2513 = vpop.f32.mrf.mxu0
  %v2514 = vadd.f32 %v2345, %v2513
  %2515 = vmatmul.bf16.gmra.mxu0 %v1243
  %v2516 = vpop.f32.mrf.mxu0
  %v2517 = vadd.f32 %v2348, %v2516
  %v2518 = vpop.f32.mrf.mxu0
  %v2519 = vadd.f32 %v2350, %v2518
  %2520 = vmatmul.bf16.gmra.mxu0 %v1251
  %v2521 = vpop.f32.mrf.mxu0
  %v2522 = vadd.f32 %v2353, %v2521
  %v2523 = vpop.f32.mrf.mxu0
  %v2524 = vadd.f32 %v2355, %v2523
  %2525 = vmatmul.bf16.gmra.mxu0 %v1259
  %v2526 = vpop.f32.mrf.mxu0
  %v2527 = vadd.f32 %v2358, %v2526
  %v2528 = vpop.f32.mrf.mxu0
  %v2529 = vadd.f32 %v2360, %v2528
  %2530 = vmatmul.bf16.gmra.mxu0 %v1267
  %v2531 = vpop.f32.mrf.mxu0
  %v2532 = vadd.f32 %v2363, %v2531
  %v2533 = vpop.f32.mrf.mxu0
  %v2534 = vadd.f32 %v2365, %v2533
  %2535 = vmatmul.bf16.gmra.mxu0 %v1275
  %v2536 = vpop.f32.mrf.mxu0
  %v2537 = vadd.f32 %v2368, %v2536
  %v2538 = vpop.f32.mrf.mxu0
  %v2539 = vadd.f32 %v2370, %v2538
  %2540 = vmatmul.bf16.gmra.mxu0 %v1283
  %v2541 = vpop.f32.mrf.mxu0
  %v2542 = vadd.f32 %v2373, %v2541
  %v2543 = vpop.f32.mrf.mxu0
  %v2544 = vadd.f32 %v2375, %v2543
  %2545 = vmatmul.bf16.gmra.mxu0 %v1291
  %v2546 = vpop.f32.mrf.mxu0
  %v2547 = vadd.f32 %v2378, %v2546
  %v2548 = vpop.f32.mrf.mxu0
  %v2549 = vadd.f32 %v2380, %v2548
  %2550 = vmatmul.bf16.gmra.mxu0 %v1299
  %v2551 = vpop.f32.mrf.mxu0
  %v2552 = vadd.f32 %v2383, %v2551
  %v2553 = vpop.f32.mrf.mxu0
  %v2554 = vadd.f32 %v2385, %v2553
  %2555 = vmatmul.bf16.gmra.mxu0 %v1307
  %v2556 = vpop.f32.mrf.mxu0
  %v2557 = vadd.f32 %v2388, %v2556
  %v2558 = vpop.f32.mrf.mxu0
  %v2559 = vadd.f32 %v2390, %v2558
  %2560 = vmatmul.bf16.gmra.mxu0 %v1315
  %v2561 = vpop.f32.mrf.mxu0
  %v2562 = vadd.f32 %v2393, %v2561
  %v2563 = vpop.f32.mrf.mxu0
  %v2564 = vadd.f32 %v2395, %v2563
  %2565 = vmatmul.bf16.gmra.mxu0 %v1323
  %v2566 = vpop.f32.mrf.mxu0
  %v2567 = vadd.f32 %v2398, %v2566
  %v2568 = vpop.f32.mrf.mxu0
  %v2569 = vadd.f32 %v2400, %v2568
  %2570 = vmatmul.bf16.gmra.mxu0 %v1331
  %v2571 = vpop.f32.mrf.mxu0
  %v2572 = vadd.f32 %v2403, %v2571
  %v2573 = vpop.f32.mrf.mxu0
  %v2574 = vadd.f32 %v2405, %v2573
  %2575 = vmatmul.bf16.gmra.mxu0 %v1339
  %v2576 = vpop.f32.mrf.mxu0
  %v2577 = vadd.f32 %v2408, %v2576
  %v2578 = vpop.f32.mrf.mxu0
  %v2579 = vadd.f32 %v2410, %v2578
  %2580 = vmatmul.bf16.gmra.mxu0 %v1347
  %v2581 = vpop.f32.mrf.mxu0
  %v2582 = vadd.f32 %v2413, %v2581
  %v2583 = vpop.f32.mrf.mxu0
  %v2584 = vadd.f32 %v2415, %v2583
  %2585 = vmatmul.bf16.gmra.mxu0 %v1355
  %v2586 = vpop.f32.mrf.mxu0
  %v2587 = vadd.f32 %v2418, %v2586
  %v2588 = vpop.f32.mrf.mxu0
  %v2589 = vadd.f32 %v2420, %v2588
  %2590 = vmatmul.bf16.gmra.mxu0 %v1363
  %v2591 = vpop.f32.mrf.mxu0
  %v2592 = vadd.f32 %v2423, %v2591
  %v2593 = vpop.f32.mrf.mxu0
  %v2594 = vadd.f32 %v2425, %v2593
  %2595 = vmatmul.bf16.gmra.mxu0 %v1371
  %v2596 = vpop.f32.mrf.mxu0
  %v2597 = vadd.f32 %v2428, %v2596
  %v2598 = vpop.f32.mrf.mxu0
  %v2599 = vadd.f32 %v2430, %v2598
  %2600 = vmatmul.bf16.gmra.mxu0 %v1379
  %v2601 = vpop.f32.mrf.mxu0
  %v2602 = vadd.f32 %v2433, %v2601
  %v2603 = vpop.f32.mrf.mxu0
  %v2604 = vadd.f32 %v2435, %v2603
  %2605 = vmatmul.bf16.gmra.mxu0 %v1387
  %v2606 = vpop.f32.mrf.mxu0
  %v2607 = vadd.f32 %v2438, %v2606
  %v2608 = vpop.f32.mrf.mxu0
  %v2609 = vadd.f32 %v2440, %v2608
  %2610 = vmatmul.bf16.gmra.mxu0 %v1395
  %v2611 = vpop.f32.mrf.mxu0
  %v2612 = vadd.f32 %v2443, %v2611
  %v2613 = vpop.f32.mrf.mxu0
  %v2614 = vadd.f32 %v2445, %v2613
  %2615 = vmatmul.bf16.gmra.mxu0 %v1403
  %v2616 = vpop.f32.mrf.mxu0
  %v2617 = vadd.f32 %v2448, %v2616
  %v2618 = vpop.f32.mrf.mxu0
  %v2619 = vadd.f32 %v2450, %v2618
  %2620 = vmatmul.bf16.gmra.mxu0 %v1411
  %v2621 = vpop.f32.mrf.mxu0
  %v2622 = vadd.f32 %v2453, %v2621
  %v2623 = vpop.f32.mrf.mxu0
  %v2624 = vadd.f32 %v2455, %v2623
  %2625 = vmatmul.bf16.gmra.mxu0 %v1419
  %v2626 = vpop.f32.mrf.mxu0
  %v2627 = vadd.f32 %v2458, %v2626
  %v2628 = vpop.f32.mrf.mxu0
  %v2629 = vadd.f32 %v2460, %v2628
  %2630 = vdwg.mxu0
  %2631 = vmatpush.bf16.msra.mxu0 %v1932
  %2632 = vmatpush.bf16.msra.mxu0 %v1931
  %2633 = vmatpush.bf16.msra.mxu0 %v1930
  %2634 = vmatpush.bf16.msra.mxu0 %v1929
  %2635 = vmatpush.bf16.msra.mxu0 %v1928
  %2636 = vmatpush.bf16.msra.mxu0 %v1927
  %2637 = vmatpush.bf16.msra.mxu0 %v1926
  %2638 = vmatpush.bf16.msra.mxu0 %v1925
  %2639 = vmatmul.bf16.gmra.mxu0 %v1172
  %v2640 = vpop.f32.mrf.mxu0
  %v2641 = vadd.f32 %v2472, %v2640
  %v2642 = vpop.f32.mrf.mxu0
  %v2643 = vadd.f32 %v2474, %v2642
  %2644 = vmatmul.bf16.gmra.mxu0 %v1180
  %v2645 = vpop.f32.mrf.mxu0
  %v2646 = vadd.f32 %v2477, %v2645
  %v2647 = vpop.f32.mrf.mxu0
  %v2648 = vadd.f32 %v2479, %v2647
  %2649 = vmatmul.bf16.gmra.mxu0 %v1188
  %v2650 = vpop.f32.mrf.mxu0
  %v2651 = vadd.f32 %v2482, %v2650
  %v2652 = vpop.f32.mrf.mxu0
  %v2653 = vadd.f32 %v2484, %v2652
  %2654 = vmatmul.bf16.gmra.mxu0 %v1196
  %v2655 = vpop.f32.mrf.mxu0
  %v2656 = vadd.f32 %v2487, %v2655
  %v2657 = vpop.f32.mrf.mxu0
  %v2658 = vadd.f32 %v2489, %v2657
  %2659 = vmatmul.bf16.gmra.mxu0 %v1204
  %v2660 = vpop.f32.mrf.mxu0
  %v2661 = vadd.f32 %v2492, %v2660
  %v2662 = vpop.f32.mrf.mxu0
  %v2663 = vadd.f32 %v2494, %v2662
  %2664 = vmatmul.bf16.gmra.mxu0 %v1212
  %v2665 = vpop.f32.mrf.mxu0
  %v2666 = vadd.f32 %v2497, %v2665
  %v2667 = vpop.f32.mrf.mxu0
  %v2668 = vadd.f32 %v2499, %v2667
  %2669 = vmatmul.bf16.gmra.mxu0 %v1220
  %v2670 = vpop.f32.mrf.mxu0
  %v2671 = vadd.f32 %v2502, %v2670
  %v2672 = vpop.f32.mrf.mxu0
  %v2673 = vadd.f32 %v2504, %v2672
  %2674 = vmatmul.bf16.gmra.mxu0 %v1228
  %v2675 = vpop.f32.mrf.mxu0
  %v2676 = vadd.f32 %v2507, %v2675
  %v2677 = vpop.f32.mrf.mxu0
  %v2678 = vadd.f32 %v2509, %v2677
  %2679 = vmatmul.bf16.gmra.mxu0 %v1236
  %v2680 = vpop.f32.mrf.mxu0
  %v2681 = vadd.f32 %v2512, %v2680
  %v2682 = vpop.f32.mrf.mxu0
  %v2683 = vadd.f32 %v2514, %v2682
  %2684 = vmatmul.bf16.gmra.mxu0 %v1244
  %v2685 = vpop.f32.mrf.mxu0
  %v2686 = vadd.f32 %v2517, %v2685
  %v2687 = vpop.f32.mrf.mxu0
  %v2688 = vadd.f32 %v2519, %v2687
  %2689 = vmatmul.bf16.gmra.mxu0 %v1252
  %v2690 = vpop.f32.mrf.mxu0
  %v2691 = vadd.f32 %v2522, %v2690
  %v2692 = vpop.f32.mrf.mxu0
  %v2693 = vadd.f32 %v2524, %v2692
  %2694 = vmatmul.bf16.gmra.mxu0 %v1260
  %v2695 = vpop.f32.mrf.mxu0
  %v2696 = vadd.f32 %v2527, %v2695
  %v2697 = vpop.f32.mrf.mxu0
  %v2698 = vadd.f32 %v2529, %v2697
  %2699 = vmatmul.bf16.gmra.mxu0 %v1268
  %v2700 = vpop.f32.mrf.mxu0
  %v2701 = vadd.f32 %v2532, %v2700
  %v2702 = vpop.f32.mrf.mxu0
  %v2703 = vadd.f32 %v2534, %v2702
  %2704 = vmatmul.bf16.gmra.mxu0 %v1276
  %v2705 = vpop.f32.mrf.mxu0
  %v2706 = vadd.f32 %v2537, %v2705
  %v2707 = vpop.f32.mrf.mxu0
  %v2708 = vadd.f32 %v2539, %v2707
  %2709 = vmatmul.bf16.gmra.mxu0 %v1284
  %v2710 = vpop.f32.mrf.mxu0
  %v2711 = vadd.f32 %v2542, %v2710
  %v2712 = vpop.f32.mrf.mxu0
  %v2713 = vadd.f32 %v2544, %v2712
  %2714 = vmatmul.bf16.gmra.mxu0 %v1292
  %v2715 = vpop.f32.mrf.mxu0
  %v2716 = vadd.f32 %v2547, %v2715
  %v2717 = vpop.f32.mrf.mxu0
  %v2718 = vadd.f32 %v2549, %v2717
  %2719 = vmatmul.bf16.gmra.mxu0 %v1300
  %v2720 = vpop.f32.mrf.mxu0
  %v2721 = vadd.f32 %v2552, %v2720
  %v2722 = vpop.f32.mrf.mxu0
  %v2723 = vadd.f32 %v2554, %v2722
  %2724 = vmatmul.bf16.gmra.mxu0 %v1308
  %v2725 = vpop.f32.mrf.mxu0
  %v2726 = vadd.f32 %v2557, %v2725
  %v2727 = vpop.f32.mrf.mxu0
  %v2728 = vadd.f32 %v2559, %v2727
  %2729 = vmatmul.bf16.gmra.mxu0 %v1316
  %v2730 = vpop.f32.mrf.mxu0
  %v2731 = vadd.f32 %v2562, %v2730
  %v2732 = vpop.f32.mrf.mxu0
  %v2733 = vadd.f32 %v2564, %v2732
  %2734 = vmatmul.bf16.gmra.mxu0 %v1324
  %v2735 = vpop.f32.mrf.mxu0
  %v2736 = vadd.f32 %v2567, %v2735
  %v2737 = vpop.f32.mrf.mxu0
  %v2738 = vadd.f32 %v2569, %v2737
  %2739 = vmatmul.bf16.gmra.mxu0 %v1332
  %v2740 = vpop.f32.mrf.mxu0
  %v2741 = vadd.f32 %v2572, %v2740
  %v2742 = vpop.f32.mrf.mxu0
  %v2743 = vadd.f32 %v2574, %v2742
  %2744 = vmatmul.bf16.gmra.mxu0 %v1340
  %v2745 = vpop.f32.mrf.mxu0
  %v2746 = vadd.f32 %v2577, %v2745
  %v2747 = vpop.f32.mrf.mxu0
  %v2748 = vadd.f32 %v2579, %v2747
  %2749 = vmatmul.bf16.gmra.mxu0 %v1348
  %v2750 = vpop.f32.mrf.mxu0
  %v2751 = vadd.f32 %v2582, %v2750
  %v2752 = vpop.f32.mrf.mxu0
  %v2753 = vadd.f32 %v2584, %v2752
  %2754 = vmatmul.bf16.gmra.mxu0 %v1356
  %v2755 = vpop.f32.mrf.mxu0
  %v2756 = vadd.f32 %v2587, %v2755
  %v2757 = vpop.f32.mrf.mxu0
  %v2758 = vadd.f32 %v2589, %v2757
  %2759 = vmatmul.bf16.gmra.mxu0 %v1364
  %v2760 = vpop.f32.mrf.mxu0
  %v2761 = vadd.f32 %v2592, %v2760
  %v2762 = vpop.f32.mrf.mxu0
  %v2763 = vadd.f32 %v2594, %v2762
  %2764 = vmatmul.bf16.gmra.mxu0 %v1372
  %v2765 = vpop.f32.mrf.mxu0
  %v2766 = vadd.f32 %v2597, %v2765
  %v2767 = vpop.f32.mrf.mxu0
  %v2768 = vadd.f32 %v2599, %v2767
  %2769 = vmatmul.bf16.gmra.mxu0 %v1380
  %v2770 = vpop.f32.mrf.mxu0
  %v2771 = vadd.f32 %v2602, %v2770
  %v2772 = vpop.f32.mrf.mxu0
  %v2773 = vadd.f32 %v2604, %v2772
  %2774 = vmatmul.bf16.gmra.mxu0 %v1388
  %v2775 = vpop.f32.mrf.mxu0
  %v2776 = vadd.f32 %v2607, %v2775
  %v2777 = vpop.f32.mrf.mxu0
  %v2778 = vadd.f32 %v2609, %v2777
  %2779 = vmatmul.bf16.gmra.mxu0 %v1396
  %v2780 = vpop.f32.mrf.mxu0
  %v2781 = vadd.f32 %v2612, %v2780
  %v2782 = vpop.f32.mrf.mxu0
  %v2783 = vadd.f32 %v2614, %v2782
  %2784 = vmatmul.bf16.gmra.mxu0 %v1404
  %v2785 = vpop.f32.mrf.mxu0
  %v2786 = vadd.f32 %v2617, %v2785
  %v2787 = vpop.f32.mrf.mxu0
  %v2788 = vadd.f32 %v2619, %v2787
  %2789 = vmatmul.bf16.gmra.mxu0 %v1412
  %v2790 = vpop.f32.mrf.mxu0
  %v2791 = vadd.f32 %v2622, %v2790
  %v2792 = vpop.f32.mrf.mxu0
  %v2793 = vadd.f32 %v2624, %v2792
  %2794 = vmatmul.bf16.gmra.mxu0 %v1420
  %v2795 = vpop.f32.mrf.mxu0
  %v2796 = vadd.f32 %v2627, %v2795
  %v2797 = vpop.f32.mrf.mxu0
  %v2798 = vadd.f32 %v2629, %v2797
  %2799 = vdwg.mxu0
  %2800 = vmatpush.bf16.msra.mxu0 %v1940
  %2801 = vmatpush.bf16.msra.mxu0 %v1939
  %2802 = vmatpush.bf16.msra.mxu0 %v1938
  %2803 = vmatpush.bf16.msra.mxu0 %v1937
  %2804 = vmatpush.bf16.msra.mxu0 %v1936
  %2805 = vmatpush.bf16.msra.mxu0 %v1935
  %2806 = vmatpush.bf16.msra.mxu0 %v1934
  %2807 = vmatpush.bf16.msra.mxu0 %v1933
  %2808 = vmatmul.bf16.gmra.mxu0 %v1173
  %v2809 = vpop.f32.mrf.mxu0
  %v2810 = vadd.f32 %v2641, %v2809
  %v2811 = vpop.f32.mrf.mxu0
  %v2812 = vadd.f32 %v2643, %v2811
  %2813 = vmatmul.bf16.gmra.mxu0 %v1181
  %v2814 = vpop.f32.mrf.mxu0
  %v2815 = vadd.f32 %v2646, %v2814
  %v2816 = vpop.f32.mrf.mxu0
  %v2817 = vadd.f32 %v2648, %v2816
  %2818 = vmatmul.bf16.gmra.mxu0 %v1189
  %v2819 = vpop.f32.mrf.mxu0
  %v2820 = vadd.f32 %v2651, %v2819
  %v2821 = vpop.f32.mrf.mxu0
  %v2822 = vadd.f32 %v2653, %v2821
  %2823 = vmatmul.bf16.gmra.mxu0 %v1197
  %v2824 = vpop.f32.mrf.mxu0
  %v2825 = vadd.f32 %v2656, %v2824
  %v2826 = vpop.f32.mrf.mxu0
  %v2827 = vadd.f32 %v2658, %v2826
  %2828 = vmatmul.bf16.gmra.mxu0 %v1205
  %v2829 = vpop.f32.mrf.mxu0
  %v2830 = vadd.f32 %v2661, %v2829
  %v2831 = vpop.f32.mrf.mxu0
  %v2832 = vadd.f32 %v2663, %v2831
  %2833 = vmatmul.bf16.gmra.mxu0 %v1213
  %v2834 = vpop.f32.mrf.mxu0
  %v2835 = vadd.f32 %v2666, %v2834
  %v2836 = vpop.f32.mrf.mxu0
  %v2837 = vadd.f32 %v2668, %v2836
  %2838 = vmatmul.bf16.gmra.mxu0 %v1221
  %v2839 = vpop.f32.mrf.mxu0
  %v2840 = vadd.f32 %v2671, %v2839
  %v2841 = vpop.f32.mrf.mxu0
  %v2842 = vadd.f32 %v2673, %v2841
  %2843 = vmatmul.bf16.gmra.mxu0 %v1229
  %v2844 = vpop.f32.mrf.mxu0
  %v2845 = vadd.f32 %v2676, %v2844
  %v2846 = vpop.f32.mrf.mxu0
  %v2847 = vadd.f32 %v2678, %v2846
  %2848 = vmatmul.bf16.gmra.mxu0 %v1237
  %v2849 = vpop.f32.mrf.mxu0
  %v2850 = vadd.f32 %v2681, %v2849
  %v2851 = vpop.f32.mrf.mxu0
  %v2852 = vadd.f32 %v2683, %v2851
  %2853 = vmatmul.bf16.gmra.mxu0 %v1245
  %v2854 = vpop.f32.mrf.mxu0
  %v2855 = vadd.f32 %v2686, %v2854
  %v2856 = vpop.f32.mrf.mxu0
  %v2857 = vadd.f32 %v2688, %v2856
  %2858 = vmatmul.bf16.gmra.mxu0 %v1253
  %v2859 = vpop.f32.mrf.mxu0
  %v2860 = vadd.f32 %v2691, %v2859
  %v2861 = vpop.f32.mrf.mxu0
  %v2862 = vadd.f32 %v2693, %v2861
  %2863 = vmatmul.bf16.gmra.mxu0 %v1261
  %v2864 = vpop.f32.mrf.mxu0
  %v2865 = vadd.f32 %v2696, %v2864
  %v2866 = vpop.f32.mrf.mxu0
  %v2867 = vadd.f32 %v2698, %v2866
  %2868 = vmatmul.bf16.gmra.mxu0 %v1269
  %v2869 = vpop.f32.mrf.mxu0
  %v2870 = vadd.f32 %v2701, %v2869
  %v2871 = vpop.f32.mrf.mxu0
  %v2872 = vadd.f32 %v2703, %v2871
  %2873 = vmatmul.bf16.gmra.mxu0 %v1277
  %v2874 = vpop.f32.mrf.mxu0
  %v2875 = vadd.f32 %v2706, %v2874
  %v2876 = vpop.f32.mrf.mxu0
  %v2877 = vadd.f32 %v2708, %v2876
  %2878 = vmatmul.bf16.gmra.mxu0 %v1285
  %v2879 = vpop.f32.mrf.mxu0
  %v2880 = vadd.f32 %v2711, %v2879
  %v2881 = vpop.f32.mrf.mxu0
  %v2882 = vadd.f32 %v2713, %v2881
  %2883 = vmatmul.bf16.gmra.mxu0 %v1293
  %v2884 = vpop.f32.mrf.mxu0
  %v2885 = vadd.f32 %v2716, %v2884
  %v2886 = vpop.f32.mrf.mxu0
  %v2887 = vadd.f32 %v2718, %v2886
  %2888 = vmatmul.bf16.gmra.mxu0 %v1301
  %v2889 = vpop.f32.mrf.mxu0
  %v2890 = vadd.f32 %v2721, %v2889
  %v2891 = vpop.f32.mrf.mxu0
  %v2892 = vadd.f32 %v2723, %v2891
  %2893 = vmatmul.bf16.gmra.mxu0 %v1309
  %v2894 = vpop.f32.mrf.mxu0
  %v2895 = vadd.f32 %v2726, %v2894
  %v2896 = vpop.f32.mrf.mxu0
  %v2897 = vadd.f32 %v2728, %v2896
  %2898 = vmatmul.bf16.gmra.mxu0 %v1317
  %v2899 = vpop.f32.mrf.mxu0
  %v2900 = vadd.f32 %v2731, %v2899
  %v2901 = vpop.f32.mrf.mxu0
  %v2902 = vadd.f32 %v2733, %v2901
  %2903 = vmatmul.bf16.gmra.mxu0 %v1325
  %v2904 = vpop.f32.mrf.mxu0
  %v2905 = vadd.f32 %v2736, %v2904
  %v2906 = vpop.f32.mrf.mxu0
  %v2907 = vadd.f32 %v2738, %v2906
  %2908 = vmatmul.bf16.gmra.mxu0 %v1333
  %v2909 = vpop.f32.mrf.mxu0
  %v2910 = vadd.f32 %v2741, %v2909
  %v2911 = vpop.f32.mrf.mxu0
  %v2912 = vadd.f32 %v2743, %v2911
  %2913 = vmatmul.bf16.gmra.mxu0 %v1341
  %v2914 = vpop.f32.mrf.mxu0
  %v2915 = vadd.f32 %v2746, %v2914
  %v2916 = vpop.f32.mrf.mxu0
  %v2917 = vadd.f32 %v2748, %v2916
  %2918 = vmatmul.bf16.gmra.mxu0 %v1349
  %v2919 = vpop.f32.mrf.mxu0
  %v2920 = vadd.f32 %v2751, %v2919
  %v2921 = vpop.f32.mrf.mxu0
  %v2922 = vadd.f32 %v2753, %v2921
  %2923 = vmatmul.bf16.gmra.mxu0 %v1357
  %v2924 = vpop.f32.mrf.mxu0
  %v2925 = vadd.f32 %v2756, %v2924
  %v2926 = vpop.f32.mrf.mxu0
  %v2927 = vadd.f32 %v2758, %v2926
  %2928 = vmatmul.bf16.gmra.mxu0 %v1365
  %v2929 = vpop.f32.mrf.mxu0
  %v2930 = vadd.f32 %v2761, %v2929
  %v2931 = vpop.f32.mrf.mxu0
  %v2932 = vadd.f32 %v2763, %v2931
  %2933 = vmatmul.bf16.gmra.mxu0 %v1373
  %v2934 = vpop.f32.mrf.mxu0
  %v2935 = vadd.f32 %v2766, %v2934
  %v2936 = vpop.f32.mrf.mxu0
  %v2937 = vadd.f32 %v2768, %v2936
  %2938 = vmatmul.bf16.gmra.mxu0 %v1381
  %v2939 = vpop.f32.mrf.mxu0
  %v2940 = vadd.f32 %v2771, %v2939
  %v2941 = vpop.f32.mrf.mxu0
  %v2942 = vadd.f32 %v2773, %v2941
  %2943 = vmatmul.bf16.gmra.mxu0 %v1389
  %v2944 = vpop.f32.mrf.mxu0
  %v2945 = vadd.f32 %v2776, %v2944
  %v2946 = vpop.f32.mrf.mxu0
  %v2947 = vadd.f32 %v2778, %v2946
  %2948 = vmatmul.bf16.gmra.mxu0 %v1397
  %v2949 = vpop.f32.mrf.mxu0
  %v2950 = vadd.f32 %v2781, %v2949
  %v2951 = vpop.f32.mrf.mxu0
  %v2952 = vadd.f32 %v2783, %v2951
  %2953 = vmatmul.bf16.gmra.mxu0 %v1405
  %v2954 = vpop.f32.mrf.mxu0
  %v2955 = vadd.f32 %v2786, %v2954
  %v2956 = vpop.f32.mrf.mxu0
  %v2957 = vadd.f32 %v2788, %v2956
  %2958 = vmatmul.bf16.gmra.mxu0 %v1413
  %v2959 = vpop.f32.mrf.mxu0
  %v2960 = vadd.f32 %v2791, %v2959
  %v2961 = vpop.f32.mrf.mxu0
  %v2962 = vadd.f32 %v2793, %v2961
  %2963 = vmatmul.bf16.gmra.mxu0 %v1421
  %v2964 = vpop.f32.mrf.mxu0
  %v2965 = vadd.f32 %v2796, %v2964
  %v2966 = vpop.f32.mrf.mxu0
  %v2967 = vadd.f32 %v2798, %v2966
  %2968 = vdwg.mxu0
  %2969 = vmatpush.bf16.msra.mxu0 %v1948
  %2970 = vmatpush.bf16.msra.mxu0 %v1947
  %2971 = vmatpush.bf16.msra.mxu0 %v1946
  %2972 = vmatpush.bf16.msra.mxu0 %v1945
  %2973 = vmatpush.bf16.msra.mxu0 %v1944
  %2974 = vmatpush.bf16.msra.mxu0 %v1943
  %2975 = vmatpush.bf16.msra.mxu0 %v1942
  %2976 = vmatpush.bf16.msra.mxu0 %v1941
  %2977 = vmatmul.bf16.gmra.mxu0 %v1174
  %v2978 = vpop.f32.mrf.mxu0
  %v2979 = vadd.f32 %v2810, %v2978
  %v2980 = vpop.f32.mrf.mxu0
  %v2981 = vadd.f32 %v2812, %v2980
  %2982 = vmatmul.bf16.gmra.mxu0 %v1182
  %v2983 = vpop.f32.mrf.mxu0
  %v2984 = vadd.f32 %v2815, %v2983
  %v2985 = vpop.f32.mrf.mxu0
  %v2986 = vadd.f32 %v2817, %v2985
  %2987 = vmatmul.bf16.gmra.mxu0 %v1190
  %v2988 = vpop.f32.mrf.mxu0
  %v2989 = vadd.f32 %v2820, %v2988
  %v2990 = vpop.f32.mrf.mxu0
  %v2991 = vadd.f32 %v2822, %v2990
  %2992 = vmatmul.bf16.gmra.mxu0 %v1198
  %v2993 = vpop.f32.mrf.mxu0
  %v2994 = vadd.f32 %v2825, %v2993
  %v2995 = vpop.f32.mrf.mxu0
  %v2996 = vadd.f32 %v2827, %v2995
  %2997 = vmatmul.bf16.gmra.mxu0 %v1206
  %v2998 = vpop.f32.mrf.mxu0
  %v2999 = vadd.f32 %v2830, %v2998
  %v3000 = vpop.f32.mrf.mxu0
  %v3001 = vadd.f32 %v2832, %v3000
  %3002 = vmatmul.bf16.gmra.mxu0 %v1214
  %v3003 = vpop.f32.mrf.mxu0
  %v3004 = vadd.f32 %v2835, %v3003
  %v3005 = vpop.f32.mrf.mxu0
  %v3006 = vadd.f32 %v2837, %v3005
  %3007 = vmatmul.bf16.gmra.mxu0 %v1222
  %v3008 = vpop.f32.mrf.mxu0
  %v3009 = vadd.f32 %v2840, %v3008
  %v3010 = vpop.f32.mrf.mxu0
  %v3011 = vadd.f32 %v2842, %v3010
  %3012 = vmatmul.bf16.gmra.mxu0 %v1230
  %v3013 = vpop.f32.mrf.mxu0
  %v3014 = vadd.f32 %v2845, %v3013
  %v3015 = vpop.f32.mrf.mxu0
  %v3016 = vadd.f32 %v2847, %v3015
  %3017 = vmatmul.bf16.gmra.mxu0 %v1238
  %v3018 = vpop.f32.mrf.mxu0
  %v3019 = vadd.f32 %v2850, %v3018
  %v3020 = vpop.f32.mrf.mxu0
  %v3021 = vadd.f32 %v2852, %v3020
  %3022 = vmatmul.bf16.gmra.mxu0 %v1246
  %v3023 = vpop.f32.mrf.mxu0
  %v3024 = vadd.f32 %v2855, %v3023
  %v3025 = vpop.f32.mrf.mxu0
  %v3026 = vadd.f32 %v2857, %v3025
  %3027 = vmatmul.bf16.gmra.mxu0 %v1254
  %v3028 = vpop.f32.mrf.mxu0
  %v3029 = vadd.f32 %v2860, %v3028
  %v3030 = vpop.f32.mrf.mxu0
  %v3031 = vadd.f32 %v2862, %v3030
  %3032 = vmatmul.bf16.gmra.mxu0 %v1262
  %v3033 = vpop.f32.mrf.mxu0
  %v3034 = vadd.f32 %v2865, %v3033
  %v3035 = vpop.f32.mrf.mxu0
  %v3036 = vadd.f32 %v2867, %v3035
  %3037 = vmatmul.bf16.gmra.mxu0 %v1270
  %v3038 = vpop.f32.mrf.mxu0
  %v3039 = vadd.f32 %v2870, %v3038
  %v3040 = vpop.f32.mrf.mxu0
  %v3041 = vadd.f32 %v2872, %v3040
  %3042 = vmatmul.bf16.gmra.mxu0 %v1278
  %v3043 = vpop.f32.mrf.mxu0
  %v3044 = vadd.f32 %v2875, %v3043
  %v3045 = vpop.f32.mrf.mxu0
  %v3046 = vadd.f32 %v2877, %v3045
  %3047 = vmatmul.bf16.gmra.mxu0 %v1286
  %v3048 = vpop.f32.mrf.mxu0
  %v3049 = vadd.f32 %v2880, %v3048
  %v3050 = vpop.f32.mrf.mxu0
  %v3051 = vadd.f32 %v2882, %v3050
  %3052 = vmatmul.bf16.gmra.mxu0 %v1294
  %v3053 = vpop.f32.mrf.mxu0
  %v3054 = vadd.f32 %v2885, %v3053
  %v3055 = vpop.f32.mrf.mxu0
  %v3056 = vadd.f32 %v2887, %v3055
  %3057 = vmatmul.bf16.gmra.mxu0 %v1302
  %v3058 = vpop.f32.mrf.mxu0
  %v3059 = vadd.f32 %v2890, %v3058
  %v3060 = vpop.f32.mrf.mxu0
  %v3061 = vadd.f32 %v2892, %v3060
  %3062 = vmatmul.bf16.gmra.mxu0 %v1310
  %v3063 = vpop.f32.mrf.mxu0
  %v3064 = vadd.f32 %v2895, %v3063
  %v3065 = vpop.f32.mrf.mxu0
  %v3066 = vadd.f32 %v2897, %v3065
  %3067 = vmatmul.bf16.gmra.mxu0 %v1318
  %v3068 = vpop.f32.mrf.mxu0
  %v3069 = vadd.f32 %v2900, %v3068
  %v3070 = vpop.f32.mrf.mxu0
  %v3071 = vadd.f32 %v2902, %v3070
  %3072 = vmatmul.bf16.gmra.mxu0 %v1326
  %v3073 = vpop.f32.mrf.mxu0
  %v3074 = vadd.f32 %v2905, %v3073
  %v3075 = vpop.f32.mrf.mxu0
  %v3076 = vadd.f32 %v2907, %v3075
  %3077 = vmatmul.bf16.gmra.mxu0 %v1334
  %v3078 = vpop.f32.mrf.mxu0
  %v3079 = vadd.f32 %v2910, %v3078
  %v3080 = vpop.f32.mrf.mxu0
  %v3081 = vadd.f32 %v2912, %v3080
  %3082 = vmatmul.bf16.gmra.mxu0 %v1342
  %v3083 = vpop.f32.mrf.mxu0
  %v3084 = vadd.f32 %v2915, %v3083
  %v3085 = vpop.f32.mrf.mxu0
  %v3086 = vadd.f32 %v2917, %v3085
  %3087 = vmatmul.bf16.gmra.mxu0 %v1350
  %v3088 = vpop.f32.mrf.mxu0
  %v3089 = vadd.f32 %v2920, %v3088
  %v3090 = vpop.f32.mrf.mxu0
  %v3091 = vadd.f32 %v2922, %v3090
  %3092 = vmatmul.bf16.gmra.mxu0 %v1358
  %v3093 = vpop.f32.mrf.mxu0
  %v3094 = vadd.f32 %v2925, %v3093
  %v3095 = vpop.f32.mrf.mxu0
  %v3096 = vadd.f32 %v2927, %v3095
  %3097 = vmatmul.bf16.gmra.mxu0 %v1366
  %v3098 = vpop.f32.mrf.mxu0
  %v3099 = vadd.f32 %v2930, %v3098
  %v3100 = vpop.f32.mrf.mxu0
  %v3101 = vadd.f32 %v2932, %v3100
  %3102 = vmatmul.bf16.gmra.mxu0 %v1374
  %v3103 = vpop.f32.mrf.mxu0
  %v3104 = vadd.f32 %v2935, %v3103
  %v3105 = vpop.f32.mrf.mxu0
  %v3106 = vadd.f32 %v2937, %v3105
  %3107 = vmatmul.bf16.gmra.mxu0 %v1382
  %v3108 = vpop.f32.mrf.mxu0
  %v3109 = vadd.f32 %v2940, %v3108
  %v3110 = vpop.f32.mrf.mxu0
  %v3111 = vadd.f32 %v2942, %v3110
  %3112 = vmatmul.bf16.gmra.mxu0 %v1390
  %v3113 = vpop.f32.mrf.mxu0
  %v3114 = vadd.f32 %v2945, %v3113
  %v3115 = vpop.f32.mrf.mxu0
  %v3116 = vadd.f32 %v2947, %v3115
  %3117 = vmatmul.bf16.gmra.mxu0 %v1398
  %v3118 = vpop.f32.mrf.mxu0
  %v3119 = vadd.f32 %v2950, %v3118
  %v3120 = vpop.f32.mrf.mxu0
  %v3121 = vadd.f32 %v2952, %v3120
  %3122 = vmatmul.bf16.gmra.mxu0 %v1406
  %v3123 = vpop.f32.mrf.mxu0
  %v3124 = vadd.f32 %v2955, %v3123
  %v3125 = vpop.f32.mrf.mxu0
  %v3126 = vadd.f32 %v2957, %v3125
  %3127 = vmatmul.bf16.gmra.mxu0 %v1414
  %v3128 = vpop.f32.mrf.mxu0
  %v3129 = vadd.f32 %v2960, %v3128
  %v3130 = vpop.f32.mrf.mxu0
  %v3131 = vadd.f32 %v2962, %v3130
  %3132 = vmatmul.bf16.gmra.mxu0 %v1422
  %v3133 = vpop.f32.mrf.mxu0
  %v3134 = vadd.f32 %v2965, %v3133
  %v3135 = vpop.f32.mrf.mxu0
  %v3136 = vadd.f32 %v2967, %v3135
  %3137 = vdwg.mxu0
  %3138 = vmatpush.bf16.msra.mxu0 %v1956
  %3139 = vmatpush.bf16.msra.mxu0 %v1955
  %3140 = vmatpush.bf16.msra.mxu0 %v1954
  %3141 = vmatpush.bf16.msra.mxu0 %v1953
  %3142 = vmatpush.bf16.msra.mxu0 %v1952
  %3143 = vmatpush.bf16.msra.mxu0 %v1951
  %3144 = vmatpush.bf16.msra.mxu0 %v1950
  %3145 = vmatpush.bf16.msra.mxu0 %v1949
  %3146 = vmatmul.bf16.gmra.mxu0 %v1175
  %v3147 = vpop.f32.mrf.mxu0
  %v3148 = vadd.f32 %v2979, %v3147
  %v3149 = vpop.f32.mrf.mxu0
  %v3150 = vadd.f32 %v2981, %v3149
  %3151 = vmatmul.bf16.gmra.mxu0 %v1183
  %v3152 = vpop.f32.mrf.mxu0
  %v3153 = vadd.f32 %v2984, %v3152
  %v3154 = vpop.f32.mrf.mxu0
  %v3155 = vadd.f32 %v2986, %v3154
  %3156 = vmatmul.bf16.gmra.mxu0 %v1191
  %v3157 = vpop.f32.mrf.mxu0
  %v3158 = vadd.f32 %v2989, %v3157
  %v3159 = vpop.f32.mrf.mxu0
  %v3160 = vadd.f32 %v2991, %v3159
  %3161 = vmatmul.bf16.gmra.mxu0 %v1199
  %v3162 = vpop.f32.mrf.mxu0
  %v3163 = vadd.f32 %v2994, %v3162
  %v3164 = vpop.f32.mrf.mxu0
  %v3165 = vadd.f32 %v2996, %v3164
  %3166 = vmatmul.bf16.gmra.mxu0 %v1207
  %v3167 = vpop.f32.mrf.mxu0
  %v3168 = vadd.f32 %v2999, %v3167
  %v3169 = vpop.f32.mrf.mxu0
  %v3170 = vadd.f32 %v3001, %v3169
  %3171 = vmatmul.bf16.gmra.mxu0 %v1215
  %v3172 = vpop.f32.mrf.mxu0
  %v3173 = vadd.f32 %v3004, %v3172
  %v3174 = vpop.f32.mrf.mxu0
  %v3175 = vadd.f32 %v3006, %v3174
  %3176 = vmatmul.bf16.gmra.mxu0 %v1223
  %v3177 = vpop.f32.mrf.mxu0
  %v3178 = vadd.f32 %v3009, %v3177
  %v3179 = vpop.f32.mrf.mxu0
  %v3180 = vadd.f32 %v3011, %v3179
  %3181 = vmatmul.bf16.gmra.mxu0 %v1231
  %v3182 = vpop.f32.mrf.mxu0
  %v3183 = vadd.f32 %v3014, %v3182
  %v3184 = vpop.f32.mrf.mxu0
  %v3185 = vadd.f32 %v3016, %v3184
  %3186 = vmatmul.bf16.gmra.mxu0 %v1239
  %v3187 = vpop.f32.mrf.mxu0
  %v3188 = vadd.f32 %v3019, %v3187
  %v3189 = vpop.f32.mrf.mxu0
  %v3190 = vadd.f32 %v3021, %v3189
  %3191 = vmatmul.bf16.gmra.mxu0 %v1247
  %v3192 = vpop.f32.mrf.mxu0
  %v3193 = vadd.f32 %v3024, %v3192
  %v3194 = vpop.f32.mrf.mxu0
  %v3195 = vadd.f32 %v3026, %v3194
  %3196 = vmatmul.bf16.gmra.mxu0 %v1255
  %v3197 = vpop.f32.mrf.mxu0
  %v3198 = vadd.f32 %v3029, %v3197
  %v3199 = vpop.f32.mrf.mxu0
  %v3200 = vadd.f32 %v3031, %v3199
  %3201 = vmatmul.bf16.gmra.mxu0 %v1263
  %v3202 = vpop.f32.mrf.mxu0
  %v3203 = vadd.f32 %v3034, %v3202
  %v3204 = vpop.f32.mrf.mxu0
  %v3205 = vadd.f32 %v3036, %v3204
  %3206 = vmatmul.bf16.gmra.mxu0 %v1271
  %v3207 = vpop.f32.mrf.mxu0
  %v3208 = vadd.f32 %v3039, %v3207
  %v3209 = vpop.f32.mrf.mxu0
  %v3210 = vadd.f32 %v3041, %v3209
  %3211 = vmatmul.bf16.gmra.mxu0 %v1279
  %v3212 = vpop.f32.mrf.mxu0
  %v3213 = vadd.f32 %v3044, %v3212
  %v3214 = vpop.f32.mrf.mxu0
  %v3215 = vadd.f32 %v3046, %v3214
  %3216 = vmatmul.bf16.gmra.mxu0 %v1287
  %v3217 = vpop.f32.mrf.mxu0
  %v3218 = vadd.f32 %v3049, %v3217
  %v3219 = vpop.f32.mrf.mxu0
  %v3220 = vadd.f32 %v3051, %v3219
  %3221 = vmatmul.bf16.gmra.mxu0 %v1295
  %v3222 = vpop.f32.mrf.mxu0
  %v3223 = vadd.f32 %v3054, %v3222
  %v3224 = vpop.f32.mrf.mxu0
  %v3225 = vadd.f32 %v3056, %v3224
  %3226 = vmatmul.bf16.gmra.mxu0 %v1303
  %v3227 = vpop.f32.mrf.mxu0
  %v3228 = vadd.f32 %v3059, %v3227
  %v3229 = vpop.f32.mrf.mxu0
  %v3230 = vadd.f32 %v3061, %v3229
  %3231 = vmatmul.bf16.gmra.mxu0 %v1311
  %v3232 = vpop.f32.mrf.mxu0
  %v3233 = vadd.f32 %v3064, %v3232
  %v3234 = vpop.f32.mrf.mxu0
  %v3235 = vadd.f32 %v3066, %v3234
  %3236 = vmatmul.bf16.gmra.mxu0 %v1319
  %v3237 = vpop.f32.mrf.mxu0
  %v3238 = vadd.f32 %v3069, %v3237
  %v3239 = vpop.f32.mrf.mxu0
  %v3240 = vadd.f32 %v3071, %v3239
  %3241 = vmatmul.bf16.gmra.mxu0 %v1327
  %v3242 = vpop.f32.mrf.mxu0
  %v3243 = vadd.f32 %v3074, %v3242
  %v3244 = vpop.f32.mrf.mxu0
  %v3245 = vadd.f32 %v3076, %v3244
  %3246 = vmatmul.bf16.gmra.mxu0 %v1335
  %v3247 = vpop.f32.mrf.mxu0
  %v3248 = vadd.f32 %v3079, %v3247
  %v3249 = vpop.f32.mrf.mxu0
  %v3250 = vadd.f32 %v3081, %v3249
  %3251 = vmatmul.bf16.gmra.mxu0 %v1343
  %v3252 = vpop.f32.mrf.mxu0
  %v3253 = vadd.f32 %v3084, %v3252
  %v3254 = vpop.f32.mrf.mxu0
  %v3255 = vadd.f32 %v3086, %v3254
  %3256 = vmatmul.bf16.gmra.mxu0 %v1351
  %v3257 = vpop.f32.mrf.mxu0
  %v3258 = vadd.f32 %v3089, %v3257
  %v3259 = vpop.f32.mrf.mxu0
  %v3260 = vadd.f32 %v3091, %v3259
  %3261 = vmatmul.bf16.gmra.mxu0 %v1359
  %v3262 = vpop.f32.mrf.mxu0
  %v3263 = vadd.f32 %v3094, %v3262
  %v3264 = vpop.f32.mrf.mxu0
  %v3265 = vadd.f32 %v3096, %v3264
  %3266 = vmatmul.bf16.gmra.mxu0 %v1367
  %v3267 = vpop.f32.mrf.mxu0
  %v3268 = vadd.f32 %v3099, %v3267
  %v3269 = vpop.f32.mrf.mxu0
  %v3270 = vadd.f32 %v3101, %v3269
  %3271 = vmatmul.bf16.gmra.mxu0 %v1375
  %v3272 = vpop.f32.mrf.mxu0
  %v3273 = vadd.f32 %v3104, %v3272
  %v3274 = vpop.f32.mrf.mxu0
  %v3275 = vadd.f32 %v3106, %v3274
  %3276 = vmatmul.bf16.gmra.mxu0 %v1383
  %v3277 = vpop.f32.mrf.mxu0
  %v3278 = vadd.f32 %v3109, %v3277
  %v3279 = vpop.f32.mrf.mxu0
  %v3280 = vadd.f32 %v3111, %v3279
  %3281 = vmatmul.bf16.gmra.mxu0 %v1391
  %v3282 = vpop.f32.mrf.mxu0
  %v3283 = vadd.f32 %v3114, %v3282
  %v3284 = vpop.f32.mrf.mxu0
  %v3285 = vadd.f32 %v3116, %v3284
  %3286 = vmatmul.bf16.gmra.mxu0 %v1399
  %v3287 = vpop.f32.mrf.mxu0
  %v3288 = vadd.f32 %v3119, %v3287
  %v3289 = vpop.f32.mrf.mxu0
  %v3290 = vadd.f32 %v3121, %v3289
  %3291 = vmatmul.bf16.gmra.mxu0 %v1407
  %v3292 = vpop.f32.mrf.mxu0
  %v3293 = vadd.f32 %v3124, %v3292
  %v3294 = vpop.f32.mrf.mxu0
  %v3295 = vadd.f32 %v3126, %v3294
  %3296 = vmatmul.bf16.gmra.mxu0 %v1415
  %v3297 = vpop.f32.mrf.mxu0
  %v3298 = vadd.f32 %v3129, %v3297
  %v3299 = vpop.f32.mrf.mxu0
  %v3300 = vadd.f32 %v3131, %v3299
  %3301 = vmatmul.bf16.gmra.mxu0 %v1423
  %v3302 = vpop.f32.mrf.mxu0
  %v3303 = vadd.f32 %v3134, %v3302
  %v3304 = vpop.f32.mrf.mxu0
  %v3305 = vadd.f32 %v3136, %v3304
  %3306 = vdwg.mxu0
  %3307 = vmatpush.bf16.msra.mxu0 0
  %3308 = vmatpush.bf16.msra.mxu0 %v1963
  %3309 = vmatpush.bf16.msra.mxu0 %v1962
  %3310 = vmatpush.bf16.msra.mxu0 %v1961
  %3311 = vmatpush.bf16.msra.mxu0 %v1960
  %3312 = vmatpush.bf16.msra.mxu0 %v1959
  %3313 = vmatpush.bf16.msra.mxu0 %v1958
  %3314 = vmatpush.bf16.msra.mxu0 %v1957
  %3315 = vmatmul.bf16.gmra.mxu0 %v2029
  %v3316 = vpop.f32.mrf.mxu0
  %v3317 = vadd.f32 %v3148, %v3316
  %v3318 = vpop.f32.mrf.mxu0
  %v3319 = vadd.f32 %v3150, %v3318
  %3320 = vmatmul.bf16.gmra.mxu0 %v2032
  %v3321 = vpop.f32.mrf.mxu0
  %v3322 = vadd.f32 %v3153, %v3321
  %v3323 = vpop.f32.mrf.mxu0
  %v3324 = vadd.f32 %v3155, %v3323
  %3325 = vmatmul.bf16.gmra.mxu0 %v2035
  %v3326 = vpop.f32.mrf.mxu0
  %v3327 = vadd.f32 %v3158, %v3326
  %v3328 = vpop.f32.mrf.mxu0
  %v3329 = vadd.f32 %v3160, %v3328
  %3330 = vmatmul.bf16.gmra.mxu0 %v2038
  %v3331 = vpop.f32.mrf.mxu0
  %v3332 = vadd.f32 %v3163, %v3331
  %v3333 = vpop.f32.mrf.mxu0
  %v3334 = vadd.f32 %v3165, %v3333
  %3335 = vmatmul.bf16.gmra.mxu0 %v2041
  %v3336 = vpop.f32.mrf.mxu0
  %v3337 = vadd.f32 %v3168, %v3336
  %v3338 = vpop.f32.mrf.mxu0
  %v3339 = vadd.f32 %v3170, %v3338
  %3340 = vmatmul.bf16.gmra.mxu0 %v2044
  %v3341 = vpop.f32.mrf.mxu0
  %v3342 = vadd.f32 %v3173, %v3341
  %v3343 = vpop.f32.mrf.mxu0
  %v3344 = vadd.f32 %v3175, %v3343
  %3345 = vmatmul.bf16.gmra.mxu0 %v2047
  %v3346 = vpop.f32.mrf.mxu0
  %v3347 = vadd.f32 %v3178, %v3346
  %v3348 = vpop.f32.mrf.mxu0
  %v3349 = vadd.f32 %v3180, %v3348
  %3350 = vmatmul.bf16.gmra.mxu0 %v2050
  %v3351 = vpop.f32.mrf.mxu0
  %v3352 = vadd.f32 %v3183, %v3351
  %v3353 = vpop.f32.mrf.mxu0
  %v3354 = vadd.f32 %v3185, %v3353
  %3355 = vmatmul.bf16.gmra.mxu0 %v2053
  %v3356 = vpop.f32.mrf.mxu0
  %v3357 = vadd.f32 %v3188, %v3356
  %v3358 = vpop.f32.mrf.mxu0
  %v3359 = vadd.f32 %v3190, %v3358
  %3360 = vmatmul.bf16.gmra.mxu0 %v2056
  %v3361 = vpop.f32.mrf.mxu0
  %v3362 = vadd.f32 %v3193, %v3361
  %v3363 = vpop.f32.mrf.mxu0
  %v3364 = vadd.f32 %v3195, %v3363
  %3365 = vmatmul.bf16.gmra.mxu0 %v2059
  %v3366 = vpop.f32.mrf.mxu0
  %v3367 = vadd.f32 %v3198, %v3366
  %v3368 = vpop.f32.mrf.mxu0
  %v3369 = vadd.f32 %v3200, %v3368
  %3370 = vmatmul.bf16.gmra.mxu0 %v2062
  %v3371 = vpop.f32.mrf.mxu0
  %v3372 = vadd.f32 %v3203, %v3371
  %v3373 = vpop.f32.mrf.mxu0
  %v3374 = vadd.f32 %v3205, %v3373
  %3375 = vmatmul.bf16.gmra.mxu0 %v2065
  %v3376 = vpop.f32.mrf.mxu0
  %v3377 = vadd.f32 %v3208, %v3376
  %v3378 = vpop.f32.mrf.mxu0
  %v3379 = vadd.f32 %v3210, %v3378
  %3380 = vmatmul.bf16.gmra.mxu0 %v2068
  %v3381 = vpop.f32.mrf.mxu0
  %v3382 = vadd.f32 %v3213, %v3381
  %v3383 = vpop.f32.mrf.mxu0
  %v3384 = vadd.f32 %v3215, %v3383
  %3385 = vmatmul.bf16.gmra.mxu0 %v2071
  %v3386 = vpop.f32.mrf.mxu0
  %v3387 = vadd.f32 %v3218, %v3386
  %v3388 = vpop.f32.mrf.mxu0
  %v3389 = vadd.f32 %v3220, %v3388
  %3390 = vmatmul.bf16.gmra.mxu0 %v2074
  %v3391 = vpop.f32.mrf.mxu0
  %v3392 = vadd.f32 %v3223, %v3391
  %v3393 = vpop.f32.mrf.mxu0
  %v3394 = vadd.f32 %v3225, %v3393
  %3395 = vmatmul.bf16.gmra.mxu0 %v2077
  %v3396 = vpop.f32.mrf.mxu0
  %v3397 = vadd.f32 %v3228, %v3396
  %v3398 = vpop.f32.mrf.mxu0
  %v3399 = vadd.f32 %v3230, %v3398
  %3400 = vmatmul.bf16.gmra.mxu0 %v2080
  %v3401 = vpop.f32.mrf.mxu0
  %v3402 = vadd.f32 %v3233, %v3401
  %v3403 = vpop.f32.mrf.mxu0
  %v3404 = vadd.f32 %v3235, %v3403
  %3405 = vmatmul.bf16.gmra.mxu0 %v2083
  %v3406 = vpop.f32.mrf.mxu0
  %v3407 = vadd.f32 %v3238, %v3406
  %v3408 = vpop.f32.mrf.mxu0
  %v3409 = vadd.f32 %v3240, %v3408
  %3410 = vmatmul.bf16.gmra.mxu0 %v2086
  %v3411 = vpop.f32.mrf.mxu0
  %v3412 = vadd.f32 %v3243, %v3411
  %v3413 = vpop.f32.mrf.mxu0
  %v3414 = vadd.f32 %v3245, %v3413
  %3415 = vmatmul.bf16.gmra.mxu0 %v2089
  %v3416 = vpop.f32.mrf.mxu0
  %v3417 = vadd.f32 %v3248, %v3416
  %v3418 = vpop.f32.mrf.mxu0
  %v3419 = vadd.f32 %v3250, %v3418
  %3420 = vmatmul.bf16.gmra.mxu0 %v2092
  %v3421 = vpop.f32.mrf.mxu0
  %v3422 = vadd.f32 %v3253, %v3421
  %v3423 = vpop.f32.mrf.mxu0
  %v3424 = vadd.f32 %v3255, %v3423
  %3425 = vmatmul.bf16.gmra.mxu0 %v2095
  %v3426 = vpop.f32.mrf.mxu0
  %v3427 = vadd.f32 %v3258, %v3426
  %v3428 = vpop.f32.mrf.mxu0
  %v3429 = vadd.f32 %v3260, %v3428
  %3430 = vmatmul.bf16.gmra.mxu0 %v2098
  %v3431 = vpop.f32.mrf.mxu0
  %v3432 = vadd.f32 %v3263, %v3431
  %v3433 = vpop.f32.mrf.mxu0
  %v3434 = vadd.f32 %v3265, %v3433
  %3435 = vmatmul.bf16.gmra.mxu0 %v2101
  %v3436 = vpop.f32.mrf.mxu0
  %v3437 = vadd.f32 %v3268, %v3436
  %v3438 = vpop.f32.mrf.mxu0
  %v3439 = vadd.f32 %v3270, %v3438
  %3440 = vmatmul.bf16.gmra.mxu0 %v2104
  %v3441 = vpop.f32.mrf.mxu0
  %v3442 = vadd.f32 %v3273, %v3441
  %v3443 = vpop.f32.mrf.mxu0
  %v3444 = vadd.f32 %v3275, %v3443
  %3445 = vmatmul.bf16.gmra.mxu0 %v2107
  %v3446 = vpop.f32.mrf.mxu0
  %v3447 = vadd.f32 %v3278, %v3446
  %v3448 = vpop.f32.mrf.mxu0
  %v3449 = vadd.f32 %v3280, %v3448
  %3450 = vmatmul.bf16.gmra.mxu0 %v2110
  %v3451 = vpop.f32.mrf.mxu0
  %v3452 = vadd.f32 %v3283, %v3451
  %v3453 = vpop.f32.mrf.mxu0
  %v3454 = vadd.f32 %v3285, %v3453
  %3455 = vmatmul.bf16.gmra.mxu0 %v2113
  %v3456 = vpop.f32.mrf.mxu0
  %v3457 = vadd.f32 %v3288, %v3456
  %v3458 = vpop.f32.mrf.mxu0
  %v3459 = vadd.f32 %v3290, %v3458
  %3460 = vmatmul.bf16.gmra.mxu0 %v2116
  %v3461 = vpop.f32.mrf.mxu0
  %v3462 = vadd.f32 %v3293, %v3461
  %v3463 = vpop.f32.mrf.mxu0
  %v3464 = vadd.f32 %v3295, %v3463
  %3465 = vmatmul.bf16.gmra.mxu0 %v2119
  %v3466 = vpop.f32.mrf.mxu0
  %v3467 = vadd.f32 %v3298, %v3466
  %v3468 = vpop.f32.mrf.mxu0
  %v3469 = vadd.f32 %v3300, %v3468
  %3470 = vmatmul.bf16.gmra.mxu0 %v2122
  %v3471 = vpop.f32.mrf.mxu0
  %v3472 = vadd.f32 %v3303, %v3471
  %v3473 = vpop.f32.mrf.mxu0
  %v3474 = vadd.f32 %v3305, %v3473
  %3475 = vdwg.mxu0
  %v3476 = vmax.f32 %v3317, 0.0
  %v3477 = vmax.f32 %v3319, 0.0
  %v3478 = vmax.f32 %v3322, 0.0
  %v3479 = vmax.f32 %v3324, 0.0
  %v3480 = vmax.f32 %v3327, 0.0
  %v3481 = vmax.f32 %v3329, 0.0
  %v3482 = vmax.f32 %v3332, 0.0
  %v3483 = vmax.f32 %v3334, 0.0
  %v3484 = vmax.f32 %v3337, 0.0
  %v3485 = vmax.f32 %v3339, 0.0
  %v3486 = vmax.f32 %v3342, 0.0
  %v3487 = vmax.f32 %v3344, 0.0
  %v3488 = vmax.f32 %v3347, 0.0
  %v3489 = vmax.f32 %v3349, 0.0
  %v3490 = vmax.f32 %v3352, 0.0
  %v3491 = vmax.f32 %v3354, 0.0
  %v3492 = vmax.f32 %v3357, 0.0
  %v3493 = vmax.f32 %v3359, 0.0
  %v3494 = vmax.f32 %v3362, 0.0
  %v3495 = vmax.f32 %v3364, 0.0
  %v3496 = vmax.f32 %v3367, 0.0
  %v3497 = vmax.f32 %v3369, 0.0
  %v3498 = vmax.f32 %v3372, 0.0
  %v3499 = vmax.f32 %v3374, 0.0
  %v3500 = vmax.f32 %v3377, 0.0
  %v3501 = vmax.f32 %v3379, 0.0
  %v3502 = vmax.f32 %v3382, 0.0
  %v3503 = vmax.f32 %v3384, 0.0
  %v3504 = vmax.f32 %v3387, 0.0
  %v3505 = vmax.f32 %v3389, 0.0
  %v3506 = vmax.f32 %v3392, 0.0
  %v3507 = vmax.f32 %v3394, 0.0
  %v3508 = vmax.f32 %v3397, 0.0
  %v3509 = vmax.f32 %v3399, 0.0
  %v3510 = vmax.f32 %v3402, 0.0
  %v3511 = vmax.f32 %v3404, 0.0
  %v3512 = vmax.f32 %v3407, 0.0
  %v3513 = vmax.f32 %v3409, 0.0
  %v3514 = vmax.f32 %v3412, 0.0
  %v3515 = vmax.f32 %v3414, 0.0
  %v3516 = vmax.f32 %v3417, 0.0
  %v3517 = vmax.f32 %v3419, 0.0
  %v3518 = vmax.f32 %v3422, 0.0
  %v3519 = vmax.f32 %v3424, 0.0
  %v3520 = vmax.f32 %v3427, 0.0
  %v3521 = vmax.f32 %v3429, 0.0
  %v3522 = vmax.f32 %v3432, 0.0
  %v3523 = vmax.f32 %v3434, 0.0
  %v3524 = vmax.f32 %v3437, 0.0
  %v3525 = vmax.f32 %v3439, 0.0
  %v3526 = vmax.f32 %v3442, 0.0
  %v3527 = vmax.f32 %v3444, 0.0
  %v3528 = vmax.f32 %v3447, 0.0
  %v3529 = vmax.f32 %v3449, 0.0
  %v3530 = vmax.f32 %v3452, 0.0
  %v3531 = vmax.f32 %v3454, 0.0
  %v3532 = vmax.f32 %v3457, 0.0
  %v3533 = vmax.f32 %v3459, 0.0
  %v3534 = vmax.f32 %v3462, 0.0
  %v3535 = vmax.f32 %v3464, 0.0
  %v3536 = vmax.f32 %v3467, 0.0
  %v3537 = vmax.f32 %v3469, 0.0
  %v3538 = vmax.f32 %v3472, 0.0
  %v3539 = vmax.f32 %v3474, 0.0
  %v3540 = vpack.c.bf16 %v3476, %v3476
  %v3541 = vpack.c.bf16 %v3477, %v3477
  %v3542 = vpack.c.bf16 %v3478, %v3478
  %v3543 = vpack.c.bf16 %v3479, %v3479
  %v3544 = vpack.c.bf16 %v3480, %v3480
  %v3545 = vpack.c.bf16 %v3481, %v3481
  %v3546 = vpack.c.bf16 %v3482, %v3482
  %v3547 = vpack.c.bf16 %v3483, %v3483
  %v3548 = vpack.c.bf16 %v3484, %v3484
  %v3549 = vpack.c.bf16 %v3485, %v3485
  %v3550 = vpack.c.bf16 %v3486, %v3486
  %v3551 = vpack.c.bf16 %v3487, %v3487
  %v3552 = vpack.c.bf16 %v3488, %v3488
  %v3553 = vpack.c.bf16 %v3489, %v3489
  %v3554 = vpack.c.bf16 %v3490, %v3490
  %v3555 = vpack.c.bf16 %v3491, %v3491
  %v3556 = vpack.c.bf16 %v3492, %v3492
  %v3557 = vpack.c.bf16 %v3493, %v3493
  %v3558 = vpack.c.bf16 %v3494, %v3494
  %v3559 = vpack.c.bf16 %v3495, %v3495
  %v3560 = vpack.c.bf16 %v3496, %v3496
  %v3561 = vpack.c.bf16 %v3497, %v3497
  %v3562 = vpack.c.bf16 %v3498, %v3498
  %v3563 = vpack.c.bf16 %v3499, %v3499
  %v3564 = vpack.c.bf16 %v3500, %v3500
  %v3565 = vpack.c.bf16 %v3501, %v3501
  %v3566 = vpack.c.bf16 %v3502, %v3502
  %v3567 = vpack.c.bf16 %v3503, %v3503
  %v3568 = vpack.c.bf16 %v3504, %v3504
  %v3569 = vpack.c.bf16 %v3505, %v3505
  %v3570 = vpack.c.bf16 %v3506, %v3506
  %v3571 = vpack.c.bf16 %v3507, %v3507
  %v3572 = vpack.c.bf16 %v3508, %v3508
  %v3573 = vpack.c.bf16 %v3509, %v3509
  %v3574 = vpack.c.bf16 %v3510, %v3510
  %v3575 = vpack.c.bf16 %v3511, %v3511
  %v3576 = vpack.c.bf16 %v3512, %v3512
  %v3577 = vpack.c.bf16 %v3513, %v3513
  %v3578 = vpack.c.bf16 %v3514, %v3514
  %v3579 = vpack.c.bf16 %v3515, %v3515
  %v3580 = vpack.c.bf16 %v3516, %v3516
  %v3581 = vpack.c.bf16 %v3517, %v3517
  %v3582 = vpack.c.bf16 %v3518, %v3518
  %v3583 = vpack.c.bf16 %v3519, %v3519
  %v3584 = vpack.c.bf16 %v3520, %v3520
  %v3585 = vpack.c.bf16 %v3521, %v3521
  %v3586 = vpack.c.bf16 %v3522, %v3522
  %v3587 = vpack.c.bf16 %v3523, %v3523
  %v3588 = vpack.c.bf16 %v3524, %v3524
  %v3589 = vpack.c.bf16 %v3525, %v3525
  %v3590 = vpack.c.bf16 %v3526, %v3526
  %v3591 = vpack.c.bf16 %v3527, %v3527
  %v3592 = vpack.c.bf16 %v3528, %v3528
  %v3593 = vpack.c.bf16 %v3529, %v3529
  %v3594 = vpack.c.bf16 %v3530, %v3530
  %v3595 = vpack.c.bf16 %v3531, %v3531
  %v3596 = vpack.c.bf16 %v3532, %v3532
  %v3597 = vpack.c.bf16 %v3533, %v3533
  %v3598 = vpack.c.bf16 %v3534, %v3534
  %v3599 = vpack.c.bf16 %v3535, %v3535
  %v3600 = vpack.c.bf16 %v3536, %v3536
  %v3601 = vpack.c.bf16 %v3537, %v3537
  %v3602 = vpack.c.bf16 %v3538, %v3538
  %v3603 = vpack.c.bf16 %v3539, %v3539
  %3604 = vst [vmem:[%s3] sm:$0xf] %v3540
  %3605 = vst [vmem:[%s3 + $0x4] sm:$0xf] %v3541
  %3606 = vst [vmem:[%s3 + $0x8] sm:$0xf] %v3542
  %3607 = vst [vmem:[%s3 + $0xc] sm:$0xf] %v3543
  %3608 = vst [vmem:[%s3 + $0x10] sm:$0xf] %v3544
  %3609 = vst [vmem:[%s3 + $0x14] sm:$0xf] %v3545
  %3610 = vst [vmem:[%s3 + $0x18] sm:$0xf] %v3546
  %3611 = vst [vmem:[%s3 + $0x1c] sm:$0xf] %v3547
  %3612 = vst [vmem:[%s3 + $0x20] sm:$0xf] %v3548
  %3613 = vst [vmem:[%s3 + $0x24] sm:$0xf] %v3549
  %3614 = vst [vmem:[%s3 + $0x28] sm:$0xf] %v3550
  %3615 = vst [vmem:[%s3 + $0x2c] sm:$0xf] %v3551
  %3616 = vst [vmem:[%s3 + $0x30] sm:$0xf] %v3552
  %3617 = vst [vmem:[%s3 + $0x34] sm:$0xf] %v3553
  %3618 = vst [vmem:[%s3 + $0x38] sm:$0xf] %v3554
  %3619 = vst [vmem:[%s3 + $0x3c] sm:$0xf] %v3555
  %3620 = vst [vmem:[%s3 + $0x40] sm:$0xf] %v3556
  %3621 = vst [vmem:[%s3 + $0x44] sm:$0xf] %v3557
  %3622 = vst [vmem:[%s3 + $0x48] sm:$0xf] %v3558
  %3623 = vst [vmem:[%s3 + $0x4c] sm:$0xf] %v3559
  %3624 = vst [vmem:[%s3 + $0x50] sm:$0xf] %v3560
  %3625 = vst [vmem:[%s3 + $0x54] sm:$0xf] %v3561
  %3626 = vst [vmem:[%s3 + $0x58] sm:$0xf] %v3562
  %3627 = vst [vmem:[%s3 + $0x5c] sm:$0xf] %v3563
  %3628 = vst [vmem:[%s3 + $0x60] sm:$0xf] %v3564
  %3629 = vst [vmem:[%s3 + $0x64] sm:$0xf] %v3565
  %3630 = vst [vmem:[%s3 + $0x68] sm:$0xf] %v3566
  %3631 = vst [vmem:[%s3 + $0x6c] sm:$0xf] %v3567
  %3632 = vst [vmem:[%s3 + $0x70] sm:$0xf] %v3568
  %3633 = vst [vmem:[%s3 + $0x74] sm:$0xf] %v3569
  %3634 = vst [vmem:[%s3 + $0x78] sm:$0xf] %v3570
  %3635 = vst [vmem:[%s3 + $0x7c] sm:$0xf] %v3571
  %3636 = vst [vmem:[%s3 + $0x80] sm:$0xf] %v3572
  %3637 = vst [vmem:[%s3 + $0x84] sm:$0xf] %v3573
  %3638 = vst [vmem:[%s3 + $0x88] sm:$0xf] %v3574
  %3639 = vst [vmem:[%s3 + $0x8c] sm:$0xf] %v3575
  %3640 = vst [vmem:[%s3 + $0x90] sm:$0xf] %v3576
  %3641 = vst [vmem:[%s3 + $0x94] sm:$0xf] %v3577
  %3642 = vst [vmem:[%s3 + $0x98] sm:$0xf] %v3578
  %3643 = vst [vmem:[%s3 + $0x9c] sm:$0xf] %v3579
  %3644 = vst [vmem:[%s3 + $0xa0] sm:$0xf] %v3580
  %3645 = vst [vmem:[%s3 + $0xa4] sm:$0xf] %v3581
  %3646 = vst [vmem:[%s3 + $0xa8] sm:$0xf] %v3582
  %3647 = vst [vmem:[%s3 + $0xac] sm:$0xf] %v3583
  %3648 = vst [vmem:[%s3 + $0xb0] sm:$0xf] %v3584
  %3649 = vst [vmem:[%s3 + $0xb4] sm:$0xf] %v3585
  %3650 = vst [vmem:[%s3 + $0xb8] sm:$0xf] %v3586
  %3651 = vst [vmem:[%s3 + $0xbc] sm:$0xf] %v3587
  %3652 = vst [vmem:[%s3 + $0xc0] sm:$0xf] %v3588
  %3653 = vst [vmem:[%s3 + $0xc4] sm:$0xf] %v3589
  %3654 = vst [vmem:[%s3 + $0xc8] sm:$0xf] %v3590
  %3655 = vst [vmem:[%s3 + $0xcc] sm:$0xf] %v3591
  %3656 = vst [vmem:[%s3 + $0xd0] sm:$0xf] %v3592
  %3657 = vst [vmem:[%s3 + $0xd4] sm:$0xf] %v3593
  %3658 = vst [vmem:[%s3 + $0xd8] sm:$0xf] %v3594
  %3659 = vst [vmem:[%s3 + $0xdc] sm:$0xf] %v3595
  %3660 = vst [vmem:[%s3 + $0xe0] sm:$0xf] %v3596
  %3661 = vst [vmem:[%s3 + $0xe4] sm:$0xf] %v3597
  %3662 = vst [vmem:[%s3 + $0xe8] sm:$0xf] %v3598
  %3663 = vst [vmem:[%s3 + $0xec] sm:$0xf] %v3599
  %3664 = vst [vmem:[%s3 + $0xf0] sm:$0xf] %v3600
  %3665 = vst [vmem:[%s3 + $0xf4] sm:$0xf] %v3601
  %3666 = vst [vmem:[%s3 + $0xf8] sm:$0xf] %v3602
  %3667 = vst [vmem:[%s3 + $0xfc] sm:$0xf] %v3603
  // Predicated region
  $region14: #{deeplabv3plus_forward.22} parent=0 // pred_check
    _
  $region15: #{deeplabv3plus_forward.22} parent=0 // pred_check_branch
    %3669 = sbr.rel (0) target = $region17
  $region16: #{deeplabv3plus_forward.22} parent=0 // pred_region
    _
  $region17: #{deeplabv3plus_forward.22} parent=0 // pred_fallthru
    _
  // Predicated region
  $region18: #{deeplabv3plus_forward.22} parent=0 // pred_check
    _
  $region19: #{deeplabv3plus_forward.22} parent=0 // pred_check_branch
    %3671 = sbr.rel (0) target = $region21
  $region20: #{deeplabv3plus_forward.22} parent=0 // pred_region
    _
  $region21: #{deeplabv3plus_forward.22} parent=0 // pred_fallthru
    _

// kernel: deeplabv3plus_forward.23
$region0: #{deeplabv3plus_forward.23}
  #allocation0 [shape = 'u32[]', space=smem, size = 0x4, offset = 0x4, fixed_abs, tag = 'smem constant byte address 0x4 - core index']
  #allocation1 [shape = 'u32[72,128]{1,0:T(1,128)}', space=vmem, size = 0x9000, scoped, tag = 'internal scratch']
  %s0 = inlined_call_operand.vmem [shape: bf16[512,576], index: 0, kind: input, shape index: {}]
  %s1 = inlined_call_operand.vmem [shape: bf16[576,128], index: 1, kind: input, shape index: {}]
  %s2 = inlined_call_operand.vmem [shape: f32[1,128], index: 2, kind: input, shape index: {}]
  %s3 = inlined_call_operand.vmem [shape: bf16[512,128], index: 3, kind: output, shape index: {}]
  %s4 = sld [smem:[#allocation0]]
  $region22: #{deeplabv3plus_forward.23} parent=0
    _
  %s6 = ssub.s32 1, %s4
  %s7 = scalar_select 0, %s6, %s4
  // Predicated region
  $region2: #{deeplabv3plus_forward.23} parent=0 // pred_check
    _
  $region3: #{deeplabv3plus_forward.23} parent=0 // pred_check_branch
    %9 = sbr.rel (0) target = $region5
  $region4: #{deeplabv3plus_forward.23} parent=0 // pred_region
    _
  $region5: #{deeplabv3plus_forward.23} parent=0 // pred_fallthru
    _
  // Predicated region
  $region6: #{deeplabv3plus_forward.23} parent=0 // pred_check
    _
  $region7: #{deeplabv3plus_forward.23} parent=0 // pred_check_branch
    %11 = sbr.rel (0) target = $region9
  $region8: #{deeplabv3plus_forward.23} parent=0 // pred_region
    _
  $region9: #{deeplabv3plus_forward.23} parent=0 // pred_fallthru
    _
  // Predicated region
  $region10: #{deeplabv3plus_forward.23} parent=0 // pred_check
    _
  $region11: #{deeplabv3plus_forward.23} parent=0 // pred_check_branch
    %13 = sbr.rel (0) target = $region13
  $region12: #{deeplabv3plus_forward.23} parent=0 // pred_region
    _
  $region13: #{deeplabv3plus_forward.23} parent=0 // pred_fallthru
    _
  %v15 = vld [vmem:[%s0] sm:$0xff]
  %v16 = vld [vmem:[%s0 + $0x8] sm:$0xff]
  %v17 = vld [vmem:[%s0 + $0x10] sm:$0xf]
  %v18 = vld [vmem:[%s0 + $0x14] sm:$0xff]
  %v19 = vld [vmem:[%s0 + $0x1c] sm:$0xff]
  %v20 = vld [vmem:[%s0 + $0x24] sm:$0xf]
  %v21 = vld [vmem:[%s0 + $0x28] sm:$0xff]
  %v22 = vld [vmem:[%s0 + $0x30] sm:$0xff]
  %v23 = vld [vmem:[%s0 + $0x38] sm:$0xf]
  %v24 = vld [vmem:[%s0 + $0x3c] sm:$0xff]
  %v25 = vld [vmem:[%s0 + $0x44] sm:$0xff]
  %v26 = vld [vmem:[%s0 + $0x4c] sm:$0xf]
  %v27 = vld [vmem:[%s0 + $0x50] sm:$0xff]
  %v28 = vld [vmem:[%s0 + $0x58] sm:$0xff]
  %v29 = vld [vmem:[%s0 + $0x60] sm:$0xf]
  %v30 = vld [vmem:[%s0 + $0x64] sm:$0xff]
  %v31 = vld [vmem:[%s0 + $0x6c] sm:$0xff]
  %v32 = vld [vmem:[%s0 + $0x74] sm:$0xf]
  %v33 = vld [vmem:[%s0 + $0x78] sm:$0xff]
  %v34 = vld [vmem:[%s0 + $0x80] sm:$0xff]
  %v35 = vld [vmem:[%s0 + $0x88] sm:$0xf]
  %v36 = vld [vmem:[%s0 + $0x8c] sm:$0xff]
  %v37 = vld [vmem:[%s0 + $0x94] sm:$0xff]
  %v38 = vld [vmem:[%s0 + $0x9c] sm:$0xf]
  %v39 = vld [vmem:[%s0 + $0xa0] sm:$0xff]
  %v40 = vld [vmem:[%s0 + $0xa8] sm:$0xff]
  %v41 = vld [vmem:[%s0 + $0xb0] sm:$0xf]
  %v42 = vld [vmem:[%s0 + $0xb4] sm:$0xff]
  %v43 = vld [vmem:[%s0 + $0xbc] sm:$0xff]
  %v44 = vld [vmem:[%s0 + $0xc4] sm:$0xf]
  %v45 = vld [vmem:[%s0 + $0xc8] sm:$0xff]
  %v46 = vld [vmem:[%s0 + $0xd0] sm:$0xff]
  %v47 = vld [vmem:[%s0 + $0xd8] sm:$0xf]
  %v48 = vld [vmem:[%s0 + $0xdc] sm:$0xff]
  %v49 = vld [vmem:[%s0 + $0xe4] sm:$0xff]
  %v50 = vld [vmem:[%s0 + $0xec] sm:$0xf]
  %v51 = vld [vmem:[%s0 + $0xf0] sm:$0xff]
  %v52 = vld [vmem:[%s0 + $0xf8] sm:$0xff]
  %v53 = vld [vmem:[%s0 + $0x100] sm:$0xf]
  %v54 = vld [vmem:[%s0 + $0x104] sm:$0xff]
  %v55 = vld [vmem:[%s0 + $0x10c] sm:$0xff]
  %v56 = vld [vmem:[%s0 + $0x114] sm:$0xf]
  %v57 = vld [vmem:[%s0 + $0x118] sm:$0xff]
  %v58 = vld [vmem:[%s0 + $0x120] sm:$0xff]
  %v59 = vld [vmem:[%s0 + $0x128] sm:$0xf]
  %v60 = vld [vmem:[%s0 + $0x12c] sm:$0xff]
  %v61 = vld [vmem:[%s0 + $0x134] sm:$0xff]
  %v62 = vld [vmem:[%s0 + $0x13c] sm:$0xf]
  %v63 = vld [vmem:[%s0 + $0x140] sm:$0xff]
  %v64 = vld [vmem:[%s0 + $0x148] sm:$0xff]
  %v65 = vld [vmem:[%s0 + $0x150] sm:$0xf]
  %v66 = vld [vmem:[%s0 + $0x154] sm:$0xff]
  %v67 = vld [vmem:[%s0 + $0x15c] sm:$0xff]
  %v68 = vld [vmem:[%s0 + $0x164] sm:$0xf]
  %v69 = vld [vmem:[%s0 + $0x168] sm:$0xff]
  %v70 = vld [vmem:[%s0 + $0x170] sm:$0xff]
  %v71 = vld [vmem:[%s0 + $0x178] sm:$0xf]
  %v72 = vld [vmem:[%s0 + $0x17c] sm:$0xff]
  %v73 = vld [vmem:[%s0 + $0x184] sm:$0xff]
  %v74 = vld [vmem:[%s0 + $0x18c] sm:$0xf]
  %v75 = vld [vmem:[%s0 + $0x190] sm:$0xff]
  %v76 = vld [vmem:[%s0 + $0x198] sm:$0xff]
  %v77 = vld [vmem:[%s0 + $0x1a0] sm:$0xf]
  %v78 = vld [vmem:[%s0 + $0x1a4] sm:$0xff]
  %v79 = vld [vmem:[%s0 + $0x1ac] sm:$0xff]
  %v80 = vld [vmem:[%s0 + $0x1b4] sm:$0xf]
  %v81 = vld [vmem:[%s0 + $0x1b8] sm:$0xff]
  %v82 = vld [vmem:[%s0 + $0x1c0] sm:$0xff]
  %v83 = vld [vmem:[%s0 + $0x1c8] sm:$0xf]
  %v84 = vld [vmem:[%s0 + $0x1cc] sm:$0xff]
  %v85 = vld [vmem:[%s0 + $0x1d4] sm:$0xff]
  %v86 = vld [vmem:[%s0 + $0x1dc] sm:$0xf]
  %v87 = vld [vmem:[%s0 + $0x1e0] sm:$0xff]
  %v88 = vld [vmem:[%s0 + $0x1e8] sm:$0xff]
  %v89 = vld [vmem:[%s0 + $0x1f0] sm:$0xf]
  %v90 = vld [vmem:[%s0 + $0x1f4] sm:$0xff]
  %v91 = vld [vmem:[%s0 + $0x1fc] sm:$0xff]
  %v92 = vld [vmem:[%s0 + $0x204] sm:$0xf]
  %v93 = vld [vmem:[%s0 + $0x208] sm:$0xff]
  %v94 = vld [vmem:[%s0 + $0x210] sm:$0xff]
  %v95 = vld [vmem:[%s0 + $0x218] sm:$0xf]
  %v96 = vld [vmem:[%s0 + $0x21c] sm:$0xff]
  %v97 = vld [vmem:[%s0 + $0x224] sm:$0xff]
  %v98 = vld [vmem:[%s0 + $0x22c] sm:$0xf]
  %v99 = vld [vmem:[%s0 + $0x230] sm:$0xff]
  %v100 = vld [vmem:[%s0 + $0x238] sm:$0xff]
  %v101 = vld [vmem:[%s0 + $0x240] sm:$0xf]
  %v102 = vld [vmem:[%s0 + $0x244] sm:$0xff]
  %v103 = vld [vmem:[%s0 + $0x24c] sm:$0xff]
  %v104 = vld [vmem:[%s0 + $0x254] sm:$0xf]
  %v105 = vld [vmem:[%s0 + $0x258] sm:$0xff]
  %v106 = vld [vmem:[%s0 + $0x260] sm:$0xff]
  %v107 = vld [vmem:[%s0 + $0x268] sm:$0xf]
  %v108 = vld [vmem:[%s0 + $0x26c] sm:$0xff]
  %v109 = vld [vmem:[%s0 + $0x274] sm:$0xff]
  %v110 = vld [vmem:[%s0 + $0x27c] sm:$0xf]
  %v111 = vld [vmem:[%s0 + $0x280] sm:$0xff]
  %v112 = vld [vmem:[%s0 + $0x288] sm:$0xff]
  %v113 = vld [vmem:[%s0 + $0x290] sm:$0xf]
  %v114 = vld [vmem:[%s0 + $0x294] sm:$0xff]
  %v115 = vld [vmem:[%s0 + $0x29c] sm:$0xff]
  %v116 = vld [vmem:[%s0 + $0x2a4] sm:$0xf]
  %v117 = vld [vmem:[%s0 + $0x2a8] sm:$0xff]
  %v118 = vld [vmem:[%s0 + $0x2b0] sm:$0xff]
  %v119 = vld [vmem:[%s0 + $0x2b8] sm:$0xf]
  %v120 = vld [vmem:[%s0 + $0x2bc] sm:$0xff]
  %v121 = vld [vmem:[%s0 + $0x2c4] sm:$0xff]
  %v122 = vld [vmem:[%s0 + $0x2cc] sm:$0xf]
  %v123 = vld [vmem:[%s0 + $0x2d0] sm:$0xff]
  %v124 = vld [vmem:[%s0 + $0x2d8] sm:$0xff]
  %v125 = vld [vmem:[%s0 + $0x2e0] sm:$0xf]
  %v126 = vld [vmem:[%s0 + $0x2e4] sm:$0xff]
  %v127 = vld [vmem:[%s0 + $0x2ec] sm:$0xff]
  %v128 = vld [vmem:[%s0 + $0x2f4] sm:$0xf]
  %v129 = vld [vmem:[%s0 + $0x2f8] sm:$0xff]
  %v130 = vld [vmem:[%s0 + $0x300] sm:$0xff]
  %v131 = vld [vmem:[%s0 + $0x308] sm:$0xf]
  %v132 = vld [vmem:[%s0 + $0x30c] sm:$0xff]
  %v133 = vld [vmem:[%s0 + $0x314] sm:$0xff]
  %v134 = vld [vmem:[%s0 + $0x31c] sm:$0xf]
  %v135 = vld [vmem:[%s0 + $0x320] sm:$0xff]
  %v136 = vld [vmem:[%s0 + $0x328] sm:$0xff]
  %v137 = vld [vmem:[%s0 + $0x330] sm:$0xf]
  %v138 = vld [vmem:[%s0 + $0x334] sm:$0xff]
  %v139 = vld [vmem:[%s0 + $0x33c] sm:$0xff]
  %v140 = vld [vmem:[%s0 + $0x344] sm:$0xf]
  %v141 = vld [vmem:[%s0 + $0x348] sm:$0xff]
  %v142 = vld [vmem:[%s0 + $0x350] sm:$0xff]
  %v143 = vld [vmem:[%s0 + $0x358] sm:$0xf]
  %v144 = vld [vmem:[%s0 + $0x35c] sm:$0xff]
  %v145 = vld [vmem:[%s0 + $0x364] sm:$0xff]
  %v146 = vld [vmem:[%s0 + $0x36c] sm:$0xf]
  %v147 = vld [vmem:[%s0 + $0x370] sm:$0xff]
  %v148 = vld [vmem:[%s0 + $0x378] sm:$0xff]
  %v149 = vld [vmem:[%s0 + $0x380] sm:$0xf]
  %v150 = vld [vmem:[%s0 + $0x384] sm:$0xff]
  %v151 = vld [vmem:[%s0 + $0x38c] sm:$0xff]
  %v152 = vld [vmem:[%s0 + $0x394] sm:$0xf]
  %v153 = vld [vmem:[%s0 + $0x398] sm:$0xff]
  %v154 = vld [vmem:[%s0 + $0x3a0] sm:$0xff]
  %v155 = vld [vmem:[%s0 + $0x3a8] sm:$0xf]
  %v156 = vld [vmem:[%s0 + $0x3ac] sm:$0xff]
  %v157 = vld [vmem:[%s0 + $0x3b4] sm:$0xff]
  %v158 = vld [vmem:[%s0 + $0x3bc] sm:$0xf]
  %v159 = vld [vmem:[%s0 + $0x3c0] sm:$0xff]
  %v160 = vld [vmem:[%s0 + $0x3c8] sm:$0xff]
  %v161 = vld [vmem:[%s0 + $0x3d0] sm:$0xf]
  %v162 = vld [vmem:[%s0 + $0x3d4] sm:$0xff]
  %v163 = vld [vmem:[%s0 + $0x3dc] sm:$0xff]
  %v164 = vld [vmem:[%s0 + $0x3e4] sm:$0xf]
  %v165 = vld [vmem:[%s0 + $0x3e8] sm:$0xff]
  %v166 = vld [vmem:[%s0 + $0x3f0] sm:$0xff]
  %v167 = vld [vmem:[%s0 + $0x3f8] sm:$0xf]
  %v168 = vld [vmem:[%s0 + $0x3fc] sm:$0xff]
  %v169 = vld [vmem:[%s0 + $0x404] sm:$0xff]
  %v170 = vld [vmem:[%s0 + $0x40c] sm:$0xf]
  %v171 = vld [vmem:[%s0 + $0x410] sm:$0xff]
  %v172 = vld [vmem:[%s0 + $0x418] sm:$0xff]
  %v173 = vld [vmem:[%s0 + $0x420] sm:$0xf]
  %v174 = vld [vmem:[%s0 + $0x424] sm:$0xff]
  %v175 = vld [vmem:[%s0 + $0x42c] sm:$0xff]
  %v176 = vld [vmem:[%s0 + $0x434] sm:$0xf]
  %v177 = vld [vmem:[%s0 + $0x438] sm:$0xff]
  %v178 = vld [vmem:[%s0 + $0x440] sm:$0xff]
  %v179 = vld [vmem:[%s0 + $0x448] sm:$0xf]
  %v180 = vld [vmem:[%s0 + $0x44c] sm:$0xff]
  %v181 = vld [vmem:[%s0 + $0x454] sm:$0xff]
  %v182 = vld [vmem:[%s0 + $0x45c] sm:$0xf]
  %v183 = vld [vmem:[%s0 + $0x460] sm:$0xff]
  %v184 = vld [vmem:[%s0 + $0x468] sm:$0xff]
  %v185 = vld [vmem:[%s0 + $0x470] sm:$0xf]
  %v186 = vld [vmem:[%s0 + $0x474] sm:$0xff]
  %v187 = vld [vmem:[%s0 + $0x47c] sm:$0xff]
  %v188 = vld [vmem:[%s0 + $0x484] sm:$0xf]
  %v189 = vld [vmem:[%s0 + $0x488] sm:$0xff]
  %v190 = vld [vmem:[%s0 + $0x490] sm:$0xff]
  %v191 = vld [vmem:[%s0 + $0x498] sm:$0xf]
  %v192 = vld [vmem:[%s0 + $0x49c] sm:$0xff]
  %v193 = vld [vmem:[%s0 + $0x4a4] sm:$0xff]
  %v194 = vld [vmem:[%s0 + $0x4ac] sm:$0xf]
  %v195 = vld [vmem:[%s0 + $0x4b0] sm:$0xff]
  %v196 = vld [vmem:[%s0 + $0x4b8] sm:$0xff]
  %v197 = vld [vmem:[%s0 + $0x4c0] sm:$0xf]
  %v198 = vld [vmem:[%s0 + $0x4c4] sm:$0xff]
  %v199 = vld [vmem:[%s0 + $0x4cc] sm:$0xff]
  %v200 = vld [vmem:[%s0 + $0x4d4] sm:$0xf]
  %v201 = vld [vmem:[%s0 + $0x4d8] sm:$0xff]
  %v202 = vld [vmem:[%s0 + $0x4e0] sm:$0xff]
  %v203 = vld [vmem:[%s0 + $0x4e8] sm:$0xf]
  %v204 = vld [vmem:[%s0 + $0x4ec] sm:$0xff]
  %v205 = vld [vmem:[%s0 + $0x4f4] sm:$0xff]
  %v206 = vld [vmem:[%s0 + $0x4fc] sm:$0xf]
  %v207 = vld [vmem:[%s1] sm:$0xf]
  %v208 = vld [vmem:[%s1 + $0x4] sm:$0xf]
  %v209 = vld [vmem:[%s1 + $0x8] sm:$0xf]
  %v210 = vld [vmem:[%s1 + $0xc] sm:$0xf]
  %v211 = vld [vmem:[%s1 + $0x10] sm:$0xf]
  %v212 = vld [vmem:[%s1 + $0x14] sm:$0xf]
  %v213 = vld [vmem:[%s1 + $0x18] sm:$0xf]
  %v214 = vld [vmem:[%s1 + $0x1c] sm:$0xf]
  %v215 = vld [vmem:[%s1 + $0x20] sm:$0xf]
  %v216 = vld [vmem:[%s1 + $0x24] sm:$0xf]
  %v217 = vld [vmem:[%s1 + $0x28] sm:$0xf]
  %v218 = vld [vmem:[%s1 + $0x2c] sm:$0xf]
  %v219 = vld [vmem:[%s1 + $0x30] sm:$0xf]
  %v220 = vld [vmem:[%s1 + $0x34] sm:$0xf]
  %v221 = vld [vmem:[%s1 + $0x38] sm:$0xf]
  %v222 = vld [vmem:[%s1 + $0x3c] sm:$0xf]
  %v223 = vld [vmem:[%s1 + $0x40] sm:$0xf]
  %v224 = vld [vmem:[%s1 + $0x44] sm:$0xf]
  %v225 = vld [vmem:[%s1 + $0x48] sm:$0xf]
  %v226 = vld [vmem:[%s1 + $0x4c] sm:$0xf]
  %v227 = vld [vmem:[%s1 + $0x50] sm:$0xf]
  %v228 = vld [vmem:[%s1 + $0x54] sm:$0xf]
  %v229 = vld [vmem:[%s1 + $0x58] sm:$0xf]
  %v230 = vld [vmem:[%s1 + $0x5c] sm:$0xf]
  %v231 = vld [vmem:[%s1 + $0x60] sm:$0xf]
  %v232 = vld [vmem:[%s1 + $0x64] sm:$0xf]
  %v233 = vld [vmem:[%s1 + $0x68] sm:$0xf]
  %v234 = vld [vmem:[%s1 + $0x6c] sm:$0xf]
  %v235 = vld [vmem:[%s1 + $0x70] sm:$0xf]
  %v236 = vld [vmem:[%s1 + $0x74] sm:$0xf]
  %v237 = vld [vmem:[%s1 + $0x78] sm:$0xf]
  %v238 = vld [vmem:[%s1 + $0x7c] sm:$0xf]
  %v239 = vld [vmem:[%s1 + $0x80] sm:$0xf]
  %v240 = vld [vmem:[%s1 + $0x84] sm:$0xf]
  %v241 = vld [vmem:[%s1 + $0x88] sm:$0xf]
  %v242 = vld [vmem:[%s1 + $0x8c] sm:$0xf]
  %v243 = vld [vmem:[%s1 + $0x90] sm:$0xf]
  %v244 = vld [vmem:[%s1 + $0x94] sm:$0xf]
  %v245 = vld [vmem:[%s1 + $0x98] sm:$0xf]
  %v246 = vld [vmem:[%s1 + $0x9c] sm:$0xf]
  %v247 = vld [vmem:[%s1 + $0xa0] sm:$0xf]
  %v248 = vld [vmem:[%s1 + $0xa4] sm:$0xf]
  %v249 = vld [vmem:[%s1 + $0xa8] sm:$0xf]
  %v250 = vld [vmem:[%s1 + $0xac] sm:$0xf]
  %v251 = vld [vmem:[%s1 + $0xb0] sm:$0xf]
  %v252 = vld [vmem:[%s1 + $0xb4] sm:$0xf]
  %v253 = vld [vmem:[%s1 + $0xb8] sm:$0xf]
  %v254 = vld [vmem:[%s1 + $0xbc] sm:$0xf]
  %v255 = vld [vmem:[%s1 + $0xc0] sm:$0xf]
  %v256 = vld [vmem:[%s1 + $0xc4] sm:$0xf]
  %v257 = vld [vmem:[%s1 + $0xc8] sm:$0xf]
  %v258 = vld [vmem:[%s1 + $0xcc] sm:$0xf]
  %v259 = vld [vmem:[%s1 + $0xd0] sm:$0xf]
  %v260 = vld [vmem:[%s1 + $0xd4] sm:$0xf]
  %v261 = vld [vmem:[%s1 + $0xd8] sm:$0xf]
  %v262 = vld [vmem:[%s1 + $0xdc] sm:$0xf]
  %v263 = vld [vmem:[%s1 + $0xe0] sm:$0xf]
  %v264 = vld [vmem:[%s1 + $0xe4] sm:$0xf]
  %v265 = vld [vmem:[%s1 + $0xe8] sm:$0xf]
  %v266 = vld [vmem:[%s1 + $0xec] sm:$0xf]
  %v267 = vld [vmem:[%s1 + $0xf0] sm:$0xf]
  %v268 = vld [vmem:[%s1 + $0xf4] sm:$0xf]
  %v269 = vld [vmem:[%s1 + $0xf8] sm:$0xf]
  %v270 = vld [vmem:[%s1 + $0xfc] sm:$0xf]
  %v271 = vld [vmem:[%s1 + $0x100] sm:$0xf]
  %v272 = vld [vmem:[%s1 + $0x104] sm:$0xf]
  %v273 = vld [vmem:[%s1 + $0x108] sm:$0xf]
  %v274 = vld [vmem:[%s1 + $0x10c] sm:$0xf]
  %v275 = vld [vmem:[%s1 + $0x110] sm:$0xf]
  %v276 = vld [vmem:[%s1 + $0x114] sm:$0xf]
  %v277 = vld [vmem:[%s1 + $0x118] sm:$0xf]
  %v278 = vld [vmem:[%s1 + $0x11c] sm:$0xf]
  %v279 = vld [vmem:[%s2] sm:$0x1]
  %v281 = vperm.slane %v279, 0
  %v475 = vunpack.c.l.b16 %v15
  %v476 = vunpack.c.h.b16 %v15
  %v477 = vunpack.c.l.b16 %v16
  %v478 = vunpack.c.h.b16 %v16
  %v479 = vunpack.c.l.b16 %v17
  %v480 = vunpack.c.l.b16 %v18
  %v481 = vunpack.c.h.b16 %v18
  %v482 = vunpack.c.l.b16 %v19
  %v483 = vunpack.c.h.b16 %v19
  %v484 = vunpack.c.l.b16 %v20
  %v485 = vunpack.c.l.b16 %v21
  %v486 = vunpack.c.h.b16 %v21
  %v487 = vunpack.c.l.b16 %v22
  %v488 = vunpack.c.h.b16 %v22
  %v489 = vunpack.c.l.b16 %v23
  %v490 = vunpack.c.l.b16 %v24
  %v491 = vunpack.c.h.b16 %v24
  %v492 = vunpack.c.l.b16 %v25
  %v493 = vunpack.c.h.b16 %v25
  %v494 = vunpack.c.l.b16 %v26
  %v495 = vunpack.c.l.b16 %v27
  %v496 = vunpack.c.h.b16 %v27
  %v497 = vunpack.c.l.b16 %v28
  %v498 = vunpack.c.h.b16 %v28
  %v499 = vunpack.c.l.b16 %v29
  %v500 = vunpack.c.l.b16 %v30
  %v501 = vunpack.c.h.b16 %v30
  %v502 = vunpack.c.l.b16 %v31
  %v503 = vunpack.c.h.b16 %v31
  %v504 = vunpack.c.l.b16 %v32
  %v505 = vunpack.c.l.b16 %v33
  %v506 = vunpack.c.h.b16 %v33
  %v507 = vunpack.c.l.b16 %v34
  %v508 = vunpack.c.h.b16 %v34
  %v509 = vunpack.c.l.b16 %v35
  %v510 = vunpack.c.l.b16 %v36
  %v511 = vunpack.c.h.b16 %v36
  %v512 = vunpack.c.l.b16 %v37
  %v513 = vunpack.c.h.b16 %v37
  %v514 = vunpack.c.l.b16 %v38
  %v515 = vunpack.c.l.b16 %v39
  %v516 = vunpack.c.h.b16 %v39
  %v517 = vunpack.c.l.b16 %v40
  %v518 = vunpack.c.h.b16 %v40
  %v519 = vunpack.c.l.b16 %v41
  %v520 = vunpack.c.l.b16 %v42
  %v521 = vunpack.c.h.b16 %v42
  %v522 = vunpack.c.l.b16 %v43
  %v523 = vunpack.c.h.b16 %v43
  %v524 = vunpack.c.l.b16 %v44
  %v525 = vunpack.c.l.b16 %v45
  %v526 = vunpack.c.h.b16 %v45
  %v527 = vunpack.c.l.b16 %v46
  %v528 = vunpack.c.h.b16 %v46
  %v529 = vunpack.c.l.b16 %v47
  %v530 = vunpack.c.l.b16 %v48
  %v531 = vunpack.c.h.b16 %v48
  %v532 = vunpack.c.l.b16 %v49
  %v533 = vunpack.c.h.b16 %v49
  %v534 = vunpack.c.l.b16 %v50
  %v535 = vunpack.c.l.b16 %v51
  %v536 = vunpack.c.h.b16 %v51
  %v537 = vunpack.c.l.b16 %v52
  %v538 = vunpack.c.h.b16 %v52
  %v539 = vunpack.c.l.b16 %v53
  %v540 = vunpack.c.l.b16 %v54
  %v541 = vunpack.c.h.b16 %v54
  %v542 = vunpack.c.l.b16 %v55
  %v543 = vunpack.c.h.b16 %v55
  %v544 = vunpack.c.l.b16 %v56
  %v545 = vunpack.c.l.b16 %v57
  %v546 = vunpack.c.h.b16 %v57
  %v547 = vunpack.c.l.b16 %v58
  %v548 = vunpack.c.h.b16 %v58
  %v549 = vunpack.c.l.b16 %v59
  %v550 = vunpack.c.l.b16 %v60
  %v551 = vunpack.c.h.b16 %v60
  %v552 = vunpack.c.l.b16 %v61
  %v553 = vunpack.c.h.b16 %v61
  %v554 = vunpack.c.l.b16 %v62
  %v555 = vunpack.c.l.b16 %v63
  %v556 = vunpack.c.h.b16 %v63
  %v557 = vunpack.c.l.b16 %v64
  %v558 = vunpack.c.h.b16 %v64
  %v559 = vunpack.c.l.b16 %v65
  %v560 = vunpack.c.l.b16 %v66
  %v561 = vunpack.c.h.b16 %v66
  %v562 = vunpack.c.l.b16 %v67
  %v563 = vunpack.c.h.b16 %v67
  %v564 = vunpack.c.l.b16 %v68
  %v565 = vunpack.c.l.b16 %v69
  %v566 = vunpack.c.h.b16 %v69
  %v567 = vunpack.c.l.b16 %v70
  %v568 = vunpack.c.h.b16 %v70
  %v569 = vunpack.c.l.b16 %v71
  %v570 = vunpack.c.l.b16 %v72
  %v571 = vunpack.c.h.b16 %v72
  %v572 = vunpack.c.l.b16 %v73
  %v573 = vunpack.c.h.b16 %v73
  %v574 = vunpack.c.l.b16 %v74
  %v575 = vunpack.c.l.b16 %v75
  %v576 = vunpack.c.h.b16 %v75
  %v577 = vunpack.c.l.b16 %v76
  %v578 = vunpack.c.h.b16 %v76
  %v579 = vunpack.c.l.b16 %v77
  %v580 = vunpack.c.l.b16 %v78
  %v581 = vunpack.c.h.b16 %v78
  %v582 = vunpack.c.l.b16 %v79
  %v583 = vunpack.c.h.b16 %v79
  %v584 = vunpack.c.l.b16 %v80
  %v585 = vunpack.c.l.b16 %v81
  %v586 = vunpack.c.h.b16 %v81
  %v587 = vunpack.c.l.b16 %v82
  %v588 = vunpack.c.h.b16 %v82
  %v589 = vunpack.c.l.b16 %v83
  %v590 = vunpack.c.l.b16 %v84
  %v591 = vunpack.c.h.b16 %v84
  %v592 = vunpack.c.l.b16 %v85
  %v593 = vunpack.c.h.b16 %v85
  %v594 = vunpack.c.l.b16 %v86
  %v595 = vunpack.c.l.b16 %v87
  %v596 = vunpack.c.h.b16 %v87
  %v597 = vunpack.c.l.b16 %v88
  %v598 = vunpack.c.h.b16 %v88
  %v599 = vunpack.c.l.b16 %v89
  %v600 = vunpack.c.l.b16 %v90
  %v601 = vunpack.c.h.b16 %v90
  %v602 = vunpack.c.l.b16 %v91
  %v603 = vunpack.c.h.b16 %v91
  %v604 = vunpack.c.l.b16 %v92
  %v605 = vunpack.c.l.b16 %v93
  %v606 = vunpack.c.h.b16 %v93
  %v607 = vunpack.c.l.b16 %v94
  %v608 = vunpack.c.h.b16 %v94
  %v609 = vunpack.c.l.b16 %v95
  %v610 = vunpack.c.l.b16 %v96
  %v611 = vunpack.c.h.b16 %v96
  %v612 = vunpack.c.l.b16 %v97
  %v613 = vunpack.c.h.b16 %v97
  %v614 = vunpack.c.l.b16 %v98
  %v615 = vunpack.c.l.b16 %v99
  %v616 = vunpack.c.h.b16 %v99
  %v617 = vunpack.c.l.b16 %v100
  %v618 = vunpack.c.h.b16 %v100
  %v619 = vunpack.c.l.b16 %v101
  %v620 = vunpack.c.l.b16 %v102
  %v621 = vunpack.c.h.b16 %v102
  %v622 = vunpack.c.l.b16 %v103
  %v623 = vunpack.c.h.b16 %v103
  %v624 = vunpack.c.l.b16 %v104
  %v625 = vunpack.c.l.b16 %v105
  %v626 = vunpack.c.h.b16 %v105
  %v627 = vunpack.c.l.b16 %v106
  %v628 = vunpack.c.h.b16 %v106
  %v629 = vunpack.c.l.b16 %v107
  %v630 = vunpack.c.l.b16 %v108
  %v631 = vunpack.c.h.b16 %v108
  %v632 = vunpack.c.l.b16 %v109
  %v633 = vunpack.c.h.b16 %v109
  %v634 = vunpack.c.l.b16 %v110
  %v635 = vunpack.c.l.b16 %v111
  %v636 = vunpack.c.h.b16 %v111
  %v637 = vunpack.c.l.b16 %v112
  %v638 = vunpack.c.h.b16 %v112
  %v639 = vunpack.c.l.b16 %v113
  %v640 = vunpack.c.l.b16 %v114
  %v641 = vunpack.c.h.b16 %v114
  %v642 = vunpack.c.l.b16 %v115
  %v643 = vunpack.c.h.b16 %v115
  %v644 = vunpack.c.l.b16 %v116
  %v645 = vunpack.c.l.b16 %v117
  %v646 = vunpack.c.h.b16 %v117
  %v647 = vunpack.c.l.b16 %v118
  %v648 = vunpack.c.h.b16 %v118
  %v649 = vunpack.c.l.b16 %v119
  %v650 = vunpack.c.l.b16 %v120
  %v651 = vunpack.c.h.b16 %v120
  %v652 = vunpack.c.l.b16 %v121
  %v653 = vunpack.c.h.b16 %v121
  %v654 = vunpack.c.l.b16 %v122
  %v655 = vunpack.c.l.b16 %v123
  %v656 = vunpack.c.h.b16 %v123
  %v657 = vunpack.c.l.b16 %v124
  %v658 = vunpack.c.h.b16 %v124
  %v659 = vunpack.c.l.b16 %v125
  %v660 = vunpack.c.l.b16 %v126
  %v661 = vunpack.c.h.b16 %v126
  %v662 = vunpack.c.l.b16 %v127
  %v663 = vunpack.c.h.b16 %v127
  %v664 = vunpack.c.l.b16 %v128
  %v665 = vunpack.c.l.b16 %v129
  %v666 = vunpack.c.h.b16 %v129
  %v667 = vunpack.c.l.b16 %v130
  %v668 = vunpack.c.h.b16 %v130
  %v669 = vunpack.c.l.b16 %v131
  %v670 = vunpack.c.l.b16 %v132
  %v671 = vunpack.c.h.b16 %v132
  %v672 = vunpack.c.l.b16 %v133
  %v673 = vunpack.c.h.b16 %v133
  %v674 = vunpack.c.l.b16 %v134
  %v675 = vunpack.c.l.b16 %v135
  %v676 = vunpack.c.h.b16 %v135
  %v677 = vunpack.c.l.b16 %v136
  %v678 = vunpack.c.h.b16 %v136
  %v679 = vunpack.c.l.b16 %v137
  %v680 = vunpack.c.l.b16 %v138
  %v681 = vunpack.c.h.b16 %v138
  %v682 = vunpack.c.l.b16 %v139
  %v683 = vunpack.c.h.b16 %v139
  %v684 = vunpack.c.l.b16 %v140
  %v685 = vunpack.c.l.b16 %v141
  %v686 = vunpack.c.h.b16 %v141
  %v687 = vunpack.c.l.b16 %v142
  %v688 = vunpack.c.h.b16 %v142
  %v689 = vunpack.c.l.b16 %v143
  %v690 = vunpack.c.l.b16 %v144
  %v691 = vunpack.c.h.b16 %v144
  %v692 = vunpack.c.l.b16 %v145
  %v693 = vunpack.c.h.b16 %v145
  %v694 = vunpack.c.l.b16 %v146
  %v695 = vunpack.c.l.b16 %v147
  %v696 = vunpack.c.h.b16 %v147
  %v697 = vunpack.c.l.b16 %v148
  %v698 = vunpack.c.h.b16 %v148
  %v699 = vunpack.c.l.b16 %v149
  %v700 = vunpack.c.l.b16 %v150
  %v701 = vunpack.c.h.b16 %v150
  %v702 = vunpack.c.l.b16 %v151
  %v703 = vunpack.c.h.b16 %v151
  %v704 = vunpack.c.l.b16 %v152
  %v705 = vunpack.c.l.b16 %v153
  %v706 = vunpack.c.h.b16 %v153
  %v707 = vunpack.c.l.b16 %v154
  %v708 = vunpack.c.h.b16 %v154
  %v709 = vunpack.c.l.b16 %v155
  %v710 = vunpack.c.l.b16 %v156
  %v711 = vunpack.c.h.b16 %v156
  %v712 = vunpack.c.l.b16 %v157
  %v713 = vunpack.c.h.b16 %v157
  %v714 = vunpack.c.l.b16 %v158
  %v715 = vunpack.c.l.b16 %v159
  %v716 = vunpack.c.h.b16 %v159
  %v717 = vunpack.c.l.b16 %v160
  %v718 = vunpack.c.h.b16 %v160
  %v719 = vunpack.c.l.b16 %v161
  %v720 = vunpack.c.l.b16 %v162
  %v721 = vunpack.c.h.b16 %v162
  %v722 = vunpack.c.l.b16 %v163
  %v723 = vunpack.c.h.b16 %v163
  %v724 = vunpack.c.l.b16 %v164
  %v725 = vunpack.c.l.b16 %v165
  %v726 = vunpack.c.h.b16 %v165
  %v727 = vunpack.c.l.b16 %v166
  %v728 = vunpack.c.h.b16 %v166
  %v729 = vunpack.c.l.b16 %v167
  %v730 = vunpack.c.l.b16 %v168
  %v731 = vunpack.c.h.b16 %v168
  %v732 = vunpack.c.l.b16 %v169
  %v733 = vunpack.c.h.b16 %v169
  %v734 = vunpack.c.l.b16 %v170
  %v735 = vunpack.c.l.b16 %v171
  %v736 = vunpack.c.h.b16 %v171
  %v737 = vunpack.c.l.b16 %v172
  %v738 = vunpack.c.h.b16 %v172
  %v739 = vunpack.c.l.b16 %v173
  %v740 = vunpack.c.l.b16 %v174
  %v741 = vunpack.c.h.b16 %v174
  %v742 = vunpack.c.l.b16 %v175
  %v743 = vunpack.c.h.b16 %v175
  %v744 = vunpack.c.l.b16 %v176
  %v745 = vunpack.c.l.b16 %v177
  %v746 = vunpack.c.h.b16 %v177
  %v747 = vunpack.c.l.b16 %v178
  %v748 = vunpack.c.h.b16 %v178
  %v749 = vunpack.c.l.b16 %v179
  %v750 = vunpack.c.l.b16 %v180
  %v751 = vunpack.c.h.b16 %v180
  %v752 = vunpack.c.l.b16 %v181
  %v753 = vunpack.c.h.b16 %v181
  %v754 = vunpack.c.l.b16 %v182
  %v755 = vunpack.c.l.b16 %v183
  %v756 = vunpack.c.h.b16 %v183
  %v757 = vunpack.c.l.b16 %v184
  %v758 = vunpack.c.h.b16 %v184
  %v759 = vunpack.c.l.b16 %v185
  %v760 = vunpack.c.l.b16 %v186
  %v761 = vunpack.c.h.b16 %v186
  %v762 = vunpack.c.l.b16 %v187
  %v763 = vunpack.c.h.b16 %v187
  %v764 = vunpack.c.l.b16 %v188
  %v765 = vunpack.c.l.b16 %v189
  %v766 = vunpack.c.h.b16 %v189
  %v767 = vunpack.c.l.b16 %v190
  %v768 = vunpack.c.h.b16 %v190
  %v769 = vunpack.c.l.b16 %v191
  %v770 = vunpack.c.l.b16 %v192
  %v771 = vunpack.c.h.b16 %v192
  %v772 = vunpack.c.l.b16 %v193
  %v773 = vunpack.c.h.b16 %v193
  %v774 = vunpack.c.l.b16 %v194
  %v775 = vunpack.c.l.b16 %v195
  %v776 = vunpack.c.h.b16 %v195
  %v777 = vunpack.c.l.b16 %v196
  %v778 = vunpack.c.h.b16 %v196
  %v779 = vunpack.c.l.b16 %v197
  %v780 = vunpack.c.l.b16 %v198
  %v781 = vunpack.c.h.b16 %v198
  %v782 = vunpack.c.l.b16 %v199
  %v783 = vunpack.c.h.b16 %v199
  %v784 = vunpack.c.l.b16 %v200
  %v785 = vunpack.c.l.b16 %v201
  %v786 = vunpack.c.h.b16 %v201
  %v787 = vunpack.c.l.b16 %v202
  %v788 = vunpack.c.h.b16 %v202
  %v789 = vunpack.c.l.b16 %v203
  %v790 = vunpack.c.l.b16 %v204
  %v791 = vunpack.c.h.b16 %v204
  %v792 = vunpack.c.l.b16 %v205
  %v793 = vunpack.c.h.b16 %v205
  %v794 = vunpack.c.l.b16 %v206
  %v795 = vpack.c.b16 %v480, %v475
  %v796 = vpack.c.b16 %v481, %v476
  %v797 = vpack.c.b16 %v482, %v477
  %v798 = vpack.c.b16 %v483, %v478
  %v799 = vpack.c.b16 %v484, %v479
  %v800 = vpack.c.b16 %v490, %v485
  %v801 = vpack.c.b16 %v491, %v486
  %v802 = vpack.c.b16 %v492, %v487
  %v803 = vpack.c.b16 %v493, %v488
  %v804 = vpack.c.b16 %v494, %v489
  %v805 = vpack.c.b16 %v500, %v495
  %v806 = vpack.c.b16 %v501, %v496
  %v807 = vpack.c.b16 %v502, %v497
  %v808 = vpack.c.b16 %v503, %v498
  %v809 = vpack.c.b16 %v504, %v499
  %v810 = vpack.c.b16 %v510, %v505
  %v811 = vpack.c.b16 %v511, %v506
  %v812 = vpack.c.b16 %v512, %v507
  %v813 = vpack.c.b16 %v513, %v508
  %v814 = vpack.c.b16 %v514, %v509
  %v815 = vpack.c.b16 %v520, %v515
  %v816 = vpack.c.b16 %v521, %v516
  %v817 = vpack.c.b16 %v522, %v517
  %v818 = vpack.c.b16 %v523, %v518
  %v819 = vpack.c.b16 %v524, %v519
  %v820 = vpack.c.b16 %v530, %v525
  %v821 = vpack.c.b16 %v531, %v526
  %v822 = vpack.c.b16 %v532, %v527
  %v823 = vpack.c.b16 %v533, %v528
  %v824 = vpack.c.b16 %v534, %v529
  %v825 = vpack.c.b16 %v540, %v535
  %v826 = vpack.c.b16 %v541, %v536
  %v827 = vpack.c.b16 %v542, %v537
  %v828 = vpack.c.b16 %v543, %v538
  %v829 = vpack.c.b16 %v544, %v539
  %v830 = vpack.c.b16 %v550, %v545
  %v831 = vpack.c.b16 %v551, %v546
  %v832 = vpack.c.b16 %v552, %v547
  %v833 = vpack.c.b16 %v553, %v548
  %v834 = vpack.c.b16 %v554, %v549
  %v835 = vpack.c.b16 %v560, %v555
  %v836 = vpack.c.b16 %v561, %v556
  %v837 = vpack.c.b16 %v562, %v557
  %v838 = vpack.c.b16 %v563, %v558
  %v839 = vpack.c.b16 %v564, %v559
  %v840 = vpack.c.b16 %v570, %v565
  %v841 = vpack.c.b16 %v571, %v566
  %v842 = vpack.c.b16 %v572, %v567
  %v843 = vpack.c.b16 %v573, %v568
  %v844 = vpack.c.b16 %v574, %v569
  %v845 = vpack.c.b16 %v580, %v575
  %v846 = vpack.c.b16 %v581, %v576
  %v847 = vpack.c.b16 %v582, %v577
  %v848 = vpack.c.b16 %v583, %v578
  %v849 = vpack.c.b16 %v584, %v579
  %v850 = vpack.c.b16 %v590, %v585
  %v851 = vpack.c.b16 %v591, %v586
  %v852 = vpack.c.b16 %v592, %v587
  %v853 = vpack.c.b16 %v593, %v588
  %v854 = vpack.c.b16 %v594, %v589
  %v855 = vpack.c.b16 %v600, %v595
  %v856 = vpack.c.b16 %v601, %v596
  %v857 = vpack.c.b16 %v602, %v597
  %v858 = vpack.c.b16 %v603, %v598
  %v859 = vpack.c.b16 %v604, %v599
  %v860 = vpack.c.b16 %v610, %v605
  %v861 = vpack.c.b16 %v611, %v606
  %v862 = vpack.c.b16 %v612, %v607
  %v863 = vpack.c.b16 %v613, %v608
  %v864 = vpack.c.b16 %v614, %v609
  %v865 = vpack.c.b16 %v620, %v615
  %v866 = vpack.c.b16 %v621, %v616
  %v867 = vpack.c.b16 %v622, %v617
  %v868 = vpack.c.b16 %v623, %v618
  %v869 = vpack.c.b16 %v624, %v619
  %v870 = vpack.c.b16 %v630, %v625
  %v871 = vpack.c.b16 %v631, %v626
  %v872 = vpack.c.b16 %v632, %v627
  %v873 = vpack.c.b16 %v633, %v628
  %v874 = vpack.c.b16 %v634, %v629
  %v875 = vpack.c.b16 %v640, %v635
  %v876 = vpack.c.b16 %v641, %v636
  %v877 = vpack.c.b16 %v642, %v637
  %v878 = vpack.c.b16 %v643, %v638
  %v879 = vpack.c.b16 %v644, %v639
  %v880 = vpack.c.b16 %v650, %v645
  %v881 = vpack.c.b16 %v651, %v646
  %v882 = vpack.c.b16 %v652, %v647
  %v883 = vpack.c.b16 %v653, %v648
  %v884 = vpack.c.b16 %v654, %v649
  %v885 = vpack.c.b16 %v660, %v655
  %v886 = vpack.c.b16 %v661, %v656
  %v887 = vpack.c.b16 %v662, %v657
  %v888 = vpack.c.b16 %v663, %v658
  %v889 = vpack.c.b16 %v664, %v659
  %v890 = vpack.c.b16 %v670, %v665
  %v891 = vpack.c.b16 %v671, %v666
  %v892 = vpack.c.b16 %v672, %v667
  %v893 = vpack.c.b16 %v673, %v668
  %v894 = vpack.c.b16 %v674, %v669
  %v895 = vpack.c.b16 %v680, %v675
  %v896 = vpack.c.b16 %v681, %v676
  %v897 = vpack.c.b16 %v682, %v677
  %v898 = vpack.c.b16 %v683, %v678
  %v899 = vpack.c.b16 %v684, %v679
  %v900 = vpack.c.b16 %v690, %v685
  %v901 = vpack.c.b16 %v691, %v686
  %v902 = vpack.c.b16 %v692, %v687
  %v903 = vpack.c.b16 %v693, %v688
  %v904 = vpack.c.b16 %v694, %v689
  %v905 = vpack.c.b16 %v700, %v695
  %v906 = vpack.c.b16 %v701, %v696
  %v907 = vpack.c.b16 %v702, %v697
  %v908 = vpack.c.b16 %v703, %v698
  %v909 = vpack.c.b16 %v704, %v699
  %v910 = vpack.c.b16 %v710, %v705
  %v911 = vpack.c.b16 %v711, %v706
  %v912 = vpack.c.b16 %v712, %v707
  %v913 = vpack.c.b16 %v713, %v708
  %v914 = vpack.c.b16 %v714, %v709
  %v915 = vpack.c.b16 %v720, %v715
  %v916 = vpack.c.b16 %v721, %v716
  %v917 = vpack.c.b16 %v722, %v717
  %v918 = vpack.c.b16 %v723, %v718
  %v919 = vpack.c.b16 %v724, %v719
  %v920 = vpack.c.b16 %v730, %v725
  %v921 = vpack.c.b16 %v731, %v726
  %v922 = vpack.c.b16 %v732, %v727
  %v923 = vpack.c.b16 %v733, %v728
  %v924 = vpack.c.b16 %v734, %v729
  %v925 = vpack.c.b16 %v740, %v735
  %v926 = vpack.c.b16 %v741, %v736
  %v927 = vpack.c.b16 %v742, %v737
  %v928 = vpack.c.b16 %v743, %v738
  %v929 = vpack.c.b16 %v744, %v739
  %v930 = vpack.c.b16 %v750, %v745
  %v931 = vpack.c.b16 %v751, %v746
  %v932 = vpack.c.b16 %v752, %v747
  %v933 = vpack.c.b16 %v753, %v748
  %v934 = vpack.c.b16 %v754, %v749
  %v935 = vpack.c.b16 %v760, %v755
  %v936 = vpack.c.b16 %v761, %v756
  %v937 = vpack.c.b16 %v762, %v757
  %v938 = vpack.c.b16 %v763, %v758
  %v939 = vpack.c.b16 %v764, %v759
  %v940 = vpack.c.b16 %v770, %v765
  %v941 = vpack.c.b16 %v771, %v766
  %v942 = vpack.c.b16 %v772, %v767
  %v943 = vpack.c.b16 %v773, %v768
  %v944 = vpack.c.b16 %v774, %v769
  %v945 = vpack.c.b16 %v780, %v775
  %v946 = vpack.c.b16 %v781, %v776
  %v947 = vpack.c.b16 %v782, %v777
  %v948 = vpack.c.b16 %v783, %v778
  %v949 = vpack.c.b16 %v784, %v779
  %v950 = vpack.c.b16 %v790, %v785
  %v951 = vpack.c.b16 %v791, %v786
  %v952 = vpack.c.b16 %v792, %v787
  %v953 = vpack.c.b16 %v793, %v788
  %v954 = vpack.c.b16 %v794, %v789
  %v1155 = vunpack.c.l.b16 %v207
  %v1156 = vunpack.c.l.b16 %v208
  %v1157 = vunpack.c.l.b16 %v209
  %v1158 = vunpack.c.l.b16 %v210
  %v1159 = vunpack.c.l.b16 %v211
  %v1160 = vunpack.c.l.b16 %v212
  %v1161 = vunpack.c.l.b16 %v213
  %v1162 = vunpack.c.l.b16 %v214
  %v1163 = vunpack.c.l.b16 %v215
  %v1164 = vunpack.c.l.b16 %v216
  %v1165 = vunpack.c.l.b16 %v217
  %v1166 = vunpack.c.l.b16 %v218
  %v1167 = vunpack.c.l.b16 %v219
  %v1168 = vunpack.c.l.b16 %v220
  %v1169 = vunpack.c.l.b16 %v221
  %v1170 = vunpack.c.l.b16 %v222
  %v1171 = vunpack.c.l.b16 %v223
  %v1172 = vunpack.c.l.b16 %v224
  %v1173 = vunpack.c.l.b16 %v225
  %v1174 = vunpack.c.l.b16 %v226
  %v1175 = vunpack.c.l.b16 %v227
  %v1176 = vunpack.c.l.b16 %v228
  %v1177 = vunpack.c.l.b16 %v229
  %v1178 = vunpack.c.l.b16 %v230
  %v1179 = vunpack.c.l.b16 %v231
  %v1180 = vunpack.c.l.b16 %v232
  %v1181 = vunpack.c.l.b16 %v233
  %v1182 = vunpack.c.l.b16 %v234
  %v1183 = vunpack.c.l.b16 %v235
  %v1184 = vunpack.c.l.b16 %v236
  %v1185 = vunpack.c.l.b16 %v237
  %v1186 = vunpack.c.l.b16 %v238
  %v1187 = vunpack.c.l.b16 %v239
  %v1188 = vunpack.c.l.b16 %v240
  %v1189 = vunpack.c.l.b16 %v241
  %v1190 = vunpack.c.l.b16 %v242
  %v1191 = vunpack.c.l.b16 %v243
  %v1192 = vunpack.c.l.b16 %v244
  %v1193 = vunpack.c.l.b16 %v245
  %v1194 = vunpack.c.l.b16 %v246
  %v1195 = vunpack.c.l.b16 %v247
  %v1196 = vunpack.c.l.b16 %v248
  %v1197 = vunpack.c.l.b16 %v249
  %v1198 = vunpack.c.l.b16 %v250
  %v1199 = vunpack.c.l.b16 %v251
  %v1200 = vunpack.c.l.b16 %v252
  %v1201 = vunpack.c.l.b16 %v253
  %v1202 = vunpack.c.l.b16 %v254
  %v1203 = vunpack.c.l.b16 %v255
  %v1204 = vunpack.c.l.b16 %v256
  %v1205 = vunpack.c.l.b16 %v257
  %v1206 = vunpack.c.l.b16 %v258
  %v1207 = vunpack.c.l.b16 %v259
  %v1208 = vunpack.c.l.b16 %v260
  %v1209 = vunpack.c.l.b16 %v261
  %v1210 = vunpack.c.l.b16 %v262
  %v1211 = vunpack.c.l.b16 %v263
  %v1212 = vunpack.c.l.b16 %v264
  %v1213 = vunpack.c.l.b16 %v265
  %v1214 = vunpack.c.l.b16 %v266
  %v1215 = vunpack.c.l.b16 %v267
  %v1216 = vunpack.c.l.b16 %v268
  %v1217 = vunpack.c.l.b16 %v269
  %v1218 = vunpack.c.l.b16 %v270
  %v1219 = vunpack.c.l.b16 %v271
  %v1220 = vunpack.c.l.b16 %v272
  %v1221 = vunpack.c.l.b16 %v273
  %v1222 = vunpack.c.l.b16 %v274
  %v1223 = vunpack.c.l.b16 %v275
  %v1224 = vunpack.c.l.b16 %v276
  %v1225 = vunpack.c.l.b16 %v277
  %v1226 = vunpack.c.l.b16 %v278
  %v1227 = vpack.c.b16 %v1156, %v1155
  %v1228 = vpack.c.b16 %v1158, %v1157
  %v1229 = vpack.c.b16 %v1160, %v1159
  %v1230 = vpack.c.b16 %v1162, %v1161
  %v1231 = vpack.c.b16 %v1164, %v1163
  %v1232 = vpack.c.b16 %v1166, %v1165
  %v1233 = vpack.c.b16 %v1168, %v1167
  %v1234 = vpack.c.b16 %v1170, %v1169
  %v1235 = vpack.c.b16 %v1172, %v1171
  %v1236 = vpack.c.b16 %v1174, %v1173
  %v1237 = vpack.c.b16 %v1176, %v1175
  %v1238 = vpack.c.b16 %v1178, %v1177
  %v1239 = vpack.c.b16 %v1180, %v1179
  %v1240 = vpack.c.b16 %v1182, %v1181
  %v1241 = vpack.c.b16 %v1184, %v1183
  %v1242 = vpack.c.b16 %v1186, %v1185
  %v1243 = vpack.c.b16 %v1188, %v1187
  %v1244 = vpack.c.b16 %v1190, %v1189
  %v1245 = vpack.c.b16 %v1192, %v1191
  %v1246 = vpack.c.b16 %v1194, %v1193
  %v1247 = vpack.c.b16 %v1196, %v1195
  %v1248 = vpack.c.b16 %v1198, %v1197
  %v1249 = vpack.c.b16 %v1200, %v1199
  %v1250 = vpack.c.b16 %v1202, %v1201
  %v1251 = vpack.c.b16 %v1204, %v1203
  %v1252 = vpack.c.b16 %v1206, %v1205
  %v1253 = vpack.c.b16 %v1208, %v1207
  %v1254 = vpack.c.b16 %v1210, %v1209
  %v1255 = vpack.c.b16 %v1212, %v1211
  %v1256 = vpack.c.b16 %v1214, %v1213
  %v1257 = vpack.c.b16 %v1216, %v1215
  %v1258 = vpack.c.b16 %v1218, %v1217
  %v1259 = vpack.c.b16 %v1220, %v1219
  %v1260 = vpack.c.b16 %v1222, %v1221
  %v1261 = vpack.c.b16 %v1224, %v1223
  %v1262 = vpack.c.b16 %v1226, %v1225
  %vm1299 = vcmask 523264
  %v1301 = vsel %vm1299, %v799, 0
  %v1304 = vsel %vm1299, %v804, 0
  %v1307 = vsel %vm1299, %v809, 0
  %v1310 = vsel %vm1299, %v814, 0
  %v1313 = vsel %vm1299, %v819, 0
  %v1316 = vsel %vm1299, %v824, 0
  %v1319 = vsel %vm1299, %v829, 0
  %v1322 = vsel %vm1299, %v834, 0
  %v1325 = vsel %vm1299, %v839, 0
  %v1328 = vsel %vm1299, %v844, 0
  %v1331 = vsel %vm1299, %v849, 0
  %v1334 = vsel %vm1299, %v854, 0
  %v1337 = vsel %vm1299, %v859, 0
  %v1340 = vsel %vm1299, %v864, 0
  %v1343 = vsel %vm1299, %v869, 0
  %v1346 = vsel %vm1299, %v874, 0
  %v1349 = vsel %vm1299, %v879, 0
  %v1352 = vsel %vm1299, %v884, 0
  %v1355 = vsel %vm1299, %v889, 0
  %v1358 = vsel %vm1299, %v894, 0
  %v1361 = vsel %vm1299, %v899, 0
  %v1364 = vsel %vm1299, %v904, 0
  %v1367 = vsel %vm1299, %v909, 0
  %v1370 = vsel %vm1299, %v914, 0
  %v1373 = vsel %vm1299, %v919, 0
  %v1376 = vsel %vm1299, %v924, 0
  %v1379 = vsel %vm1299, %v929, 0
  %v1382 = vsel %vm1299, %v934, 0
  %v1385 = vsel %vm1299, %v939, 0
  %v1388 = vsel %vm1299, %v944, 0
  %v1391 = vsel %vm1299, %v949, 0
  %v1394 = vsel %vm1299, %v954, 0
  %1396 = vmatpush.bf16.msra.mxu0 %v1234
  %1397 = vmatpush.bf16.msra.mxu0 %v1233
  %1398 = vmatpush.bf16.msra.mxu0 %v1232
  %1399 = vmatpush.bf16.msra.mxu0 %v1231
  %1400 = vmatpush.bf16.msra.mxu0 %v1230
  %1401 = vmatpush.bf16.msra.mxu0 %v1229
  %1402 = vmatpush.bf16.msra.mxu0 %v1228
  %1403 = vmatpush.bf16.msra.mxu0 %v1227
  %1404 = vmatmul.bf16.gmra.mxu0 %v795
  %v1405 = vpop.f32.mrf.mxu0
  %v1406 = vadd.f32 %v281, %v1405
  %v1407 = vpop.f32.mrf.mxu0
  %v1408 = vadd.f32 %v281, %v1407
  %1409 = vmatmul.bf16.gmra.mxu0 %v800
  %v1410 = vpop.f32.mrf.mxu0
  %v1411 = vadd.f32 %v281, %v1410
  %v1412 = vpop.f32.mrf.mxu0
  %v1413 = vadd.f32 %v281, %v1412
  %1414 = vmatmul.bf16.gmra.mxu0 %v805
  %v1415 = vpop.f32.mrf.mxu0
  %v1416 = vadd.f32 %v281, %v1415
  %v1417 = vpop.f32.mrf.mxu0
  %v1418 = vadd.f32 %v281, %v1417
  %1419 = vmatmul.bf16.gmra.mxu0 %v810
  %v1420 = vpop.f32.mrf.mxu0
  %v1421 = vadd.f32 %v281, %v1420
  %v1422 = vpop.f32.mrf.mxu0
  %v1423 = vadd.f32 %v281, %v1422
  %1424 = vmatmul.bf16.gmra.mxu0 %v815
  %v1425 = vpop.f32.mrf.mxu0
  %v1426 = vadd.f32 %v281, %v1425
  %v1427 = vpop.f32.mrf.mxu0
  %v1428 = vadd.f32 %v281, %v1427
  %1429 = vmatmul.bf16.gmra.mxu0 %v820
  %v1430 = vpop.f32.mrf.mxu0
  %v1431 = vadd.f32 %v281, %v1430
  %v1432 = vpop.f32.mrf.mxu0
  %v1433 = vadd.f32 %v281, %v1432
  %1434 = vmatmul.bf16.gmra.mxu0 %v825
  %v1435 = vpop.f32.mrf.mxu0
  %v1436 = vadd.f32 %v281, %v1435
  %v1437 = vpop.f32.mrf.mxu0
  %v1438 = vadd.f32 %v281, %v1437
  %1439 = vmatmul.bf16.gmra.mxu0 %v830
  %v1440 = vpop.f32.mrf.mxu0
  %v1441 = vadd.f32 %v281, %v1440
  %v1442 = vpop.f32.mrf.mxu0
  %v1443 = vadd.f32 %v281, %v1442
  %1444 = vmatmul.bf16.gmra.mxu0 %v835
  %v1445 = vpop.f32.mrf.mxu0
  %v1446 = vadd.f32 %v281, %v1445
  %v1447 = vpop.f32.mrf.mxu0
  %v1448 = vadd.f32 %v281, %v1447
  %1449 = vmatmul.bf16.gmra.mxu0 %v840
  %v1450 = vpop.f32.mrf.mxu0
  %v1451 = vadd.f32 %v281, %v1450
  %v1452 = vpop.f32.mrf.mxu0
  %v1453 = vadd.f32 %v281, %v1452
  %1454 = vmatmul.bf16.gmra.mxu0 %v845
  %v1455 = vpop.f32.mrf.mxu0
  %v1456 = vadd.f32 %v281, %v1455
  %v1457 = vpop.f32.mrf.mxu0
  %v1458 = vadd.f32 %v281, %v1457
  %1459 = vmatmul.bf16.gmra.mxu0 %v850
  %v1460 = vpop.f32.mrf.mxu0
  %v1461 = vadd.f32 %v281, %v1460
  %v1462 = vpop.f32.mrf.mxu0
  %v1463 = vadd.f32 %v281, %v1462
  %1464 = vmatmul.bf16.gmra.mxu0 %v855
  %v1465 = vpop.f32.mrf.mxu0
  %v1466 = vadd.f32 %v281, %v1465
  %v1467 = vpop.f32.mrf.mxu0
  %v1468 = vadd.f32 %v281, %v1467
  %1469 = vmatmul.bf16.gmra.mxu0 %v860
  %v1470 = vpop.f32.mrf.mxu0
  %v1471 = vadd.f32 %v281, %v1470
  %v1472 = vpop.f32.mrf.mxu0
  %v1473 = vadd.f32 %v281, %v1472
  %1474 = vmatmul.bf16.gmra.mxu0 %v865
  %v1475 = vpop.f32.mrf.mxu0
  %v1476 = vadd.f32 %v281, %v1475
  %v1477 = vpop.f32.mrf.mxu0
  %v1478 = vadd.f32 %v281, %v1477
  %1479 = vmatmul.bf16.gmra.mxu0 %v870
  %v1480 = vpop.f32.mrf.mxu0
  %v1481 = vadd.f32 %v281, %v1480
  %v1482 = vpop.f32.mrf.mxu0
  %v1483 = vadd.f32 %v281, %v1482
  %1484 = vmatmul.bf16.gmra.mxu0 %v875
  %v1485 = vpop.f32.mrf.mxu0
  %v1486 = vadd.f32 %v281, %v1485
  %v1487 = vpop.f32.mrf.mxu0
  %v1488 = vadd.f32 %v281, %v1487
  %1489 = vmatmul.bf16.gmra.mxu0 %v880
  %v1490 = vpop.f32.mrf.mxu0
  %v1491 = vadd.f32 %v281, %v1490
  %v1492 = vpop.f32.mrf.mxu0
  %v1493 = vadd.f32 %v281, %v1492
  %1494 = vmatmul.bf16.gmra.mxu0 %v885
  %v1495 = vpop.f32.mrf.mxu0
  %v1496 = vadd.f32 %v281, %v1495
  %v1497 = vpop.f32.mrf.mxu0
  %v1498 = vadd.f32 %v281, %v1497
  %1499 = vmatmul.bf16.gmra.mxu0 %v890
  %v1500 = vpop.f32.mrf.mxu0
  %v1501 = vadd.f32 %v281, %v1500
  %v1502 = vpop.f32.mrf.mxu0
  %v1503 = vadd.f32 %v281, %v1502
  %1504 = vmatmul.bf16.gmra.mxu0 %v895
  %v1505 = vpop.f32.mrf.mxu0
  %v1506 = vadd.f32 %v281, %v1505
  %v1507 = vpop.f32.mrf.mxu0
  %v1508 = vadd.f32 %v281, %v1507
  %1509 = vmatmul.bf16.gmra.mxu0 %v900
  %v1510 = vpop.f32.mrf.mxu0
  %v1511 = vadd.f32 %v281, %v1510
  %v1512 = vpop.f32.mrf.mxu0
  %v1513 = vadd.f32 %v281, %v1512
  %1514 = vmatmul.bf16.gmra.mxu0 %v905
  %v1515 = vpop.f32.mrf.mxu0
  %v1516 = vadd.f32 %v281, %v1515
  %v1517 = vpop.f32.mrf.mxu0
  %v1518 = vadd.f32 %v281, %v1517
  %1519 = vmatmul.bf16.gmra.mxu0 %v910
  %v1520 = vpop.f32.mrf.mxu0
  %v1521 = vadd.f32 %v281, %v1520
  %v1522 = vpop.f32.mrf.mxu0
  %v1523 = vadd.f32 %v281, %v1522
  %1524 = vmatmul.bf16.gmra.mxu0 %v915
  %v1525 = vpop.f32.mrf.mxu0
  %v1526 = vadd.f32 %v281, %v1525
  %v1527 = vpop.f32.mrf.mxu0
  %v1528 = vadd.f32 %v281, %v1527
  %1529 = vmatmul.bf16.gmra.mxu0 %v920
  %v1530 = vpop.f32.mrf.mxu0
  %v1531 = vadd.f32 %v281, %v1530
  %v1532 = vpop.f32.mrf.mxu0
  %v1533 = vadd.f32 %v281, %v1532
  %1534 = vmatmul.bf16.gmra.mxu0 %v925
  %v1535 = vpop.f32.mrf.mxu0
  %v1536 = vadd.f32 %v281, %v1535
  %v1537 = vpop.f32.mrf.mxu0
  %v1538 = vadd.f32 %v281, %v1537
  %1539 = vmatmul.bf16.gmra.mxu0 %v930
  %v1540 = vpop.f32.mrf.mxu0
  %v1541 = vadd.f32 %v281, %v1540
  %v1542 = vpop.f32.mrf.mxu0
  %v1543 = vadd.f32 %v281, %v1542
  %1544 = vmatmul.bf16.gmra.mxu0 %v935
  %v1545 = vpop.f32.mrf.mxu0
  %v1546 = vadd.f32 %v281, %v1545
  %v1547 = vpop.f32.mrf.mxu0
  %v1548 = vadd.f32 %v281, %v1547
  %1549 = vmatmul.bf16.gmra.mxu0 %v940
  %v1550 = vpop.f32.mrf.mxu0
  %v1551 = vadd.f32 %v281, %v1550
  %v1552 = vpop.f32.mrf.mxu0
  %v1553 = vadd.f32 %v281, %v1552
  %1554 = vmatmul.bf16.gmra.mxu0 %v945
  %v1555 = vpop.f32.mrf.mxu0
  %v1556 = vadd.f32 %v281, %v1555
  %v1557 = vpop.f32.mrf.mxu0
  %v1558 = vadd.f32 %v281, %v1557
  %1559 = vmatmul.bf16.gmra.mxu0 %v950
  %v1560 = vpop.f32.mrf.mxu0
  %v1561 = vadd.f32 %v281, %v1560
  %v1562 = vpop.f32.mrf.mxu0
  %v1563 = vadd.f32 %v281, %v1562
  %1564 = vdwg.mxu0
  %1565 = vmatpush.bf16.msra.mxu0 %v1242
  %1566 = vmatpush.bf16.msra.mxu0 %v1241
  %1567 = vmatpush.bf16.msra.mxu0 %v1240
  %1568 = vmatpush.bf16.msra.mxu0 %v1239
  %1569 = vmatpush.bf16.msra.mxu0 %v1238
  %1570 = vmatpush.bf16.msra.mxu0 %v1237
  %1571 = vmatpush.bf16.msra.mxu0 %v1236
  %1572 = vmatpush.bf16.msra.mxu0 %v1235
  %1573 = vmatmul.bf16.gmra.mxu0 %v796
  %v1574 = vpop.f32.mrf.mxu0
  %v1575 = vadd.f32 %v1406, %v1574
  %v1576 = vpop.f32.mrf.mxu0
  %v1577 = vadd.f32 %v1408, %v1576
  %1578 = vmatmul.bf16.gmra.mxu0 %v801
  %v1579 = vpop.f32.mrf.mxu0
  %v1580 = vadd.f32 %v1411, %v1579
  %v1581 = vpop.f32.mrf.mxu0
  %v1582 = vadd.f32 %v1413, %v1581
  %1583 = vmatmul.bf16.gmra.mxu0 %v806
  %v1584 = vpop.f32.mrf.mxu0
  %v1585 = vadd.f32 %v1416, %v1584
  %v1586 = vpop.f32.mrf.mxu0
  %v1587 = vadd.f32 %v1418, %v1586
  %1588 = vmatmul.bf16.gmra.mxu0 %v811
  %v1589 = vpop.f32.mrf.mxu0
  %v1590 = vadd.f32 %v1421, %v1589
  %v1591 = vpop.f32.mrf.mxu0
  %v1592 = vadd.f32 %v1423, %v1591
  %1593 = vmatmul.bf16.gmra.mxu0 %v816
  %v1594 = vpop.f32.mrf.mxu0
  %v1595 = vadd.f32 %v1426, %v1594
  %v1596 = vpop.f32.mrf.mxu0
  %v1597 = vadd.f32 %v1428, %v1596
  %1598 = vmatmul.bf16.gmra.mxu0 %v821
  %v1599 = vpop.f32.mrf.mxu0
  %v1600 = vadd.f32 %v1431, %v1599
  %v1601 = vpop.f32.mrf.mxu0
  %v1602 = vadd.f32 %v1433, %v1601
  %1603 = vmatmul.bf16.gmra.mxu0 %v826
  %v1604 = vpop.f32.mrf.mxu0
  %v1605 = vadd.f32 %v1436, %v1604
  %v1606 = vpop.f32.mrf.mxu0
  %v1607 = vadd.f32 %v1438, %v1606
  %1608 = vmatmul.bf16.gmra.mxu0 %v831
  %v1609 = vpop.f32.mrf.mxu0
  %v1610 = vadd.f32 %v1441, %v1609
  %v1611 = vpop.f32.mrf.mxu0
  %v1612 = vadd.f32 %v1443, %v1611
  %1613 = vmatmul.bf16.gmra.mxu0 %v836
  %v1614 = vpop.f32.mrf.mxu0
  %v1615 = vadd.f32 %v1446, %v1614
  %v1616 = vpop.f32.mrf.mxu0
  %v1617 = vadd.f32 %v1448, %v1616
  %1618 = vmatmul.bf16.gmra.mxu0 %v841
  %v1619 = vpop.f32.mrf.mxu0
  %v1620 = vadd.f32 %v1451, %v1619
  %v1621 = vpop.f32.mrf.mxu0
  %v1622 = vadd.f32 %v1453, %v1621
  %1623 = vmatmul.bf16.gmra.mxu0 %v846
  %v1624 = vpop.f32.mrf.mxu0
  %v1625 = vadd.f32 %v1456, %v1624
  %v1626 = vpop.f32.mrf.mxu0
  %v1627 = vadd.f32 %v1458, %v1626
  %1628 = vmatmul.bf16.gmra.mxu0 %v851
  %v1629 = vpop.f32.mrf.mxu0
  %v1630 = vadd.f32 %v1461, %v1629
  %v1631 = vpop.f32.mrf.mxu0
  %v1632 = vadd.f32 %v1463, %v1631
  %1633 = vmatmul.bf16.gmra.mxu0 %v856
  %v1634 = vpop.f32.mrf.mxu0
  %v1635 = vadd.f32 %v1466, %v1634
  %v1636 = vpop.f32.mrf.mxu0
  %v1637 = vadd.f32 %v1468, %v1636
  %1638 = vmatmul.bf16.gmra.mxu0 %v861
  %v1639 = vpop.f32.mrf.mxu0
  %v1640 = vadd.f32 %v1471, %v1639
  %v1641 = vpop.f32.mrf.mxu0
  %v1642 = vadd.f32 %v1473, %v1641
  %1643 = vmatmul.bf16.gmra.mxu0 %v866
  %v1644 = vpop.f32.mrf.mxu0
  %v1645 = vadd.f32 %v1476, %v1644
  %v1646 = vpop.f32.mrf.mxu0
  %v1647 = vadd.f32 %v1478, %v1646
  %1648 = vmatmul.bf16.gmra.mxu0 %v871
  %v1649 = vpop.f32.mrf.mxu0
  %v1650 = vadd.f32 %v1481, %v1649
  %v1651 = vpop.f32.mrf.mxu0
  %v1652 = vadd.f32 %v1483, %v1651
  %1653 = vmatmul.bf16.gmra.mxu0 %v876
  %v1654 = vpop.f32.mrf.mxu0
  %v1655 = vadd.f32 %v1486, %v1654
  %v1656 = vpop.f32.mrf.mxu0
  %v1657 = vadd.f32 %v1488, %v1656
  %1658 = vmatmul.bf16.gmra.mxu0 %v881
  %v1659 = vpop.f32.mrf.mxu0
  %v1660 = vadd.f32 %v1491, %v1659
  %v1661 = vpop.f32.mrf.mxu0
  %v1662 = vadd.f32 %v1493, %v1661
  %1663 = vmatmul.bf16.gmra.mxu0 %v886
  %v1664 = vpop.f32.mrf.mxu0
  %v1665 = vadd.f32 %v1496, %v1664
  %v1666 = vpop.f32.mrf.mxu0
  %v1667 = vadd.f32 %v1498, %v1666
  %1668 = vmatmul.bf16.gmra.mxu0 %v891
  %v1669 = vpop.f32.mrf.mxu0
  %v1670 = vadd.f32 %v1501, %v1669
  %v1671 = vpop.f32.mrf.mxu0
  %v1672 = vadd.f32 %v1503, %v1671
  %1673 = vmatmul.bf16.gmra.mxu0 %v896
  %v1674 = vpop.f32.mrf.mxu0
  %v1675 = vadd.f32 %v1506, %v1674
  %v1676 = vpop.f32.mrf.mxu0
  %v1677 = vadd.f32 %v1508, %v1676
  %1678 = vmatmul.bf16.gmra.mxu0 %v901
  %v1679 = vpop.f32.mrf.mxu0
  %v1680 = vadd.f32 %v1511, %v1679
  %v1681 = vpop.f32.mrf.mxu0
  %v1682 = vadd.f32 %v1513, %v1681
  %1683 = vmatmul.bf16.gmra.mxu0 %v906
  %v1684 = vpop.f32.mrf.mxu0
  %v1685 = vadd.f32 %v1516, %v1684
  %v1686 = vpop.f32.mrf.mxu0
  %v1687 = vadd.f32 %v1518, %v1686
  %1688 = vmatmul.bf16.gmra.mxu0 %v911
  %v1689 = vpop.f32.mrf.mxu0
  %v1690 = vadd.f32 %v1521, %v1689
  %v1691 = vpop.f32.mrf.mxu0
  %v1692 = vadd.f32 %v1523, %v1691
  %1693 = vmatmul.bf16.gmra.mxu0 %v916
  %v1694 = vpop.f32.mrf.mxu0
  %v1695 = vadd.f32 %v1526, %v1694
  %v1696 = vpop.f32.mrf.mxu0
  %v1697 = vadd.f32 %v1528, %v1696
  %1698 = vmatmul.bf16.gmra.mxu0 %v921
  %v1699 = vpop.f32.mrf.mxu0
  %v1700 = vadd.f32 %v1531, %v1699
  %v1701 = vpop.f32.mrf.mxu0
  %v1702 = vadd.f32 %v1533, %v1701
  %1703 = vmatmul.bf16.gmra.mxu0 %v926
  %v1704 = vpop.f32.mrf.mxu0
  %v1705 = vadd.f32 %v1536, %v1704
  %v1706 = vpop.f32.mrf.mxu0
  %v1707 = vadd.f32 %v1538, %v1706
  %1708 = vmatmul.bf16.gmra.mxu0 %v931
  %v1709 = vpop.f32.mrf.mxu0
  %v1710 = vadd.f32 %v1541, %v1709
  %v1711 = vpop.f32.mrf.mxu0
  %v1712 = vadd.f32 %v1543, %v1711
  %1713 = vmatmul.bf16.gmra.mxu0 %v936
  %v1714 = vpop.f32.mrf.mxu0
  %v1715 = vadd.f32 %v1546, %v1714
  %v1716 = vpop.f32.mrf.mxu0
  %v1717 = vadd.f32 %v1548, %v1716
  %1718 = vmatmul.bf16.gmra.mxu0 %v941
  %v1719 = vpop.f32.mrf.mxu0
  %v1720 = vadd.f32 %v1551, %v1719
  %v1721 = vpop.f32.mrf.mxu0
  %v1722 = vadd.f32 %v1553, %v1721
  %1723 = vmatmul.bf16.gmra.mxu0 %v946
  %v1724 = vpop.f32.mrf.mxu0
  %v1725 = vadd.f32 %v1556, %v1724
  %v1726 = vpop.f32.mrf.mxu0
  %v1727 = vadd.f32 %v1558, %v1726
  %1728 = vmatmul.bf16.gmra.mxu0 %v951
  %v1729 = vpop.f32.mrf.mxu0
  %v1730 = vadd.f32 %v1561, %v1729
  %v1731 = vpop.f32.mrf.mxu0
  %v1732 = vadd.f32 %v1563, %v1731
  %1733 = vdwg.mxu0
  %1734 = vmatpush.bf16.msra.mxu0 %v1250
  %1735 = vmatpush.bf16.msra.mxu0 %v1249
  %1736 = vmatpush.bf16.msra.mxu0 %v1248
  %1737 = vmatpush.bf16.msra.mxu0 %v1247
  %1738 = vmatpush.bf16.msra.mxu0 %v1246
  %1739 = vmatpush.bf16.msra.mxu0 %v1245
  %1740 = vmatpush.bf16.msra.mxu0 %v1244
  %1741 = vmatpush.bf16.msra.mxu0 %v1243
  %1742 = vmatmul.bf16.gmra.mxu0 %v797
  %v1743 = vpop.f32.mrf.mxu0
  %v1744 = vadd.f32 %v1575, %v1743
  %v1745 = vpop.f32.mrf.mxu0
  %v1746 = vadd.f32 %v1577, %v1745
  %1747 = vmatmul.bf16.gmra.mxu0 %v802
  %v1748 = vpop.f32.mrf.mxu0
  %v1749 = vadd.f32 %v1580, %v1748
  %v1750 = vpop.f32.mrf.mxu0
  %v1751 = vadd.f32 %v1582, %v1750
  %1752 = vmatmul.bf16.gmra.mxu0 %v807
  %v1753 = vpop.f32.mrf.mxu0
  %v1754 = vadd.f32 %v1585, %v1753
  %v1755 = vpop.f32.mrf.mxu0
  %v1756 = vadd.f32 %v1587, %v1755
  %1757 = vmatmul.bf16.gmra.mxu0 %v812
  %v1758 = vpop.f32.mrf.mxu0
  %v1759 = vadd.f32 %v1590, %v1758
  %v1760 = vpop.f32.mrf.mxu0
  %v1761 = vadd.f32 %v1592, %v1760
  %1762 = vmatmul.bf16.gmra.mxu0 %v817
  %v1763 = vpop.f32.mrf.mxu0
  %v1764 = vadd.f32 %v1595, %v1763
  %v1765 = vpop.f32.mrf.mxu0
  %v1766 = vadd.f32 %v1597, %v1765
  %1767 = vmatmul.bf16.gmra.mxu0 %v822
  %v1768 = vpop.f32.mrf.mxu0
  %v1769 = vadd.f32 %v1600, %v1768
  %v1770 = vpop.f32.mrf.mxu0
  %v1771 = vadd.f32 %v1602, %v1770
  %1772 = vmatmul.bf16.gmra.mxu0 %v827
  %v1773 = vpop.f32.mrf.mxu0
  %v1774 = vadd.f32 %v1605, %v1773
  %v1775 = vpop.f32.mrf.mxu0
  %v1776 = vadd.f32 %v1607, %v1775
  %1777 = vmatmul.bf16.gmra.mxu0 %v832
  %v1778 = vpop.f32.mrf.mxu0
  %v1779 = vadd.f32 %v1610, %v1778
  %v1780 = vpop.f32.mrf.mxu0
  %v1781 = vadd.f32 %v1612, %v1780
  %1782 = vmatmul.bf16.gmra.mxu0 %v837
  %v1783 = vpop.f32.mrf.mxu0
  %v1784 = vadd.f32 %v1615, %v1783
  %v1785 = vpop.f32.mrf.mxu0
  %v1786 = vadd.f32 %v1617, %v1785
  %1787 = vmatmul.bf16.gmra.mxu0 %v842
  %v1788 = vpop.f32.mrf.mxu0
  %v1789 = vadd.f32 %v1620, %v1788
  %v1790 = vpop.f32.mrf.mxu0
  %v1791 = vadd.f32 %v1622, %v1790
  %1792 = vmatmul.bf16.gmra.mxu0 %v847
  %v1793 = vpop.f32.mrf.mxu0
  %v1794 = vadd.f32 %v1625, %v1793
  %v1795 = vpop.f32.mrf.mxu0
  %v1796 = vadd.f32 %v1627, %v1795
  %1797 = vmatmul.bf16.gmra.mxu0 %v852
  %v1798 = vpop.f32.mrf.mxu0
  %v1799 = vadd.f32 %v1630, %v1798
  %v1800 = vpop.f32.mrf.mxu0
  %v1801 = vadd.f32 %v1632, %v1800
  %1802 = vmatmul.bf16.gmra.mxu0 %v857
  %v1803 = vpop.f32.mrf.mxu0
  %v1804 = vadd.f32 %v1635, %v1803
  %v1805 = vpop.f32.mrf.mxu0
  %v1806 = vadd.f32 %v1637, %v1805
  %1807 = vmatmul.bf16.gmra.mxu0 %v862
  %v1808 = vpop.f32.mrf.mxu0
  %v1809 = vadd.f32 %v1640, %v1808
  %v1810 = vpop.f32.mrf.mxu0
  %v1811 = vadd.f32 %v1642, %v1810
  %1812 = vmatmul.bf16.gmra.mxu0 %v867
  %v1813 = vpop.f32.mrf.mxu0
  %v1814 = vadd.f32 %v1645, %v1813
  %v1815 = vpop.f32.mrf.mxu0
  %v1816 = vadd.f32 %v1647, %v1815
  %1817 = vmatmul.bf16.gmra.mxu0 %v872
  %v1818 = vpop.f32.mrf.mxu0
  %v1819 = vadd.f32 %v1650, %v1818
  %v1820 = vpop.f32.mrf.mxu0
  %v1821 = vadd.f32 %v1652, %v1820
  %1822 = vmatmul.bf16.gmra.mxu0 %v877
  %v1823 = vpop.f32.mrf.mxu0
  %v1824 = vadd.f32 %v1655, %v1823
  %v1825 = vpop.f32.mrf.mxu0
  %v1826 = vadd.f32 %v1657, %v1825
  %1827 = vmatmul.bf16.gmra.mxu0 %v882
  %v1828 = vpop.f32.mrf.mxu0
  %v1829 = vadd.f32 %v1660, %v1828
  %v1830 = vpop.f32.mrf.mxu0
  %v1831 = vadd.f32 %v1662, %v1830
  %1832 = vmatmul.bf16.gmra.mxu0 %v887
  %v1833 = vpop.f32.mrf.mxu0
  %v1834 = vadd.f32 %v1665, %v1833
  %v1835 = vpop.f32.mrf.mxu0
  %v1836 = vadd.f32 %v1667, %v1835
  %1837 = vmatmul.bf16.gmra.mxu0 %v892
  %v1838 = vpop.f32.mrf.mxu0
  %v1839 = vadd.f32 %v1670, %v1838
  %v1840 = vpop.f32.mrf.mxu0
  %v1841 = vadd.f32 %v1672, %v1840
  %1842 = vmatmul.bf16.gmra.mxu0 %v897
  %v1843 = vpop.f32.mrf.mxu0
  %v1844 = vadd.f32 %v1675, %v1843
  %v1845 = vpop.f32.mrf.mxu0
  %v1846 = vadd.f32 %v1677, %v1845
  %1847 = vmatmul.bf16.gmra.mxu0 %v902
  %v1848 = vpop.f32.mrf.mxu0
  %v1849 = vadd.f32 %v1680, %v1848
  %v1850 = vpop.f32.mrf.mxu0
  %v1851 = vadd.f32 %v1682, %v1850
  %1852 = vmatmul.bf16.gmra.mxu0 %v907
  %v1853 = vpop.f32.mrf.mxu0
  %v1854 = vadd.f32 %v1685, %v1853
  %v1855 = vpop.f32.mrf.mxu0
  %v1856 = vadd.f32 %v1687, %v1855
  %1857 = vmatmul.bf16.gmra.mxu0 %v912
  %v1858 = vpop.f32.mrf.mxu0
  %v1859 = vadd.f32 %v1690, %v1858
  %v1860 = vpop.f32.mrf.mxu0
  %v1861 = vadd.f32 %v1692, %v1860
  %1862 = vmatmul.bf16.gmra.mxu0 %v917
  %v1863 = vpop.f32.mrf.mxu0
  %v1864 = vadd.f32 %v1695, %v1863
  %v1865 = vpop.f32.mrf.mxu0
  %v1866 = vadd.f32 %v1697, %v1865
  %1867 = vmatmul.bf16.gmra.mxu0 %v922
  %v1868 = vpop.f32.mrf.mxu0
  %v1869 = vadd.f32 %v1700, %v1868
  %v1870 = vpop.f32.mrf.mxu0
  %v1871 = vadd.f32 %v1702, %v1870
  %1872 = vmatmul.bf16.gmra.mxu0 %v927
  %v1873 = vpop.f32.mrf.mxu0
  %v1874 = vadd.f32 %v1705, %v1873
  %v1875 = vpop.f32.mrf.mxu0
  %v1876 = vadd.f32 %v1707, %v1875
  %1877 = vmatmul.bf16.gmra.mxu0 %v932
  %v1878 = vpop.f32.mrf.mxu0
  %v1879 = vadd.f32 %v1710, %v1878
  %v1880 = vpop.f32.mrf.mxu0
  %v1881 = vadd.f32 %v1712, %v1880
  %1882 = vmatmul.bf16.gmra.mxu0 %v937
  %v1883 = vpop.f32.mrf.mxu0
  %v1884 = vadd.f32 %v1715, %v1883
  %v1885 = vpop.f32.mrf.mxu0
  %v1886 = vadd.f32 %v1717, %v1885
  %1887 = vmatmul.bf16.gmra.mxu0 %v942
  %v1888 = vpop.f32.mrf.mxu0
  %v1889 = vadd.f32 %v1720, %v1888
  %v1890 = vpop.f32.mrf.mxu0
  %v1891 = vadd.f32 %v1722, %v1890
  %1892 = vmatmul.bf16.gmra.mxu0 %v947
  %v1893 = vpop.f32.mrf.mxu0
  %v1894 = vadd.f32 %v1725, %v1893
  %v1895 = vpop.f32.mrf.mxu0
  %v1896 = vadd.f32 %v1727, %v1895
  %1897 = vmatmul.bf16.gmra.mxu0 %v952
  %v1898 = vpop.f32.mrf.mxu0
  %v1899 = vadd.f32 %v1730, %v1898
  %v1900 = vpop.f32.mrf.mxu0
  %v1901 = vadd.f32 %v1732, %v1900
  %1902 = vdwg.mxu0
  %1903 = vmatpush.bf16.msra.mxu0 %v1258
  %1904 = vmatpush.bf16.msra.mxu0 %v1257
  %1905 = vmatpush.bf16.msra.mxu0 %v1256
  %1906 = vmatpush.bf16.msra.mxu0 %v1255
  %1907 = vmatpush.bf16.msra.mxu0 %v1254
  %1908 = vmatpush.bf16.msra.mxu0 %v1253
  %1909 = vmatpush.bf16.msra.mxu0 %v1252
  %1910 = vmatpush.bf16.msra.mxu0 %v1251
  %1911 = vmatmul.bf16.gmra.mxu0 %v798
  %v1912 = vpop.f32.mrf.mxu0
  %v1913 = vadd.f32 %v1744, %v1912
  %v1914 = vpop.f32.mrf.mxu0
  %v1915 = vadd.f32 %v1746, %v1914
  %1916 = vmatmul.bf16.gmra.mxu0 %v803
  %v1917 = vpop.f32.mrf.mxu0
  %v1918 = vadd.f32 %v1749, %v1917
  %v1919 = vpop.f32.mrf.mxu0
  %v1920 = vadd.f32 %v1751, %v1919
  %1921 = vmatmul.bf16.gmra.mxu0 %v808
  %v1922 = vpop.f32.mrf.mxu0
  %v1923 = vadd.f32 %v1754, %v1922
  %v1924 = vpop.f32.mrf.mxu0
  %v1925 = vadd.f32 %v1756, %v1924
  %1926 = vmatmul.bf16.gmra.mxu0 %v813
  %v1927 = vpop.f32.mrf.mxu0
  %v1928 = vadd.f32 %v1759, %v1927
  %v1929 = vpop.f32.mrf.mxu0
  %v1930 = vadd.f32 %v1761, %v1929
  %1931 = vmatmul.bf16.gmra.mxu0 %v818
  %v1932 = vpop.f32.mrf.mxu0
  %v1933 = vadd.f32 %v1764, %v1932
  %v1934 = vpop.f32.mrf.mxu0
  %v1935 = vadd.f32 %v1766, %v1934
  %1936 = vmatmul.bf16.gmra.mxu0 %v823
  %v1937 = vpop.f32.mrf.mxu0
  %v1938 = vadd.f32 %v1769, %v1937
  %v1939 = vpop.f32.mrf.mxu0
  %v1940 = vadd.f32 %v1771, %v1939
  %1941 = vmatmul.bf16.gmra.mxu0 %v828
  %v1942 = vpop.f32.mrf.mxu0
  %v1943 = vadd.f32 %v1774, %v1942
  %v1944 = vpop.f32.mrf.mxu0
  %v1945 = vadd.f32 %v1776, %v1944
  %1946 = vmatmul.bf16.gmra.mxu0 %v833
  %v1947 = vpop.f32.mrf.mxu0
  %v1948 = vadd.f32 %v1779, %v1947
  %v1949 = vpop.f32.mrf.mxu0
  %v1950 = vadd.f32 %v1781, %v1949
  %1951 = vmatmul.bf16.gmra.mxu0 %v838
  %v1952 = vpop.f32.mrf.mxu0
  %v1953 = vadd.f32 %v1784, %v1952
  %v1954 = vpop.f32.mrf.mxu0
  %v1955 = vadd.f32 %v1786, %v1954
  %1956 = vmatmul.bf16.gmra.mxu0 %v843
  %v1957 = vpop.f32.mrf.mxu0
  %v1958 = vadd.f32 %v1789, %v1957
  %v1959 = vpop.f32.mrf.mxu0
  %v1960 = vadd.f32 %v1791, %v1959
  %1961 = vmatmul.bf16.gmra.mxu0 %v848
  %v1962 = vpop.f32.mrf.mxu0
  %v1963 = vadd.f32 %v1794, %v1962
  %v1964 = vpop.f32.mrf.mxu0
  %v1965 = vadd.f32 %v1796, %v1964
  %1966 = vmatmul.bf16.gmra.mxu0 %v853
  %v1967 = vpop.f32.mrf.mxu0
  %v1968 = vadd.f32 %v1799, %v1967
  %v1969 = vpop.f32.mrf.mxu0
  %v1970 = vadd.f32 %v1801, %v1969
  %1971 = vmatmul.bf16.gmra.mxu0 %v858
  %v1972 = vpop.f32.mrf.mxu0
  %v1973 = vadd.f32 %v1804, %v1972
  %v1974 = vpop.f32.mrf.mxu0
  %v1975 = vadd.f32 %v1806, %v1974
  %1976 = vmatmul.bf16.gmra.mxu0 %v863
  %v1977 = vpop.f32.mrf.mxu0
  %v1978 = vadd.f32 %v1809, %v1977
  %v1979 = vpop.f32.mrf.mxu0
  %v1980 = vadd.f32 %v1811, %v1979
  %1981 = vmatmul.bf16.gmra.mxu0 %v868
  %v1982 = vpop.f32.mrf.mxu0
  %v1983 = vadd.f32 %v1814, %v1982
  %v1984 = vpop.f32.mrf.mxu0
  %v1985 = vadd.f32 %v1816, %v1984
  %1986 = vmatmul.bf16.gmra.mxu0 %v873
  %v1987 = vpop.f32.mrf.mxu0
  %v1988 = vadd.f32 %v1819, %v1987
  %v1989 = vpop.f32.mrf.mxu0
  %v1990 = vadd.f32 %v1821, %v1989
  %1991 = vmatmul.bf16.gmra.mxu0 %v878
  %v1992 = vpop.f32.mrf.mxu0
  %v1993 = vadd.f32 %v1824, %v1992
  %v1994 = vpop.f32.mrf.mxu0
  %v1995 = vadd.f32 %v1826, %v1994
  %1996 = vmatmul.bf16.gmra.mxu0 %v883
  %v1997 = vpop.f32.mrf.mxu0
  %v1998 = vadd.f32 %v1829, %v1997
  %v1999 = vpop.f32.mrf.mxu0
  %v2000 = vadd.f32 %v1831, %v1999
  %2001 = vmatmul.bf16.gmra.mxu0 %v888
  %v2002 = vpop.f32.mrf.mxu0
  %v2003 = vadd.f32 %v1834, %v2002
  %v2004 = vpop.f32.mrf.mxu0
  %v2005 = vadd.f32 %v1836, %v2004
  %2006 = vmatmul.bf16.gmra.mxu0 %v893
  %v2007 = vpop.f32.mrf.mxu0
  %v2008 = vadd.f32 %v1839, %v2007
  %v2009 = vpop.f32.mrf.mxu0
  %v2010 = vadd.f32 %v1841, %v2009
  %2011 = vmatmul.bf16.gmra.mxu0 %v898
  %v2012 = vpop.f32.mrf.mxu0
  %v2013 = vadd.f32 %v1844, %v2012
  %v2014 = vpop.f32.mrf.mxu0
  %v2015 = vadd.f32 %v1846, %v2014
  %2016 = vmatmul.bf16.gmra.mxu0 %v903
  %v2017 = vpop.f32.mrf.mxu0
  %v2018 = vadd.f32 %v1849, %v2017
  %v2019 = vpop.f32.mrf.mxu0
  %v2020 = vadd.f32 %v1851, %v2019
  %2021 = vmatmul.bf16.gmra.mxu0 %v908
  %v2022 = vpop.f32.mrf.mxu0
  %v2023 = vadd.f32 %v1854, %v2022
  %v2024 = vpop.f32.mrf.mxu0
  %v2025 = vadd.f32 %v1856, %v2024
  %2026 = vmatmul.bf16.gmra.mxu0 %v913
  %v2027 = vpop.f32.mrf.mxu0
  %v2028 = vadd.f32 %v1859, %v2027
  %v2029 = vpop.f32.mrf.mxu0
  %v2030 = vadd.f32 %v1861, %v2029
  %2031 = vmatmul.bf16.gmra.mxu0 %v918
  %v2032 = vpop.f32.mrf.mxu0
  %v2033 = vadd.f32 %v1864, %v2032
  %v2034 = vpop.f32.mrf.mxu0
  %v2035 = vadd.f32 %v1866, %v2034
  %2036 = vmatmul.bf16.gmra.mxu0 %v923
  %v2037 = vpop.f32.mrf.mxu0
  %v2038 = vadd.f32 %v1869, %v2037
  %v2039 = vpop.f32.mrf.mxu0
  %v2040 = vadd.f32 %v1871, %v2039
  %2041 = vmatmul.bf16.gmra.mxu0 %v928
  %v2042 = vpop.f32.mrf.mxu0
  %v2043 = vadd.f32 %v1874, %v2042
  %v2044 = vpop.f32.mrf.mxu0
  %v2045 = vadd.f32 %v1876, %v2044
  %2046 = vmatmul.bf16.gmra.mxu0 %v933
  %v2047 = vpop.f32.mrf.mxu0
  %v2048 = vadd.f32 %v1879, %v2047
  %v2049 = vpop.f32.mrf.mxu0
  %v2050 = vadd.f32 %v1881, %v2049
  %2051 = vmatmul.bf16.gmra.mxu0 %v938
  %v2052 = vpop.f32.mrf.mxu0
  %v2053 = vadd.f32 %v1884, %v2052
  %v2054 = vpop.f32.mrf.mxu0
  %v2055 = vadd.f32 %v1886, %v2054
  %2056 = vmatmul.bf16.gmra.mxu0 %v943
  %v2057 = vpop.f32.mrf.mxu0
  %v2058 = vadd.f32 %v1889, %v2057
  %v2059 = vpop.f32.mrf.mxu0
  %v2060 = vadd.f32 %v1891, %v2059
  %2061 = vmatmul.bf16.gmra.mxu0 %v948
  %v2062 = vpop.f32.mrf.mxu0
  %v2063 = vadd.f32 %v1894, %v2062
  %v2064 = vpop.f32.mrf.mxu0
  %v2065 = vadd.f32 %v1896, %v2064
  %2066 = vmatmul.bf16.gmra.mxu0 %v953
  %v2067 = vpop.f32.mrf.mxu0
  %v2068 = vadd.f32 %v1899, %v2067
  %v2069 = vpop.f32.mrf.mxu0
  %v2070 = vadd.f32 %v1901, %v2069
  %2071 = vdwg.mxu0
  %2072 = vmatpush.bf16.msra.mxu0 0
  %2073 = vmatpush.bf16.msra.mxu0 0
  %2074 = vmatpush.bf16.msra.mxu0 0
  %2075 = vmatpush.bf16.msra.mxu0 0
  %2076 = vmatpush.bf16.msra.mxu0 %v1262
  %2077 = vmatpush.bf16.msra.mxu0 %v1261
  %2078 = vmatpush.bf16.msra.mxu0 %v1260
  %2079 = vmatpush.bf16.msra.mxu0 %v1259
  %2080 = vmatmul.bf16.gmra.mxu0 %v1301
  %v2081 = vpop.f32.mrf.mxu0
  %v2082 = vadd.f32 %v1913, %v2081
  %v2083 = vpop.f32.mrf.mxu0
  %v2084 = vadd.f32 %v1915, %v2083
  %2085 = vmatmul.bf16.gmra.mxu0 %v1304
  %v2086 = vpop.f32.mrf.mxu0
  %v2087 = vadd.f32 %v1918, %v2086
  %v2088 = vpop.f32.mrf.mxu0
  %v2089 = vadd.f32 %v1920, %v2088
  %2090 = vmatmul.bf16.gmra.mxu0 %v1307
  %v2091 = vpop.f32.mrf.mxu0
  %v2092 = vadd.f32 %v1923, %v2091
  %v2093 = vpop.f32.mrf.mxu0
  %v2094 = vadd.f32 %v1925, %v2093
  %2095 = vmatmul.bf16.gmra.mxu0 %v1310
  %v2096 = vpop.f32.mrf.mxu0
  %v2097 = vadd.f32 %v1928, %v2096
  %v2098 = vpop.f32.mrf.mxu0
  %v2099 = vadd.f32 %v1930, %v2098
  %2100 = vmatmul.bf16.gmra.mxu0 %v1313
  %v2101 = vpop.f32.mrf.mxu0
  %v2102 = vadd.f32 %v1933, %v2101
  %v2103 = vpop.f32.mrf.mxu0
  %v2104 = vadd.f32 %v1935, %v2103
  %2105 = vmatmul.bf16.gmra.mxu0 %v1316
  %v2106 = vpop.f32.mrf.mxu0
  %v2107 = vadd.f32 %v1938, %v2106
  %v2108 = vpop.f32.mrf.mxu0
  %v2109 = vadd.f32 %v1940, %v2108
  %2110 = vmatmul.bf16.gmra.mxu0 %v1319
  %v2111 = vpop.f32.mrf.mxu0
  %v2112 = vadd.f32 %v1943, %v2111
  %v2113 = vpop.f32.mrf.mxu0
  %v2114 = vadd.f32 %v1945, %v2113
  %2115 = vmatmul.bf16.gmra.mxu0 %v1322
  %v2116 = vpop.f32.mrf.mxu0
  %v2117 = vadd.f32 %v1948, %v2116
  %v2118 = vpop.f32.mrf.mxu0
  %v2119 = vadd.f32 %v1950, %v2118
  %2120 = vmatmul.bf16.gmra.mxu0 %v1325
  %v2121 = vpop.f32.mrf.mxu0
  %v2122 = vadd.f32 %v1953, %v2121
  %v2123 = vpop.f32.mrf.mxu0
  %v2124 = vadd.f32 %v1955, %v2123
  %2125 = vmatmul.bf16.gmra.mxu0 %v1328
  %v2126 = vpop.f32.mrf.mxu0
  %v2127 = vadd.f32 %v1958, %v2126
  %v2128 = vpop.f32.mrf.mxu0
  %v2129 = vadd.f32 %v1960, %v2128
  %2130 = vmatmul.bf16.gmra.mxu0 %v1331
  %v2131 = vpop.f32.mrf.mxu0
  %v2132 = vadd.f32 %v1963, %v2131
  %v2133 = vpop.f32.mrf.mxu0
  %v2134 = vadd.f32 %v1965, %v2133
  %2135 = vmatmul.bf16.gmra.mxu0 %v1334
  %v2136 = vpop.f32.mrf.mxu0
  %v2137 = vadd.f32 %v1968, %v2136
  %v2138 = vpop.f32.mrf.mxu0
  %v2139 = vadd.f32 %v1970, %v2138
  %2140 = vmatmul.bf16.gmra.mxu0 %v1337
  %v2141 = vpop.f32.mrf.mxu0
  %v2142 = vadd.f32 %v1973, %v2141
  %v2143 = vpop.f32.mrf.mxu0
  %v2144 = vadd.f32 %v1975, %v2143
  %2145 = vmatmul.bf16.gmra.mxu0 %v1340
  %v2146 = vpop.f32.mrf.mxu0
  %v2147 = vadd.f32 %v1978, %v2146
  %v2148 = vpop.f32.mrf.mxu0
  %v2149 = vadd.f32 %v1980, %v2148
  %2150 = vmatmul.bf16.gmra.mxu0 %v1343
  %v2151 = vpop.f32.mrf.mxu0
  %v2152 = vadd.f32 %v1983, %v2151
  %v2153 = vpop.f32.mrf.mxu0
  %v2154 = vadd.f32 %v1985, %v2153
  %2155 = vmatmul.bf16.gmra.mxu0 %v1346
  %v2156 = vpop.f32.mrf.mxu0
  %v2157 = vadd.f32 %v1988, %v2156
  %v2158 = vpop.f32.mrf.mxu0
  %v2159 = vadd.f32 %v1990, %v2158
  %2160 = vmatmul.bf16.gmra.mxu0 %v1349
  %v2161 = vpop.f32.mrf.mxu0
  %v2162 = vadd.f32 %v1993, %v2161
  %v2163 = vpop.f32.mrf.mxu0
  %v2164 = vadd.f32 %v1995, %v2163
  %2165 = vmatmul.bf16.gmra.mxu0 %v1352
  %v2166 = vpop.f32.mrf.mxu0
  %v2167 = vadd.f32 %v1998, %v2166
  %v2168 = vpop.f32.mrf.mxu0
  %v2169 = vadd.f32 %v2000, %v2168
  %2170 = vmatmul.bf16.gmra.mxu0 %v1355
  %v2171 = vpop.f32.mrf.mxu0
  %v2172 = vadd.f32 %v2003, %v2171
  %v2173 = vpop.f32.mrf.mxu0
  %v2174 = vadd.f32 %v2005, %v2173
  %2175 = vmatmul.bf16.gmra.mxu0 %v1358
  %v2176 = vpop.f32.mrf.mxu0
  %v2177 = vadd.f32 %v2008, %v2176
  %v2178 = vpop.f32.mrf.mxu0
  %v2179 = vadd.f32 %v2010, %v2178
  %2180 = vmatmul.bf16.gmra.mxu0 %v1361
  %v2181 = vpop.f32.mrf.mxu0
  %v2182 = vadd.f32 %v2013, %v2181
  %v2183 = vpop.f32.mrf.mxu0
  %v2184 = vadd.f32 %v2015, %v2183
  %2185 = vmatmul.bf16.gmra.mxu0 %v1364
  %v2186 = vpop.f32.mrf.mxu0
  %v2187 = vadd.f32 %v2018, %v2186
  %v2188 = vpop.f32.mrf.mxu0
  %v2189 = vadd.f32 %v2020, %v2188
  %2190 = vmatmul.bf16.gmra.mxu0 %v1367
  %v2191 = vpop.f32.mrf.mxu0
  %v2192 = vadd.f32 %v2023, %v2191
  %v2193 = vpop.f32.mrf.mxu0
  %v2194 = vadd.f32 %v2025, %v2193
  %2195 = vmatmul.bf16.gmra.mxu0 %v1370
  %v2196 = vpop.f32.mrf.mxu0
  %v2197 = vadd.f32 %v2028, %v2196
  %v2198 = vpop.f32.mrf.mxu0
  %v2199 = vadd.f32 %v2030, %v2198
  %2200 = vmatmul.bf16.gmra.mxu0 %v1373
  %v2201 = vpop.f32.mrf.mxu0
  %v2202 = vadd.f32 %v2033, %v2201
  %v2203 = vpop.f32.mrf.mxu0
  %v2204 = vadd.f32 %v2035, %v2203
  %2205 = vmatmul.bf16.gmra.mxu0 %v1376
  %v2206 = vpop.f32.mrf.mxu0
  %v2207 = vadd.f32 %v2038, %v2206
  %v2208 = vpop.f32.mrf.mxu0
  %v2209 = vadd.f32 %v2040, %v2208
  %2210 = vmatmul.bf16.gmra.mxu0 %v1379
  %v2211 = vpop.f32.mrf.mxu0
  %v2212 = vadd.f32 %v2043, %v2211
  %v2213 = vpop.f32.mrf.mxu0
  %v2214 = vadd.f32 %v2045, %v2213
  %2215 = vmatmul.bf16.gmra.mxu0 %v1382
  %v2216 = vpop.f32.mrf.mxu0
  %v2217 = vadd.f32 %v2048, %v2216
  %v2218 = vpop.f32.mrf.mxu0
  %v2219 = vadd.f32 %v2050, %v2218
  %2220 = vmatmul.bf16.gmra.mxu0 %v1385
  %v2221 = vpop.f32.mrf.mxu0
  %v2222 = vadd.f32 %v2053, %v2221
  %v2223 = vpop.f32.mrf.mxu0
  %v2224 = vadd.f32 %v2055, %v2223
  %2225 = vmatmul.bf16.gmra.mxu0 %v1388
  %v2226 = vpop.f32.mrf.mxu0
  %v2227 = vadd.f32 %v2058, %v2226
  %v2228 = vpop.f32.mrf.mxu0
  %v2229 = vadd.f32 %v2060, %v2228
  %2230 = vmatmul.bf16.gmra.mxu0 %v1391
  %v2231 = vpop.f32.mrf.mxu0
  %v2232 = vadd.f32 %v2063, %v2231
  %v2233 = vpop.f32.mrf.mxu0
  %v2234 = vadd.f32 %v2065, %v2233
  %2235 = vmatmul.bf16.gmra.mxu0 %v1394
  %v2236 = vpop.f32.mrf.mxu0
  %v2237 = vadd.f32 %v2068, %v2236
  %v2238 = vpop.f32.mrf.mxu0
  %v2239 = vadd.f32 %v2070, %v2238
  %2240 = vdwg.mxu0
  %v2241 = vpack.c.bf16 %v2082, %v2082
  %v2242 = vpack.c.bf16 %v2084, %v2084
  %v2243 = vpack.c.bf16 %v2087, %v2087
  %v2244 = vpack.c.bf16 %v2089, %v2089
  %v2245 = vpack.c.bf16 %v2092, %v2092
  %v2246 = vpack.c.bf16 %v2094, %v2094
  %v2247 = vpack.c.bf16 %v2097, %v2097
  %v2248 = vpack.c.bf16 %v2099, %v2099
  %v2249 = vpack.c.bf16 %v2102, %v2102
  %v2250 = vpack.c.bf16 %v2104, %v2104
  %v2251 = vpack.c.bf16 %v2107, %v2107
  %v2252 = vpack.c.bf16 %v2109, %v2109
  %v2253 = vpack.c.bf16 %v2112, %v2112
  %v2254 = vpack.c.bf16 %v2114, %v2114
  %v2255 = vpack.c.bf16 %v2117, %v2117
  %v2256 = vpack.c.bf16 %v2119, %v2119
  %v2257 = vpack.c.bf16 %v2122, %v2122
  %v2258 = vpack.c.bf16 %v2124, %v2124
  %v2259 = vpack.c.bf16 %v2127, %v2127
  %v2260 = vpack.c.bf16 %v2129, %v2129
  %v2261 = vpack.c.bf16 %v2132, %v2132
  %v2262 = vpack.c.bf16 %v2134, %v2134
  %v2263 = vpack.c.bf16 %v2137, %v2137
  %v2264 = vpack.c.bf16 %v2139, %v2139
  %v2265 = vpack.c.bf16 %v2142, %v2142
  %v2266 = vpack.c.bf16 %v2144, %v2144
  %v2267 = vpack.c.bf16 %v2147, %v2147
  %v2268 = vpack.c.bf16 %v2149, %v2149
  %v2269 = vpack.c.bf16 %v2152, %v2152
  %v2270 = vpack.c.bf16 %v2154, %v2154
  %v2271 = vpack.c.bf16 %v2157, %v2157
  %v2272 = vpack.c.bf16 %v2159, %v2159
  %v2273 = vpack.c.bf16 %v2162, %v2162
  %v2274 = vpack.c.bf16 %v2164, %v2164
  %v2275 = vpack.c.bf16 %v2167, %v2167
  %v2276 = vpack.c.bf16 %v2169, %v2169
  %v2277 = vpack.c.bf16 %v2172, %v2172
  %v2278 = vpack.c.bf16 %v2174, %v2174
  %v2279 = vpack.c.bf16 %v2177, %v2177
  %v2280 = vpack.c.bf16 %v2179, %v2179
  %v2281 = vpack.c.bf16 %v2182, %v2182
  %v2282 = vpack.c.bf16 %v2184, %v2184
  %v2283 = vpack.c.bf16 %v2187, %v2187
  %v2284 = vpack.c.bf16 %v2189, %v2189
  %v2285 = vpack.c.bf16 %v2192, %v2192
  %v2286 = vpack.c.bf16 %v2194, %v2194
  %v2287 = vpack.c.bf16 %v2197, %v2197
  %v2288 = vpack.c.bf16 %v2199, %v2199
  %v2289 = vpack.c.bf16 %v2202, %v2202
  %v2290 = vpack.c.bf16 %v2204, %v2204
  %v2291 = vpack.c.bf16 %v2207, %v2207
  %v2292 = vpack.c.bf16 %v2209, %v2209
  %v2293 = vpack.c.bf16 %v2212, %v2212
  %v2294 = vpack.c.bf16 %v2214, %v2214
  %v2295 = vpack.c.bf16 %v2217, %v2217
  %v2296 = vpack.c.bf16 %v2219, %v2219
  %v2297 = vpack.c.bf16 %v2222, %v2222
  %v2298 = vpack.c.bf16 %v2224, %v2224
  %v2299 = vpack.c.bf16 %v2227, %v2227
  %v2300 = vpack.c.bf16 %v2229, %v2229
  %v2301 = vpack.c.bf16 %v2232, %v2232
  %v2302 = vpack.c.bf16 %v2234, %v2234
  %v2303 = vpack.c.bf16 %v2237, %v2237
  %v2304 = vpack.c.bf16 %v2239, %v2239
  %2305 = vst [vmem:[%s3] sm:$0xf] %v2241
  %2306 = vst [vmem:[%s3 + $0x4] sm:$0xf] %v2242
  %2307 = vst [vmem:[%s3 + $0x8] sm:$0xf] %v2243
  %2308 = vst [vmem:[%s3 + $0xc] sm:$0xf] %v2244
  %2309 = vst [vmem:[%s3 + $0x10] sm:$0xf] %v2245
  %2310 = vst [vmem:[%s3 + $0x14] sm:$0xf] %v2246
  %2311 = vst [vmem:[%s3 + $0x18] sm:$0xf] %v2247
  %2312 = vst [vmem:[%s3 + $0x1c] sm:$0xf] %v2248
  %2313 = vst [vmem:[%s3 + $0x20] sm:$0xf] %v2249
  %2314 = vst [vmem:[%s3 + $0x24] sm:$0xf] %v2250
  %2315 = vst [vmem:[%s3 + $0x28] sm:$0xf] %v2251
  %2316 = vst [vmem:[%s3 + $0x2c] sm:$0xf] %v2252
  %2317 = vst [vmem:[%s3 + $0x30] sm:$0xf] %v2253
  %2318 = vst [vmem:[%s3 + $0x34] sm:$0xf] %v2254
  %2319 = vst [vmem:[%s3 + $0x38] sm:$0xf] %v2255
  %2320 = vst [vmem:[%s3 + $0x3c] sm:$0xf] %v2256
  %2321 = vst [vmem:[%s3 + $0x40] sm:$0xf] %v2257
  %2322 = vst [vmem:[%s3 + $0x44] sm:$0xf] %v2258
  %2323 = vst [vmem:[%s3 + $0x48] sm:$0xf] %v2259
  %2324 = vst [vmem:[%s3 + $0x4c] sm:$0xf] %v2260
  %2325 = vst [vmem:[%s3 + $0x50] sm:$0xf] %v2261
  %2326 = vst [vmem:[%s3 + $0x54] sm:$0xf] %v2262
  %2327 = vst [vmem:[%s3 + $0x58] sm:$0xf] %v2263
  %2328 = vst [vmem:[%s3 + $0x5c] sm:$0xf] %v2264
  %2329 = vst [vmem:[%s3 + $0x60] sm:$0xf] %v2265
  %2330 = vst [vmem:[%s3 + $0x64] sm:$0xf] %v2266
  %2331 = vst [vmem:[%s3 + $0x68] sm:$0xf] %v2267
  %2332 = vst [vmem:[%s3 + $0x6c] sm:$0xf] %v2268
  %2333 = vst [vmem:[%s3 + $0x70] sm:$0xf] %v2269
  %2334 = vst [vmem:[%s3 + $0x74] sm:$0xf] %v2270
  %2335 = vst [vmem:[%s3 + $0x78] sm:$0xf] %v2271
  %2336 = vst [vmem:[%s3 + $0x7c] sm:$0xf] %v2272
  %2337 = vst [vmem:[%s3 + $0x80] sm:$0xf] %v2273
  %2338 = vst [vmem:[%s3 + $0x84] sm:$0xf] %v2274
  %2339 = vst [vmem:[%s3 + $0x88] sm:$0xf] %v2275
  %2340 = vst [vmem:[%s3 + $0x8c] sm:$0xf] %v2276
  %2341 = vst [vmem:[%s3 + $0x90] sm:$0xf] %v2277
  %2342 = vst [vmem:[%s3 + $0x94] sm:$0xf] %v2278
  %2343 = vst [vmem:[%s3 + $0x98] sm:$0xf] %v2279
  %2344 = vst [vmem:[%s3 + $0x9c] sm:$0xf] %v2280
  %2345 = vst [vmem:[%s3 + $0xa0] sm:$0xf] %v2281
  %2346 = vst [vmem:[%s3 + $0xa4] sm:$0xf] %v2282
  %2347 = vst [vmem:[%s3 + $0xa8] sm:$0xf] %v2283
  %2348 = vst [vmem:[%s3 + $0xac] sm:$0xf] %v2284
  %2349 = vst [vmem:[%s3 + $0xb0] sm:$0xf] %v2285
  %2350 = vst [vmem:[%s3 + $0xb4] sm:$0xf] %v2286
  %2351 = vst [vmem:[%s3 + $0xb8] sm:$0xf] %v2287
  %2352 = vst [vmem:[%s3 + $0xbc] sm:$0xf] %v2288
  %2353 = vst [vmem:[%s3 + $0xc0] sm:$0xf] %v2289
  %2354 = vst [vmem:[%s3 + $0xc4] sm:$0xf] %v2290
  %2355 = vst [vmem:[%s3 + $0xc8] sm:$0xf] %v2291
  %2356 = vst [vmem:[%s3 + $0xcc] sm:$0xf] %v2292
  %2357 = vst [vmem:[%s3 + $0xd0] sm:$0xf] %v2293
  %2358 = vst [vmem:[%s3 + $0xd4] sm:$0xf] %v2294
  %2359 = vst [vmem:[%s3 + $0xd8] sm:$0xf] %v2295
  %2360 = vst [vmem:[%s3 + $0xdc] sm:$0xf] %v2296
  %2361 = vst [vmem:[%s3 + $0xe0] sm:$0xf] %v2297
  %2362 = vst [vmem:[%s3 + $0xe4] sm:$0xf] %v2298
  %2363 = vst [vmem:[%s3 + $0xe8] sm:$0xf] %v2299
  %2364 = vst [vmem:[%s3 + $0xec] sm:$0xf] %v2300
  %2365 = vst [vmem:[%s3 + $0xf0] sm:$0xf] %v2301
  %2366 = vst [vmem:[%s3 + $0xf4] sm:$0xf] %v2302
  %2367 = vst [vmem:[%s3 + $0xf8] sm:$0xf] %v2303
  %2368 = vst [vmem:[%s3 + $0xfc] sm:$0xf] %v2304
  // Predicated region
  $region14: #{deeplabv3plus_forward.23} parent=0 // pred_check
    _
  $region15: #{deeplabv3plus_forward.23} parent=0 // pred_check_branch
    %2370 = sbr.rel (0) target = $region17
  $region16: #{deeplabv3plus_forward.23} parent=0 // pred_region
    _
  $region17: #{deeplabv3plus_forward.23} parent=0 // pred_fallthru
    _
  // Predicated region
  $region18: #{deeplabv3plus_forward.23} parent=0 // pred_check
    _
  $region19: #{deeplabv3plus_forward.23} parent=0 // pred_check_branch
    %2372 = sbr.rel (0) target = $region21
  $region20: #{deeplabv3plus_forward.23} parent=0 // pred_region
    _
  $region21: #{deeplabv3plus_forward.23} parent=0 // pred_fallthru
    _

</llo_original>
